<compile_context>
chip_gen: v5e
topology: v5e:2x2
jax: 0.10.0
libtpu: 0.0.40
codegen_flags: <defaults>
</compile_context>

<pallas_src>
import math
import jax
import jax.numpy as jnp
from jax.experimental import pallas as pl
from jax.experimental.pallas import tpu as pltpu


def _round_up(x, m):
    return ((x + m - 1) // m) * m


def rcnn_kernel(x_ref, w1_ref, b1_ref, w2_ref, b2_ref, wh_ref, bh_ref,
                logit_ref, head_ref):
    """Fused MLP tile: x -> relu(x@W1+b1) -> relu(@W2+b2) -> fused (cls|box) head."""
    x = x_ref[...].astype(jnp.bfloat16)                                # cast in-kernel
    h1 = jnp.dot(x, w1_ref[...], preferred_element_type=jnp.float32)
    h1 = jnp.maximum(h1 + b1_ref[...], 0.0)                            # f32 [TN, 1024]
    h2 = jnp.dot(h1.astype(jnp.bfloat16), w2_ref[...],
                 preferred_element_type=jnp.float32)
    h2 = jnp.maximum(h2 + b2_ref[...], 0.0)                            # f32 [TN, 1024]
    logit_ref[...] = h2
    # Single lane-dense head matmul (cls and box concatenated, padded to 128).
    head_ref[...] = jnp.dot(h2.astype(jnp.bfloat16), wh_ref[...],
                            preferred_element_type=jnp.float32) + bh_ref[...]


def pack_rcnn_params(params):
    """One-time parameter packing (hoisted out of the per-call path).

    bf16 weights (halves HBM->VMEM traffic, bf16 MXU), f32 biases, and the
    cls/box heads fused into a single [1024, hpad] lane-dense matrix.
    """
    w1, b1, w2, b2, wc, bc, wb, bb = params
    num_classes = wc.shape[1]
    head_dim = num_classes + 4
    hpad = _round_up(head_dim, 128)

    wh = jnp.zeros((1024, hpad), jnp.float32)
    wh = wh.at[:, :num_classes].set(wc).at[:, num_classes:head_dim].set(wb)
    bh = jnp.zeros((1, hpad), jnp.float32)
    bh = bh.at[:, :num_classes].set(bc).at[:, num_classes:head_dim].set(bb)

    return {
        "w1": w1.astype(jnp.bfloat16),
        "b1": b1.astype(jnp.float32).reshape(1, 1024),
        "w2": w2.astype(jnp.bfloat16),
        "b2": b2.astype(jnp.float32).reshape(1, 1024),
        "wh": wh.astype(jnp.bfloat16),
        "bh": bh,
        "num_classes": num_classes,
        "head_dim": head_dim,
        "hpad": hpad,
    }


def rcnn_forward(pooled_features, packed):
    """JAX wrapper reproducing RCNN.forward.

    `packed` must come from pack_rcnn_params (computed once, reused).
    Returns [cls, box, region_feature, logit] exactly as the torch module.
    """
    n = pooled_features.shape[0]
    region_feature = pooled_features.reshape(n, -1)   # dtype-preserving, like .view
    f = region_feature.shape[1]

    num_classes = packed["num_classes"]
    head_dim = packed["head_dim"]
    hpad = packed["hpad"]

    # ---- N tiling / padding --------------------------------------------------
    # TN=256 amortizes the 2x256x256 MXU (v6e/v7x) while keeping >=2 grid steps;
    # 128 for mid-size N; small N padded to the f32 sublane multiple.
    if n >= 512:
        tn = 256
    elif n >= 128:
        tn = 128
    else:
        tn = _round_up(n, 8)
    n_pad = _round_up(n, tn)

    # Feed x in its native dtype; bf16 cast is done inside the kernel.
    x_in = region_feature
    if x_in.dtype not in (jnp.float32, jnp.bfloat16):
        x_in = x_in.astype(jnp.float32)
    if n_pad != n:
        x_in = jnp.pad(x_in, ((0, n_pad - n), (0, 0)))
    grid = (n_pad // tn,)
    x_bytes = jnp.dtype(x_in.dtype).itemsize

    # ---- VMEM budget / cost estimate ------------------------------------------
    # Weights are single-buffered (Buffered(1)); x tile + outputs double-buffer;
    # include the f32 h1/h2 intermediates and bf16 casts in the tile budget.
    weight_bytes = 2 * (f * 1024 + 1024 * 1024 + 1024 * hpad) \
        + 4 * (1024 + 1024 + hpad)
    tile_bytes = (2 * tn * f * x_bytes          # x tile (double-buffered)
                  + 2 * tn * 1024 * 4           # logit output (double-buffered)
                  + 2 * tn * hpad * 4           # fused head output (double-buffered)
                  + 2 * tn * 1024 * 4           # h1 + h2 f32 intermediates
                  + tn * (f + 1024) * 2)        # bf16 casts of x / h
    vmem_need = weight_bytes + tile_bytes
    try:
        vmem_cap = pltpu.get_tpu_info().vmem_capacity_bytes
    except Exception:
        vmem_cap = 64 << 20                     # v7x per-TC worst case
    vmem_limit = max(int(1.3 * vmem_need) + (4 << 20), 32 << 20)
    vmem_limit = min(vmem_limit, vmem_cap - (4 << 20))

    flops = 2 * n_pad * (f * 1024 + 1024 * 1024 + 1024 * hpad)
    bytes_accessed = (n_pad * f * x_bytes + weight_bytes
                      + n_pad * (1024 + hpad) * 4)
    cost = pl.CostEstimate(flops=flops, transcendentals=0,
                           bytes_accessed=bytes_accessed)

    # ---- pallas_call ----------------------------------------------------------
    const = lambda i: (0, 0)

    def resident(shape):
        # Constant block index (no re-DMA across the grid) + single-buffered.
        return pl.BlockSpec(shape, const, pipeline_mode=pl.Buffered(1))

    logit_pad, head_pad = pl.pallas_call(
        rcnn_kernel,
        out_shape=(
            jax.ShapeDtypeStruct((n_pad, 1024), jnp.float32),   # logit
            jax.ShapeDtypeStruct((n_pad, hpad), jnp.float32),   # fused cls|box
        ),
        grid=grid,
        in_specs=[
            pl.BlockSpec((tn, f), lambda i: (i, 0)),            # x tile (pipelined)
            resident((f, 1024)),                                # W1
            resident((1, 1024)),                                # b1
            resident((1024, 1024)),                             # W2
            resident((1, 1024)),                                # b2
            resident((1024, hpad)),                             # fused head W
            resident((1, hpad)),                                # fused head b
        ],
        out_specs=(
            pl.BlockSpec((tn, 1024), lambda i: (i, 0)),
            pl.BlockSpec((tn, hpad), lambda i: (i, 0)),
        ),
        compiler_params=pltpu.CompilerParams(
            dimension_semantics=("parallel",),
            vmem_limit_bytes=vmem_limit),
        cost_estimate=cost,
    )(x_in, packed["w1"], packed["b1"], packed["w2"], packed["b2"],
      packed["wh"], packed["bh"])

    # Drop row padding and split fused head back into cls / box.
    logit = logit_pad[:n]
    cls = head_pad[:n, :num_classes]
    box = head_pad[:n, num_classes:head_dim]
    return [cls, box, region_feature, logit]


def init_rcnn_params(key, num_channels, num_classes, feat_height, feat_width,
                     activation="softmax"):
    """Deterministic init matching the module's __init__ (gaussian weights,
    zero biases, special cls/box bias values)."""
    in_features = num_channels * feat_height * feat_width
    k1, k2, k3, k4 = jax.random.split(key, 4)

    # utils.init_gauss(..., std): N(0, std) weights, zero biases.
    w1 = 0.01 * jax.random.normal(k1, (in_features, 1024), dtype=jnp.float32)
    b1 = jnp.zeros((1, 1024), dtype=jnp.float32)
    w2 = 0.01 * jax.random.normal(k2, (1024, 1024), dtype=jnp.float32)
    b2 = jnp.zeros((1, 1024), dtype=jnp.float32)
    wc = 0.01 * jax.random.normal(k3, (1024, num_classes), dtype=jnp.float32)
    bc = jnp.zeros((1, num_classes), dtype=jnp.float32)
    wb = 0.001 * jax.random.normal(k4, (1024, 4), dtype=jnp.float32)
    bb = jnp.zeros((1, 4), dtype=jnp.float32)

    if activation == "sigmoid":
        bc = jnp.full((1, num_classes), -2.19, dtype=jnp.float32)
    elif activation == "softmax":
        bc = jnp.zeros((1, num_classes), dtype=jnp.float32)
        # box_out.bias.data[0::num_classes] = log(9 * (num_classes - 1))
        idx = jnp.arange(4)
        bb = jnp.where((idx % num_classes) == 0,
                       math.log(9.0 * (num_classes - 1)), 0.0
                       ).astype(jnp.float32).reshape(1, 4)
    else:
        raise ValueError("Unknown activation function {:s}".format(activation))

    return (w1, b1, w2, b2, wc, bc, wb, bb)


if __name__ == "__main__":
    # Small shapes consistent with the module: pooled features [N, C, H, W].
    batch, num_channels, feat_h, feat_w = 2, 4, 16, 16   # in_features = 1024
    num_classes = 8

    key = jax.random.PRNGKey(0)
    k_in, k_par = jax.random.split(key)
    pooled_features = jax.random.normal(
        k_in, (batch, num_channels, feat_h, feat_w), dtype=jnp.float32)

    params = init_rcnn_params(k_par, num_channels, num_classes,
                              feat_h, feat_w, activation="softmax")
    packed = pack_rcnn_params(params)          # one-time packing, reused per call
    packed = {k: (jax.block_until_ready(v) if isinstance(v, jax.Array) else v)
              for k, v in packed.items()}

    cls, box, region_feature, logit = rcnn_forward(pooled_features, packed)
    jax.block_until_ready((cls, box, region_feature, logit))

    assert cls.shape == (batch, num_classes)
    assert box.shape == (batch, 4)
    assert region_feature.shape == (batch, num_channels * feat_h * feat_w)
    assert logit.shape == (batch, 1024)

    # TODO(synk): K-tile the first matmul only if in_features grows past what
    # single-buffered weights can hold in per-TC VMEM (~25-30K on v7x).

    print("KERNEL_OK")
</pallas_src>

<mosaic_0001>
module attributes {stable_mosaic.version = 11 : i64} {
  func.func @rcnn_kernel(%arg0: i32, %arg1: memref<8x1024xf32, #tpu.memory_space<vmem>>, %arg2: memref<1024x1024xbf16, #tpu.memory_space<vmem>>, %arg3: memref<1x1024xf32, #tpu.memory_space<vmem>>, %arg4: memref<1024x1024xbf16, #tpu.memory_space<vmem>>, %arg5: memref<1x1024xf32, #tpu.memory_space<vmem>>, %arg6: memref<1024x128xbf16, #tpu.memory_space<vmem>>, %arg7: memref<1x128xf32, #tpu.memory_space<vmem>>, %arg8: memref<8x1024xf32, #tpu.memory_space<vmem>>, %arg9: memref<8x128xf32, #tpu.memory_space<vmem>>) attributes {dimension_semantics = [#tpu.dimension_semantics<parallel>], iteration_bounds = array<i64: 1>, scalar_prefetch = 0 : i64, scratch_operands = 0 : i64, tpu.core_type = #tpu.core_type<tc>, window_params = [{transform_indices = @transform_0, window_bounds = array<i64: 8, 1024>}, {pipeline_mode = #tpu.pipeline_mode<synchronous>, transform_indices = @transform_1, window_bounds = array<i64: 1024, 1024>}, {pipeline_mode = #tpu.pipeline_mode<synchronous>, transform_indices = @transform_2, window_bounds = array<i64: 1, 1024>}, {pipeline_mode = #tpu.pipeline_mode<synchronous>, transform_indices = @transform_3, window_bounds = array<i64: 1024, 1024>}, {pipeline_mode = #tpu.pipeline_mode<synchronous>, transform_indices = @transform_4, window_bounds = array<i64: 1, 1024>}, {pipeline_mode = #tpu.pipeline_mode<synchronous>, transform_indices = @transform_5, window_bounds = array<i64: 1024, 128>}, {pipeline_mode = #tpu.pipeline_mode<synchronous>, transform_indices = @transform_6, window_bounds = array<i64: 1, 128>}, {transform_indices = @transform_7, window_bounds = array<i64: 8, 1024>}, {transform_indices = @transform_8, window_bounds = array<i64: 8, 128>}]} {
    %c0 = arith.constant 0 : index
    %c0_0 = arith.constant 0 : index
    %0 = vector.load %arg1[%c0, %c0_0] : memref<8x1024xf32, #tpu.memory_space<vmem>>, vector<8x1024xf32>
    %1 = arith.truncf %0 : vector<8x1024xf32> to vector<8x1024xbf16>
    %c0_1 = arith.constant 0 : index
    %c0_2 = arith.constant 0 : index
    %2 = vector.load %arg2[%c0_1, %c0_2] : memref<1024x1024xbf16, #tpu.memory_space<vmem>>, vector<1024x1024xbf16>
    %cst = arith.constant dense<0.000000e+00> : vector<8x1024xf32>
    %3 = tpu.matmul %1, %2, %cst {dimension_numbers = #tpu.dot_dimension_numbers<[1], [0], [0], [1], [0, 0, 1, 1], [], []>} : vector<8x1024xbf16>, vector<1024x1024xbf16>, vector<8x1024xf32> -> vector<8x1024xf32>
    %c0_3 = arith.constant 0 : index
    %c0_4 = arith.constant 0 : index
    %4 = vector.load %arg3[%c0_3, %c0_4] : memref<1x1024xf32, #tpu.memory_space<vmem>>, vector<1x1024xf32>
    %5 = vector.broadcast %4 : vector<1x1024xf32> to vector<8x1024xf32>
    %6 = arith.addf %3, %5 : vector<8x1024xf32>
    %cst_5 = arith.constant 0.000000e+00 : f32
    %7 = vector.broadcast %cst_5 : f32 to vector<8x1024xf32>
    %8 = arith.maximumf %6, %7 : vector<8x1024xf32>
    %9 = arith.truncf %8 : vector<8x1024xf32> to vector<8x1024xbf16>
    %c0_6 = arith.constant 0 : index
    %c0_7 = arith.constant 0 : index
    %10 = vector.load %arg4[%c0_6, %c0_7] : memref<1024x1024xbf16, #tpu.memory_space<vmem>>, vector<1024x1024xbf16>
    %cst_8 = arith.constant dense<0.000000e+00> : vector<8x1024xf32>
    %11 = tpu.matmul %9, %10, %cst_8 {dimension_numbers = #tpu.dot_dimension_numbers<[1], [0], [0], [1], [0, 0, 1, 1], [], []>} : vector<8x1024xbf16>, vector<1024x1024xbf16>, vector<8x1024xf32> -> vector<8x1024xf32>
    %c0_9 = arith.constant 0 : index
    %c0_10 = arith.constant 0 : index
    %12 = vector.load %arg5[%c0_9, %c0_10] : memref<1x1024xf32, #tpu.memory_space<vmem>>, vector<1x1024xf32>
    %13 = vector.broadcast %12 : vector<1x1024xf32> to vector<8x1024xf32>
    %14 = arith.addf %11, %13 : vector<8x1024xf32>
    %cst_11 = arith.constant 0.000000e+00 : f32
    %15 = vector.broadcast %cst_11 : f32 to vector<8x1024xf32>
    %16 = arith.maximumf %14, %15 : vector<8x1024xf32>
    %c0_12 = arith.constant 0 : index
    %c0_13 = arith.constant 0 : index
    %17 = vector.load %arg8[%c0_12, %c0_13] : memref<8x1024xf32, #tpu.memory_space<vmem>>, vector<8x1024xf32>
    tpu.vector_store %arg8[%c0_12, %c0_13], %16 {strides = array<i32>} : memref<8x1024xf32, #tpu.memory_space<vmem>>, vector<8x1024xf32>,
    %18 = arith.truncf %16 : vector<8x1024xf32> to vector<8x1024xbf16>
    %c0_14 = arith.constant 0 : index
    %c0_15 = arith.constant 0 : index
    %19 = vector.load %arg6[%c0_14, %c0_15] : memref<1024x128xbf16, #tpu.memory_space<vmem>>, vector<1024x128xbf16>
    %cst_16 = arith.constant dense<0.000000e+00> : vector<8x128xf32>
    %20 = tpu.matmul %18, %19, %cst_16 {dimension_numbers = #tpu.dot_dimension_numbers<[1], [0], [0], [1], [0, 0, 1, 1], [], []>} : vector<8x1024xbf16>, vector<1024x128xbf16>, vector<8x128xf32> -> vector<8x128xf32>
    %c0_17 = arith.constant 0 : index
    %c0_18 = arith.constant 0 : index
    %21 = vector.load %arg7[%c0_17, %c0_18] : memref<1x128xf32, #tpu.memory_space<vmem>>, vector<1x128xf32>
    %22 = vector.broadcast %21 : vector<1x128xf32> to vector<8x128xf32>
    %23 = arith.addf %20, %22 : vector<8x128xf32>
    %c0_19 = arith.constant 0 : index
    %c0_20 = arith.constant 0 : index
    %24 = vector.load %arg9[%c0_19, %c0_20] : memref<8x128xf32, #tpu.memory_space<vmem>>, vector<8x128xf32>
    tpu.vector_store %arg9[%c0_19, %c0_20], %23 {strides = array<i32>} : memref<8x128xf32, #tpu.memory_space<vmem>>, vector<8x128xf32>,
    return
  }
  func.func @transform_0(%arg0: i32) -> (i32, i32) {
    %c0_i32 = arith.constant 0 : i32
    %c0_i32_0 = arith.constant 0 : i32
    return %arg0, %c0_i32 : i32, i32
  }
  func.func @transform_1(%arg0: i32) -> (i32, i32) {
    %c0_i32 = arith.constant 0 : i32
    %c0_i32_0 = arith.constant 0 : i32
    %c0_i32_1 = arith.constant 0 : i32
    return %c0_i32, %c0_i32_0 : i32, i32
  }
  func.func @transform_2(%arg0: i32) -> (i32, i32) {
    %c0_i32 = arith.constant 0 : i32
    %c0_i32_0 = arith.constant 0 : i32
    %c0_i32_1 = arith.constant 0 : i32
    return %c0_i32, %c0_i32_0 : i32, i32
  }
  func.func @transform_3(%arg0: i32) -> (i32, i32) {
    %c0_i32 = arith.constant 0 : i32
    %c0_i32_0 = arith.constant 0 : i32
    %c0_i32_1 = arith.constant 0 : i32
    return %c0_i32, %c0_i32_0 : i32, i32
  }
  func.func @transform_4(%arg0: i32) -> (i32, i32) {
    %c0_i32 = arith.constant 0 : i32
    %c0_i32_0 = arith.constant 0 : i32
    %c0_i32_1 = arith.constant 0 : i32
    return %c0_i32, %c0_i32_0 : i32, i32
  }
  func.func @transform_5(%arg0: i32) -> (i32, i32) {
    %c0_i32 = arith.constant 0 : i32
    %c0_i32_0 = arith.constant 0 : i32
    %c0_i32_1 = arith.constant 0 : i32
    return %c0_i32, %c0_i32_0 : i32, i32
  }
  func.func @transform_6(%arg0: i32) -> (i32, i32) {
    %c0_i32 = arith.constant 0 : i32
    %c0_i32_0 = arith.constant 0 : i32
    %c0_i32_1 = arith.constant 0 : i32
    return %c0_i32, %c0_i32_0 : i32, i32
  }
  func.func @transform_7(%arg0: i32) -> (i32, i32) {
    %c0_i32 = arith.constant 0 : i32
    %c0_i32_0 = arith.constant 0 : i32
    return %arg0, %c0_i32 : i32, i32
  }
  func.func @transform_8(%arg0: i32) -> (i32, i32) {
    %c0_i32 = arith.constant 0 : i32
    %c0_i32_0 = arith.constant 0 : i32
    return %arg0, %c0_i32 : i32, i32
  }
}

</mosaic_0001>

<llo_original>
// kernel: tpu_custom_call.1
$region0: #{tpu_custom_call.1}
  #allocation0 [shape = 'u32[]', space=smem, size = 0x4, offset = 0x4, fixed_abs, tag = 'smem constant byte address 0x4 - core index']
  #allocation1 [shape = 'u32[72,128]{1,0:T(1,128)}', space=vmem, size = 0x9000, scoped, tag = 'internal scratch']
  %s0 = inlined_call_operand.hbm [shape: f32[8,1024], index: 0, kind: input, shape index: {}]
  %s1 = inlined_call_operand.hbm [shape: bf16[1024,1024], index: 1, kind: input, shape index: {}]
  %s2 = inlined_call_operand.hbm [shape: f32[1,1024], index: 2, kind: input, shape index: {}]
  %s3 = inlined_call_operand.hbm [shape: bf16[1024,1024], index: 3, kind: input, shape index: {}]
  %s4 = inlined_call_operand.hbm [shape: f32[1,1024], index: 4, kind: input, shape index: {}]
  %s5 = inlined_call_operand.hbm [shape: bf16[1024,128], index: 5, kind: input, shape index: {}]
  %s6 = inlined_call_operand.hbm [shape: f32[1,128], index: 6, kind: input, shape index: {}]
  %s7 = inlined_call_operand.hbm [shape: f32[8,1024], index: 7, kind: output, shape index: {0}]
  %s8 = inlined_call_operand.hbm [shape: f32[8,128], index: 8, kind: output, shape index: {1}]
  %9 = xla_tuple %s7, %s8
  %s10 = sld [smem:[#allocation0]]
  $region74: #{tpu_custom_call.1} parent=0
    _
  %s12 = ssub.s32 1, %s10
  %s13 = scalar_select 0, %s12, %s10
  $region1: #{tpu_custom_call.1} parent=0
    #allocation2 [shape = 'u8[32768]{0}', space=vmem, size = 0x8000, scoped, tag = 'input window, operand 0, single buffered']
    #allocation3 [shape = 's32[1]{0}', space=sflag, size = 0x4, scoped, tag = 'scoped memory for tpu_custom_call.1']
    #allocation4 [shape = 's32[1]{0}', space=sflag, size = 0x4, scoped, tag = 'scoped memory for tpu_custom_call.1']
    #allocation5 [shape = 'u8[2097152]{0}', space=vmem, size = 0x200000, scoped, tag = 'input window, operand 1, single buffered']
    #allocation6 [shape = 's32[1]{0}', space=sflag, size = 0x4, scoped, tag = 'scoped memory for tpu_custom_call.1']
    #allocation7 [shape = 'u8[4096]{0}', space=vmem, size = 0x1000, scoped, tag = 'input window, operand 2, single buffered']
    #allocation8 [shape = 'u8[2097152]{0}', space=vmem, size = 0x200000, scoped, tag = 'input window, operand 3, single buffered']
    #allocation9 [shape = 's32[1]{0}', space=sflag, size = 0x4, scoped, tag = 'scoped memory for tpu_custom_call.1']
    #allocation10 [shape = 'u8[4096]{0}', space=vmem, size = 0x1000, scoped, tag = 'input window, operand 4, single buffered']
    #allocation11 [shape = 'u8[262144]{0}', space=vmem, size = 0x40000, scoped, tag = 'input window, operand 5, single buffered']
    #allocation12 [shape = 's32[1]{0}', space=sflag, size = 0x4, scoped, tag = 'scoped memory for tpu_custom_call.1']
    #allocation13 [shape = 'u8[512]{0}', space=vmem, size = 0x400, scoped, tag = 'input window, operand 6, single buffered']
    #allocation14 [shape = 'u8[32768]{0}', space=vmem, size = 0x8000, scoped, tag = 'output window, operand 0, single buffered']
    #allocation15 [shape = 'u8[4096]{0}', space=vmem, size = 0x1000, scoped, tag = 'output window, operand 1, single buffered']
    #allocation16 [shape = 's32[1]{0}', space=sflag, size = 0x4, scoped, tag = 'scoped memory for tpu_custom_call.1']
    %14 = vsyncpa [#allocation3], 0
    %15 = vsyncpa [#allocation6], 0
    %16 = vsyncpa [#allocation9], 0
    %17 = vsyncpa [#allocation12], 0
    %18 = vsyncpa [#allocation4], 0
    %19 = vsyncpa [#allocation16], 0
    // Predicated region
    $region2: #{tpu_custom_call.1} parent=1 // pred_check
      _
    $region3: #{tpu_custom_call.1} parent=1 // pred_check_branch
      %21 = sbr.rel (0) target = $region5
    $region4: #{tpu_custom_call.1} parent=1 // pred_region
      %23 = vsyncadd [#allocation3], 0
      %s25 = sshll.u32 %s0, 4
      %s26 = int_to_ptr.hbm [resolvable:$true] %s25
      %s27 = sshll.u32 [#allocation2], 4
      %s28 = int_to_ptr.vmem [resolvable:$true] %s27
      %30 = dma.hbm_to_vmem [thread:$0]  %s26, 1024, %s28, [#allocation3]
    $region5: #{tpu_custom_call.1} parent=1 // pred_fallthru
      _
    // Predicated region
    $region6: #{tpu_custom_call.1} parent=1 // pred_check
      _
    $region7: #{tpu_custom_call.1} parent=1 // pred_check_branch
      %32 = sbr.rel (0) target = $region9
    $region8: #{tpu_custom_call.1} parent=1 // pred_region
      %34 = vsyncadd [#allocation6], 0
      %s35 = sshll.u32 %s1, 4
      %s36 = int_to_ptr.hbm [resolvable:$true] %s35
      %s37 = sshll.u32 [#allocation5], 4
      %s38 = int_to_ptr.vmem [resolvable:$true] %s37
      %43 = dma.hbm_to_vmem [thread:$0]  %s36, 65536, %s38, [#allocation6], 512, 512, 32
    $region9: #{tpu_custom_call.1} parent=1 // pred_fallthru
      _
    // Predicated region
    $region10: #{tpu_custom_call.1} parent=1 // pred_check
      _
    $region11: #{tpu_custom_call.1} parent=1 // pred_check_branch
      %45 = sbr.rel (0) target = $region13
    $region12: #{tpu_custom_call.1} parent=1 // pred_region
      %47 = vsyncadd [#allocation6], 0
      %s49 = sshll.u32 %s2, 4
      %s50 = int_to_ptr.hbm [resolvable:$true] %s49
      %s51 = sshll.u32 [#allocation7], 4
      %s52 = int_to_ptr.vmem [resolvable:$true] %s51
      %54 = dma.hbm_to_vmem [thread:$0]  %s50, 128, %s52, [#allocation6]
    $region13: #{tpu_custom_call.1} parent=1 // pred_fallthru
      _
    // Predicated region
    $region14: #{tpu_custom_call.1} parent=1 // pred_check
      _
    $region15: #{tpu_custom_call.1} parent=1 // pred_check_branch
      %56 = sbr.rel (0) target = $region17
    $region16: #{tpu_custom_call.1} parent=1 // pred_region
      %58 = vsyncadd [#allocation9], 0
      %s59 = sshll.u32 %s3, 4
      %s60 = int_to_ptr.hbm [resolvable:$true] %s59
      %s61 = sshll.u32 [#allocation8], 4
      %s62 = int_to_ptr.vmem [resolvable:$true] %s61
      %67 = dma.hbm_to_vmem [thread:$0]  %s60, 65536, %s62, [#allocation9], 512, 512, 32
    $region17: #{tpu_custom_call.1} parent=1 // pred_fallthru
      _
    // Predicated region
    $region18: #{tpu_custom_call.1} parent=1 // pred_check
      _
    $region19: #{tpu_custom_call.1} parent=1 // pred_check_branch
      %69 = sbr.rel (0) target = $region21
    $region20: #{tpu_custom_call.1} parent=1 // pred_region
      %71 = vsyncadd [#allocation9], 0
      %s73 = sshll.u32 %s4, 4
      %s74 = int_to_ptr.hbm [resolvable:$true] %s73
      %s75 = sshll.u32 [#allocation10], 4
      %s76 = int_to_ptr.vmem [resolvable:$true] %s75
      %78 = dma.hbm_to_vmem [thread:$0]  %s74, 128, %s76, [#allocation9]
    $region21: #{tpu_custom_call.1} parent=1 // pred_fallthru
      _
    // Predicated region
    $region22: #{tpu_custom_call.1} parent=1 // pred_check
      _
    $region23: #{tpu_custom_call.1} parent=1 // pred_check_branch
      %80 = sbr.rel (0) target = $region25
    $region24: #{tpu_custom_call.1} parent=1 // pred_region
      %82 = vsyncadd [#allocation12], 0
      %s83 = sshll.u32 %s5, 4
      %s84 = int_to_ptr.hbm [resolvable:$true] %s83
      %s85 = sshll.u32 [#allocation11], 4
      %s86 = int_to_ptr.vmem [resolvable:$true] %s85
      %91 = dma.hbm_to_vmem [thread:$0]  %s84, 8192, %s86, [#allocation12], 64, 64, 4
    $region25: #{tpu_custom_call.1} parent=1 // pred_fallthru
      _
    // Predicated region
    $region26: #{tpu_custom_call.1} parent=1 // pred_check
      _
    $region27: #{tpu_custom_call.1} parent=1 // pred_check_branch
      %93 = sbr.rel (0) target = $region29
    $region28: #{tpu_custom_call.1} parent=1 // pred_region
      %95 = vsyncadd [#allocation12], 0
      %s97 = sshll.u32 %s6, 4
      %s98 = int_to_ptr.hbm [resolvable:$true] %s97
      %s99 = sshll.u32 [#allocation13], 4
      %s100 = int_to_ptr.vmem [resolvable:$true] %s99
      %102 = dma.hbm_to_vmem [thread:$0]  %s98, 16, %s100, [#allocation12]
    $region29: #{tpu_custom_call.1} parent=1 // pred_fallthru
      _
    // Predicated region
    $region30: #{tpu_custom_call.1} parent=1 // pred_check
      _
    $region31: #{tpu_custom_call.1} parent=1 // pred_check_branch
      %104 = sbr.rel (0) target = $region33
    $region32: #{tpu_custom_call.1} parent=1 // pred_region
      %106 = dma.done [#allocation3], 1024
    $region33: #{tpu_custom_call.1} parent=1 // pred_fallthru
      _
    // Predicated region
    $region34: #{tpu_custom_call.1} parent=1 // pred_check
      _
    $region35: #{tpu_custom_call.1} parent=1 // pred_check_branch
      %108 = sbr.rel (0) target = $region37
    $region36: #{tpu_custom_call.1} parent=1 // pred_region
      %110 = dma.done [#allocation6], 65536
    $region37: #{tpu_custom_call.1} parent=1 // pred_fallthru
      _
    // Predicated region
    $region38: #{tpu_custom_call.1} parent=1 // pred_check
      _
    $region39: #{tpu_custom_call.1} parent=1 // pred_check_branch
      %112 = sbr.rel (0) target = $region41
    $region40: #{tpu_custom_call.1} parent=1 // pred_region
      %114 = dma.done [#allocation6], 128
    $region41: #{tpu_custom_call.1} parent=1 // pred_fallthru
      _
    // Predicated region
    $region42: #{tpu_custom_call.1} parent=1 // pred_check
      _
    $region43: #{tpu_custom_call.1} parent=1 // pred_check_branch
      %116 = sbr.rel (0) target = $region45
    $region44: #{tpu_custom_call.1} parent=1 // pred_region
      %118 = dma.done [#allocation9], 65536
    $region45: #{tpu_custom_call.1} parent=1 // pred_fallthru
      _
    // Predicated region
    $region46: #{tpu_custom_call.1} parent=1 // pred_check
      _
    $region47: #{tpu_custom_call.1} parent=1 // pred_check_branch
      %120 = sbr.rel (0) target = $region49
    $region48: #{tpu_custom_call.1} parent=1 // pred_region
      %122 = dma.done [#allocation9], 128
    $region49: #{tpu_custom_call.1} parent=1 // pred_fallthru
      _
    // Predicated region
    $region50: #{tpu_custom_call.1} parent=1 // pred_check
      _
    $region51: #{tpu_custom_call.1} parent=1 // pred_check_branch
      %124 = sbr.rel (0) target = $region53
    $region52: #{tpu_custom_call.1} parent=1 // pred_region
      %126 = dma.done [#allocation12], 8192
    $region53: #{tpu_custom_call.1} parent=1 // pred_fallthru
      _
    // Predicated region
    $region54: #{tpu_custom_call.1} parent=1 // pred_check
      _
    $region55: #{tpu_custom_call.1} parent=1 // pred_check_branch
      %128 = sbr.rel (0) target = $region57
    $region56: #{tpu_custom_call.1} parent=1 // pred_region
      %130 = dma.done [#allocation12], 16
    $region57: #{tpu_custom_call.1} parent=1 // pred_fallthru
      _
    %v131 = vld [vmem:[#allocation2] sm:$0xff]
    %v132 = vld [vmem:[#allocation2 + $0x8] sm:$0xff]
    %v133 = vld [vmem:[#allocation2 + $0x10] sm:$0xff]
    %v134 = vld [vmem:[#allocation2 + $0x18] sm:$0xff]
    %v135 = vld [vmem:[#allocation2 + $0x20] sm:$0xff]
    %v136 = vld [vmem:[#allocation2 + $0x28] sm:$0xff]
    %v137 = vld [vmem:[#allocation2 + $0x30] sm:$0xff]
    %v138 = vld [vmem:[#allocation2 + $0x38] sm:$0xff]
    %v139 = vpack.c.bf16 %v131, %v131
    %v140 = vpack.c.bf16 %v132, %v132
    %v141 = vpack.c.bf16 %v133, %v133
    %v142 = vpack.c.bf16 %v134, %v134
    %v143 = vpack.c.bf16 %v135, %v135
    %v144 = vpack.c.bf16 %v136, %v136
    %v145 = vpack.c.bf16 %v137, %v137
    %v146 = vpack.c.bf16 %v138, %v138
    %v147 = vld [vmem:[#allocation5] sm:$0xff]
    %v148 = vld [vmem:[#allocation5 + $0x8] sm:$0xff]
    %v149 = vld [vmem:[#allocation5 + $0x10] sm:$0xff]
    %v150 = vld [vmem:[#allocation5 + $0x18] sm:$0xff]
    %v151 = vld [vmem:[#allocation5 + $0x20] sm:$0xff]
    %v152 = vld [vmem:[#allocation5 + $0x28] sm:$0xff]
    %v153 = vld [vmem:[#allocation5 + $0x30] sm:$0xff]
    %v154 = vld [vmem:[#allocation5 + $0x38] sm:$0xff]
    %v155 = vld [vmem:[#allocation5 + $0x40] sm:$0xff]
    %v156 = vld [vmem:[#allocation5 + $0x48] sm:$0xff]
    %v157 = vld [vmem:[#allocation5 + $0x50] sm:$0xff]
    %v158 = vld [vmem:[#allocation5 + $0x58] sm:$0xff]
    %v159 = vld [vmem:[#allocation5 + $0x60] sm:$0xff]
    %v160 = vld [vmem:[#allocation5 + $0x68] sm:$0xff]
    %v161 = vld [vmem:[#allocation5 + $0x70] sm:$0xff]
    %v162 = vld [vmem:[#allocation5 + $0x78] sm:$0xff]
    %v163 = vld [vmem:[#allocation5 + $0x80] sm:$0xff]
    %v164 = vld [vmem:[#allocation5 + $0x88] sm:$0xff]
    %v165 = vld [vmem:[#allocation5 + $0x90] sm:$0xff]
    %v166 = vld [vmem:[#allocation5 + $0x98] sm:$0xff]
    %v167 = vld [vmem:[#allocation5 + $0xa0] sm:$0xff]
    %v168 = vld [vmem:[#allocation5 + $0xa8] sm:$0xff]
    %v169 = vld [vmem:[#allocation5 + $0xb0] sm:$0xff]
    %v170 = vld [vmem:[#allocation5 + $0xb8] sm:$0xff]
    %v171 = vld [vmem:[#allocation5 + $0xc0] sm:$0xff]
    %v172 = vld [vmem:[#allocation5 + $0xc8] sm:$0xff]
    %v173 = vld [vmem:[#allocation5 + $0xd0] sm:$0xff]
    %v174 = vld [vmem:[#allocation5 + $0xd8] sm:$0xff]
    %v175 = vld [vmem:[#allocation5 + $0xe0] sm:$0xff]
    %v176 = vld [vmem:[#allocation5 + $0xe8] sm:$0xff]
    %v177 = vld [vmem:[#allocation5 + $0xf0] sm:$0xff]
    %v178 = vld [vmem:[#allocation5 + $0xf8] sm:$0xff]
    %v179 = vld [vmem:[#allocation5 + $0x100] sm:$0xff]
    %v180 = vld [vmem:[#allocation5 + $0x108] sm:$0xff]
    %v181 = vld [vmem:[#allocation5 + $0x110] sm:$0xff]
    %v182 = vld [vmem:[#allocation5 + $0x118] sm:$0xff]
    %v183 = vld [vmem:[#allocation5 + $0x120] sm:$0xff]
    %v184 = vld [vmem:[#allocation5 + $0x128] sm:$0xff]
    %v185 = vld [vmem:[#allocation5 + $0x130] sm:$0xff]
    %v186 = vld [vmem:[#allocation5 + $0x138] sm:$0xff]
    %v187 = vld [vmem:[#allocation5 + $0x140] sm:$0xff]
    %v188 = vld [vmem:[#allocation5 + $0x148] sm:$0xff]
    %v189 = vld [vmem:[#allocation5 + $0x150] sm:$0xff]
    %v190 = vld [vmem:[#allocation5 + $0x158] sm:$0xff]
    %v191 = vld [vmem:[#allocation5 + $0x160] sm:$0xff]
    %v192 = vld [vmem:[#allocation5 + $0x168] sm:$0xff]
    %v193 = vld [vmem:[#allocation5 + $0x170] sm:$0xff]
    %v194 = vld [vmem:[#allocation5 + $0x178] sm:$0xff]
    %v195 = vld [vmem:[#allocation5 + $0x180] sm:$0xff]
    %v196 = vld [vmem:[#allocation5 + $0x188] sm:$0xff]
    %v197 = vld [vmem:[#allocation5 + $0x190] sm:$0xff]
    %v198 = vld [vmem:[#allocation5 + $0x198] sm:$0xff]
    %v199 = vld [vmem:[#allocation5 + $0x1a0] sm:$0xff]
    %v200 = vld [vmem:[#allocation5 + $0x1a8] sm:$0xff]
    %v201 = vld [vmem:[#allocation5 + $0x1b0] sm:$0xff]
    %v202 = vld [vmem:[#allocation5 + $0x1b8] sm:$0xff]
    %v203 = vld [vmem:[#allocation5 + $0x1c0] sm:$0xff]
    %v204 = vld [vmem:[#allocation5 + $0x1c8] sm:$0xff]
    %v205 = vld [vmem:[#allocation5 + $0x1d0] sm:$0xff]
    %v206 = vld [vmem:[#allocation5 + $0x1d8] sm:$0xff]
    %v207 = vld [vmem:[#allocation5 + $0x1e0] sm:$0xff]
    %v208 = vld [vmem:[#allocation5 + $0x1e8] sm:$0xff]
    %v209 = vld [vmem:[#allocation5 + $0x1f0] sm:$0xff]
    %v210 = vld [vmem:[#allocation5 + $0x1f8] sm:$0xff]
    %v211 = vld [vmem:[#allocation5 + $0x200] sm:$0xff]
    %v212 = vld [vmem:[#allocation5 + $0x208] sm:$0xff]
    %v213 = vld [vmem:[#allocation5 + $0x210] sm:$0xff]
    %v214 = vld [vmem:[#allocation5 + $0x218] sm:$0xff]
    %v215 = vld [vmem:[#allocation5 + $0x220] sm:$0xff]
    %v216 = vld [vmem:[#allocation5 + $0x228] sm:$0xff]
    %v217 = vld [vmem:[#allocation5 + $0x230] sm:$0xff]
    %v218 = vld [vmem:[#allocation5 + $0x238] sm:$0xff]
    %v219 = vld [vmem:[#allocation5 + $0x240] sm:$0xff]
    %v220 = vld [vmem:[#allocation5 + $0x248] sm:$0xff]
    %v221 = vld [vmem:[#allocation5 + $0x250] sm:$0xff]
    %v222 = vld [vmem:[#allocation5 + $0x258] sm:$0xff]
    %v223 = vld [vmem:[#allocation5 + $0x260] sm:$0xff]
    %v224 = vld [vmem:[#allocation5 + $0x268] sm:$0xff]
    %v225 = vld [vmem:[#allocation5 + $0x270] sm:$0xff]
    %v226 = vld [vmem:[#allocation5 + $0x278] sm:$0xff]
    %v227 = vld [vmem:[#allocation5 + $0x280] sm:$0xff]
    %v228 = vld [vmem:[#allocation5 + $0x288] sm:$0xff]
    %v229 = vld [vmem:[#allocation5 + $0x290] sm:$0xff]
    %v230 = vld [vmem:[#allocation5 + $0x298] sm:$0xff]
    %v231 = vld [vmem:[#allocation5 + $0x2a0] sm:$0xff]
    %v232 = vld [vmem:[#allocation5 + $0x2a8] sm:$0xff]
    %v233 = vld [vmem:[#allocation5 + $0x2b0] sm:$0xff]
    %v234 = vld [vmem:[#allocation5 + $0x2b8] sm:$0xff]
    %v235 = vld [vmem:[#allocation5 + $0x2c0] sm:$0xff]
    %v236 = vld [vmem:[#allocation5 + $0x2c8] sm:$0xff]
    %v237 = vld [vmem:[#allocation5 + $0x2d0] sm:$0xff]
    %v238 = vld [vmem:[#allocation5 + $0x2d8] sm:$0xff]
    %v239 = vld [vmem:[#allocation5 + $0x2e0] sm:$0xff]
    %v240 = vld [vmem:[#allocation5 + $0x2e8] sm:$0xff]
    %v241 = vld [vmem:[#allocation5 + $0x2f0] sm:$0xff]
    %v242 = vld [vmem:[#allocation5 + $0x2f8] sm:$0xff]
    %v243 = vld [vmem:[#allocation5 + $0x300] sm:$0xff]
    %v244 = vld [vmem:[#allocation5 + $0x308] sm:$0xff]
    %v245 = vld [vmem:[#allocation5 + $0x310] sm:$0xff]
    %v246 = vld [vmem:[#allocation5 + $0x318] sm:$0xff]
    %v247 = vld [vmem:[#allocation5 + $0x320] sm:$0xff]
    %v248 = vld [vmem:[#allocation5 + $0x328] sm:$0xff]
    %v249 = vld [vmem:[#allocation5 + $0x330] sm:$0xff]
    %v250 = vld [vmem:[#allocation5 + $0x338] sm:$0xff]
    %v251 = vld [vmem:[#allocation5 + $0x340] sm:$0xff]
    %v252 = vld [vmem:[#allocation5 + $0x348] sm:$0xff]
    %v253 = vld [vmem:[#allocation5 + $0x350] sm:$0xff]
    %v254 = vld [vmem:[#allocation5 + $0x358] sm:$0xff]
    %v255 = vld [vmem:[#allocation5 + $0x360] sm:$0xff]
    %v256 = vld [vmem:[#allocation5 + $0x368] sm:$0xff]
    %v257 = vld [vmem:[#allocation5 + $0x370] sm:$0xff]
    %v258 = vld [vmem:[#allocation5 + $0x378] sm:$0xff]
    %v259 = vld [vmem:[#allocation5 + $0x380] sm:$0xff]
    %v260 = vld [vmem:[#allocation5 + $0x388] sm:$0xff]
    %v261 = vld [vmem:[#allocation5 + $0x390] sm:$0xff]
    %v262 = vld [vmem:[#allocation5 + $0x398] sm:$0xff]
    %v263 = vld [vmem:[#allocation5 + $0x3a0] sm:$0xff]
    %v264 = vld [vmem:[#allocation5 + $0x3a8] sm:$0xff]
    %v265 = vld [vmem:[#allocation5 + $0x3b0] sm:$0xff]
    %v266 = vld [vmem:[#allocation5 + $0x3b8] sm:$0xff]
    %v267 = vld [vmem:[#allocation5 + $0x3c0] sm:$0xff]
    %v268 = vld [vmem:[#allocation5 + $0x3c8] sm:$0xff]
    %v269 = vld [vmem:[#allocation5 + $0x3d0] sm:$0xff]
    %v270 = vld [vmem:[#allocation5 + $0x3d8] sm:$0xff]
    %v271 = vld [vmem:[#allocation5 + $0x3e0] sm:$0xff]
    %v272 = vld [vmem:[#allocation5 + $0x3e8] sm:$0xff]
    %v273 = vld [vmem:[#allocation5 + $0x3f0] sm:$0xff]
    %v274 = vld [vmem:[#allocation5 + $0x3f8] sm:$0xff]
    %v275 = vld [vmem:[#allocation5 + $0x400] sm:$0xff]
    %v276 = vld [vmem:[#allocation5 + $0x408] sm:$0xff]
    %v277 = vld [vmem:[#allocation5 + $0x410] sm:$0xff]
    %v278 = vld [vmem:[#allocation5 + $0x418] sm:$0xff]
    %v279 = vld [vmem:[#allocation5 + $0x420] sm:$0xff]
    %v280 = vld [vmem:[#allocation5 + $0x428] sm:$0xff]
    %v281 = vld [vmem:[#allocation5 + $0x430] sm:$0xff]
    %v282 = vld [vmem:[#allocation5 + $0x438] sm:$0xff]
    %v283 = vld [vmem:[#allocation5 + $0x440] sm:$0xff]
    %v284 = vld [vmem:[#allocation5 + $0x448] sm:$0xff]
    %v285 = vld [vmem:[#allocation5 + $0x450] sm:$0xff]
    %v286 = vld [vmem:[#allocation5 + $0x458] sm:$0xff]
    %v287 = vld [vmem:[#allocation5 + $0x460] sm:$0xff]
    %v288 = vld [vmem:[#allocation5 + $0x468] sm:$0xff]
    %v289 = vld [vmem:[#allocation5 + $0x470] sm:$0xff]
    %v290 = vld [vmem:[#allocation5 + $0x478] sm:$0xff]
    %v291 = vld [vmem:[#allocation5 + $0x480] sm:$0xff]
    %v292 = vld [vmem:[#allocation5 + $0x488] sm:$0xff]
    %v293 = vld [vmem:[#allocation5 + $0x490] sm:$0xff]
    %v294 = vld [vmem:[#allocation5 + $0x498] sm:$0xff]
    %v295 = vld [vmem:[#allocation5 + $0x4a0] sm:$0xff]
    %v296 = vld [vmem:[#allocation5 + $0x4a8] sm:$0xff]
    %v297 = vld [vmem:[#allocation5 + $0x4b0] sm:$0xff]
    %v298 = vld [vmem:[#allocation5 + $0x4b8] sm:$0xff]
    %v299 = vld [vmem:[#allocation5 + $0x4c0] sm:$0xff]
    %v300 = vld [vmem:[#allocation5 + $0x4c8] sm:$0xff]
    %v301 = vld [vmem:[#allocation5 + $0x4d0] sm:$0xff]
    %v302 = vld [vmem:[#allocation5 + $0x4d8] sm:$0xff]
    %v303 = vld [vmem:[#allocation5 + $0x4e0] sm:$0xff]
    %v304 = vld [vmem:[#allocation5 + $0x4e8] sm:$0xff]
    %v305 = vld [vmem:[#allocation5 + $0x4f0] sm:$0xff]
    %v306 = vld [vmem:[#allocation5 + $0x4f8] sm:$0xff]
    %v307 = vld [vmem:[#allocation5 + $0x500] sm:$0xff]
    %v308 = vld [vmem:[#allocation5 + $0x508] sm:$0xff]
    %v309 = vld [vmem:[#allocation5 + $0x510] sm:$0xff]
    %v310 = vld [vmem:[#allocation5 + $0x518] sm:$0xff]
    %v311 = vld [vmem:[#allocation5 + $0x520] sm:$0xff]
    %v312 = vld [vmem:[#allocation5 + $0x528] sm:$0xff]
    %v313 = vld [vmem:[#allocation5 + $0x530] sm:$0xff]
    %v314 = vld [vmem:[#allocation5 + $0x538] sm:$0xff]
    %v315 = vld [vmem:[#allocation5 + $0x540] sm:$0xff]
    %v316 = vld [vmem:[#allocation5 + $0x548] sm:$0xff]
    %v317 = vld [vmem:[#allocation5 + $0x550] sm:$0xff]
    %v318 = vld [vmem:[#allocation5 + $0x558] sm:$0xff]
    %v319 = vld [vmem:[#allocation5 + $0x560] sm:$0xff]
    %v320 = vld [vmem:[#allocation5 + $0x568] sm:$0xff]
    %v321 = vld [vmem:[#allocation5 + $0x570] sm:$0xff]
    %v322 = vld [vmem:[#allocation5 + $0x578] sm:$0xff]
    %v323 = vld [vmem:[#allocation5 + $0x580] sm:$0xff]
    %v324 = vld [vmem:[#allocation5 + $0x588] sm:$0xff]
    %v325 = vld [vmem:[#allocation5 + $0x590] sm:$0xff]
    %v326 = vld [vmem:[#allocation5 + $0x598] sm:$0xff]
    %v327 = vld [vmem:[#allocation5 + $0x5a0] sm:$0xff]
    %v328 = vld [vmem:[#allocation5 + $0x5a8] sm:$0xff]
    %v329 = vld [vmem:[#allocation5 + $0x5b0] sm:$0xff]
    %v330 = vld [vmem:[#allocation5 + $0x5b8] sm:$0xff]
    %v331 = vld [vmem:[#allocation5 + $0x5c0] sm:$0xff]
    %v332 = vld [vmem:[#allocation5 + $0x5c8] sm:$0xff]
    %v333 = vld [vmem:[#allocation5 + $0x5d0] sm:$0xff]
    %v334 = vld [vmem:[#allocation5 + $0x5d8] sm:$0xff]
    %v335 = vld [vmem:[#allocation5 + $0x5e0] sm:$0xff]
    %v336 = vld [vmem:[#allocation5 + $0x5e8] sm:$0xff]
    %v337 = vld [vmem:[#allocation5 + $0x5f0] sm:$0xff]
    %v338 = vld [vmem:[#allocation5 + $0x5f8] sm:$0xff]
    %v339 = vld [vmem:[#allocation5 + $0x600] sm:$0xff]
    %v340 = vld [vmem:[#allocation5 + $0x608] sm:$0xff]
    %v341 = vld [vmem:[#allocation5 + $0x610] sm:$0xff]
    %v342 = vld [vmem:[#allocation5 + $0x618] sm:$0xff]
    %v343 = vld [vmem:[#allocation5 + $0x620] sm:$0xff]
    %v344 = vld [vmem:[#allocation5 + $0x628] sm:$0xff]
    %v345 = vld [vmem:[#allocation5 + $0x630] sm:$0xff]
    %v346 = vld [vmem:[#allocation5 + $0x638] sm:$0xff]
    %v347 = vld [vmem:[#allocation5 + $0x640] sm:$0xff]
    %v348 = vld [vmem:[#allocation5 + $0x648] sm:$0xff]
    %v349 = vld [vmem:[#allocation5 + $0x650] sm:$0xff]
    %v350 = vld [vmem:[#allocation5 + $0x658] sm:$0xff]
    %v351 = vld [vmem:[#allocation5 + $0x660] sm:$0xff]
    %v352 = vld [vmem:[#allocation5 + $0x668] sm:$0xff]
    %v353 = vld [vmem:[#allocation5 + $0x670] sm:$0xff]
    %v354 = vld [vmem:[#allocation5 + $0x678] sm:$0xff]
    %v355 = vld [vmem:[#allocation5 + $0x680] sm:$0xff]
    %v356 = vld [vmem:[#allocation5 + $0x688] sm:$0xff]
    %v357 = vld [vmem:[#allocation5 + $0x690] sm:$0xff]
    %v358 = vld [vmem:[#allocation5 + $0x698] sm:$0xff]
    %v359 = vld [vmem:[#allocation5 + $0x6a0] sm:$0xff]
    %v360 = vld [vmem:[#allocation5 + $0x6a8] sm:$0xff]
    %v361 = vld [vmem:[#allocation5 + $0x6b0] sm:$0xff]
    %v362 = vld [vmem:[#allocation5 + $0x6b8] sm:$0xff]
    %v363 = vld [vmem:[#allocation5 + $0x6c0] sm:$0xff]
    %v364 = vld [vmem:[#allocation5 + $0x6c8] sm:$0xff]
    %v365 = vld [vmem:[#allocation5 + $0x6d0] sm:$0xff]
    %v366 = vld [vmem:[#allocation5 + $0x6d8] sm:$0xff]
    %v367 = vld [vmem:[#allocation5 + $0x6e0] sm:$0xff]
    %v368 = vld [vmem:[#allocation5 + $0x6e8] sm:$0xff]
    %v369 = vld [vmem:[#allocation5 + $0x6f0] sm:$0xff]
    %v370 = vld [vmem:[#allocation5 + $0x6f8] sm:$0xff]
    %v371 = vld [vmem:[#allocation5 + $0x700] sm:$0xff]
    %v372 = vld [vmem:[#allocation5 + $0x708] sm:$0xff]
    %v373 = vld [vmem:[#allocation5 + $0x710] sm:$0xff]
    %v374 = vld [vmem:[#allocation5 + $0x718] sm:$0xff]
    %v375 = vld [vmem:[#allocation5 + $0x720] sm:$0xff]
    %v376 = vld [vmem:[#allocation5 + $0x728] sm:$0xff]
    %v377 = vld [vmem:[#allocation5 + $0x730] sm:$0xff]
    %v378 = vld [vmem:[#allocation5 + $0x738] sm:$0xff]
    %v379 = vld [vmem:[#allocation5 + $0x740] sm:$0xff]
    %v380 = vld [vmem:[#allocation5 + $0x748] sm:$0xff]
    %v381 = vld [vmem:[#allocation5 + $0x750] sm:$0xff]
    %v382 = vld [vmem:[#allocation5 + $0x758] sm:$0xff]
    %v383 = vld [vmem:[#allocation5 + $0x760] sm:$0xff]
    %v384 = vld [vmem:[#allocation5 + $0x768] sm:$0xff]
    %v385 = vld [vmem:[#allocation5 + $0x770] sm:$0xff]
    %v386 = vld [vmem:[#allocation5 + $0x778] sm:$0xff]
    %v387 = vld [vmem:[#allocation5 + $0x780] sm:$0xff]
    %v388 = vld [vmem:[#allocation5 + $0x788] sm:$0xff]
    %v389 = vld [vmem:[#allocation5 + $0x790] sm:$0xff]
    %v390 = vld [vmem:[#allocation5 + $0x798] sm:$0xff]
    %v391 = vld [vmem:[#allocation5 + $0x7a0] sm:$0xff]
    %v392 = vld [vmem:[#allocation5 + $0x7a8] sm:$0xff]
    %v393 = vld [vmem:[#allocation5 + $0x7b0] sm:$0xff]
    %v394 = vld [vmem:[#allocation5 + $0x7b8] sm:$0xff]
    %v395 = vld [vmem:[#allocation5 + $0x7c0] sm:$0xff]
    %v396 = vld [vmem:[#allocation5 + $0x7c8] sm:$0xff]
    %v397 = vld [vmem:[#allocation5 + $0x7d0] sm:$0xff]
    %v398 = vld [vmem:[#allocation5 + $0x7d8] sm:$0xff]
    %v399 = vld [vmem:[#allocation5 + $0x7e0] sm:$0xff]
    %v400 = vld [vmem:[#allocation5 + $0x7e8] sm:$0xff]
    %v401 = vld [vmem:[#allocation5 + $0x7f0] sm:$0xff]
    %v402 = vld [vmem:[#allocation5 + $0x7f8] sm:$0xff]
    %v403 = vld [vmem:[#allocation5 + $0x800] sm:$0xff]
    %v404 = vld [vmem:[#allocation5 + $0x808] sm:$0xff]
    %v405 = vld [vmem:[#allocation5 + $0x810] sm:$0xff]
    %v406 = vld [vmem:[#allocation5 + $0x818] sm:$0xff]
    %v407 = vld [vmem:[#allocation5 + $0x820] sm:$0xff]
    %v408 = vld [vmem:[#allocation5 + $0x828] sm:$0xff]
    %v409 = vld [vmem:[#allocation5 + $0x830] sm:$0xff]
    %v410 = vld [vmem:[#allocation5 + $0x838] sm:$0xff]
    %v411 = vld [vmem:[#allocation5 + $0x840] sm:$0xff]
    %v412 = vld [vmem:[#allocation5 + $0x848] sm:$0xff]
    %v413 = vld [vmem:[#allocation5 + $0x850] sm:$0xff]
    %v414 = vld [vmem:[#allocation5 + $0x858] sm:$0xff]
    %v415 = vld [vmem:[#allocation5 + $0x860] sm:$0xff]
    %v416 = vld [vmem:[#allocation5 + $0x868] sm:$0xff]
    %v417 = vld [vmem:[#allocation5 + $0x870] sm:$0xff]
    %v418 = vld [vmem:[#allocation5 + $0x878] sm:$0xff]
    %v419 = vld [vmem:[#allocation5 + $0x880] sm:$0xff]
    %v420 = vld [vmem:[#allocation5 + $0x888] sm:$0xff]
    %v421 = vld [vmem:[#allocation5 + $0x890] sm:$0xff]
    %v422 = vld [vmem:[#allocation5 + $0x898] sm:$0xff]
    %v423 = vld [vmem:[#allocation5 + $0x8a0] sm:$0xff]
    %v424 = vld [vmem:[#allocation5 + $0x8a8] sm:$0xff]
    %v425 = vld [vmem:[#allocation5 + $0x8b0] sm:$0xff]
    %v426 = vld [vmem:[#allocation5 + $0x8b8] sm:$0xff]
    %v427 = vld [vmem:[#allocation5 + $0x8c0] sm:$0xff]
    %v428 = vld [vmem:[#allocation5 + $0x8c8] sm:$0xff]
    %v429 = vld [vmem:[#allocation5 + $0x8d0] sm:$0xff]
    %v430 = vld [vmem:[#allocation5 + $0x8d8] sm:$0xff]
    %v431 = vld [vmem:[#allocation5 + $0x8e0] sm:$0xff]
    %v432 = vld [vmem:[#allocation5 + $0x8e8] sm:$0xff]
    %v433 = vld [vmem:[#allocation5 + $0x8f0] sm:$0xff]
    %v434 = vld [vmem:[#allocation5 + $0x8f8] sm:$0xff]
    %v435 = vld [vmem:[#allocation5 + $0x900] sm:$0xff]
    %v436 = vld [vmem:[#allocation5 + $0x908] sm:$0xff]
    %v437 = vld [vmem:[#allocation5 + $0x910] sm:$0xff]
    %v438 = vld [vmem:[#allocation5 + $0x918] sm:$0xff]
    %v439 = vld [vmem:[#allocation5 + $0x920] sm:$0xff]
    %v440 = vld [vmem:[#allocation5 + $0x928] sm:$0xff]
    %v441 = vld [vmem:[#allocation5 + $0x930] sm:$0xff]
    %v442 = vld [vmem:[#allocation5 + $0x938] sm:$0xff]
    %v443 = vld [vmem:[#allocation5 + $0x940] sm:$0xff]
    %v444 = vld [vmem:[#allocation5 + $0x948] sm:$0xff]
    %v445 = vld [vmem:[#allocation5 + $0x950] sm:$0xff]
    %v446 = vld [vmem:[#allocation5 + $0x958] sm:$0xff]
    %v447 = vld [vmem:[#allocation5 + $0x960] sm:$0xff]
    %v448 = vld [vmem:[#allocation5 + $0x968] sm:$0xff]
    %v449 = vld [vmem:[#allocation5 + $0x970] sm:$0xff]
    %v450 = vld [vmem:[#allocation5 + $0x978] sm:$0xff]
    %v451 = vld [vmem:[#allocation5 + $0x980] sm:$0xff]
    %v452 = vld [vmem:[#allocation5 + $0x988] sm:$0xff]
    %v453 = vld [vmem:[#allocation5 + $0x990] sm:$0xff]
    %v454 = vld [vmem:[#allocation5 + $0x998] sm:$0xff]
    %v455 = vld [vmem:[#allocation5 + $0x9a0] sm:$0xff]
    %v456 = vld [vmem:[#allocation5 + $0x9a8] sm:$0xff]
    %v457 = vld [vmem:[#allocation5 + $0x9b0] sm:$0xff]
    %v458 = vld [vmem:[#allocation5 + $0x9b8] sm:$0xff]
    %v459 = vld [vmem:[#allocation5 + $0x9c0] sm:$0xff]
    %v460 = vld [vmem:[#allocation5 + $0x9c8] sm:$0xff]
    %v461 = vld [vmem:[#allocation5 + $0x9d0] sm:$0xff]
    %v462 = vld [vmem:[#allocation5 + $0x9d8] sm:$0xff]
    %v463 = vld [vmem:[#allocation5 + $0x9e0] sm:$0xff]
    %v464 = vld [vmem:[#allocation5 + $0x9e8] sm:$0xff]
    %v465 = vld [vmem:[#allocation5 + $0x9f0] sm:$0xff]
    %v466 = vld [vmem:[#allocation5 + $0x9f8] sm:$0xff]
    %v467 = vld [vmem:[#allocation5 + $0xa00] sm:$0xff]
    %v468 = vld [vmem:[#allocation5 + $0xa08] sm:$0xff]
    %v469 = vld [vmem:[#allocation5 + $0xa10] sm:$0xff]
    %v470 = vld [vmem:[#allocation5 + $0xa18] sm:$0xff]
    %v471 = vld [vmem:[#allocation5 + $0xa20] sm:$0xff]
    %v472 = vld [vmem:[#allocation5 + $0xa28] sm:$0xff]
    %v473 = vld [vmem:[#allocation5 + $0xa30] sm:$0xff]
    %v474 = vld [vmem:[#allocation5 + $0xa38] sm:$0xff]
    %v475 = vld [vmem:[#allocation5 + $0xa40] sm:$0xff]
    %v476 = vld [vmem:[#allocation5 + $0xa48] sm:$0xff]
    %v477 = vld [vmem:[#allocation5 + $0xa50] sm:$0xff]
    %v478 = vld [vmem:[#allocation5 + $0xa58] sm:$0xff]
    %v479 = vld [vmem:[#allocation5 + $0xa60] sm:$0xff]
    %v480 = vld [vmem:[#allocation5 + $0xa68] sm:$0xff]
    %v481 = vld [vmem:[#allocation5 + $0xa70] sm:$0xff]
    %v482 = vld [vmem:[#allocation5 + $0xa78] sm:$0xff]
    %v483 = vld [vmem:[#allocation5 + $0xa80] sm:$0xff]
    %v484 = vld [vmem:[#allocation5 + $0xa88] sm:$0xff]
    %v485 = vld [vmem:[#allocation5 + $0xa90] sm:$0xff]
    %v486 = vld [vmem:[#allocation5 + $0xa98] sm:$0xff]
    %v487 = vld [vmem:[#allocation5 + $0xaa0] sm:$0xff]
    %v488 = vld [vmem:[#allocation5 + $0xaa8] sm:$0xff]
    %v489 = vld [vmem:[#allocation5 + $0xab0] sm:$0xff]
    %v490 = vld [vmem:[#allocation5 + $0xab8] sm:$0xff]
    %v491 = vld [vmem:[#allocation5 + $0xac0] sm:$0xff]
    %v492 = vld [vmem:[#allocation5 + $0xac8] sm:$0xff]
    %v493 = vld [vmem:[#allocation5 + $0xad0] sm:$0xff]
    %v494 = vld [vmem:[#allocation5 + $0xad8] sm:$0xff]
    %v495 = vld [vmem:[#allocation5 + $0xae0] sm:$0xff]
    %v496 = vld [vmem:[#allocation5 + $0xae8] sm:$0xff]
    %v497 = vld [vmem:[#allocation5 + $0xaf0] sm:$0xff]
    %v498 = vld [vmem:[#allocation5 + $0xaf8] sm:$0xff]
    %v499 = vld [vmem:[#allocation5 + $0xb00] sm:$0xff]
    %v500 = vld [vmem:[#allocation5 + $0xb08] sm:$0xff]
    %v501 = vld [vmem:[#allocation5 + $0xb10] sm:$0xff]
    %v502 = vld [vmem:[#allocation5 + $0xb18] sm:$0xff]
    %v503 = vld [vmem:[#allocation5 + $0xb20] sm:$0xff]
    %v504 = vld [vmem:[#allocation5 + $0xb28] sm:$0xff]
    %v505 = vld [vmem:[#allocation5 + $0xb30] sm:$0xff]
    %v506 = vld [vmem:[#allocation5 + $0xb38] sm:$0xff]
    %v507 = vld [vmem:[#allocation5 + $0xb40] sm:$0xff]
    %v508 = vld [vmem:[#allocation5 + $0xb48] sm:$0xff]
    %v509 = vld [vmem:[#allocation5 + $0xb50] sm:$0xff]
    %v510 = vld [vmem:[#allocation5 + $0xb58] sm:$0xff]
    %v511 = vld [vmem:[#allocation5 + $0xb60] sm:$0xff]
    %v512 = vld [vmem:[#allocation5 + $0xb68] sm:$0xff]
    %v513 = vld [vmem:[#allocation5 + $0xb70] sm:$0xff]
    %v514 = vld [vmem:[#allocation5 + $0xb78] sm:$0xff]
    %v515 = vld [vmem:[#allocation5 + $0xb80] sm:$0xff]
    %v516 = vld [vmem:[#allocation5 + $0xb88] sm:$0xff]
    %v517 = vld [vmem:[#allocation5 + $0xb90] sm:$0xff]
    %v518 = vld [vmem:[#allocation5 + $0xb98] sm:$0xff]
    %v519 = vld [vmem:[#allocation5 + $0xba0] sm:$0xff]
    %v520 = vld [vmem:[#allocation5 + $0xba8] sm:$0xff]
    %v521 = vld [vmem:[#allocation5 + $0xbb0] sm:$0xff]
    %v522 = vld [vmem:[#allocation5 + $0xbb8] sm:$0xff]
    %v523 = vld [vmem:[#allocation5 + $0xbc0] sm:$0xff]
    %v524 = vld [vmem:[#allocation5 + $0xbc8] sm:$0xff]
    %v525 = vld [vmem:[#allocation5 + $0xbd0] sm:$0xff]
    %v526 = vld [vmem:[#allocation5 + $0xbd8] sm:$0xff]
    %v527 = vld [vmem:[#allocation5 + $0xbe0] sm:$0xff]
    %v528 = vld [vmem:[#allocation5 + $0xbe8] sm:$0xff]
    %v529 = vld [vmem:[#allocation5 + $0xbf0] sm:$0xff]
    %v530 = vld [vmem:[#allocation5 + $0xbf8] sm:$0xff]
    %v531 = vld [vmem:[#allocation5 + $0xc00] sm:$0xff]
    %v532 = vld [vmem:[#allocation5 + $0xc08] sm:$0xff]
    %v533 = vld [vmem:[#allocation5 + $0xc10] sm:$0xff]
    %v534 = vld [vmem:[#allocation5 + $0xc18] sm:$0xff]
    %v535 = vld [vmem:[#allocation5 + $0xc20] sm:$0xff]
    %v536 = vld [vmem:[#allocation5 + $0xc28] sm:$0xff]
    %v537 = vld [vmem:[#allocation5 + $0xc30] sm:$0xff]
    %v538 = vld [vmem:[#allocation5 + $0xc38] sm:$0xff]
    %v539 = vld [vmem:[#allocation5 + $0xc40] sm:$0xff]
    %v540 = vld [vmem:[#allocation5 + $0xc48] sm:$0xff]
    %v541 = vld [vmem:[#allocation5 + $0xc50] sm:$0xff]
    %v542 = vld [vmem:[#allocation5 + $0xc58] sm:$0xff]
    %v543 = vld [vmem:[#allocation5 + $0xc60] sm:$0xff]
    %v544 = vld [vmem:[#allocation5 + $0xc68] sm:$0xff]
    %v545 = vld [vmem:[#allocation5 + $0xc70] sm:$0xff]
    %v546 = vld [vmem:[#allocation5 + $0xc78] sm:$0xff]
    %v547 = vld [vmem:[#allocation5 + $0xc80] sm:$0xff]
    %v548 = vld [vmem:[#allocation5 + $0xc88] sm:$0xff]
    %v549 = vld [vmem:[#allocation5 + $0xc90] sm:$0xff]
    %v550 = vld [vmem:[#allocation5 + $0xc98] sm:$0xff]
    %v551 = vld [vmem:[#allocation5 + $0xca0] sm:$0xff]
    %v552 = vld [vmem:[#allocation5 + $0xca8] sm:$0xff]
    %v553 = vld [vmem:[#allocation5 + $0xcb0] sm:$0xff]
    %v554 = vld [vmem:[#allocation5 + $0xcb8] sm:$0xff]
    %v555 = vld [vmem:[#allocation5 + $0xcc0] sm:$0xff]
    %v556 = vld [vmem:[#allocation5 + $0xcc8] sm:$0xff]
    %v557 = vld [vmem:[#allocation5 + $0xcd0] sm:$0xff]
    %v558 = vld [vmem:[#allocation5 + $0xcd8] sm:$0xff]
    %v559 = vld [vmem:[#allocation5 + $0xce0] sm:$0xff]
    %v560 = vld [vmem:[#allocation5 + $0xce8] sm:$0xff]
    %v561 = vld [vmem:[#allocation5 + $0xcf0] sm:$0xff]
    %v562 = vld [vmem:[#allocation5 + $0xcf8] sm:$0xff]
    %v563 = vld [vmem:[#allocation5 + $0xd00] sm:$0xff]
    %v564 = vld [vmem:[#allocation5 + $0xd08] sm:$0xff]
    %v565 = vld [vmem:[#allocation5 + $0xd10] sm:$0xff]
    %v566 = vld [vmem:[#allocation5 + $0xd18] sm:$0xff]
    %v567 = vld [vmem:[#allocation5 + $0xd20] sm:$0xff]
    %v568 = vld [vmem:[#allocation5 + $0xd28] sm:$0xff]
    %v569 = vld [vmem:[#allocation5 + $0xd30] sm:$0xff]
    %v570 = vld [vmem:[#allocation5 + $0xd38] sm:$0xff]
    %v571 = vld [vmem:[#allocation5 + $0xd40] sm:$0xff]
    %v572 = vld [vmem:[#allocation5 + $0xd48] sm:$0xff]
    %v573 = vld [vmem:[#allocation5 + $0xd50] sm:$0xff]
    %v574 = vld [vmem:[#allocation5 + $0xd58] sm:$0xff]
    %v575 = vld [vmem:[#allocation5 + $0xd60] sm:$0xff]
    %v576 = vld [vmem:[#allocation5 + $0xd68] sm:$0xff]
    %v577 = vld [vmem:[#allocation5 + $0xd70] sm:$0xff]
    %v578 = vld [vmem:[#allocation5 + $0xd78] sm:$0xff]
    %v579 = vld [vmem:[#allocation5 + $0xd80] sm:$0xff]
    %v580 = vld [vmem:[#allocation5 + $0xd88] sm:$0xff]
    %v581 = vld [vmem:[#allocation5 + $0xd90] sm:$0xff]
    %v582 = vld [vmem:[#allocation5 + $0xd98] sm:$0xff]
    %v583 = vld [vmem:[#allocation5 + $0xda0] sm:$0xff]
    %v584 = vld [vmem:[#allocation5 + $0xda8] sm:$0xff]
    %v585 = vld [vmem:[#allocation5 + $0xdb0] sm:$0xff]
    %v586 = vld [vmem:[#allocation5 + $0xdb8] sm:$0xff]
    %v587 = vld [vmem:[#allocation5 + $0xdc0] sm:$0xff]
    %v588 = vld [vmem:[#allocation5 + $0xdc8] sm:$0xff]
    %v589 = vld [vmem:[#allocation5 + $0xdd0] sm:$0xff]
    %v590 = vld [vmem:[#allocation5 + $0xdd8] sm:$0xff]
    %v591 = vld [vmem:[#allocation5 + $0xde0] sm:$0xff]
    %v592 = vld [vmem:[#allocation5 + $0xde8] sm:$0xff]
    %v593 = vld [vmem:[#allocation5 + $0xdf0] sm:$0xff]
    %v594 = vld [vmem:[#allocation5 + $0xdf8] sm:$0xff]
    %v595 = vld [vmem:[#allocation5 + $0xe00] sm:$0xff]
    %v596 = vld [vmem:[#allocation5 + $0xe08] sm:$0xff]
    %v597 = vld [vmem:[#allocation5 + $0xe10] sm:$0xff]
    %v598 = vld [vmem:[#allocation5 + $0xe18] sm:$0xff]
    %v599 = vld [vmem:[#allocation5 + $0xe20] sm:$0xff]
    %v600 = vld [vmem:[#allocation5 + $0xe28] sm:$0xff]
    %v601 = vld [vmem:[#allocation5 + $0xe30] sm:$0xff]
    %v602 = vld [vmem:[#allocation5 + $0xe38] sm:$0xff]
    %v603 = vld [vmem:[#allocation5 + $0xe40] sm:$0xff]
    %v604 = vld [vmem:[#allocation5 + $0xe48] sm:$0xff]
    %v605 = vld [vmem:[#allocation5 + $0xe50] sm:$0xff]
    %v606 = vld [vmem:[#allocation5 + $0xe58] sm:$0xff]
    %v607 = vld [vmem:[#allocation5 + $0xe60] sm:$0xff]
    %v608 = vld [vmem:[#allocation5 + $0xe68] sm:$0xff]
    %v609 = vld [vmem:[#allocation5 + $0xe70] sm:$0xff]
    %v610 = vld [vmem:[#allocation5 + $0xe78] sm:$0xff]
    %v611 = vld [vmem:[#allocation5 + $0xe80] sm:$0xff]
    %v612 = vld [vmem:[#allocation5 + $0xe88] sm:$0xff]
    %v613 = vld [vmem:[#allocation5 + $0xe90] sm:$0xff]
    %v614 = vld [vmem:[#allocation5 + $0xe98] sm:$0xff]
    %v615 = vld [vmem:[#allocation5 + $0xea0] sm:$0xff]
    %v616 = vld [vmem:[#allocation5 + $0xea8] sm:$0xff]
    %v617 = vld [vmem:[#allocation5 + $0xeb0] sm:$0xff]
    %v618 = vld [vmem:[#allocation5 + $0xeb8] sm:$0xff]
    %v619 = vld [vmem:[#allocation5 + $0xec0] sm:$0xff]
    %v620 = vld [vmem:[#allocation5 + $0xec8] sm:$0xff]
    %v621 = vld [vmem:[#allocation5 + $0xed0] sm:$0xff]
    %v622 = vld [vmem:[#allocation5 + $0xed8] sm:$0xff]
    %v623 = vld [vmem:[#allocation5 + $0xee0] sm:$0xff]
    %v624 = vld [vmem:[#allocation5 + $0xee8] sm:$0xff]
    %v625 = vld [vmem:[#allocation5 + $0xef0] sm:$0xff]
    %v626 = vld [vmem:[#allocation5 + $0xef8] sm:$0xff]
    %v627 = vld [vmem:[#allocation5 + $0xf00] sm:$0xff]
    %v628 = vld [vmem:[#allocation5 + $0xf08] sm:$0xff]
    %v629 = vld [vmem:[#allocation5 + $0xf10] sm:$0xff]
    %v630 = vld [vmem:[#allocation5 + $0xf18] sm:$0xff]
    %v631 = vld [vmem:[#allocation5 + $0xf20] sm:$0xff]
    %v632 = vld [vmem:[#allocation5 + $0xf28] sm:$0xff]
    %v633 = vld [vmem:[#allocation5 + $0xf30] sm:$0xff]
    %v634 = vld [vmem:[#allocation5 + $0xf38] sm:$0xff]
    %v635 = vld [vmem:[#allocation5 + $0xf40] sm:$0xff]
    %v636 = vld [vmem:[#allocation5 + $0xf48] sm:$0xff]
    %v637 = vld [vmem:[#allocation5 + $0xf50] sm:$0xff]
    %v638 = vld [vmem:[#allocation5 + $0xf58] sm:$0xff]
    %v639 = vld [vmem:[#allocation5 + $0xf60] sm:$0xff]
    %v640 = vld [vmem:[#allocation5 + $0xf68] sm:$0xff]
    %v641 = vld [vmem:[#allocation5 + $0xf70] sm:$0xff]
    %v642 = vld [vmem:[#allocation5 + $0xf78] sm:$0xff]
    %v643 = vld [vmem:[#allocation5 + $0xf80] sm:$0xff]
    %v644 = vld [vmem:[#allocation5 + $0xf88] sm:$0xff]
    %v645 = vld [vmem:[#allocation5 + $0xf90] sm:$0xff]
    %v646 = vld [vmem:[#allocation5 + $0xf98] sm:$0xff]
    %v647 = vld [vmem:[#allocation5 + $0xfa0] sm:$0xff]
    %v648 = vld [vmem:[#allocation5 + $0xfa8] sm:$0xff]
    %v649 = vld [vmem:[#allocation5 + $0xfb0] sm:$0xff]
    %v650 = vld [vmem:[#allocation5 + $0xfb8] sm:$0xff]
    %v651 = vld [vmem:[#allocation5 + $0xfc0] sm:$0xff]
    %v652 = vld [vmem:[#allocation5 + $0xfc8] sm:$0xff]
    %v653 = vld [vmem:[#allocation5 + $0xfd0] sm:$0xff]
    %v654 = vld [vmem:[#allocation5 + $0xfd8] sm:$0xff]
    %v655 = vld [vmem:[#allocation5 + $0xfe0] sm:$0xff]
    %v656 = vld [vmem:[#allocation5 + $0xfe8] sm:$0xff]
    %v657 = vld [vmem:[#allocation5 + $0xff0] sm:$0xff]
    %v658 = vld [vmem:[#allocation5 + $0xff8] sm:$0xff]
    %v659 = vld [vmem:[#allocation7] sm:$0xff]
    %v661 = vperm.slane %v659, 0
    %v662 = vperm.slane %v659, 1
    %v663 = vperm.slane %v659, 2
    %v664 = vperm.slane %v659, 3
    %v665 = vperm.slane %v659, 4
    %v666 = vperm.slane %v659, 5
    %v667 = vperm.slane %v659, 6
    %v668 = vperm.slane %v659, 7
    %v1189 = vunpack.c.l.b16 %v147
    %v1190 = vunpack.c.h.b16 %v147
    %v1191 = vunpack.c.l.b16 %v148
    %v1192 = vunpack.c.h.b16 %v148
    %v1193 = vunpack.c.l.b16 %v149
    %v1194 = vunpack.c.h.b16 %v149
    %v1195 = vunpack.c.l.b16 %v150
    %v1196 = vunpack.c.h.b16 %v150
    %v1197 = vunpack.c.l.b16 %v151
    %v1198 = vunpack.c.h.b16 %v151
    %v1199 = vunpack.c.l.b16 %v152
    %v1200 = vunpack.c.h.b16 %v152
    %v1201 = vunpack.c.l.b16 %v153
    %v1202 = vunpack.c.h.b16 %v153
    %v1203 = vunpack.c.l.b16 %v154
    %v1204 = vunpack.c.h.b16 %v154
    %v1205 = vunpack.c.l.b16 %v155
    %v1206 = vunpack.c.h.b16 %v155
    %v1207 = vunpack.c.l.b16 %v156
    %v1208 = vunpack.c.h.b16 %v156
    %v1209 = vunpack.c.l.b16 %v157
    %v1210 = vunpack.c.h.b16 %v157
    %v1211 = vunpack.c.l.b16 %v158
    %v1212 = vunpack.c.h.b16 %v158
    %v1213 = vunpack.c.l.b16 %v159
    %v1214 = vunpack.c.h.b16 %v159
    %v1215 = vunpack.c.l.b16 %v160
    %v1216 = vunpack.c.h.b16 %v160
    %v1217 = vunpack.c.l.b16 %v161
    %v1218 = vunpack.c.h.b16 %v161
    %v1219 = vunpack.c.l.b16 %v162
    %v1220 = vunpack.c.h.b16 %v162
    %v1221 = vunpack.c.l.b16 %v163
    %v1222 = vunpack.c.h.b16 %v163
    %v1223 = vunpack.c.l.b16 %v164
    %v1224 = vunpack.c.h.b16 %v164
    %v1225 = vunpack.c.l.b16 %v165
    %v1226 = vunpack.c.h.b16 %v165
    %v1227 = vunpack.c.l.b16 %v166
    %v1228 = vunpack.c.h.b16 %v166
    %v1229 = vunpack.c.l.b16 %v167
    %v1230 = vunpack.c.h.b16 %v167
    %v1231 = vunpack.c.l.b16 %v168
    %v1232 = vunpack.c.h.b16 %v168
    %v1233 = vunpack.c.l.b16 %v169
    %v1234 = vunpack.c.h.b16 %v169
    %v1235 = vunpack.c.l.b16 %v170
    %v1236 = vunpack.c.h.b16 %v170
    %v1237 = vunpack.c.l.b16 %v171
    %v1238 = vunpack.c.h.b16 %v171
    %v1239 = vunpack.c.l.b16 %v172
    %v1240 = vunpack.c.h.b16 %v172
    %v1241 = vunpack.c.l.b16 %v173
    %v1242 = vunpack.c.h.b16 %v173
    %v1243 = vunpack.c.l.b16 %v174
    %v1244 = vunpack.c.h.b16 %v174
    %v1245 = vunpack.c.l.b16 %v175
    %v1246 = vunpack.c.h.b16 %v175
    %v1247 = vunpack.c.l.b16 %v176
    %v1248 = vunpack.c.h.b16 %v176
    %v1249 = vunpack.c.l.b16 %v177
    %v1250 = vunpack.c.h.b16 %v177
    %v1251 = vunpack.c.l.b16 %v178
    %v1252 = vunpack.c.h.b16 %v178
    %v1253 = vunpack.c.l.b16 %v179
    %v1254 = vunpack.c.h.b16 %v179
    %v1255 = vunpack.c.l.b16 %v180
    %v1256 = vunpack.c.h.b16 %v180
    %v1257 = vunpack.c.l.b16 %v181
    %v1258 = vunpack.c.h.b16 %v181
    %v1259 = vunpack.c.l.b16 %v182
    %v1260 = vunpack.c.h.b16 %v182
    %v1261 = vunpack.c.l.b16 %v183
    %v1262 = vunpack.c.h.b16 %v183
    %v1263 = vunpack.c.l.b16 %v184
    %v1264 = vunpack.c.h.b16 %v184
    %v1265 = vunpack.c.l.b16 %v185
    %v1266 = vunpack.c.h.b16 %v185
    %v1267 = vunpack.c.l.b16 %v186
    %v1268 = vunpack.c.h.b16 %v186
    %v1269 = vunpack.c.l.b16 %v187
    %v1270 = vunpack.c.h.b16 %v187
    %v1271 = vunpack.c.l.b16 %v188
    %v1272 = vunpack.c.h.b16 %v188
    %v1273 = vunpack.c.l.b16 %v189
    %v1274 = vunpack.c.h.b16 %v189
    %v1275 = vunpack.c.l.b16 %v190
    %v1276 = vunpack.c.h.b16 %v190
    %v1277 = vunpack.c.l.b16 %v191
    %v1278 = vunpack.c.h.b16 %v191
    %v1279 = vunpack.c.l.b16 %v192
    %v1280 = vunpack.c.h.b16 %v192
    %v1281 = vunpack.c.l.b16 %v193
    %v1282 = vunpack.c.h.b16 %v193
    %v1283 = vunpack.c.l.b16 %v194
    %v1284 = vunpack.c.h.b16 %v194
    %v1285 = vunpack.c.l.b16 %v195
    %v1286 = vunpack.c.h.b16 %v195
    %v1287 = vunpack.c.l.b16 %v196
    %v1288 = vunpack.c.h.b16 %v196
    %v1289 = vunpack.c.l.b16 %v197
    %v1290 = vunpack.c.h.b16 %v197
    %v1291 = vunpack.c.l.b16 %v198
    %v1292 = vunpack.c.h.b16 %v198
    %v1293 = vunpack.c.l.b16 %v199
    %v1294 = vunpack.c.h.b16 %v199
    %v1295 = vunpack.c.l.b16 %v200
    %v1296 = vunpack.c.h.b16 %v200
    %v1297 = vunpack.c.l.b16 %v201
    %v1298 = vunpack.c.h.b16 %v201
    %v1299 = vunpack.c.l.b16 %v202
    %v1300 = vunpack.c.h.b16 %v202
    %v1301 = vunpack.c.l.b16 %v203
    %v1302 = vunpack.c.h.b16 %v203
    %v1303 = vunpack.c.l.b16 %v204
    %v1304 = vunpack.c.h.b16 %v204
    %v1305 = vunpack.c.l.b16 %v205
    %v1306 = vunpack.c.h.b16 %v205
    %v1307 = vunpack.c.l.b16 %v206
    %v1308 = vunpack.c.h.b16 %v206
    %v1309 = vunpack.c.l.b16 %v207
    %v1310 = vunpack.c.h.b16 %v207
    %v1311 = vunpack.c.l.b16 %v208
    %v1312 = vunpack.c.h.b16 %v208
    %v1313 = vunpack.c.l.b16 %v209
    %v1314 = vunpack.c.h.b16 %v209
    %v1315 = vunpack.c.l.b16 %v210
    %v1316 = vunpack.c.h.b16 %v210
    %v1317 = vunpack.c.l.b16 %v211
    %v1318 = vunpack.c.h.b16 %v211
    %v1319 = vunpack.c.l.b16 %v212
    %v1320 = vunpack.c.h.b16 %v212
    %v1321 = vunpack.c.l.b16 %v213
    %v1322 = vunpack.c.h.b16 %v213
    %v1323 = vunpack.c.l.b16 %v214
    %v1324 = vunpack.c.h.b16 %v214
    %v1325 = vunpack.c.l.b16 %v215
    %v1326 = vunpack.c.h.b16 %v215
    %v1327 = vunpack.c.l.b16 %v216
    %v1328 = vunpack.c.h.b16 %v216
    %v1329 = vunpack.c.l.b16 %v217
    %v1330 = vunpack.c.h.b16 %v217
    %v1331 = vunpack.c.l.b16 %v218
    %v1332 = vunpack.c.h.b16 %v218
    %v1333 = vunpack.c.l.b16 %v219
    %v1334 = vunpack.c.h.b16 %v219
    %v1335 = vunpack.c.l.b16 %v220
    %v1336 = vunpack.c.h.b16 %v220
    %v1337 = vunpack.c.l.b16 %v221
    %v1338 = vunpack.c.h.b16 %v221
    %v1339 = vunpack.c.l.b16 %v222
    %v1340 = vunpack.c.h.b16 %v222
    %v1341 = vunpack.c.l.b16 %v223
    %v1342 = vunpack.c.h.b16 %v223
    %v1343 = vunpack.c.l.b16 %v224
    %v1344 = vunpack.c.h.b16 %v224
    %v1345 = vunpack.c.l.b16 %v225
    %v1346 = vunpack.c.h.b16 %v225
    %v1347 = vunpack.c.l.b16 %v226
    %v1348 = vunpack.c.h.b16 %v226
    %v1349 = vunpack.c.l.b16 %v227
    %v1350 = vunpack.c.h.b16 %v227
    %v1351 = vunpack.c.l.b16 %v228
    %v1352 = vunpack.c.h.b16 %v228
    %v1353 = vunpack.c.l.b16 %v229
    %v1354 = vunpack.c.h.b16 %v229
    %v1355 = vunpack.c.l.b16 %v230
    %v1356 = vunpack.c.h.b16 %v230
    %v1357 = vunpack.c.l.b16 %v231
    %v1358 = vunpack.c.h.b16 %v231
    %v1359 = vunpack.c.l.b16 %v232
    %v1360 = vunpack.c.h.b16 %v232
    %v1361 = vunpack.c.l.b16 %v233
    %v1362 = vunpack.c.h.b16 %v233
    %v1363 = vunpack.c.l.b16 %v234
    %v1364 = vunpack.c.h.b16 %v234
    %v1365 = vunpack.c.l.b16 %v235
    %v1366 = vunpack.c.h.b16 %v235
    %v1367 = vunpack.c.l.b16 %v236
    %v1368 = vunpack.c.h.b16 %v236
    %v1369 = vunpack.c.l.b16 %v237
    %v1370 = vunpack.c.h.b16 %v237
    %v1371 = vunpack.c.l.b16 %v238
    %v1372 = vunpack.c.h.b16 %v238
    %v1373 = vunpack.c.l.b16 %v239
    %v1374 = vunpack.c.h.b16 %v239
    %v1375 = vunpack.c.l.b16 %v240
    %v1376 = vunpack.c.h.b16 %v240
    %v1377 = vunpack.c.l.b16 %v241
    %v1378 = vunpack.c.h.b16 %v241
    %v1379 = vunpack.c.l.b16 %v242
    %v1380 = vunpack.c.h.b16 %v242
    %v1381 = vunpack.c.l.b16 %v243
    %v1382 = vunpack.c.h.b16 %v243
    %v1383 = vunpack.c.l.b16 %v244
    %v1384 = vunpack.c.h.b16 %v244
    %v1385 = vunpack.c.l.b16 %v245
    %v1386 = vunpack.c.h.b16 %v245
    %v1387 = vunpack.c.l.b16 %v246
    %v1388 = vunpack.c.h.b16 %v246
    %v1389 = vunpack.c.l.b16 %v247
    %v1390 = vunpack.c.h.b16 %v247
    %v1391 = vunpack.c.l.b16 %v248
    %v1392 = vunpack.c.h.b16 %v248
    %v1393 = vunpack.c.l.b16 %v249
    %v1394 = vunpack.c.h.b16 %v249
    %v1395 = vunpack.c.l.b16 %v250
    %v1396 = vunpack.c.h.b16 %v250
    %v1397 = vunpack.c.l.b16 %v251
    %v1398 = vunpack.c.h.b16 %v251
    %v1399 = vunpack.c.l.b16 %v252
    %v1400 = vunpack.c.h.b16 %v252
    %v1401 = vunpack.c.l.b16 %v253
    %v1402 = vunpack.c.h.b16 %v253
    %v1403 = vunpack.c.l.b16 %v254
    %v1404 = vunpack.c.h.b16 %v254
    %v1405 = vunpack.c.l.b16 %v255
    %v1406 = vunpack.c.h.b16 %v255
    %v1407 = vunpack.c.l.b16 %v256
    %v1408 = vunpack.c.h.b16 %v256
    %v1409 = vunpack.c.l.b16 %v257
    %v1410 = vunpack.c.h.b16 %v257
    %v1411 = vunpack.c.l.b16 %v258
    %v1412 = vunpack.c.h.b16 %v258
    %v1413 = vunpack.c.l.b16 %v259
    %v1414 = vunpack.c.h.b16 %v259
    %v1415 = vunpack.c.l.b16 %v260
    %v1416 = vunpack.c.h.b16 %v260
    %v1417 = vunpack.c.l.b16 %v261
    %v1418 = vunpack.c.h.b16 %v261
    %v1419 = vunpack.c.l.b16 %v262
    %v1420 = vunpack.c.h.b16 %v262
    %v1421 = vunpack.c.l.b16 %v263
    %v1422 = vunpack.c.h.b16 %v263
    %v1423 = vunpack.c.l.b16 %v264
    %v1424 = vunpack.c.h.b16 %v264
    %v1425 = vunpack.c.l.b16 %v265
    %v1426 = vunpack.c.h.b16 %v265
    %v1427 = vunpack.c.l.b16 %v266
    %v1428 = vunpack.c.h.b16 %v266
    %v1429 = vunpack.c.l.b16 %v267
    %v1430 = vunpack.c.h.b16 %v267
    %v1431 = vunpack.c.l.b16 %v268
    %v1432 = vunpack.c.h.b16 %v268
    %v1433 = vunpack.c.l.b16 %v269
    %v1434 = vunpack.c.h.b16 %v269
    %v1435 = vunpack.c.l.b16 %v270
    %v1436 = vunpack.c.h.b16 %v270
    %v1437 = vunpack.c.l.b16 %v271
    %v1438 = vunpack.c.h.b16 %v271
    %v1439 = vunpack.c.l.b16 %v272
    %v1440 = vunpack.c.h.b16 %v272
    %v1441 = vunpack.c.l.b16 %v273
    %v1442 = vunpack.c.h.b16 %v273
    %v1443 = vunpack.c.l.b16 %v274
    %v1444 = vunpack.c.h.b16 %v274
    %v1445 = vunpack.c.l.b16 %v275
    %v1446 = vunpack.c.h.b16 %v275
    %v1447 = vunpack.c.l.b16 %v276
    %v1448 = vunpack.c.h.b16 %v276
    %v1449 = vunpack.c.l.b16 %v277
    %v1450 = vunpack.c.h.b16 %v277
    %v1451 = vunpack.c.l.b16 %v278
    %v1452 = vunpack.c.h.b16 %v278
    %v1453 = vunpack.c.l.b16 %v279
    %v1454 = vunpack.c.h.b16 %v279
    %v1455 = vunpack.c.l.b16 %v280
    %v1456 = vunpack.c.h.b16 %v280
    %v1457 = vunpack.c.l.b16 %v281
    %v1458 = vunpack.c.h.b16 %v281
    %v1459 = vunpack.c.l.b16 %v282
    %v1460 = vunpack.c.h.b16 %v282
    %v1461 = vunpack.c.l.b16 %v283
    %v1462 = vunpack.c.h.b16 %v283
    %v1463 = vunpack.c.l.b16 %v284
    %v1464 = vunpack.c.h.b16 %v284
    %v1465 = vunpack.c.l.b16 %v285
    %v1466 = vunpack.c.h.b16 %v285
    %v1467 = vunpack.c.l.b16 %v286
    %v1468 = vunpack.c.h.b16 %v286
    %v1469 = vunpack.c.l.b16 %v287
    %v1470 = vunpack.c.h.b16 %v287
    %v1471 = vunpack.c.l.b16 %v288
    %v1472 = vunpack.c.h.b16 %v288
    %v1473 = vunpack.c.l.b16 %v289
    %v1474 = vunpack.c.h.b16 %v289
    %v1475 = vunpack.c.l.b16 %v290
    %v1476 = vunpack.c.h.b16 %v290
    %v1477 = vunpack.c.l.b16 %v291
    %v1478 = vunpack.c.h.b16 %v291
    %v1479 = vunpack.c.l.b16 %v292
    %v1480 = vunpack.c.h.b16 %v292
    %v1481 = vunpack.c.l.b16 %v293
    %v1482 = vunpack.c.h.b16 %v293
    %v1483 = vunpack.c.l.b16 %v294
    %v1484 = vunpack.c.h.b16 %v294
    %v1485 = vunpack.c.l.b16 %v295
    %v1486 = vunpack.c.h.b16 %v295
    %v1487 = vunpack.c.l.b16 %v296
    %v1488 = vunpack.c.h.b16 %v296
    %v1489 = vunpack.c.l.b16 %v297
    %v1490 = vunpack.c.h.b16 %v297
    %v1491 = vunpack.c.l.b16 %v298
    %v1492 = vunpack.c.h.b16 %v298
    %v1493 = vunpack.c.l.b16 %v299
    %v1494 = vunpack.c.h.b16 %v299
    %v1495 = vunpack.c.l.b16 %v300
    %v1496 = vunpack.c.h.b16 %v300
    %v1497 = vunpack.c.l.b16 %v301
    %v1498 = vunpack.c.h.b16 %v301
    %v1499 = vunpack.c.l.b16 %v302
    %v1500 = vunpack.c.h.b16 %v302
    %v1501 = vunpack.c.l.b16 %v303
    %v1502 = vunpack.c.h.b16 %v303
    %v1503 = vunpack.c.l.b16 %v304
    %v1504 = vunpack.c.h.b16 %v304
    %v1505 = vunpack.c.l.b16 %v305
    %v1506 = vunpack.c.h.b16 %v305
    %v1507 = vunpack.c.l.b16 %v306
    %v1508 = vunpack.c.h.b16 %v306
    %v1509 = vunpack.c.l.b16 %v307
    %v1510 = vunpack.c.h.b16 %v307
    %v1511 = vunpack.c.l.b16 %v308
    %v1512 = vunpack.c.h.b16 %v308
    %v1513 = vunpack.c.l.b16 %v309
    %v1514 = vunpack.c.h.b16 %v309
    %v1515 = vunpack.c.l.b16 %v310
    %v1516 = vunpack.c.h.b16 %v310
    %v1517 = vunpack.c.l.b16 %v311
    %v1518 = vunpack.c.h.b16 %v311
    %v1519 = vunpack.c.l.b16 %v312
    %v1520 = vunpack.c.h.b16 %v312
    %v1521 = vunpack.c.l.b16 %v313
    %v1522 = vunpack.c.h.b16 %v313
    %v1523 = vunpack.c.l.b16 %v314
    %v1524 = vunpack.c.h.b16 %v314
    %v1525 = vunpack.c.l.b16 %v315
    %v1526 = vunpack.c.h.b16 %v315
    %v1527 = vunpack.c.l.b16 %v316
    %v1528 = vunpack.c.h.b16 %v316
    %v1529 = vunpack.c.l.b16 %v317
    %v1530 = vunpack.c.h.b16 %v317
    %v1531 = vunpack.c.l.b16 %v318
    %v1532 = vunpack.c.h.b16 %v318
    %v1533 = vunpack.c.l.b16 %v319
    %v1534 = vunpack.c.h.b16 %v319
    %v1535 = vunpack.c.l.b16 %v320
    %v1536 = vunpack.c.h.b16 %v320
    %v1537 = vunpack.c.l.b16 %v321
    %v1538 = vunpack.c.h.b16 %v321
    %v1539 = vunpack.c.l.b16 %v322
    %v1540 = vunpack.c.h.b16 %v322
    %v1541 = vunpack.c.l.b16 %v323
    %v1542 = vunpack.c.h.b16 %v323
    %v1543 = vunpack.c.l.b16 %v324
    %v1544 = vunpack.c.h.b16 %v324
    %v1545 = vunpack.c.l.b16 %v325
    %v1546 = vunpack.c.h.b16 %v325
    %v1547 = vunpack.c.l.b16 %v326
    %v1548 = vunpack.c.h.b16 %v326
    %v1549 = vunpack.c.l.b16 %v327
    %v1550 = vunpack.c.h.b16 %v327
    %v1551 = vunpack.c.l.b16 %v328
    %v1552 = vunpack.c.h.b16 %v328
    %v1553 = vunpack.c.l.b16 %v329
    %v1554 = vunpack.c.h.b16 %v329
    %v1555 = vunpack.c.l.b16 %v330
    %v1556 = vunpack.c.h.b16 %v330
    %v1557 = vunpack.c.l.b16 %v331
    %v1558 = vunpack.c.h.b16 %v331
    %v1559 = vunpack.c.l.b16 %v332
    %v1560 = vunpack.c.h.b16 %v332
    %v1561 = vunpack.c.l.b16 %v333
    %v1562 = vunpack.c.h.b16 %v333
    %v1563 = vunpack.c.l.b16 %v334
    %v1564 = vunpack.c.h.b16 %v334
    %v1565 = vunpack.c.l.b16 %v335
    %v1566 = vunpack.c.h.b16 %v335
    %v1567 = vunpack.c.l.b16 %v336
    %v1568 = vunpack.c.h.b16 %v336
    %v1569 = vunpack.c.l.b16 %v337
    %v1570 = vunpack.c.h.b16 %v337
    %v1571 = vunpack.c.l.b16 %v338
    %v1572 = vunpack.c.h.b16 %v338
    %v1573 = vunpack.c.l.b16 %v339
    %v1574 = vunpack.c.h.b16 %v339
    %v1575 = vunpack.c.l.b16 %v340
    %v1576 = vunpack.c.h.b16 %v340
    %v1577 = vunpack.c.l.b16 %v341
    %v1578 = vunpack.c.h.b16 %v341
    %v1579 = vunpack.c.l.b16 %v342
    %v1580 = vunpack.c.h.b16 %v342
    %v1581 = vunpack.c.l.b16 %v343
    %v1582 = vunpack.c.h.b16 %v343
    %v1583 = vunpack.c.l.b16 %v344
    %v1584 = vunpack.c.h.b16 %v344
    %v1585 = vunpack.c.l.b16 %v345
    %v1586 = vunpack.c.h.b16 %v345
    %v1587 = vunpack.c.l.b16 %v346
    %v1588 = vunpack.c.h.b16 %v346
    %v1589 = vunpack.c.l.b16 %v347
    %v1590 = vunpack.c.h.b16 %v347
    %v1591 = vunpack.c.l.b16 %v348
    %v1592 = vunpack.c.h.b16 %v348
    %v1593 = vunpack.c.l.b16 %v349
    %v1594 = vunpack.c.h.b16 %v349
    %v1595 = vunpack.c.l.b16 %v350
    %v1596 = vunpack.c.h.b16 %v350
    %v1597 = vunpack.c.l.b16 %v351
    %v1598 = vunpack.c.h.b16 %v351
    %v1599 = vunpack.c.l.b16 %v352
    %v1600 = vunpack.c.h.b16 %v352
    %v1601 = vunpack.c.l.b16 %v353
    %v1602 = vunpack.c.h.b16 %v353
    %v1603 = vunpack.c.l.b16 %v354
    %v1604 = vunpack.c.h.b16 %v354
    %v1605 = vunpack.c.l.b16 %v355
    %v1606 = vunpack.c.h.b16 %v355
    %v1607 = vunpack.c.l.b16 %v356
    %v1608 = vunpack.c.h.b16 %v356
    %v1609 = vunpack.c.l.b16 %v357
    %v1610 = vunpack.c.h.b16 %v357
    %v1611 = vunpack.c.l.b16 %v358
    %v1612 = vunpack.c.h.b16 %v358
    %v1613 = vunpack.c.l.b16 %v359
    %v1614 = vunpack.c.h.b16 %v359
    %v1615 = vunpack.c.l.b16 %v360
    %v1616 = vunpack.c.h.b16 %v360
    %v1617 = vunpack.c.l.b16 %v361
    %v1618 = vunpack.c.h.b16 %v361
    %v1619 = vunpack.c.l.b16 %v362
    %v1620 = vunpack.c.h.b16 %v362
    %v1621 = vunpack.c.l.b16 %v363
    %v1622 = vunpack.c.h.b16 %v363
    %v1623 = vunpack.c.l.b16 %v364
    %v1624 = vunpack.c.h.b16 %v364
    %v1625 = vunpack.c.l.b16 %v365
    %v1626 = vunpack.c.h.b16 %v365
    %v1627 = vunpack.c.l.b16 %v366
    %v1628 = vunpack.c.h.b16 %v366
    %v1629 = vunpack.c.l.b16 %v367
    %v1630 = vunpack.c.h.b16 %v367
    %v1631 = vunpack.c.l.b16 %v368
    %v1632 = vunpack.c.h.b16 %v368
    %v1633 = vunpack.c.l.b16 %v369
    %v1634 = vunpack.c.h.b16 %v369
    %v1635 = vunpack.c.l.b16 %v370
    %v1636 = vunpack.c.h.b16 %v370
    %v1637 = vunpack.c.l.b16 %v371
    %v1638 = vunpack.c.h.b16 %v371
    %v1639 = vunpack.c.l.b16 %v372
    %v1640 = vunpack.c.h.b16 %v372
    %v1641 = vunpack.c.l.b16 %v373
    %v1642 = vunpack.c.h.b16 %v373
    %v1643 = vunpack.c.l.b16 %v374
    %v1644 = vunpack.c.h.b16 %v374
    %v1645 = vunpack.c.l.b16 %v375
    %v1646 = vunpack.c.h.b16 %v375
    %v1647 = vunpack.c.l.b16 %v376
    %v1648 = vunpack.c.h.b16 %v376
    %v1649 = vunpack.c.l.b16 %v377
    %v1650 = vunpack.c.h.b16 %v377
    %v1651 = vunpack.c.l.b16 %v378
    %v1652 = vunpack.c.h.b16 %v378
    %v1653 = vunpack.c.l.b16 %v379
    %v1654 = vunpack.c.h.b16 %v379
    %v1655 = vunpack.c.l.b16 %v380
    %v1656 = vunpack.c.h.b16 %v380
    %v1657 = vunpack.c.l.b16 %v381
    %v1658 = vunpack.c.h.b16 %v381
    %v1659 = vunpack.c.l.b16 %v382
    %v1660 = vunpack.c.h.b16 %v382
    %v1661 = vunpack.c.l.b16 %v383
    %v1662 = vunpack.c.h.b16 %v383
    %v1663 = vunpack.c.l.b16 %v384
    %v1664 = vunpack.c.h.b16 %v384
    %v1665 = vunpack.c.l.b16 %v385
    %v1666 = vunpack.c.h.b16 %v385
    %v1667 = vunpack.c.l.b16 %v386
    %v1668 = vunpack.c.h.b16 %v386
    %v1669 = vunpack.c.l.b16 %v387
    %v1670 = vunpack.c.h.b16 %v387
    %v1671 = vunpack.c.l.b16 %v388
    %v1672 = vunpack.c.h.b16 %v388
    %v1673 = vunpack.c.l.b16 %v389
    %v1674 = vunpack.c.h.b16 %v389
    %v1675 = vunpack.c.l.b16 %v390
    %v1676 = vunpack.c.h.b16 %v390
    %v1677 = vunpack.c.l.b16 %v391
    %v1678 = vunpack.c.h.b16 %v391
    %v1679 = vunpack.c.l.b16 %v392
    %v1680 = vunpack.c.h.b16 %v392
    %v1681 = vunpack.c.l.b16 %v393
    %v1682 = vunpack.c.h.b16 %v393
    %v1683 = vunpack.c.l.b16 %v394
    %v1684 = vunpack.c.h.b16 %v394
    %v1685 = vunpack.c.l.b16 %v395
    %v1686 = vunpack.c.h.b16 %v395
    %v1687 = vunpack.c.l.b16 %v396
    %v1688 = vunpack.c.h.b16 %v396
    %v1689 = vunpack.c.l.b16 %v397
    %v1690 = vunpack.c.h.b16 %v397
    %v1691 = vunpack.c.l.b16 %v398
    %v1692 = vunpack.c.h.b16 %v398
    %v1693 = vunpack.c.l.b16 %v399
    %v1694 = vunpack.c.h.b16 %v399
    %v1695 = vunpack.c.l.b16 %v400
    %v1696 = vunpack.c.h.b16 %v400
    %v1697 = vunpack.c.l.b16 %v401
    %v1698 = vunpack.c.h.b16 %v401
    %v1699 = vunpack.c.l.b16 %v402
    %v1700 = vunpack.c.h.b16 %v402
    %v1701 = vunpack.c.l.b16 %v403
    %v1702 = vunpack.c.h.b16 %v403
    %v1703 = vunpack.c.l.b16 %v404
    %v1704 = vunpack.c.h.b16 %v404
    %v1705 = vunpack.c.l.b16 %v405
    %v1706 = vunpack.c.h.b16 %v405
    %v1707 = vunpack.c.l.b16 %v406
    %v1708 = vunpack.c.h.b16 %v406
    %v1709 = vunpack.c.l.b16 %v407
    %v1710 = vunpack.c.h.b16 %v407
    %v1711 = vunpack.c.l.b16 %v408
    %v1712 = vunpack.c.h.b16 %v408
    %v1713 = vunpack.c.l.b16 %v409
    %v1714 = vunpack.c.h.b16 %v409
    %v1715 = vunpack.c.l.b16 %v410
    %v1716 = vunpack.c.h.b16 %v410
    %v1717 = vunpack.c.l.b16 %v411
    %v1718 = vunpack.c.h.b16 %v411
    %v1719 = vunpack.c.l.b16 %v412
    %v1720 = vunpack.c.h.b16 %v412
    %v1721 = vunpack.c.l.b16 %v413
    %v1722 = vunpack.c.h.b16 %v413
    %v1723 = vunpack.c.l.b16 %v414
    %v1724 = vunpack.c.h.b16 %v414
    %v1725 = vunpack.c.l.b16 %v415
    %v1726 = vunpack.c.h.b16 %v415
    %v1727 = vunpack.c.l.b16 %v416
    %v1728 = vunpack.c.h.b16 %v416
    %v1729 = vunpack.c.l.b16 %v417
    %v1730 = vunpack.c.h.b16 %v417
    %v1731 = vunpack.c.l.b16 %v418
    %v1732 = vunpack.c.h.b16 %v418
    %v1733 = vunpack.c.l.b16 %v419
    %v1734 = vunpack.c.h.b16 %v419
    %v1735 = vunpack.c.l.b16 %v420
    %v1736 = vunpack.c.h.b16 %v420
    %v1737 = vunpack.c.l.b16 %v421
    %v1738 = vunpack.c.h.b16 %v421
    %v1739 = vunpack.c.l.b16 %v422
    %v1740 = vunpack.c.h.b16 %v422
    %v1741 = vunpack.c.l.b16 %v423
    %v1742 = vunpack.c.h.b16 %v423
    %v1743 = vunpack.c.l.b16 %v424
    %v1744 = vunpack.c.h.b16 %v424
    %v1745 = vunpack.c.l.b16 %v425
    %v1746 = vunpack.c.h.b16 %v425
    %v1747 = vunpack.c.l.b16 %v426
    %v1748 = vunpack.c.h.b16 %v426
    %v1749 = vunpack.c.l.b16 %v427
    %v1750 = vunpack.c.h.b16 %v427
    %v1751 = vunpack.c.l.b16 %v428
    %v1752 = vunpack.c.h.b16 %v428
    %v1753 = vunpack.c.l.b16 %v429
    %v1754 = vunpack.c.h.b16 %v429
    %v1755 = vunpack.c.l.b16 %v430
    %v1756 = vunpack.c.h.b16 %v430
    %v1757 = vunpack.c.l.b16 %v431
    %v1758 = vunpack.c.h.b16 %v431
    %v1759 = vunpack.c.l.b16 %v432
    %v1760 = vunpack.c.h.b16 %v432
    %v1761 = vunpack.c.l.b16 %v433
    %v1762 = vunpack.c.h.b16 %v433
    %v1763 = vunpack.c.l.b16 %v434
    %v1764 = vunpack.c.h.b16 %v434
    %v1765 = vunpack.c.l.b16 %v435
    %v1766 = vunpack.c.h.b16 %v435
    %v1767 = vunpack.c.l.b16 %v436
    %v1768 = vunpack.c.h.b16 %v436
    %v1769 = vunpack.c.l.b16 %v437
    %v1770 = vunpack.c.h.b16 %v437
    %v1771 = vunpack.c.l.b16 %v438
    %v1772 = vunpack.c.h.b16 %v438
    %v1773 = vunpack.c.l.b16 %v439
    %v1774 = vunpack.c.h.b16 %v439
    %v1775 = vunpack.c.l.b16 %v440
    %v1776 = vunpack.c.h.b16 %v440
    %v1777 = vunpack.c.l.b16 %v441
    %v1778 = vunpack.c.h.b16 %v441
    %v1779 = vunpack.c.l.b16 %v442
    %v1780 = vunpack.c.h.b16 %v442
    %v1781 = vunpack.c.l.b16 %v443
    %v1782 = vunpack.c.h.b16 %v443
    %v1783 = vunpack.c.l.b16 %v444
    %v1784 = vunpack.c.h.b16 %v444
    %v1785 = vunpack.c.l.b16 %v445
    %v1786 = vunpack.c.h.b16 %v445
    %v1787 = vunpack.c.l.b16 %v446
    %v1788 = vunpack.c.h.b16 %v446
    %v1789 = vunpack.c.l.b16 %v447
    %v1790 = vunpack.c.h.b16 %v447
    %v1791 = vunpack.c.l.b16 %v448
    %v1792 = vunpack.c.h.b16 %v448
    %v1793 = vunpack.c.l.b16 %v449
    %v1794 = vunpack.c.h.b16 %v449
    %v1795 = vunpack.c.l.b16 %v450
    %v1796 = vunpack.c.h.b16 %v450
    %v1797 = vunpack.c.l.b16 %v451
    %v1798 = vunpack.c.h.b16 %v451
    %v1799 = vunpack.c.l.b16 %v452
    %v1800 = vunpack.c.h.b16 %v452
    %v1801 = vunpack.c.l.b16 %v453
    %v1802 = vunpack.c.h.b16 %v453
    %v1803 = vunpack.c.l.b16 %v454
    %v1804 = vunpack.c.h.b16 %v454
    %v1805 = vunpack.c.l.b16 %v455
    %v1806 = vunpack.c.h.b16 %v455
    %v1807 = vunpack.c.l.b16 %v456
    %v1808 = vunpack.c.h.b16 %v456
    %v1809 = vunpack.c.l.b16 %v457
    %v1810 = vunpack.c.h.b16 %v457
    %v1811 = vunpack.c.l.b16 %v458
    %v1812 = vunpack.c.h.b16 %v458
    %v1813 = vunpack.c.l.b16 %v459
    %v1814 = vunpack.c.h.b16 %v459
    %v1815 = vunpack.c.l.b16 %v460
    %v1816 = vunpack.c.h.b16 %v460
    %v1817 = vunpack.c.l.b16 %v461
    %v1818 = vunpack.c.h.b16 %v461
    %v1819 = vunpack.c.l.b16 %v462
    %v1820 = vunpack.c.h.b16 %v462
    %v1821 = vunpack.c.l.b16 %v463
    %v1822 = vunpack.c.h.b16 %v463
    %v1823 = vunpack.c.l.b16 %v464
    %v1824 = vunpack.c.h.b16 %v464
    %v1825 = vunpack.c.l.b16 %v465
    %v1826 = vunpack.c.h.b16 %v465
    %v1827 = vunpack.c.l.b16 %v466
    %v1828 = vunpack.c.h.b16 %v466
    %v1829 = vunpack.c.l.b16 %v467
    %v1830 = vunpack.c.h.b16 %v467
    %v1831 = vunpack.c.l.b16 %v468
    %v1832 = vunpack.c.h.b16 %v468
    %v1833 = vunpack.c.l.b16 %v469
    %v1834 = vunpack.c.h.b16 %v469
    %v1835 = vunpack.c.l.b16 %v470
    %v1836 = vunpack.c.h.b16 %v470
    %v1837 = vunpack.c.l.b16 %v471
    %v1838 = vunpack.c.h.b16 %v471
    %v1839 = vunpack.c.l.b16 %v472
    %v1840 = vunpack.c.h.b16 %v472
    %v1841 = vunpack.c.l.b16 %v473
    %v1842 = vunpack.c.h.b16 %v473
    %v1843 = vunpack.c.l.b16 %v474
    %v1844 = vunpack.c.h.b16 %v474
    %v1845 = vunpack.c.l.b16 %v475
    %v1846 = vunpack.c.h.b16 %v475
    %v1847 = vunpack.c.l.b16 %v476
    %v1848 = vunpack.c.h.b16 %v476
    %v1849 = vunpack.c.l.b16 %v477
    %v1850 = vunpack.c.h.b16 %v477
    %v1851 = vunpack.c.l.b16 %v478
    %v1852 = vunpack.c.h.b16 %v478
    %v1853 = vunpack.c.l.b16 %v479
    %v1854 = vunpack.c.h.b16 %v479
    %v1855 = vunpack.c.l.b16 %v480
    %v1856 = vunpack.c.h.b16 %v480
    %v1857 = vunpack.c.l.b16 %v481
    %v1858 = vunpack.c.h.b16 %v481
    %v1859 = vunpack.c.l.b16 %v482
    %v1860 = vunpack.c.h.b16 %v482
    %v1861 = vunpack.c.l.b16 %v483
    %v1862 = vunpack.c.h.b16 %v483
    %v1863 = vunpack.c.l.b16 %v484
    %v1864 = vunpack.c.h.b16 %v484
    %v1865 = vunpack.c.l.b16 %v485
    %v1866 = vunpack.c.h.b16 %v485
    %v1867 = vunpack.c.l.b16 %v486
    %v1868 = vunpack.c.h.b16 %v486
    %v1869 = vunpack.c.l.b16 %v487
    %v1870 = vunpack.c.h.b16 %v487
    %v1871 = vunpack.c.l.b16 %v488
    %v1872 = vunpack.c.h.b16 %v488
    %v1873 = vunpack.c.l.b16 %v489
    %v1874 = vunpack.c.h.b16 %v489
    %v1875 = vunpack.c.l.b16 %v490
    %v1876 = vunpack.c.h.b16 %v490
    %v1877 = vunpack.c.l.b16 %v491
    %v1878 = vunpack.c.h.b16 %v491
    %v1879 = vunpack.c.l.b16 %v492
    %v1880 = vunpack.c.h.b16 %v492
    %v1881 = vunpack.c.l.b16 %v493
    %v1882 = vunpack.c.h.b16 %v493
    %v1883 = vunpack.c.l.b16 %v494
    %v1884 = vunpack.c.h.b16 %v494
    %v1885 = vunpack.c.l.b16 %v495
    %v1886 = vunpack.c.h.b16 %v495
    %v1887 = vunpack.c.l.b16 %v496
    %v1888 = vunpack.c.h.b16 %v496
    %v1889 = vunpack.c.l.b16 %v497
    %v1890 = vunpack.c.h.b16 %v497
    %v1891 = vunpack.c.l.b16 %v498
    %v1892 = vunpack.c.h.b16 %v498
    %v1893 = vunpack.c.l.b16 %v499
    %v1894 = vunpack.c.h.b16 %v499
    %v1895 = vunpack.c.l.b16 %v500
    %v1896 = vunpack.c.h.b16 %v500
    %v1897 = vunpack.c.l.b16 %v501
    %v1898 = vunpack.c.h.b16 %v501
    %v1899 = vunpack.c.l.b16 %v502
    %v1900 = vunpack.c.h.b16 %v502
    %v1901 = vunpack.c.l.b16 %v503
    %v1902 = vunpack.c.h.b16 %v503
    %v1903 = vunpack.c.l.b16 %v504
    %v1904 = vunpack.c.h.b16 %v504
    %v1905 = vunpack.c.l.b16 %v505
    %v1906 = vunpack.c.h.b16 %v505
    %v1907 = vunpack.c.l.b16 %v506
    %v1908 = vunpack.c.h.b16 %v506
    %v1909 = vunpack.c.l.b16 %v507
    %v1910 = vunpack.c.h.b16 %v507
    %v1911 = vunpack.c.l.b16 %v508
    %v1912 = vunpack.c.h.b16 %v508
    %v1913 = vunpack.c.l.b16 %v509
    %v1914 = vunpack.c.h.b16 %v509
    %v1915 = vunpack.c.l.b16 %v510
    %v1916 = vunpack.c.h.b16 %v510
    %v1917 = vunpack.c.l.b16 %v511
    %v1918 = vunpack.c.h.b16 %v511
    %v1919 = vunpack.c.l.b16 %v512
    %v1920 = vunpack.c.h.b16 %v512
    %v1921 = vunpack.c.l.b16 %v513
    %v1922 = vunpack.c.h.b16 %v513
    %v1923 = vunpack.c.l.b16 %v514
    %v1924 = vunpack.c.h.b16 %v514
    %v1925 = vunpack.c.l.b16 %v515
    %v1926 = vunpack.c.h.b16 %v515
    %v1927 = vunpack.c.l.b16 %v516
    %v1928 = vunpack.c.h.b16 %v516
    %v1929 = vunpack.c.l.b16 %v517
    %v1930 = vunpack.c.h.b16 %v517
    %v1931 = vunpack.c.l.b16 %v518
    %v1932 = vunpack.c.h.b16 %v518
    %v1933 = vunpack.c.l.b16 %v519
    %v1934 = vunpack.c.h.b16 %v519
    %v1935 = vunpack.c.l.b16 %v520
    %v1936 = vunpack.c.h.b16 %v520
    %v1937 = vunpack.c.l.b16 %v521
    %v1938 = vunpack.c.h.b16 %v521
    %v1939 = vunpack.c.l.b16 %v522
    %v1940 = vunpack.c.h.b16 %v522
    %v1941 = vunpack.c.l.b16 %v523
    %v1942 = vunpack.c.h.b16 %v523
    %v1943 = vunpack.c.l.b16 %v524
    %v1944 = vunpack.c.h.b16 %v524
    %v1945 = vunpack.c.l.b16 %v525
    %v1946 = vunpack.c.h.b16 %v525
    %v1947 = vunpack.c.l.b16 %v526
    %v1948 = vunpack.c.h.b16 %v526
    %v1949 = vunpack.c.l.b16 %v527
    %v1950 = vunpack.c.h.b16 %v527
    %v1951 = vunpack.c.l.b16 %v528
    %v1952 = vunpack.c.h.b16 %v528
    %v1953 = vunpack.c.l.b16 %v529
    %v1954 = vunpack.c.h.b16 %v529
    %v1955 = vunpack.c.l.b16 %v530
    %v1956 = vunpack.c.h.b16 %v530
    %v1957 = vunpack.c.l.b16 %v531
    %v1958 = vunpack.c.h.b16 %v531
    %v1959 = vunpack.c.l.b16 %v532
    %v1960 = vunpack.c.h.b16 %v532
    %v1961 = vunpack.c.l.b16 %v533
    %v1962 = vunpack.c.h.b16 %v533
    %v1963 = vunpack.c.l.b16 %v534
    %v1964 = vunpack.c.h.b16 %v534
    %v1965 = vunpack.c.l.b16 %v535
    %v1966 = vunpack.c.h.b16 %v535
    %v1967 = vunpack.c.l.b16 %v536
    %v1968 = vunpack.c.h.b16 %v536
    %v1969 = vunpack.c.l.b16 %v537
    %v1970 = vunpack.c.h.b16 %v537
    %v1971 = vunpack.c.l.b16 %v538
    %v1972 = vunpack.c.h.b16 %v538
    %v1973 = vunpack.c.l.b16 %v539
    %v1974 = vunpack.c.h.b16 %v539
    %v1975 = vunpack.c.l.b16 %v540
    %v1976 = vunpack.c.h.b16 %v540
    %v1977 = vunpack.c.l.b16 %v541
    %v1978 = vunpack.c.h.b16 %v541
    %v1979 = vunpack.c.l.b16 %v542
    %v1980 = vunpack.c.h.b16 %v542
    %v1981 = vunpack.c.l.b16 %v543
    %v1982 = vunpack.c.h.b16 %v543
    %v1983 = vunpack.c.l.b16 %v544
    %v1984 = vunpack.c.h.b16 %v544
    %v1985 = vunpack.c.l.b16 %v545
    %v1986 = vunpack.c.h.b16 %v545
    %v1987 = vunpack.c.l.b16 %v546
    %v1988 = vunpack.c.h.b16 %v546
    %v1989 = vunpack.c.l.b16 %v547
    %v1990 = vunpack.c.h.b16 %v547
    %v1991 = vunpack.c.l.b16 %v548
    %v1992 = vunpack.c.h.b16 %v548
    %v1993 = vunpack.c.l.b16 %v549
    %v1994 = vunpack.c.h.b16 %v549
    %v1995 = vunpack.c.l.b16 %v550
    %v1996 = vunpack.c.h.b16 %v550
    %v1997 = vunpack.c.l.b16 %v551
    %v1998 = vunpack.c.h.b16 %v551
    %v1999 = vunpack.c.l.b16 %v552
    %v2000 = vunpack.c.h.b16 %v552
    %v2001 = vunpack.c.l.b16 %v553
    %v2002 = vunpack.c.h.b16 %v553
    %v2003 = vunpack.c.l.b16 %v554
    %v2004 = vunpack.c.h.b16 %v554
    %v2005 = vunpack.c.l.b16 %v555
    %v2006 = vunpack.c.h.b16 %v555
    %v2007 = vunpack.c.l.b16 %v556
    %v2008 = vunpack.c.h.b16 %v556
    %v2009 = vunpack.c.l.b16 %v557
    %v2010 = vunpack.c.h.b16 %v557
    %v2011 = vunpack.c.l.b16 %v558
    %v2012 = vunpack.c.h.b16 %v558
    %v2013 = vunpack.c.l.b16 %v559
    %v2014 = vunpack.c.h.b16 %v559
    %v2015 = vunpack.c.l.b16 %v560
    %v2016 = vunpack.c.h.b16 %v560
    %v2017 = vunpack.c.l.b16 %v561
    %v2018 = vunpack.c.h.b16 %v561
    %v2019 = vunpack.c.l.b16 %v562
    %v2020 = vunpack.c.h.b16 %v562
    %v2021 = vunpack.c.l.b16 %v563
    %v2022 = vunpack.c.h.b16 %v563
    %v2023 = vunpack.c.l.b16 %v564
    %v2024 = vunpack.c.h.b16 %v564
    %v2025 = vunpack.c.l.b16 %v565
    %v2026 = vunpack.c.h.b16 %v565
    %v2027 = vunpack.c.l.b16 %v566
    %v2028 = vunpack.c.h.b16 %v566
    %v2029 = vunpack.c.l.b16 %v567
    %v2030 = vunpack.c.h.b16 %v567
    %v2031 = vunpack.c.l.b16 %v568
    %v2032 = vunpack.c.h.b16 %v568
    %v2033 = vunpack.c.l.b16 %v569
    %v2034 = vunpack.c.h.b16 %v569
    %v2035 = vunpack.c.l.b16 %v570
    %v2036 = vunpack.c.h.b16 %v570
    %v2037 = vunpack.c.l.b16 %v571
    %v2038 = vunpack.c.h.b16 %v571
    %v2039 = vunpack.c.l.b16 %v572
    %v2040 = vunpack.c.h.b16 %v572
    %v2041 = vunpack.c.l.b16 %v573
    %v2042 = vunpack.c.h.b16 %v573
    %v2043 = vunpack.c.l.b16 %v574
    %v2044 = vunpack.c.h.b16 %v574
    %v2045 = vunpack.c.l.b16 %v575
    %v2046 = vunpack.c.h.b16 %v575
    %v2047 = vunpack.c.l.b16 %v576
    %v2048 = vunpack.c.h.b16 %v576
    %v2049 = vunpack.c.l.b16 %v577
    %v2050 = vunpack.c.h.b16 %v577
    %v2051 = vunpack.c.l.b16 %v578
    %v2052 = vunpack.c.h.b16 %v578
    %v2053 = vunpack.c.l.b16 %v579
    %v2054 = vunpack.c.h.b16 %v579
    %v2055 = vunpack.c.l.b16 %v580
    %v2056 = vunpack.c.h.b16 %v580
    %v2057 = vunpack.c.l.b16 %v581
    %v2058 = vunpack.c.h.b16 %v581
    %v2059 = vunpack.c.l.b16 %v582
    %v2060 = vunpack.c.h.b16 %v582
    %v2061 = vunpack.c.l.b16 %v583
    %v2062 = vunpack.c.h.b16 %v583
    %v2063 = vunpack.c.l.b16 %v584
    %v2064 = vunpack.c.h.b16 %v584
    %v2065 = vunpack.c.l.b16 %v585
    %v2066 = vunpack.c.h.b16 %v585
    %v2067 = vunpack.c.l.b16 %v586
    %v2068 = vunpack.c.h.b16 %v586
    %v2069 = vunpack.c.l.b16 %v587
    %v2070 = vunpack.c.h.b16 %v587
    %v2071 = vunpack.c.l.b16 %v588
    %v2072 = vunpack.c.h.b16 %v588
    %v2073 = vunpack.c.l.b16 %v589
    %v2074 = vunpack.c.h.b16 %v589
    %v2075 = vunpack.c.l.b16 %v590
    %v2076 = vunpack.c.h.b16 %v590
    %v2077 = vunpack.c.l.b16 %v591
    %v2078 = vunpack.c.h.b16 %v591
    %v2079 = vunpack.c.l.b16 %v592
    %v2080 = vunpack.c.h.b16 %v592
    %v2081 = vunpack.c.l.b16 %v593
    %v2082 = vunpack.c.h.b16 %v593
    %v2083 = vunpack.c.l.b16 %v594
    %v2084 = vunpack.c.h.b16 %v594
    %v2085 = vunpack.c.l.b16 %v595
    %v2086 = vunpack.c.h.b16 %v595
    %v2087 = vunpack.c.l.b16 %v596
    %v2088 = vunpack.c.h.b16 %v596
    %v2089 = vunpack.c.l.b16 %v597
    %v2090 = vunpack.c.h.b16 %v597
    %v2091 = vunpack.c.l.b16 %v598
    %v2092 = vunpack.c.h.b16 %v598
    %v2093 = vunpack.c.l.b16 %v599
    %v2094 = vunpack.c.h.b16 %v599
    %v2095 = vunpack.c.l.b16 %v600
    %v2096 = vunpack.c.h.b16 %v600
    %v2097 = vunpack.c.l.b16 %v601
    %v2098 = vunpack.c.h.b16 %v601
    %v2099 = vunpack.c.l.b16 %v602
    %v2100 = vunpack.c.h.b16 %v602
    %v2101 = vunpack.c.l.b16 %v603
    %v2102 = vunpack.c.h.b16 %v603
    %v2103 = vunpack.c.l.b16 %v604
    %v2104 = vunpack.c.h.b16 %v604
    %v2105 = vunpack.c.l.b16 %v605
    %v2106 = vunpack.c.h.b16 %v605
    %v2107 = vunpack.c.l.b16 %v606
    %v2108 = vunpack.c.h.b16 %v606
    %v2109 = vunpack.c.l.b16 %v607
    %v2110 = vunpack.c.h.b16 %v607
    %v2111 = vunpack.c.l.b16 %v608
    %v2112 = vunpack.c.h.b16 %v608
    %v2113 = vunpack.c.l.b16 %v609
    %v2114 = vunpack.c.h.b16 %v609
    %v2115 = vunpack.c.l.b16 %v610
    %v2116 = vunpack.c.h.b16 %v610
    %v2117 = vunpack.c.l.b16 %v611
    %v2118 = vunpack.c.h.b16 %v611
    %v2119 = vunpack.c.l.b16 %v612
    %v2120 = vunpack.c.h.b16 %v612
    %v2121 = vunpack.c.l.b16 %v613
    %v2122 = vunpack.c.h.b16 %v613
    %v2123 = vunpack.c.l.b16 %v614
    %v2124 = vunpack.c.h.b16 %v614
    %v2125 = vunpack.c.l.b16 %v615
    %v2126 = vunpack.c.h.b16 %v615
    %v2127 = vunpack.c.l.b16 %v616
    %v2128 = vunpack.c.h.b16 %v616
    %v2129 = vunpack.c.l.b16 %v617
    %v2130 = vunpack.c.h.b16 %v617
    %v2131 = vunpack.c.l.b16 %v618
    %v2132 = vunpack.c.h.b16 %v618
    %v2133 = vunpack.c.l.b16 %v619
    %v2134 = vunpack.c.h.b16 %v619
    %v2135 = vunpack.c.l.b16 %v620
    %v2136 = vunpack.c.h.b16 %v620
    %v2137 = vunpack.c.l.b16 %v621
    %v2138 = vunpack.c.h.b16 %v621
    %v2139 = vunpack.c.l.b16 %v622
    %v2140 = vunpack.c.h.b16 %v622
    %v2141 = vunpack.c.l.b16 %v623
    %v2142 = vunpack.c.h.b16 %v623
    %v2143 = vunpack.c.l.b16 %v624
    %v2144 = vunpack.c.h.b16 %v624
    %v2145 = vunpack.c.l.b16 %v625
    %v2146 = vunpack.c.h.b16 %v625
    %v2147 = vunpack.c.l.b16 %v626
    %v2148 = vunpack.c.h.b16 %v626
    %v2149 = vunpack.c.l.b16 %v627
    %v2150 = vunpack.c.h.b16 %v627
    %v2151 = vunpack.c.l.b16 %v628
    %v2152 = vunpack.c.h.b16 %v628
    %v2153 = vunpack.c.l.b16 %v629
    %v2154 = vunpack.c.h.b16 %v629
    %v2155 = vunpack.c.l.b16 %v630
    %v2156 = vunpack.c.h.b16 %v630
    %v2157 = vunpack.c.l.b16 %v631
    %v2158 = vunpack.c.h.b16 %v631
    %v2159 = vunpack.c.l.b16 %v632
    %v2160 = vunpack.c.h.b16 %v632
    %v2161 = vunpack.c.l.b16 %v633
    %v2162 = vunpack.c.h.b16 %v633
    %v2163 = vunpack.c.l.b16 %v634
    %v2164 = vunpack.c.h.b16 %v634
    %v2165 = vunpack.c.l.b16 %v635
    %v2166 = vunpack.c.h.b16 %v635
    %v2167 = vunpack.c.l.b16 %v636
    %v2168 = vunpack.c.h.b16 %v636
    %v2169 = vunpack.c.l.b16 %v637
    %v2170 = vunpack.c.h.b16 %v637
    %v2171 = vunpack.c.l.b16 %v638
    %v2172 = vunpack.c.h.b16 %v638
    %v2173 = vunpack.c.l.b16 %v639
    %v2174 = vunpack.c.h.b16 %v639
    %v2175 = vunpack.c.l.b16 %v640
    %v2176 = vunpack.c.h.b16 %v640
    %v2177 = vunpack.c.l.b16 %v641
    %v2178 = vunpack.c.h.b16 %v641
    %v2179 = vunpack.c.l.b16 %v642
    %v2180 = vunpack.c.h.b16 %v642
    %v2181 = vunpack.c.l.b16 %v643
    %v2182 = vunpack.c.h.b16 %v643
    %v2183 = vunpack.c.l.b16 %v644
    %v2184 = vunpack.c.h.b16 %v644
    %v2185 = vunpack.c.l.b16 %v645
    %v2186 = vunpack.c.h.b16 %v645
    %v2187 = vunpack.c.l.b16 %v646
    %v2188 = vunpack.c.h.b16 %v646
    %v2189 = vunpack.c.l.b16 %v647
    %v2190 = vunpack.c.h.b16 %v647
    %v2191 = vunpack.c.l.b16 %v648
    %v2192 = vunpack.c.h.b16 %v648
    %v2193 = vunpack.c.l.b16 %v649
    %v2194 = vunpack.c.h.b16 %v649
    %v2195 = vunpack.c.l.b16 %v650
    %v2196 = vunpack.c.h.b16 %v650
    %v2197 = vunpack.c.l.b16 %v651
    %v2198 = vunpack.c.h.b16 %v651
    %v2199 = vunpack.c.l.b16 %v652
    %v2200 = vunpack.c.h.b16 %v652
    %v2201 = vunpack.c.l.b16 %v653
    %v2202 = vunpack.c.h.b16 %v653
    %v2203 = vunpack.c.l.b16 %v654
    %v2204 = vunpack.c.h.b16 %v654
    %v2205 = vunpack.c.l.b16 %v655
    %v2206 = vunpack.c.h.b16 %v655
    %v2207 = vunpack.c.l.b16 %v656
    %v2208 = vunpack.c.h.b16 %v656
    %v2209 = vunpack.c.l.b16 %v657
    %v2210 = vunpack.c.h.b16 %v657
    %v2211 = vunpack.c.l.b16 %v658
    %v2212 = vunpack.c.h.b16 %v658
    %v2213 = vpack.c.b16 %v1197, %v1189
    %v2214 = vpack.c.b16 %v1198, %v1190
    %v2215 = vpack.c.b16 %v1199, %v1191
    %v2216 = vpack.c.b16 %v1200, %v1192
    %v2217 = vpack.c.b16 %v1201, %v1193
    %v2218 = vpack.c.b16 %v1202, %v1194
    %v2219 = vpack.c.b16 %v1203, %v1195
    %v2220 = vpack.c.b16 %v1204, %v1196
    %v2221 = vpack.c.b16 %v1213, %v1205
    %v2222 = vpack.c.b16 %v1214, %v1206
    %v2223 = vpack.c.b16 %v1215, %v1207
    %v2224 = vpack.c.b16 %v1216, %v1208
    %v2225 = vpack.c.b16 %v1217, %v1209
    %v2226 = vpack.c.b16 %v1218, %v1210
    %v2227 = vpack.c.b16 %v1219, %v1211
    %v2228 = vpack.c.b16 %v1220, %v1212
    %v2229 = vpack.c.b16 %v1229, %v1221
    %v2230 = vpack.c.b16 %v1230, %v1222
    %v2231 = vpack.c.b16 %v1231, %v1223
    %v2232 = vpack.c.b16 %v1232, %v1224
    %v2233 = vpack.c.b16 %v1233, %v1225
    %v2234 = vpack.c.b16 %v1234, %v1226
    %v2235 = vpack.c.b16 %v1235, %v1227
    %v2236 = vpack.c.b16 %v1236, %v1228
    %v2237 = vpack.c.b16 %v1245, %v1237
    %v2238 = vpack.c.b16 %v1246, %v1238
    %v2239 = vpack.c.b16 %v1247, %v1239
    %v2240 = vpack.c.b16 %v1248, %v1240
    %v2241 = vpack.c.b16 %v1249, %v1241
    %v2242 = vpack.c.b16 %v1250, %v1242
    %v2243 = vpack.c.b16 %v1251, %v1243
    %v2244 = vpack.c.b16 %v1252, %v1244
    %v2245 = vpack.c.b16 %v1261, %v1253
    %v2246 = vpack.c.b16 %v1262, %v1254
    %v2247 = vpack.c.b16 %v1263, %v1255
    %v2248 = vpack.c.b16 %v1264, %v1256
    %v2249 = vpack.c.b16 %v1265, %v1257
    %v2250 = vpack.c.b16 %v1266, %v1258
    %v2251 = vpack.c.b16 %v1267, %v1259
    %v2252 = vpack.c.b16 %v1268, %v1260
    %v2253 = vpack.c.b16 %v1277, %v1269
    %v2254 = vpack.c.b16 %v1278, %v1270
    %v2255 = vpack.c.b16 %v1279, %v1271
    %v2256 = vpack.c.b16 %v1280, %v1272
    %v2257 = vpack.c.b16 %v1281, %v1273
    %v2258 = vpack.c.b16 %v1282, %v1274
    %v2259 = vpack.c.b16 %v1283, %v1275
    %v2260 = vpack.c.b16 %v1284, %v1276
    %v2261 = vpack.c.b16 %v1293, %v1285
    %v2262 = vpack.c.b16 %v1294, %v1286
    %v2263 = vpack.c.b16 %v1295, %v1287
    %v2264 = vpack.c.b16 %v1296, %v1288
    %v2265 = vpack.c.b16 %v1297, %v1289
    %v2266 = vpack.c.b16 %v1298, %v1290
    %v2267 = vpack.c.b16 %v1299, %v1291
    %v2268 = vpack.c.b16 %v1300, %v1292
    %v2269 = vpack.c.b16 %v1309, %v1301
    %v2270 = vpack.c.b16 %v1310, %v1302
    %v2271 = vpack.c.b16 %v1311, %v1303
    %v2272 = vpack.c.b16 %v1312, %v1304
    %v2273 = vpack.c.b16 %v1313, %v1305
    %v2274 = vpack.c.b16 %v1314, %v1306
    %v2275 = vpack.c.b16 %v1315, %v1307
    %v2276 = vpack.c.b16 %v1316, %v1308
    %v2277 = vpack.c.b16 %v1325, %v1317
    %v2278 = vpack.c.b16 %v1326, %v1318
    %v2279 = vpack.c.b16 %v1327, %v1319
    %v2280 = vpack.c.b16 %v1328, %v1320
    %v2281 = vpack.c.b16 %v1329, %v1321
    %v2282 = vpack.c.b16 %v1330, %v1322
    %v2283 = vpack.c.b16 %v1331, %v1323
    %v2284 = vpack.c.b16 %v1332, %v1324
    %v2285 = vpack.c.b16 %v1341, %v1333
    %v2286 = vpack.c.b16 %v1342, %v1334
    %v2287 = vpack.c.b16 %v1343, %v1335
    %v2288 = vpack.c.b16 %v1344, %v1336
    %v2289 = vpack.c.b16 %v1345, %v1337
    %v2290 = vpack.c.b16 %v1346, %v1338
    %v2291 = vpack.c.b16 %v1347, %v1339
    %v2292 = vpack.c.b16 %v1348, %v1340
    %v2293 = vpack.c.b16 %v1357, %v1349
    %v2294 = vpack.c.b16 %v1358, %v1350
    %v2295 = vpack.c.b16 %v1359, %v1351
    %v2296 = vpack.c.b16 %v1360, %v1352
    %v2297 = vpack.c.b16 %v1361, %v1353
    %v2298 = vpack.c.b16 %v1362, %v1354
    %v2299 = vpack.c.b16 %v1363, %v1355
    %v2300 = vpack.c.b16 %v1364, %v1356
    %v2301 = vpack.c.b16 %v1373, %v1365
    %v2302 = vpack.c.b16 %v1374, %v1366
    %v2303 = vpack.c.b16 %v1375, %v1367
    %v2304 = vpack.c.b16 %v1376, %v1368
    %v2305 = vpack.c.b16 %v1377, %v1369
    %v2306 = vpack.c.b16 %v1378, %v1370
    %v2307 = vpack.c.b16 %v1379, %v1371
    %v2308 = vpack.c.b16 %v1380, %v1372
    %v2309 = vpack.c.b16 %v1389, %v1381
    %v2310 = vpack.c.b16 %v1390, %v1382
    %v2311 = vpack.c.b16 %v1391, %v1383
    %v2312 = vpack.c.b16 %v1392, %v1384
    %v2313 = vpack.c.b16 %v1393, %v1385
    %v2314 = vpack.c.b16 %v1394, %v1386
    %v2315 = vpack.c.b16 %v1395, %v1387
    %v2316 = vpack.c.b16 %v1396, %v1388
    %v2317 = vpack.c.b16 %v1405, %v1397
    %v2318 = vpack.c.b16 %v1406, %v1398
    %v2319 = vpack.c.b16 %v1407, %v1399
    %v2320 = vpack.c.b16 %v1408, %v1400
    %v2321 = vpack.c.b16 %v1409, %v1401
    %v2322 = vpack.c.b16 %v1410, %v1402
    %v2323 = vpack.c.b16 %v1411, %v1403
    %v2324 = vpack.c.b16 %v1412, %v1404
    %v2325 = vpack.c.b16 %v1421, %v1413
    %v2326 = vpack.c.b16 %v1422, %v1414
    %v2327 = vpack.c.b16 %v1423, %v1415
    %v2328 = vpack.c.b16 %v1424, %v1416
    %v2329 = vpack.c.b16 %v1425, %v1417
    %v2330 = vpack.c.b16 %v1426, %v1418
    %v2331 = vpack.c.b16 %v1427, %v1419
    %v2332 = vpack.c.b16 %v1428, %v1420
    %v2333 = vpack.c.b16 %v1437, %v1429
    %v2334 = vpack.c.b16 %v1438, %v1430
    %v2335 = vpack.c.b16 %v1439, %v1431
    %v2336 = vpack.c.b16 %v1440, %v1432
    %v2337 = vpack.c.b16 %v1441, %v1433
    %v2338 = vpack.c.b16 %v1442, %v1434
    %v2339 = vpack.c.b16 %v1443, %v1435
    %v2340 = vpack.c.b16 %v1444, %v1436
    %v2341 = vpack.c.b16 %v1453, %v1445
    %v2342 = vpack.c.b16 %v1454, %v1446
    %v2343 = vpack.c.b16 %v1455, %v1447
    %v2344 = vpack.c.b16 %v1456, %v1448
    %v2345 = vpack.c.b16 %v1457, %v1449
    %v2346 = vpack.c.b16 %v1458, %v1450
    %v2347 = vpack.c.b16 %v1459, %v1451
    %v2348 = vpack.c.b16 %v1460, %v1452
    %v2349 = vpack.c.b16 %v1469, %v1461
    %v2350 = vpack.c.b16 %v1470, %v1462
    %v2351 = vpack.c.b16 %v1471, %v1463
    %v2352 = vpack.c.b16 %v1472, %v1464
    %v2353 = vpack.c.b16 %v1473, %v1465
    %v2354 = vpack.c.b16 %v1474, %v1466
    %v2355 = vpack.c.b16 %v1475, %v1467
    %v2356 = vpack.c.b16 %v1476, %v1468
    %v2357 = vpack.c.b16 %v1485, %v1477
    %v2358 = vpack.c.b16 %v1486, %v1478
    %v2359 = vpack.c.b16 %v1487, %v1479
    %v2360 = vpack.c.b16 %v1488, %v1480
    %v2361 = vpack.c.b16 %v1489, %v1481
    %v2362 = vpack.c.b16 %v1490, %v1482
    %v2363 = vpack.c.b16 %v1491, %v1483
    %v2364 = vpack.c.b16 %v1492, %v1484
    %v2365 = vpack.c.b16 %v1501, %v1493
    %v2366 = vpack.c.b16 %v1502, %v1494
    %v2367 = vpack.c.b16 %v1503, %v1495
    %v2368 = vpack.c.b16 %v1504, %v1496
    %v2369 = vpack.c.b16 %v1505, %v1497
    %v2370 = vpack.c.b16 %v1506, %v1498
    %v2371 = vpack.c.b16 %v1507, %v1499
    %v2372 = vpack.c.b16 %v1508, %v1500
    %v2373 = vpack.c.b16 %v1517, %v1509
    %v2374 = vpack.c.b16 %v1518, %v1510
    %v2375 = vpack.c.b16 %v1519, %v1511
    %v2376 = vpack.c.b16 %v1520, %v1512
    %v2377 = vpack.c.b16 %v1521, %v1513
    %v2378 = vpack.c.b16 %v1522, %v1514
    %v2379 = vpack.c.b16 %v1523, %v1515
    %v2380 = vpack.c.b16 %v1524, %v1516
    %v2381 = vpack.c.b16 %v1533, %v1525
    %v2382 = vpack.c.b16 %v1534, %v1526
    %v2383 = vpack.c.b16 %v1535, %v1527
    %v2384 = vpack.c.b16 %v1536, %v1528
    %v2385 = vpack.c.b16 %v1537, %v1529
    %v2386 = vpack.c.b16 %v1538, %v1530
    %v2387 = vpack.c.b16 %v1539, %v1531
    %v2388 = vpack.c.b16 %v1540, %v1532
    %v2389 = vpack.c.b16 %v1549, %v1541
    %v2390 = vpack.c.b16 %v1550, %v1542
    %v2391 = vpack.c.b16 %v1551, %v1543
    %v2392 = vpack.c.b16 %v1552, %v1544
    %v2393 = vpack.c.b16 %v1553, %v1545
    %v2394 = vpack.c.b16 %v1554, %v1546
    %v2395 = vpack.c.b16 %v1555, %v1547
    %v2396 = vpack.c.b16 %v1556, %v1548
    %v2397 = vpack.c.b16 %v1565, %v1557
    %v2398 = vpack.c.b16 %v1566, %v1558
    %v2399 = vpack.c.b16 %v1567, %v1559
    %v2400 = vpack.c.b16 %v1568, %v1560
    %v2401 = vpack.c.b16 %v1569, %v1561
    %v2402 = vpack.c.b16 %v1570, %v1562
    %v2403 = vpack.c.b16 %v1571, %v1563
    %v2404 = vpack.c.b16 %v1572, %v1564
    %v2405 = vpack.c.b16 %v1581, %v1573
    %v2406 = vpack.c.b16 %v1582, %v1574
    %v2407 = vpack.c.b16 %v1583, %v1575
    %v2408 = vpack.c.b16 %v1584, %v1576
    %v2409 = vpack.c.b16 %v1585, %v1577
    %v2410 = vpack.c.b16 %v1586, %v1578
    %v2411 = vpack.c.b16 %v1587, %v1579
    %v2412 = vpack.c.b16 %v1588, %v1580
    %v2413 = vpack.c.b16 %v1597, %v1589
    %v2414 = vpack.c.b16 %v1598, %v1590
    %v2415 = vpack.c.b16 %v1599, %v1591
    %v2416 = vpack.c.b16 %v1600, %v1592
    %v2417 = vpack.c.b16 %v1601, %v1593
    %v2418 = vpack.c.b16 %v1602, %v1594
    %v2419 = vpack.c.b16 %v1603, %v1595
    %v2420 = vpack.c.b16 %v1604, %v1596
    %v2421 = vpack.c.b16 %v1613, %v1605
    %v2422 = vpack.c.b16 %v1614, %v1606
    %v2423 = vpack.c.b16 %v1615, %v1607
    %v2424 = vpack.c.b16 %v1616, %v1608
    %v2425 = vpack.c.b16 %v1617, %v1609
    %v2426 = vpack.c.b16 %v1618, %v1610
    %v2427 = vpack.c.b16 %v1619, %v1611
    %v2428 = vpack.c.b16 %v1620, %v1612
    %v2429 = vpack.c.b16 %v1629, %v1621
    %v2430 = vpack.c.b16 %v1630, %v1622
    %v2431 = vpack.c.b16 %v1631, %v1623
    %v2432 = vpack.c.b16 %v1632, %v1624
    %v2433 = vpack.c.b16 %v1633, %v1625
    %v2434 = vpack.c.b16 %v1634, %v1626
    %v2435 = vpack.c.b16 %v1635, %v1627
    %v2436 = vpack.c.b16 %v1636, %v1628
    %v2437 = vpack.c.b16 %v1645, %v1637
    %v2438 = vpack.c.b16 %v1646, %v1638
    %v2439 = vpack.c.b16 %v1647, %v1639
    %v2440 = vpack.c.b16 %v1648, %v1640
    %v2441 = vpack.c.b16 %v1649, %v1641
    %v2442 = vpack.c.b16 %v1650, %v1642
    %v2443 = vpack.c.b16 %v1651, %v1643
    %v2444 = vpack.c.b16 %v1652, %v1644
    %v2445 = vpack.c.b16 %v1661, %v1653
    %v2446 = vpack.c.b16 %v1662, %v1654
    %v2447 = vpack.c.b16 %v1663, %v1655
    %v2448 = vpack.c.b16 %v1664, %v1656
    %v2449 = vpack.c.b16 %v1665, %v1657
    %v2450 = vpack.c.b16 %v1666, %v1658
    %v2451 = vpack.c.b16 %v1667, %v1659
    %v2452 = vpack.c.b16 %v1668, %v1660
    %v2453 = vpack.c.b16 %v1677, %v1669
    %v2454 = vpack.c.b16 %v1678, %v1670
    %v2455 = vpack.c.b16 %v1679, %v1671
    %v2456 = vpack.c.b16 %v1680, %v1672
    %v2457 = vpack.c.b16 %v1681, %v1673
    %v2458 = vpack.c.b16 %v1682, %v1674
    %v2459 = vpack.c.b16 %v1683, %v1675
    %v2460 = vpack.c.b16 %v1684, %v1676
    %v2461 = vpack.c.b16 %v1693, %v1685
    %v2462 = vpack.c.b16 %v1694, %v1686
    %v2463 = vpack.c.b16 %v1695, %v1687
    %v2464 = vpack.c.b16 %v1696, %v1688
    %v2465 = vpack.c.b16 %v1697, %v1689
    %v2466 = vpack.c.b16 %v1698, %v1690
    %v2467 = vpack.c.b16 %v1699, %v1691
    %v2468 = vpack.c.b16 %v1700, %v1692
    %v2469 = vpack.c.b16 %v1709, %v1701
    %v2470 = vpack.c.b16 %v1710, %v1702
    %v2471 = vpack.c.b16 %v1711, %v1703
    %v2472 = vpack.c.b16 %v1712, %v1704
    %v2473 = vpack.c.b16 %v1713, %v1705
    %v2474 = vpack.c.b16 %v1714, %v1706
    %v2475 = vpack.c.b16 %v1715, %v1707
    %v2476 = vpack.c.b16 %v1716, %v1708
    %v2477 = vpack.c.b16 %v1725, %v1717
    %v2478 = vpack.c.b16 %v1726, %v1718
    %v2479 = vpack.c.b16 %v1727, %v1719
    %v2480 = vpack.c.b16 %v1728, %v1720
    %v2481 = vpack.c.b16 %v1729, %v1721
    %v2482 = vpack.c.b16 %v1730, %v1722
    %v2483 = vpack.c.b16 %v1731, %v1723
    %v2484 = vpack.c.b16 %v1732, %v1724
    %v2485 = vpack.c.b16 %v1741, %v1733
    %v2486 = vpack.c.b16 %v1742, %v1734
    %v2487 = vpack.c.b16 %v1743, %v1735
    %v2488 = vpack.c.b16 %v1744, %v1736
    %v2489 = vpack.c.b16 %v1745, %v1737
    %v2490 = vpack.c.b16 %v1746, %v1738
    %v2491 = vpack.c.b16 %v1747, %v1739
    %v2492 = vpack.c.b16 %v1748, %v1740
    %v2493 = vpack.c.b16 %v1757, %v1749
    %v2494 = vpack.c.b16 %v1758, %v1750
    %v2495 = vpack.c.b16 %v1759, %v1751
    %v2496 = vpack.c.b16 %v1760, %v1752
    %v2497 = vpack.c.b16 %v1761, %v1753
    %v2498 = vpack.c.b16 %v1762, %v1754
    %v2499 = vpack.c.b16 %v1763, %v1755
    %v2500 = vpack.c.b16 %v1764, %v1756
    %v2501 = vpack.c.b16 %v1773, %v1765
    %v2502 = vpack.c.b16 %v1774, %v1766
    %v2503 = vpack.c.b16 %v1775, %v1767
    %v2504 = vpack.c.b16 %v1776, %v1768
    %v2505 = vpack.c.b16 %v1777, %v1769
    %v2506 = vpack.c.b16 %v1778, %v1770
    %v2507 = vpack.c.b16 %v1779, %v1771
    %v2508 = vpack.c.b16 %v1780, %v1772
    %v2509 = vpack.c.b16 %v1789, %v1781
    %v2510 = vpack.c.b16 %v1790, %v1782
    %v2511 = vpack.c.b16 %v1791, %v1783
    %v2512 = vpack.c.b16 %v1792, %v1784
    %v2513 = vpack.c.b16 %v1793, %v1785
    %v2514 = vpack.c.b16 %v1794, %v1786
    %v2515 = vpack.c.b16 %v1795, %v1787
    %v2516 = vpack.c.b16 %v1796, %v1788
    %v2517 = vpack.c.b16 %v1805, %v1797
    %v2518 = vpack.c.b16 %v1806, %v1798
    %v2519 = vpack.c.b16 %v1807, %v1799
    %v2520 = vpack.c.b16 %v1808, %v1800
    %v2521 = vpack.c.b16 %v1809, %v1801
    %v2522 = vpack.c.b16 %v1810, %v1802
    %v2523 = vpack.c.b16 %v1811, %v1803
    %v2524 = vpack.c.b16 %v1812, %v1804
    %v2525 = vpack.c.b16 %v1821, %v1813
    %v2526 = vpack.c.b16 %v1822, %v1814
    %v2527 = vpack.c.b16 %v1823, %v1815
    %v2528 = vpack.c.b16 %v1824, %v1816
    %v2529 = vpack.c.b16 %v1825, %v1817
    %v2530 = vpack.c.b16 %v1826, %v1818
    %v2531 = vpack.c.b16 %v1827, %v1819
    %v2532 = vpack.c.b16 %v1828, %v1820
    %v2533 = vpack.c.b16 %v1837, %v1829
    %v2534 = vpack.c.b16 %v1838, %v1830
    %v2535 = vpack.c.b16 %v1839, %v1831
    %v2536 = vpack.c.b16 %v1840, %v1832
    %v2537 = vpack.c.b16 %v1841, %v1833
    %v2538 = vpack.c.b16 %v1842, %v1834
    %v2539 = vpack.c.b16 %v1843, %v1835
    %v2540 = vpack.c.b16 %v1844, %v1836
    %v2541 = vpack.c.b16 %v1853, %v1845
    %v2542 = vpack.c.b16 %v1854, %v1846
    %v2543 = vpack.c.b16 %v1855, %v1847
    %v2544 = vpack.c.b16 %v1856, %v1848
    %v2545 = vpack.c.b16 %v1857, %v1849
    %v2546 = vpack.c.b16 %v1858, %v1850
    %v2547 = vpack.c.b16 %v1859, %v1851
    %v2548 = vpack.c.b16 %v1860, %v1852
    %v2549 = vpack.c.b16 %v1869, %v1861
    %v2550 = vpack.c.b16 %v1870, %v1862
    %v2551 = vpack.c.b16 %v1871, %v1863
    %v2552 = vpack.c.b16 %v1872, %v1864
    %v2553 = vpack.c.b16 %v1873, %v1865
    %v2554 = vpack.c.b16 %v1874, %v1866
    %v2555 = vpack.c.b16 %v1875, %v1867
    %v2556 = vpack.c.b16 %v1876, %v1868
    %v2557 = vpack.c.b16 %v1885, %v1877
    %v2558 = vpack.c.b16 %v1886, %v1878
    %v2559 = vpack.c.b16 %v1887, %v1879
    %v2560 = vpack.c.b16 %v1888, %v1880
    %v2561 = vpack.c.b16 %v1889, %v1881
    %v2562 = vpack.c.b16 %v1890, %v1882
    %v2563 = vpack.c.b16 %v1891, %v1883
    %v2564 = vpack.c.b16 %v1892, %v1884
    %v2565 = vpack.c.b16 %v1901, %v1893
    %v2566 = vpack.c.b16 %v1902, %v1894
    %v2567 = vpack.c.b16 %v1903, %v1895
    %v2568 = vpack.c.b16 %v1904, %v1896
    %v2569 = vpack.c.b16 %v1905, %v1897
    %v2570 = vpack.c.b16 %v1906, %v1898
    %v2571 = vpack.c.b16 %v1907, %v1899
    %v2572 = vpack.c.b16 %v1908, %v1900
    %v2573 = vpack.c.b16 %v1917, %v1909
    %v2574 = vpack.c.b16 %v1918, %v1910
    %v2575 = vpack.c.b16 %v1919, %v1911
    %v2576 = vpack.c.b16 %v1920, %v1912
    %v2577 = vpack.c.b16 %v1921, %v1913
    %v2578 = vpack.c.b16 %v1922, %v1914
    %v2579 = vpack.c.b16 %v1923, %v1915
    %v2580 = vpack.c.b16 %v1924, %v1916
    %v2581 = vpack.c.b16 %v1933, %v1925
    %v2582 = vpack.c.b16 %v1934, %v1926
    %v2583 = vpack.c.b16 %v1935, %v1927
    %v2584 = vpack.c.b16 %v1936, %v1928
    %v2585 = vpack.c.b16 %v1937, %v1929
    %v2586 = vpack.c.b16 %v1938, %v1930
    %v2587 = vpack.c.b16 %v1939, %v1931
    %v2588 = vpack.c.b16 %v1940, %v1932
    %v2589 = vpack.c.b16 %v1949, %v1941
    %v2590 = vpack.c.b16 %v1950, %v1942
    %v2591 = vpack.c.b16 %v1951, %v1943
    %v2592 = vpack.c.b16 %v1952, %v1944
    %v2593 = vpack.c.b16 %v1953, %v1945
    %v2594 = vpack.c.b16 %v1954, %v1946
    %v2595 = vpack.c.b16 %v1955, %v1947
    %v2596 = vpack.c.b16 %v1956, %v1948
    %v2597 = vpack.c.b16 %v1965, %v1957
    %v2598 = vpack.c.b16 %v1966, %v1958
    %v2599 = vpack.c.b16 %v1967, %v1959
    %v2600 = vpack.c.b16 %v1968, %v1960
    %v2601 = vpack.c.b16 %v1969, %v1961
    %v2602 = vpack.c.b16 %v1970, %v1962
    %v2603 = vpack.c.b16 %v1971, %v1963
    %v2604 = vpack.c.b16 %v1972, %v1964
    %v2605 = vpack.c.b16 %v1981, %v1973
    %v2606 = vpack.c.b16 %v1982, %v1974
    %v2607 = vpack.c.b16 %v1983, %v1975
    %v2608 = vpack.c.b16 %v1984, %v1976
    %v2609 = vpack.c.b16 %v1985, %v1977
    %v2610 = vpack.c.b16 %v1986, %v1978
    %v2611 = vpack.c.b16 %v1987, %v1979
    %v2612 = vpack.c.b16 %v1988, %v1980
    %v2613 = vpack.c.b16 %v1997, %v1989
    %v2614 = vpack.c.b16 %v1998, %v1990
    %v2615 = vpack.c.b16 %v1999, %v1991
    %v2616 = vpack.c.b16 %v2000, %v1992
    %v2617 = vpack.c.b16 %v2001, %v1993
    %v2618 = vpack.c.b16 %v2002, %v1994
    %v2619 = vpack.c.b16 %v2003, %v1995
    %v2620 = vpack.c.b16 %v2004, %v1996
    %v2621 = vpack.c.b16 %v2013, %v2005
    %v2622 = vpack.c.b16 %v2014, %v2006
    %v2623 = vpack.c.b16 %v2015, %v2007
    %v2624 = vpack.c.b16 %v2016, %v2008
    %v2625 = vpack.c.b16 %v2017, %v2009
    %v2626 = vpack.c.b16 %v2018, %v2010
    %v2627 = vpack.c.b16 %v2019, %v2011
    %v2628 = vpack.c.b16 %v2020, %v2012
    %v2629 = vpack.c.b16 %v2029, %v2021
    %v2630 = vpack.c.b16 %v2030, %v2022
    %v2631 = vpack.c.b16 %v2031, %v2023
    %v2632 = vpack.c.b16 %v2032, %v2024
    %v2633 = vpack.c.b16 %v2033, %v2025
    %v2634 = vpack.c.b16 %v2034, %v2026
    %v2635 = vpack.c.b16 %v2035, %v2027
    %v2636 = vpack.c.b16 %v2036, %v2028
    %v2637 = vpack.c.b16 %v2045, %v2037
    %v2638 = vpack.c.b16 %v2046, %v2038
    %v2639 = vpack.c.b16 %v2047, %v2039
    %v2640 = vpack.c.b16 %v2048, %v2040
    %v2641 = vpack.c.b16 %v2049, %v2041
    %v2642 = vpack.c.b16 %v2050, %v2042
    %v2643 = vpack.c.b16 %v2051, %v2043
    %v2644 = vpack.c.b16 %v2052, %v2044
    %v2645 = vpack.c.b16 %v2061, %v2053
    %v2646 = vpack.c.b16 %v2062, %v2054
    %v2647 = vpack.c.b16 %v2063, %v2055
    %v2648 = vpack.c.b16 %v2064, %v2056
    %v2649 = vpack.c.b16 %v2065, %v2057
    %v2650 = vpack.c.b16 %v2066, %v2058
    %v2651 = vpack.c.b16 %v2067, %v2059
    %v2652 = vpack.c.b16 %v2068, %v2060
    %v2653 = vpack.c.b16 %v2077, %v2069
    %v2654 = vpack.c.b16 %v2078, %v2070
    %v2655 = vpack.c.b16 %v2079, %v2071
    %v2656 = vpack.c.b16 %v2080, %v2072
    %v2657 = vpack.c.b16 %v2081, %v2073
    %v2658 = vpack.c.b16 %v2082, %v2074
    %v2659 = vpack.c.b16 %v2083, %v2075
    %v2660 = vpack.c.b16 %v2084, %v2076
    %v2661 = vpack.c.b16 %v2093, %v2085
    %v2662 = vpack.c.b16 %v2094, %v2086
    %v2663 = vpack.c.b16 %v2095, %v2087
    %v2664 = vpack.c.b16 %v2096, %v2088
    %v2665 = vpack.c.b16 %v2097, %v2089
    %v2666 = vpack.c.b16 %v2098, %v2090
    %v2667 = vpack.c.b16 %v2099, %v2091
    %v2668 = vpack.c.b16 %v2100, %v2092
    %v2669 = vpack.c.b16 %v2109, %v2101
    %v2670 = vpack.c.b16 %v2110, %v2102
    %v2671 = vpack.c.b16 %v2111, %v2103
    %v2672 = vpack.c.b16 %v2112, %v2104
    %v2673 = vpack.c.b16 %v2113, %v2105
    %v2674 = vpack.c.b16 %v2114, %v2106
    %v2675 = vpack.c.b16 %v2115, %v2107
    %v2676 = vpack.c.b16 %v2116, %v2108
    %v2677 = vpack.c.b16 %v2125, %v2117
    %v2678 = vpack.c.b16 %v2126, %v2118
    %v2679 = vpack.c.b16 %v2127, %v2119
    %v2680 = vpack.c.b16 %v2128, %v2120
    %v2681 = vpack.c.b16 %v2129, %v2121
    %v2682 = vpack.c.b16 %v2130, %v2122
    %v2683 = vpack.c.b16 %v2131, %v2123
    %v2684 = vpack.c.b16 %v2132, %v2124
    %v2685 = vpack.c.b16 %v2141, %v2133
    %v2686 = vpack.c.b16 %v2142, %v2134
    %v2687 = vpack.c.b16 %v2143, %v2135
    %v2688 = vpack.c.b16 %v2144, %v2136
    %v2689 = vpack.c.b16 %v2145, %v2137
    %v2690 = vpack.c.b16 %v2146, %v2138
    %v2691 = vpack.c.b16 %v2147, %v2139
    %v2692 = vpack.c.b16 %v2148, %v2140
    %v2693 = vpack.c.b16 %v2157, %v2149
    %v2694 = vpack.c.b16 %v2158, %v2150
    %v2695 = vpack.c.b16 %v2159, %v2151
    %v2696 = vpack.c.b16 %v2160, %v2152
    %v2697 = vpack.c.b16 %v2161, %v2153
    %v2698 = vpack.c.b16 %v2162, %v2154
    %v2699 = vpack.c.b16 %v2163, %v2155
    %v2700 = vpack.c.b16 %v2164, %v2156
    %v2701 = vpack.c.b16 %v2173, %v2165
    %v2702 = vpack.c.b16 %v2174, %v2166
    %v2703 = vpack.c.b16 %v2175, %v2167
    %v2704 = vpack.c.b16 %v2176, %v2168
    %v2705 = vpack.c.b16 %v2177, %v2169
    %v2706 = vpack.c.b16 %v2178, %v2170
    %v2707 = vpack.c.b16 %v2179, %v2171
    %v2708 = vpack.c.b16 %v2180, %v2172
    %v2709 = vpack.c.b16 %v2189, %v2181
    %v2710 = vpack.c.b16 %v2190, %v2182
    %v2711 = vpack.c.b16 %v2191, %v2183
    %v2712 = vpack.c.b16 %v2192, %v2184
    %v2713 = vpack.c.b16 %v2193, %v2185
    %v2714 = vpack.c.b16 %v2194, %v2186
    %v2715 = vpack.c.b16 %v2195, %v2187
    %v2716 = vpack.c.b16 %v2196, %v2188
    %v2717 = vpack.c.b16 %v2205, %v2197
    %v2718 = vpack.c.b16 %v2206, %v2198
    %v2719 = vpack.c.b16 %v2207, %v2199
    %v2720 = vpack.c.b16 %v2208, %v2200
    %v2721 = vpack.c.b16 %v2209, %v2201
    %v2722 = vpack.c.b16 %v2210, %v2202
    %v2723 = vpack.c.b16 %v2211, %v2203
    %v2724 = vpack.c.b16 %v2212, %v2204
    %3237 = vmatpush.bf16.msra.mxu0 %v2269
    %3238 = vmatpush.bf16.msra.mxu0 %v2261
    %3239 = vmatpush.bf16.msra.mxu0 %v2253
    %3240 = vmatpush.bf16.msra.mxu0 %v2245
    %3241 = vmatpush.bf16.msra.mxu0 %v2237
    %3242 = vmatpush.bf16.msra.mxu0 %v2229
    %3243 = vmatpush.bf16.msra.mxu0 %v2221
    %3244 = vmatpush.bf16.msra.mxu0 %v2213
    %3245 = vmatmul.bf16.gmra.mxu0 %v139
    %v3246 = vpop.f32.mrf.mxu0
    %v3247 = vadd.f32 %v661, %v3246
    %v3248 = vpop.f32.mrf.mxu0
    %3249 = vdwg.mxu0
    %3250 = vmatpush.bf16.msra.mxu0 %v2333
    %3251 = vmatpush.bf16.msra.mxu0 %v2325
    %3252 = vmatpush.bf16.msra.mxu0 %v2317
    %3253 = vmatpush.bf16.msra.mxu0 %v2309
    %3254 = vmatpush.bf16.msra.mxu0 %v2301
    %3255 = vmatpush.bf16.msra.mxu0 %v2293
    %3256 = vmatpush.bf16.msra.mxu0 %v2285
    %3257 = vmatpush.bf16.msra.mxu0 %v2277
    %3258 = vmatmul.bf16.gmra.mxu0 %v140
    %v3259 = vpop.f32.mrf.mxu0
    %v3260 = vadd.f32 %v3247, %v3259
    %v3261 = vpop.f32.mrf.mxu0
    %3262 = vdwg.mxu0
    %3263 = vmatpush.bf16.msra.mxu0 %v2397
    %3264 = vmatpush.bf16.msra.mxu0 %v2389
    %3265 = vmatpush.bf16.msra.mxu0 %v2381
    %3266 = vmatpush.bf16.msra.mxu0 %v2373
    %3267 = vmatpush.bf16.msra.mxu0 %v2365
    %3268 = vmatpush.bf16.msra.mxu0 %v2357
    %3269 = vmatpush.bf16.msra.mxu0 %v2349
    %3270 = vmatpush.bf16.msra.mxu0 %v2341
    %3271 = vmatmul.bf16.gmra.mxu0 %v141
    %v3272 = vpop.f32.mrf.mxu0
    %v3273 = vadd.f32 %v3260, %v3272
    %v3274 = vpop.f32.mrf.mxu0
    %3275 = vdwg.mxu0
    %3276 = vmatpush.bf16.msra.mxu0 %v2461
    %3277 = vmatpush.bf16.msra.mxu0 %v2453
    %3278 = vmatpush.bf16.msra.mxu0 %v2445
    %3279 = vmatpush.bf16.msra.mxu0 %v2437
    %3280 = vmatpush.bf16.msra.mxu0 %v2429
    %3281 = vmatpush.bf16.msra.mxu0 %v2421
    %3282 = vmatpush.bf16.msra.mxu0 %v2413
    %3283 = vmatpush.bf16.msra.mxu0 %v2405
    %3284 = vmatmul.bf16.gmra.mxu0 %v142
    %v3285 = vpop.f32.mrf.mxu0
    %v3286 = vadd.f32 %v3273, %v3285
    %v3287 = vpop.f32.mrf.mxu0
    %3288 = vdwg.mxu0
    %3289 = vmatpush.bf16.msra.mxu0 %v2525
    %3290 = vmatpush.bf16.msra.mxu0 %v2517
    %3291 = vmatpush.bf16.msra.mxu0 %v2509
    %3292 = vmatpush.bf16.msra.mxu0 %v2501
    %3293 = vmatpush.bf16.msra.mxu0 %v2493
    %3294 = vmatpush.bf16.msra.mxu0 %v2485
    %3295 = vmatpush.bf16.msra.mxu0 %v2477
    %3296 = vmatpush.bf16.msra.mxu0 %v2469
    %3297 = vmatmul.bf16.gmra.mxu0 %v143
    %v3298 = vpop.f32.mrf.mxu0
    %v3299 = vadd.f32 %v3286, %v3298
    %v3300 = vpop.f32.mrf.mxu0
    %3301 = vdwg.mxu0
    %3302 = vmatpush.bf16.msra.mxu0 %v2589
    %3303 = vmatpush.bf16.msra.mxu0 %v2581
    %3304 = vmatpush.bf16.msra.mxu0 %v2573
    %3305 = vmatpush.bf16.msra.mxu0 %v2565
    %3306 = vmatpush.bf16.msra.mxu0 %v2557
    %3307 = vmatpush.bf16.msra.mxu0 %v2549
    %3308 = vmatpush.bf16.msra.mxu0 %v2541
    %3309 = vmatpush.bf16.msra.mxu0 %v2533
    %3310 = vmatmul.bf16.gmra.mxu0 %v144
    %v3311 = vpop.f32.mrf.mxu0
    %v3312 = vadd.f32 %v3299, %v3311
    %v3313 = vpop.f32.mrf.mxu0
    %3314 = vdwg.mxu0
    %3315 = vmatpush.bf16.msra.mxu0 %v2653
    %3316 = vmatpush.bf16.msra.mxu0 %v2645
    %3317 = vmatpush.bf16.msra.mxu0 %v2637
    %3318 = vmatpush.bf16.msra.mxu0 %v2629
    %3319 = vmatpush.bf16.msra.mxu0 %v2621
    %3320 = vmatpush.bf16.msra.mxu0 %v2613
    %3321 = vmatpush.bf16.msra.mxu0 %v2605
    %3322 = vmatpush.bf16.msra.mxu0 %v2597
    %3323 = vmatmul.bf16.gmra.mxu0 %v145
    %v3324 = vpop.f32.mrf.mxu0
    %v3325 = vadd.f32 %v3312, %v3324
    %v3326 = vpop.f32.mrf.mxu0
    %3327 = vdwg.mxu0
    %3328 = vmatpush.bf16.msra.mxu0 %v2717
    %3329 = vmatpush.bf16.msra.mxu0 %v2709
    %3330 = vmatpush.bf16.msra.mxu0 %v2701
    %3331 = vmatpush.bf16.msra.mxu0 %v2693
    %3332 = vmatpush.bf16.msra.mxu0 %v2685
    %3333 = vmatpush.bf16.msra.mxu0 %v2677
    %3334 = vmatpush.bf16.msra.mxu0 %v2669
    %3335 = vmatpush.bf16.msra.mxu0 %v2661
    %3336 = vmatmul.bf16.gmra.mxu0 %v146
    %v3337 = vpop.f32.mrf.mxu0
    %v3338 = vadd.f32 %v3325, %v3337
    %v3339 = vpop.f32.mrf.mxu0
    %3340 = vdwg.mxu0
    %3341 = vmatpush.bf16.msra.mxu0 %v2270
    %3342 = vmatpush.bf16.msra.mxu0 %v2262
    %3343 = vmatpush.bf16.msra.mxu0 %v2254
    %3344 = vmatpush.bf16.msra.mxu0 %v2246
    %3345 = vmatpush.bf16.msra.mxu0 %v2238
    %3346 = vmatpush.bf16.msra.mxu0 %v2230
    %3347 = vmatpush.bf16.msra.mxu0 %v2222
    %3348 = vmatpush.bf16.msra.mxu0 %v2214
    %3349 = vmatmul.bf16.gmra.mxu0 %v139
    %v3350 = vpop.f32.mrf.mxu0
    %v3351 = vadd.f32 %v662, %v3350
    %v3352 = vpop.f32.mrf.mxu0
    %3353 = vdwg.mxu0
    %3354 = vmatpush.bf16.msra.mxu0 %v2334
    %3355 = vmatpush.bf16.msra.mxu0 %v2326
    %3356 = vmatpush.bf16.msra.mxu0 %v2318
    %3357 = vmatpush.bf16.msra.mxu0 %v2310
    %3358 = vmatpush.bf16.msra.mxu0 %v2302
    %3359 = vmatpush.bf16.msra.mxu0 %v2294
    %3360 = vmatpush.bf16.msra.mxu0 %v2286
    %3361 = vmatpush.bf16.msra.mxu0 %v2278
    %3362 = vmatmul.bf16.gmra.mxu0 %v140
    %v3363 = vpop.f32.mrf.mxu0
    %v3364 = vadd.f32 %v3351, %v3363
    %v3365 = vpop.f32.mrf.mxu0
    %3366 = vdwg.mxu0
    %3367 = vmatpush.bf16.msra.mxu0 %v2398
    %3368 = vmatpush.bf16.msra.mxu0 %v2390
    %3369 = vmatpush.bf16.msra.mxu0 %v2382
    %3370 = vmatpush.bf16.msra.mxu0 %v2374
    %3371 = vmatpush.bf16.msra.mxu0 %v2366
    %3372 = vmatpush.bf16.msra.mxu0 %v2358
    %3373 = vmatpush.bf16.msra.mxu0 %v2350
    %3374 = vmatpush.bf16.msra.mxu0 %v2342
    %3375 = vmatmul.bf16.gmra.mxu0 %v141
    %v3376 = vpop.f32.mrf.mxu0
    %v3377 = vadd.f32 %v3364, %v3376
    %v3378 = vpop.f32.mrf.mxu0
    %3379 = vdwg.mxu0
    %3380 = vmatpush.bf16.msra.mxu0 %v2462
    %3381 = vmatpush.bf16.msra.mxu0 %v2454
    %3382 = vmatpush.bf16.msra.mxu0 %v2446
    %3383 = vmatpush.bf16.msra.mxu0 %v2438
    %3384 = vmatpush.bf16.msra.mxu0 %v2430
    %3385 = vmatpush.bf16.msra.mxu0 %v2422
    %3386 = vmatpush.bf16.msra.mxu0 %v2414
    %3387 = vmatpush.bf16.msra.mxu0 %v2406
    %3388 = vmatmul.bf16.gmra.mxu0 %v142
    %v3389 = vpop.f32.mrf.mxu0
    %v3390 = vadd.f32 %v3377, %v3389
    %v3391 = vpop.f32.mrf.mxu0
    %3392 = vdwg.mxu0
    %3393 = vmatpush.bf16.msra.mxu0 %v2526
    %3394 = vmatpush.bf16.msra.mxu0 %v2518
    %3395 = vmatpush.bf16.msra.mxu0 %v2510
    %3396 = vmatpush.bf16.msra.mxu0 %v2502
    %3397 = vmatpush.bf16.msra.mxu0 %v2494
    %3398 = vmatpush.bf16.msra.mxu0 %v2486
    %3399 = vmatpush.bf16.msra.mxu0 %v2478
    %3400 = vmatpush.bf16.msra.mxu0 %v2470
    %3401 = vmatmul.bf16.gmra.mxu0 %v143
    %v3402 = vpop.f32.mrf.mxu0
    %v3403 = vadd.f32 %v3390, %v3402
    %v3404 = vpop.f32.mrf.mxu0
    %3405 = vdwg.mxu0
    %3406 = vmatpush.bf16.msra.mxu0 %v2590
    %3407 = vmatpush.bf16.msra.mxu0 %v2582
    %3408 = vmatpush.bf16.msra.mxu0 %v2574
    %3409 = vmatpush.bf16.msra.mxu0 %v2566
    %3410 = vmatpush.bf16.msra.mxu0 %v2558
    %3411 = vmatpush.bf16.msra.mxu0 %v2550
    %3412 = vmatpush.bf16.msra.mxu0 %v2542
    %3413 = vmatpush.bf16.msra.mxu0 %v2534
    %3414 = vmatmul.bf16.gmra.mxu0 %v144
    %v3415 = vpop.f32.mrf.mxu0
    %v3416 = vadd.f32 %v3403, %v3415
    %v3417 = vpop.f32.mrf.mxu0
    %3418 = vdwg.mxu0
    %3419 = vmatpush.bf16.msra.mxu0 %v2654
    %3420 = vmatpush.bf16.msra.mxu0 %v2646
    %3421 = vmatpush.bf16.msra.mxu0 %v2638
    %3422 = vmatpush.bf16.msra.mxu0 %v2630
    %3423 = vmatpush.bf16.msra.mxu0 %v2622
    %3424 = vmatpush.bf16.msra.mxu0 %v2614
    %3425 = vmatpush.bf16.msra.mxu0 %v2606
    %3426 = vmatpush.bf16.msra.mxu0 %v2598
    %3427 = vmatmul.bf16.gmra.mxu0 %v145
    %v3428 = vpop.f32.mrf.mxu0
    %v3429 = vadd.f32 %v3416, %v3428
    %v3430 = vpop.f32.mrf.mxu0
    %3431 = vdwg.mxu0
    %3432 = vmatpush.bf16.msra.mxu0 %v2718
    %3433 = vmatpush.bf16.msra.mxu0 %v2710
    %3434 = vmatpush.bf16.msra.mxu0 %v2702
    %3435 = vmatpush.bf16.msra.mxu0 %v2694
    %3436 = vmatpush.bf16.msra.mxu0 %v2686
    %3437 = vmatpush.bf16.msra.mxu0 %v2678
    %3438 = vmatpush.bf16.msra.mxu0 %v2670
    %3439 = vmatpush.bf16.msra.mxu0 %v2662
    %3440 = vmatmul.bf16.gmra.mxu0 %v146
    %v3441 = vpop.f32.mrf.mxu0
    %v3442 = vadd.f32 %v3429, %v3441
    %v3443 = vpop.f32.mrf.mxu0
    %3444 = vdwg.mxu0
    %3445 = vmatpush.bf16.msra.mxu0 %v2271
    %3446 = vmatpush.bf16.msra.mxu0 %v2263
    %3447 = vmatpush.bf16.msra.mxu0 %v2255
    %3448 = vmatpush.bf16.msra.mxu0 %v2247
    %3449 = vmatpush.bf16.msra.mxu0 %v2239
    %3450 = vmatpush.bf16.msra.mxu0 %v2231
    %3451 = vmatpush.bf16.msra.mxu0 %v2223
    %3452 = vmatpush.bf16.msra.mxu0 %v2215
    %3453 = vmatmul.bf16.gmra.mxu0 %v139
    %v3454 = vpop.f32.mrf.mxu0
    %v3455 = vadd.f32 %v663, %v3454
    %v3456 = vpop.f32.mrf.mxu0
    %3457 = vdwg.mxu0
    %3458 = vmatpush.bf16.msra.mxu0 %v2335
    %3459 = vmatpush.bf16.msra.mxu0 %v2327
    %3460 = vmatpush.bf16.msra.mxu0 %v2319
    %3461 = vmatpush.bf16.msra.mxu0 %v2311
    %3462 = vmatpush.bf16.msra.mxu0 %v2303
    %3463 = vmatpush.bf16.msra.mxu0 %v2295
    %3464 = vmatpush.bf16.msra.mxu0 %v2287
    %3465 = vmatpush.bf16.msra.mxu0 %v2279
    %3466 = vmatmul.bf16.gmra.mxu0 %v140
    %v3467 = vpop.f32.mrf.mxu0
    %v3468 = vadd.f32 %v3455, %v3467
    %v3469 = vpop.f32.mrf.mxu0
    %3470 = vdwg.mxu0
    %3471 = vmatpush.bf16.msra.mxu0 %v2399
    %3472 = vmatpush.bf16.msra.mxu0 %v2391
    %3473 = vmatpush.bf16.msra.mxu0 %v2383
    %3474 = vmatpush.bf16.msra.mxu0 %v2375
    %3475 = vmatpush.bf16.msra.mxu0 %v2367
    %3476 = vmatpush.bf16.msra.mxu0 %v2359
    %3477 = vmatpush.bf16.msra.mxu0 %v2351
    %3478 = vmatpush.bf16.msra.mxu0 %v2343
    %3479 = vmatmul.bf16.gmra.mxu0 %v141
    %v3480 = vpop.f32.mrf.mxu0
    %v3481 = vadd.f32 %v3468, %v3480
    %v3482 = vpop.f32.mrf.mxu0
    %3483 = vdwg.mxu0
    %3484 = vmatpush.bf16.msra.mxu0 %v2463
    %3485 = vmatpush.bf16.msra.mxu0 %v2455
    %3486 = vmatpush.bf16.msra.mxu0 %v2447
    %3487 = vmatpush.bf16.msra.mxu0 %v2439
    %3488 = vmatpush.bf16.msra.mxu0 %v2431
    %3489 = vmatpush.bf16.msra.mxu0 %v2423
    %3490 = vmatpush.bf16.msra.mxu0 %v2415
    %3491 = vmatpush.bf16.msra.mxu0 %v2407
    %3492 = vmatmul.bf16.gmra.mxu0 %v142
    %v3493 = vpop.f32.mrf.mxu0
    %v3494 = vadd.f32 %v3481, %v3493
    %v3495 = vpop.f32.mrf.mxu0
    %3496 = vdwg.mxu0
    %3497 = vmatpush.bf16.msra.mxu0 %v2527
    %3498 = vmatpush.bf16.msra.mxu0 %v2519
    %3499 = vmatpush.bf16.msra.mxu0 %v2511
    %3500 = vmatpush.bf16.msra.mxu0 %v2503
    %3501 = vmatpush.bf16.msra.mxu0 %v2495
    %3502 = vmatpush.bf16.msra.mxu0 %v2487
    %3503 = vmatpush.bf16.msra.mxu0 %v2479
    %3504 = vmatpush.bf16.msra.mxu0 %v2471
    %3505 = vmatmul.bf16.gmra.mxu0 %v143
    %v3506 = vpop.f32.mrf.mxu0
    %v3507 = vadd.f32 %v3494, %v3506
    %v3508 = vpop.f32.mrf.mxu0
    %3509 = vdwg.mxu0
    %3510 = vmatpush.bf16.msra.mxu0 %v2591
    %3511 = vmatpush.bf16.msra.mxu0 %v2583
    %3512 = vmatpush.bf16.msra.mxu0 %v2575
    %3513 = vmatpush.bf16.msra.mxu0 %v2567
    %3514 = vmatpush.bf16.msra.mxu0 %v2559
    %3515 = vmatpush.bf16.msra.mxu0 %v2551
    %3516 = vmatpush.bf16.msra.mxu0 %v2543
    %3517 = vmatpush.bf16.msra.mxu0 %v2535
    %3518 = vmatmul.bf16.gmra.mxu0 %v144
    %v3519 = vpop.f32.mrf.mxu0
    %v3520 = vadd.f32 %v3507, %v3519
    %v3521 = vpop.f32.mrf.mxu0
    %3522 = vdwg.mxu0
    %3523 = vmatpush.bf16.msra.mxu0 %v2655
    %3524 = vmatpush.bf16.msra.mxu0 %v2647
    %3525 = vmatpush.bf16.msra.mxu0 %v2639
    %3526 = vmatpush.bf16.msra.mxu0 %v2631
    %3527 = vmatpush.bf16.msra.mxu0 %v2623
    %3528 = vmatpush.bf16.msra.mxu0 %v2615
    %3529 = vmatpush.bf16.msra.mxu0 %v2607
    %3530 = vmatpush.bf16.msra.mxu0 %v2599
    %3531 = vmatmul.bf16.gmra.mxu0 %v145
    %v3532 = vpop.f32.mrf.mxu0
    %v3533 = vadd.f32 %v3520, %v3532
    %v3534 = vpop.f32.mrf.mxu0
    %3535 = vdwg.mxu0
    %3536 = vmatpush.bf16.msra.mxu0 %v2719
    %3537 = vmatpush.bf16.msra.mxu0 %v2711
    %3538 = vmatpush.bf16.msra.mxu0 %v2703
    %3539 = vmatpush.bf16.msra.mxu0 %v2695
    %3540 = vmatpush.bf16.msra.mxu0 %v2687
    %3541 = vmatpush.bf16.msra.mxu0 %v2679
    %3542 = vmatpush.bf16.msra.mxu0 %v2671
    %3543 = vmatpush.bf16.msra.mxu0 %v2663
    %3544 = vmatmul.bf16.gmra.mxu0 %v146
    %v3545 = vpop.f32.mrf.mxu0
    %v3546 = vadd.f32 %v3533, %v3545
    %v3547 = vpop.f32.mrf.mxu0
    %3548 = vdwg.mxu0
    %3549 = vmatpush.bf16.msra.mxu0 %v2272
    %3550 = vmatpush.bf16.msra.mxu0 %v2264
    %3551 = vmatpush.bf16.msra.mxu0 %v2256
    %3552 = vmatpush.bf16.msra.mxu0 %v2248
    %3553 = vmatpush.bf16.msra.mxu0 %v2240
    %3554 = vmatpush.bf16.msra.mxu0 %v2232
    %3555 = vmatpush.bf16.msra.mxu0 %v2224
    %3556 = vmatpush.bf16.msra.mxu0 %v2216
    %3557 = vmatmul.bf16.gmra.mxu0 %v139
    %v3558 = vpop.f32.mrf.mxu0
    %v3559 = vadd.f32 %v664, %v3558
    %v3560 = vpop.f32.mrf.mxu0
    %3561 = vdwg.mxu0
    %3562 = vmatpush.bf16.msra.mxu0 %v2336
    %3563 = vmatpush.bf16.msra.mxu0 %v2328
    %3564 = vmatpush.bf16.msra.mxu0 %v2320
    %3565 = vmatpush.bf16.msra.mxu0 %v2312
    %3566 = vmatpush.bf16.msra.mxu0 %v2304
    %3567 = vmatpush.bf16.msra.mxu0 %v2296
    %3568 = vmatpush.bf16.msra.mxu0 %v2288
    %3569 = vmatpush.bf16.msra.mxu0 %v2280
    %3570 = vmatmul.bf16.gmra.mxu0 %v140
    %v3571 = vpop.f32.mrf.mxu0
    %v3572 = vadd.f32 %v3559, %v3571
    %v3573 = vpop.f32.mrf.mxu0
    %3574 = vdwg.mxu0
    %3575 = vmatpush.bf16.msra.mxu0 %v2400
    %3576 = vmatpush.bf16.msra.mxu0 %v2392
    %3577 = vmatpush.bf16.msra.mxu0 %v2384
    %3578 = vmatpush.bf16.msra.mxu0 %v2376
    %3579 = vmatpush.bf16.msra.mxu0 %v2368
    %3580 = vmatpush.bf16.msra.mxu0 %v2360
    %3581 = vmatpush.bf16.msra.mxu0 %v2352
    %3582 = vmatpush.bf16.msra.mxu0 %v2344
    %3583 = vmatmul.bf16.gmra.mxu0 %v141
    %v3584 = vpop.f32.mrf.mxu0
    %v3585 = vadd.f32 %v3572, %v3584
    %v3586 = vpop.f32.mrf.mxu0
    %3587 = vdwg.mxu0
    %3588 = vmatpush.bf16.msra.mxu0 %v2464
    %3589 = vmatpush.bf16.msra.mxu0 %v2456
    %3590 = vmatpush.bf16.msra.mxu0 %v2448
    %3591 = vmatpush.bf16.msra.mxu0 %v2440
    %3592 = vmatpush.bf16.msra.mxu0 %v2432
    %3593 = vmatpush.bf16.msra.mxu0 %v2424
    %3594 = vmatpush.bf16.msra.mxu0 %v2416
    %3595 = vmatpush.bf16.msra.mxu0 %v2408
    %3596 = vmatmul.bf16.gmra.mxu0 %v142
    %v3597 = vpop.f32.mrf.mxu0
    %v3598 = vadd.f32 %v3585, %v3597
    %v3599 = vpop.f32.mrf.mxu0
    %3600 = vdwg.mxu0
    %3601 = vmatpush.bf16.msra.mxu0 %v2528
    %3602 = vmatpush.bf16.msra.mxu0 %v2520
    %3603 = vmatpush.bf16.msra.mxu0 %v2512
    %3604 = vmatpush.bf16.msra.mxu0 %v2504
    %3605 = vmatpush.bf16.msra.mxu0 %v2496
    %3606 = vmatpush.bf16.msra.mxu0 %v2488
    %3607 = vmatpush.bf16.msra.mxu0 %v2480
    %3608 = vmatpush.bf16.msra.mxu0 %v2472
    %3609 = vmatmul.bf16.gmra.mxu0 %v143
    %v3610 = vpop.f32.mrf.mxu0
    %v3611 = vadd.f32 %v3598, %v3610
    %v3612 = vpop.f32.mrf.mxu0
    %3613 = vdwg.mxu0
    %3614 = vmatpush.bf16.msra.mxu0 %v2592
    %3615 = vmatpush.bf16.msra.mxu0 %v2584
    %3616 = vmatpush.bf16.msra.mxu0 %v2576
    %3617 = vmatpush.bf16.msra.mxu0 %v2568
    %3618 = vmatpush.bf16.msra.mxu0 %v2560
    %3619 = vmatpush.bf16.msra.mxu0 %v2552
    %3620 = vmatpush.bf16.msra.mxu0 %v2544
    %3621 = vmatpush.bf16.msra.mxu0 %v2536
    %3622 = vmatmul.bf16.gmra.mxu0 %v144
    %v3623 = vpop.f32.mrf.mxu0
    %v3624 = vadd.f32 %v3611, %v3623
    %v3625 = vpop.f32.mrf.mxu0
    %3626 = vdwg.mxu0
    %3627 = vmatpush.bf16.msra.mxu0 %v2656
    %3628 = vmatpush.bf16.msra.mxu0 %v2648
    %3629 = vmatpush.bf16.msra.mxu0 %v2640
    %3630 = vmatpush.bf16.msra.mxu0 %v2632
    %3631 = vmatpush.bf16.msra.mxu0 %v2624
    %3632 = vmatpush.bf16.msra.mxu0 %v2616
    %3633 = vmatpush.bf16.msra.mxu0 %v2608
    %3634 = vmatpush.bf16.msra.mxu0 %v2600
    %3635 = vmatmul.bf16.gmra.mxu0 %v145
    %v3636 = vpop.f32.mrf.mxu0
    %v3637 = vadd.f32 %v3624, %v3636
    %v3638 = vpop.f32.mrf.mxu0
    %3639 = vdwg.mxu0
    %3640 = vmatpush.bf16.msra.mxu0 %v2720
    %3641 = vmatpush.bf16.msra.mxu0 %v2712
    %3642 = vmatpush.bf16.msra.mxu0 %v2704
    %3643 = vmatpush.bf16.msra.mxu0 %v2696
    %3644 = vmatpush.bf16.msra.mxu0 %v2688
    %3645 = vmatpush.bf16.msra.mxu0 %v2680
    %3646 = vmatpush.bf16.msra.mxu0 %v2672
    %3647 = vmatpush.bf16.msra.mxu0 %v2664
    %3648 = vmatmul.bf16.gmra.mxu0 %v146
    %v3649 = vpop.f32.mrf.mxu0
    %v3650 = vadd.f32 %v3637, %v3649
    %v3651 = vpop.f32.mrf.mxu0
    %3652 = vdwg.mxu0
    %3653 = vmatpush.bf16.msra.mxu0 %v2273
    %3654 = vmatpush.bf16.msra.mxu0 %v2265
    %3655 = vmatpush.bf16.msra.mxu0 %v2257
    %3656 = vmatpush.bf16.msra.mxu0 %v2249
    %3657 = vmatpush.bf16.msra.mxu0 %v2241
    %3658 = vmatpush.bf16.msra.mxu0 %v2233
    %3659 = vmatpush.bf16.msra.mxu0 %v2225
    %3660 = vmatpush.bf16.msra.mxu0 %v2217
    %3661 = vmatmul.bf16.gmra.mxu0 %v139
    %v3662 = vpop.f32.mrf.mxu0
    %v3663 = vadd.f32 %v665, %v3662
    %v3664 = vpop.f32.mrf.mxu0
    %3665 = vdwg.mxu0
    %3666 = vmatpush.bf16.msra.mxu0 %v2337
    %3667 = vmatpush.bf16.msra.mxu0 %v2329
    %3668 = vmatpush.bf16.msra.mxu0 %v2321
    %3669 = vmatpush.bf16.msra.mxu0 %v2313
    %3670 = vmatpush.bf16.msra.mxu0 %v2305
    %3671 = vmatpush.bf16.msra.mxu0 %v2297
    %3672 = vmatpush.bf16.msra.mxu0 %v2289
    %3673 = vmatpush.bf16.msra.mxu0 %v2281
    %3674 = vmatmul.bf16.gmra.mxu0 %v140
    %v3675 = vpop.f32.mrf.mxu0
    %v3676 = vadd.f32 %v3663, %v3675
    %v3677 = vpop.f32.mrf.mxu0
    %3678 = vdwg.mxu0
    %3679 = vmatpush.bf16.msra.mxu0 %v2401
    %3680 = vmatpush.bf16.msra.mxu0 %v2393
    %3681 = vmatpush.bf16.msra.mxu0 %v2385
    %3682 = vmatpush.bf16.msra.mxu0 %v2377
    %3683 = vmatpush.bf16.msra.mxu0 %v2369
    %3684 = vmatpush.bf16.msra.mxu0 %v2361
    %3685 = vmatpush.bf16.msra.mxu0 %v2353
    %3686 = vmatpush.bf16.msra.mxu0 %v2345
    %3687 = vmatmul.bf16.gmra.mxu0 %v141
    %v3688 = vpop.f32.mrf.mxu0
    %v3689 = vadd.f32 %v3676, %v3688
    %v3690 = vpop.f32.mrf.mxu0
    %3691 = vdwg.mxu0
    %3692 = vmatpush.bf16.msra.mxu0 %v2465
    %3693 = vmatpush.bf16.msra.mxu0 %v2457
    %3694 = vmatpush.bf16.msra.mxu0 %v2449
    %3695 = vmatpush.bf16.msra.mxu0 %v2441
    %3696 = vmatpush.bf16.msra.mxu0 %v2433
    %3697 = vmatpush.bf16.msra.mxu0 %v2425
    %3698 = vmatpush.bf16.msra.mxu0 %v2417
    %3699 = vmatpush.bf16.msra.mxu0 %v2409
    %3700 = vmatmul.bf16.gmra.mxu0 %v142
    %v3701 = vpop.f32.mrf.mxu0
    %v3702 = vadd.f32 %v3689, %v3701
    %v3703 = vpop.f32.mrf.mxu0
    %3704 = vdwg.mxu0
    %3705 = vmatpush.bf16.msra.mxu0 %v2529
    %3706 = vmatpush.bf16.msra.mxu0 %v2521
    %3707 = vmatpush.bf16.msra.mxu0 %v2513
    %3708 = vmatpush.bf16.msra.mxu0 %v2505
    %3709 = vmatpush.bf16.msra.mxu0 %v2497
    %3710 = vmatpush.bf16.msra.mxu0 %v2489
    %3711 = vmatpush.bf16.msra.mxu0 %v2481
    %3712 = vmatpush.bf16.msra.mxu0 %v2473
    %3713 = vmatmul.bf16.gmra.mxu0 %v143
    %v3714 = vpop.f32.mrf.mxu0
    %v3715 = vadd.f32 %v3702, %v3714
    %v3716 = vpop.f32.mrf.mxu0
    %3717 = vdwg.mxu0
    %3718 = vmatpush.bf16.msra.mxu0 %v2593
    %3719 = vmatpush.bf16.msra.mxu0 %v2585
    %3720 = vmatpush.bf16.msra.mxu0 %v2577
    %3721 = vmatpush.bf16.msra.mxu0 %v2569
    %3722 = vmatpush.bf16.msra.mxu0 %v2561
    %3723 = vmatpush.bf16.msra.mxu0 %v2553
    %3724 = vmatpush.bf16.msra.mxu0 %v2545
    %3725 = vmatpush.bf16.msra.mxu0 %v2537
    %3726 = vmatmul.bf16.gmra.mxu0 %v144
    %v3727 = vpop.f32.mrf.mxu0
    %v3728 = vadd.f32 %v3715, %v3727
    %v3729 = vpop.f32.mrf.mxu0
    %3730 = vdwg.mxu0
    %3731 = vmatpush.bf16.msra.mxu0 %v2657
    %3732 = vmatpush.bf16.msra.mxu0 %v2649
    %3733 = vmatpush.bf16.msra.mxu0 %v2641
    %3734 = vmatpush.bf16.msra.mxu0 %v2633
    %3735 = vmatpush.bf16.msra.mxu0 %v2625
    %3736 = vmatpush.bf16.msra.mxu0 %v2617
    %3737 = vmatpush.bf16.msra.mxu0 %v2609
    %3738 = vmatpush.bf16.msra.mxu0 %v2601
    %3739 = vmatmul.bf16.gmra.mxu0 %v145
    %v3740 = vpop.f32.mrf.mxu0
    %v3741 = vadd.f32 %v3728, %v3740
    %v3742 = vpop.f32.mrf.mxu0
    %3743 = vdwg.mxu0
    %3744 = vmatpush.bf16.msra.mxu0 %v2721
    %3745 = vmatpush.bf16.msra.mxu0 %v2713
    %3746 = vmatpush.bf16.msra.mxu0 %v2705
    %3747 = vmatpush.bf16.msra.mxu0 %v2697
    %3748 = vmatpush.bf16.msra.mxu0 %v2689
    %3749 = vmatpush.bf16.msra.mxu0 %v2681
    %3750 = vmatpush.bf16.msra.mxu0 %v2673
    %3751 = vmatpush.bf16.msra.mxu0 %v2665
    %3752 = vmatmul.bf16.gmra.mxu0 %v146
    %v3753 = vpop.f32.mrf.mxu0
    %v3754 = vadd.f32 %v3741, %v3753
    %v3755 = vpop.f32.mrf.mxu0
    %3756 = vdwg.mxu0
    %3757 = vmatpush.bf16.msra.mxu0 %v2274
    %3758 = vmatpush.bf16.msra.mxu0 %v2266
    %3759 = vmatpush.bf16.msra.mxu0 %v2258
    %3760 = vmatpush.bf16.msra.mxu0 %v2250
    %3761 = vmatpush.bf16.msra.mxu0 %v2242
    %3762 = vmatpush.bf16.msra.mxu0 %v2234
    %3763 = vmatpush.bf16.msra.mxu0 %v2226
    %3764 = vmatpush.bf16.msra.mxu0 %v2218
    %3765 = vmatmul.bf16.gmra.mxu0 %v139
    %v3766 = vpop.f32.mrf.mxu0
    %v3767 = vadd.f32 %v666, %v3766
    %v3768 = vpop.f32.mrf.mxu0
    %3769 = vdwg.mxu0
    %3770 = vmatpush.bf16.msra.mxu0 %v2338
    %3771 = vmatpush.bf16.msra.mxu0 %v2330
    %3772 = vmatpush.bf16.msra.mxu0 %v2322
    %3773 = vmatpush.bf16.msra.mxu0 %v2314
    %3774 = vmatpush.bf16.msra.mxu0 %v2306
    %3775 = vmatpush.bf16.msra.mxu0 %v2298
    %3776 = vmatpush.bf16.msra.mxu0 %v2290
    %3777 = vmatpush.bf16.msra.mxu0 %v2282
    %3778 = vmatmul.bf16.gmra.mxu0 %v140
    %v3779 = vpop.f32.mrf.mxu0
    %v3780 = vadd.f32 %v3767, %v3779
    %v3781 = vpop.f32.mrf.mxu0
    %3782 = vdwg.mxu0
    %3783 = vmatpush.bf16.msra.mxu0 %v2402
    %3784 = vmatpush.bf16.msra.mxu0 %v2394
    %3785 = vmatpush.bf16.msra.mxu0 %v2386
    %3786 = vmatpush.bf16.msra.mxu0 %v2378
    %3787 = vmatpush.bf16.msra.mxu0 %v2370
    %3788 = vmatpush.bf16.msra.mxu0 %v2362
    %3789 = vmatpush.bf16.msra.mxu0 %v2354
    %3790 = vmatpush.bf16.msra.mxu0 %v2346
    %3791 = vmatmul.bf16.gmra.mxu0 %v141
    %v3792 = vpop.f32.mrf.mxu0
    %v3793 = vadd.f32 %v3780, %v3792
    %v3794 = vpop.f32.mrf.mxu0
    %3795 = vdwg.mxu0
    %3796 = vmatpush.bf16.msra.mxu0 %v2466
    %3797 = vmatpush.bf16.msra.mxu0 %v2458
    %3798 = vmatpush.bf16.msra.mxu0 %v2450
    %3799 = vmatpush.bf16.msra.mxu0 %v2442
    %3800 = vmatpush.bf16.msra.mxu0 %v2434
    %3801 = vmatpush.bf16.msra.mxu0 %v2426
    %3802 = vmatpush.bf16.msra.mxu0 %v2418
    %3803 = vmatpush.bf16.msra.mxu0 %v2410
    %3804 = vmatmul.bf16.gmra.mxu0 %v142
    %v3805 = vpop.f32.mrf.mxu0
    %v3806 = vadd.f32 %v3793, %v3805
    %v3807 = vpop.f32.mrf.mxu0
    %3808 = vdwg.mxu0
    %3809 = vmatpush.bf16.msra.mxu0 %v2530
    %3810 = vmatpush.bf16.msra.mxu0 %v2522
    %3811 = vmatpush.bf16.msra.mxu0 %v2514
    %3812 = vmatpush.bf16.msra.mxu0 %v2506
    %3813 = vmatpush.bf16.msra.mxu0 %v2498
    %3814 = vmatpush.bf16.msra.mxu0 %v2490
    %3815 = vmatpush.bf16.msra.mxu0 %v2482
    %3816 = vmatpush.bf16.msra.mxu0 %v2474
    %3817 = vmatmul.bf16.gmra.mxu0 %v143
    %v3818 = vpop.f32.mrf.mxu0
    %v3819 = vadd.f32 %v3806, %v3818
    %v3820 = vpop.f32.mrf.mxu0
    %3821 = vdwg.mxu0
    %3822 = vmatpush.bf16.msra.mxu0 %v2594
    %3823 = vmatpush.bf16.msra.mxu0 %v2586
    %3824 = vmatpush.bf16.msra.mxu0 %v2578
    %3825 = vmatpush.bf16.msra.mxu0 %v2570
    %3826 = vmatpush.bf16.msra.mxu0 %v2562
    %3827 = vmatpush.bf16.msra.mxu0 %v2554
    %3828 = vmatpush.bf16.msra.mxu0 %v2546
    %3829 = vmatpush.bf16.msra.mxu0 %v2538
    %3830 = vmatmul.bf16.gmra.mxu0 %v144
    %v3831 = vpop.f32.mrf.mxu0
    %v3832 = vadd.f32 %v3819, %v3831
    %v3833 = vpop.f32.mrf.mxu0
    %3834 = vdwg.mxu0
    %3835 = vmatpush.bf16.msra.mxu0 %v2658
    %3836 = vmatpush.bf16.msra.mxu0 %v2650
    %3837 = vmatpush.bf16.msra.mxu0 %v2642
    %3838 = vmatpush.bf16.msra.mxu0 %v2634
    %3839 = vmatpush.bf16.msra.mxu0 %v2626
    %3840 = vmatpush.bf16.msra.mxu0 %v2618
    %3841 = vmatpush.bf16.msra.mxu0 %v2610
    %3842 = vmatpush.bf16.msra.mxu0 %v2602
    %3843 = vmatmul.bf16.gmra.mxu0 %v145
    %v3844 = vpop.f32.mrf.mxu0
    %v3845 = vadd.f32 %v3832, %v3844
    %v3846 = vpop.f32.mrf.mxu0
    %3847 = vdwg.mxu0
    %3848 = vmatpush.bf16.msra.mxu0 %v2722
    %3849 = vmatpush.bf16.msra.mxu0 %v2714
    %3850 = vmatpush.bf16.msra.mxu0 %v2706
    %3851 = vmatpush.bf16.msra.mxu0 %v2698
    %3852 = vmatpush.bf16.msra.mxu0 %v2690
    %3853 = vmatpush.bf16.msra.mxu0 %v2682
    %3854 = vmatpush.bf16.msra.mxu0 %v2674
    %3855 = vmatpush.bf16.msra.mxu0 %v2666
    %3856 = vmatmul.bf16.gmra.mxu0 %v146
    %v3857 = vpop.f32.mrf.mxu0
    %v3858 = vadd.f32 %v3845, %v3857
    %v3859 = vpop.f32.mrf.mxu0
    %3860 = vdwg.mxu0
    %3861 = vmatpush.bf16.msra.mxu0 %v2275
    %3862 = vmatpush.bf16.msra.mxu0 %v2267
    %3863 = vmatpush.bf16.msra.mxu0 %v2259
    %3864 = vmatpush.bf16.msra.mxu0 %v2251
    %3865 = vmatpush.bf16.msra.mxu0 %v2243
    %3866 = vmatpush.bf16.msra.mxu0 %v2235
    %3867 = vmatpush.bf16.msra.mxu0 %v2227
    %3868 = vmatpush.bf16.msra.mxu0 %v2219
    %3869 = vmatmul.bf16.gmra.mxu0 %v139
    %v3870 = vpop.f32.mrf.mxu0
    %v3871 = vadd.f32 %v667, %v3870
    %v3872 = vpop.f32.mrf.mxu0
    %3873 = vdwg.mxu0
    %3874 = vmatpush.bf16.msra.mxu0 %v2339
    %3875 = vmatpush.bf16.msra.mxu0 %v2331
    %3876 = vmatpush.bf16.msra.mxu0 %v2323
    %3877 = vmatpush.bf16.msra.mxu0 %v2315
    %3878 = vmatpush.bf16.msra.mxu0 %v2307
    %3879 = vmatpush.bf16.msra.mxu0 %v2299
    %3880 = vmatpush.bf16.msra.mxu0 %v2291
    %3881 = vmatpush.bf16.msra.mxu0 %v2283
    %3882 = vmatmul.bf16.gmra.mxu0 %v140
    %v3883 = vpop.f32.mrf.mxu0
    %v3884 = vadd.f32 %v3871, %v3883
    %v3885 = vpop.f32.mrf.mxu0
    %3886 = vdwg.mxu0
    %3887 = vmatpush.bf16.msra.mxu0 %v2403
    %3888 = vmatpush.bf16.msra.mxu0 %v2395
    %3889 = vmatpush.bf16.msra.mxu0 %v2387
    %3890 = vmatpush.bf16.msra.mxu0 %v2379
    %3891 = vmatpush.bf16.msra.mxu0 %v2371
    %3892 = vmatpush.bf16.msra.mxu0 %v2363
    %3893 = vmatpush.bf16.msra.mxu0 %v2355
    %3894 = vmatpush.bf16.msra.mxu0 %v2347
    %3895 = vmatmul.bf16.gmra.mxu0 %v141
    %v3896 = vpop.f32.mrf.mxu0
    %v3897 = vadd.f32 %v3884, %v3896
    %v3898 = vpop.f32.mrf.mxu0
    %3899 = vdwg.mxu0
    %3900 = vmatpush.bf16.msra.mxu0 %v2467
    %3901 = vmatpush.bf16.msra.mxu0 %v2459
    %3902 = vmatpush.bf16.msra.mxu0 %v2451
    %3903 = vmatpush.bf16.msra.mxu0 %v2443
    %3904 = vmatpush.bf16.msra.mxu0 %v2435
    %3905 = vmatpush.bf16.msra.mxu0 %v2427
    %3906 = vmatpush.bf16.msra.mxu0 %v2419
    %3907 = vmatpush.bf16.msra.mxu0 %v2411
    %3908 = vmatmul.bf16.gmra.mxu0 %v142
    %v3909 = vpop.f32.mrf.mxu0
    %v3910 = vadd.f32 %v3897, %v3909
    %v3911 = vpop.f32.mrf.mxu0
    %3912 = vdwg.mxu0
    %3913 = vmatpush.bf16.msra.mxu0 %v2531
    %3914 = vmatpush.bf16.msra.mxu0 %v2523
    %3915 = vmatpush.bf16.msra.mxu0 %v2515
    %3916 = vmatpush.bf16.msra.mxu0 %v2507
    %3917 = vmatpush.bf16.msra.mxu0 %v2499
    %3918 = vmatpush.bf16.msra.mxu0 %v2491
    %3919 = vmatpush.bf16.msra.mxu0 %v2483
    %3920 = vmatpush.bf16.msra.mxu0 %v2475
    %3921 = vmatmul.bf16.gmra.mxu0 %v143
    %v3922 = vpop.f32.mrf.mxu0
    %v3923 = vadd.f32 %v3910, %v3922
    %v3924 = vpop.f32.mrf.mxu0
    %3925 = vdwg.mxu0
    %3926 = vmatpush.bf16.msra.mxu0 %v2595
    %3927 = vmatpush.bf16.msra.mxu0 %v2587
    %3928 = vmatpush.bf16.msra.mxu0 %v2579
    %3929 = vmatpush.bf16.msra.mxu0 %v2571
    %3930 = vmatpush.bf16.msra.mxu0 %v2563
    %3931 = vmatpush.bf16.msra.mxu0 %v2555
    %3932 = vmatpush.bf16.msra.mxu0 %v2547
    %3933 = vmatpush.bf16.msra.mxu0 %v2539
    %3934 = vmatmul.bf16.gmra.mxu0 %v144
    %v3935 = vpop.f32.mrf.mxu0
    %v3936 = vadd.f32 %v3923, %v3935
    %v3937 = vpop.f32.mrf.mxu0
    %3938 = vdwg.mxu0
    %3939 = vmatpush.bf16.msra.mxu0 %v2659
    %3940 = vmatpush.bf16.msra.mxu0 %v2651
    %3941 = vmatpush.bf16.msra.mxu0 %v2643
    %3942 = vmatpush.bf16.msra.mxu0 %v2635
    %3943 = vmatpush.bf16.msra.mxu0 %v2627
    %3944 = vmatpush.bf16.msra.mxu0 %v2619
    %3945 = vmatpush.bf16.msra.mxu0 %v2611
    %3946 = vmatpush.bf16.msra.mxu0 %v2603
    %3947 = vmatmul.bf16.gmra.mxu0 %v145
    %v3948 = vpop.f32.mrf.mxu0
    %v3949 = vadd.f32 %v3936, %v3948
    %v3950 = vpop.f32.mrf.mxu0
    %3951 = vdwg.mxu0
    %3952 = vmatpush.bf16.msra.mxu0 %v2723
    %3953 = vmatpush.bf16.msra.mxu0 %v2715
    %3954 = vmatpush.bf16.msra.mxu0 %v2707
    %3955 = vmatpush.bf16.msra.mxu0 %v2699
    %3956 = vmatpush.bf16.msra.mxu0 %v2691
    %3957 = vmatpush.bf16.msra.mxu0 %v2683
    %3958 = vmatpush.bf16.msra.mxu0 %v2675
    %3959 = vmatpush.bf16.msra.mxu0 %v2667
    %3960 = vmatmul.bf16.gmra.mxu0 %v146
    %v3961 = vpop.f32.mrf.mxu0
    %v3962 = vadd.f32 %v3949, %v3961
    %v3963 = vpop.f32.mrf.mxu0
    %3964 = vdwg.mxu0
    %3965 = vmatpush.bf16.msra.mxu0 %v2276
    %3966 = vmatpush.bf16.msra.mxu0 %v2268
    %3967 = vmatpush.bf16.msra.mxu0 %v2260
    %3968 = vmatpush.bf16.msra.mxu0 %v2252
    %3969 = vmatpush.bf16.msra.mxu0 %v2244
    %3970 = vmatpush.bf16.msra.mxu0 %v2236
    %3971 = vmatpush.bf16.msra.mxu0 %v2228
    %3972 = vmatpush.bf16.msra.mxu0 %v2220
    %3973 = vmatmul.bf16.gmra.mxu0 %v139
    %v3974 = vpop.f32.mrf.mxu0
    %v3975 = vadd.f32 %v668, %v3974
    %v3976 = vpop.f32.mrf.mxu0
    %3977 = vdwg.mxu0
    %3978 = vmatpush.bf16.msra.mxu0 %v2340
    %3979 = vmatpush.bf16.msra.mxu0 %v2332
    %3980 = vmatpush.bf16.msra.mxu0 %v2324
    %3981 = vmatpush.bf16.msra.mxu0 %v2316
    %3982 = vmatpush.bf16.msra.mxu0 %v2308
    %3983 = vmatpush.bf16.msra.mxu0 %v2300
    %3984 = vmatpush.bf16.msra.mxu0 %v2292
    %3985 = vmatpush.bf16.msra.mxu0 %v2284
    %3986 = vmatmul.bf16.gmra.mxu0 %v140
    %v3987 = vpop.f32.mrf.mxu0
    %v3988 = vadd.f32 %v3975, %v3987
    %v3989 = vpop.f32.mrf.mxu0
    %3990 = vdwg.mxu0
    %3991 = vmatpush.bf16.msra.mxu0 %v2404
    %3992 = vmatpush.bf16.msra.mxu0 %v2396
    %3993 = vmatpush.bf16.msra.mxu0 %v2388
    %3994 = vmatpush.bf16.msra.mxu0 %v2380
    %3995 = vmatpush.bf16.msra.mxu0 %v2372
    %3996 = vmatpush.bf16.msra.mxu0 %v2364
    %3997 = vmatpush.bf16.msra.mxu0 %v2356
    %3998 = vmatpush.bf16.msra.mxu0 %v2348
    %3999 = vmatmul.bf16.gmra.mxu0 %v141
    %v4000 = vpop.f32.mrf.mxu0
    %v4001 = vadd.f32 %v3988, %v4000
    %v4002 = vpop.f32.mrf.mxu0
    %4003 = vdwg.mxu0
    %4004 = vmatpush.bf16.msra.mxu0 %v2468
    %4005 = vmatpush.bf16.msra.mxu0 %v2460
    %4006 = vmatpush.bf16.msra.mxu0 %v2452
    %4007 = vmatpush.bf16.msra.mxu0 %v2444
    %4008 = vmatpush.bf16.msra.mxu0 %v2436
    %4009 = vmatpush.bf16.msra.mxu0 %v2428
    %4010 = vmatpush.bf16.msra.mxu0 %v2420
    %4011 = vmatpush.bf16.msra.mxu0 %v2412
    %4012 = vmatmul.bf16.gmra.mxu0 %v142
    %v4013 = vpop.f32.mrf.mxu0
    %v4014 = vadd.f32 %v4001, %v4013
    %v4015 = vpop.f32.mrf.mxu0
    %4016 = vdwg.mxu0
    %4017 = vmatpush.bf16.msra.mxu0 %v2532
    %4018 = vmatpush.bf16.msra.mxu0 %v2524
    %4019 = vmatpush.bf16.msra.mxu0 %v2516
    %4020 = vmatpush.bf16.msra.mxu0 %v2508
    %4021 = vmatpush.bf16.msra.mxu0 %v2500
    %4022 = vmatpush.bf16.msra.mxu0 %v2492
    %4023 = vmatpush.bf16.msra.mxu0 %v2484
    %4024 = vmatpush.bf16.msra.mxu0 %v2476
    %4025 = vmatmul.bf16.gmra.mxu0 %v143
    %v4026 = vpop.f32.mrf.mxu0
    %v4027 = vadd.f32 %v4014, %v4026
    %v4028 = vpop.f32.mrf.mxu0
    %4029 = vdwg.mxu0
    %4030 = vmatpush.bf16.msra.mxu0 %v2596
    %4031 = vmatpush.bf16.msra.mxu0 %v2588
    %4032 = vmatpush.bf16.msra.mxu0 %v2580
    %4033 = vmatpush.bf16.msra.mxu0 %v2572
    %4034 = vmatpush.bf16.msra.mxu0 %v2564
    %4035 = vmatpush.bf16.msra.mxu0 %v2556
    %4036 = vmatpush.bf16.msra.mxu0 %v2548
    %4037 = vmatpush.bf16.msra.mxu0 %v2540
    %4038 = vmatmul.bf16.gmra.mxu0 %v144
    %v4039 = vpop.f32.mrf.mxu0
    %v4040 = vadd.f32 %v4027, %v4039
    %v4041 = vpop.f32.mrf.mxu0
    %4042 = vdwg.mxu0
    %4043 = vmatpush.bf16.msra.mxu0 %v2660
    %4044 = vmatpush.bf16.msra.mxu0 %v2652
    %4045 = vmatpush.bf16.msra.mxu0 %v2644
    %4046 = vmatpush.bf16.msra.mxu0 %v2636
    %4047 = vmatpush.bf16.msra.mxu0 %v2628
    %4048 = vmatpush.bf16.msra.mxu0 %v2620
    %4049 = vmatpush.bf16.msra.mxu0 %v2612
    %4050 = vmatpush.bf16.msra.mxu0 %v2604
    %4051 = vmatmul.bf16.gmra.mxu0 %v145
    %v4052 = vpop.f32.mrf.mxu0
    %v4053 = vadd.f32 %v4040, %v4052
    %v4054 = vpop.f32.mrf.mxu0
    %4055 = vdwg.mxu0
    %4056 = vmatpush.bf16.msra.mxu0 %v2724
    %4057 = vmatpush.bf16.msra.mxu0 %v2716
    %4058 = vmatpush.bf16.msra.mxu0 %v2708
    %4059 = vmatpush.bf16.msra.mxu0 %v2700
    %4060 = vmatpush.bf16.msra.mxu0 %v2692
    %4061 = vmatpush.bf16.msra.mxu0 %v2684
    %4062 = vmatpush.bf16.msra.mxu0 %v2676
    %4063 = vmatpush.bf16.msra.mxu0 %v2668
    %4064 = vmatmul.bf16.gmra.mxu0 %v146
    %v4065 = vpop.f32.mrf.mxu0
    %v4066 = vadd.f32 %v4053, %v4065
    %v4067 = vpop.f32.mrf.mxu0
    %4068 = vdwg.mxu0
    %v4069 = vmax.f32 %v3338, 0.0
    %v4070 = vmax.f32 %v3442, 0.0
    %v4071 = vmax.f32 %v3546, 0.0
    %v4072 = vmax.f32 %v3650, 0.0
    %v4073 = vmax.f32 %v3754, 0.0
    %v4074 = vmax.f32 %v3858, 0.0
    %v4075 = vmax.f32 %v3962, 0.0
    %v4076 = vmax.f32 %v4066, 0.0
    %v4077 = vpack.c.bf16 %v4069, %v4069
    %v4078 = vpack.c.bf16 %v4070, %v4070
    %v4079 = vpack.c.bf16 %v4071, %v4071
    %v4080 = vpack.c.bf16 %v4072, %v4072
    %v4081 = vpack.c.bf16 %v4073, %v4073
    %v4082 = vpack.c.bf16 %v4074, %v4074
    %v4083 = vpack.c.bf16 %v4075, %v4075
    %v4084 = vpack.c.bf16 %v4076, %v4076
    %v4085 = vld [vmem:[#allocation8] sm:$0xff]
    %v4086 = vld [vmem:[#allocation8 + $0x8] sm:$0xff]
    %v4087 = vld [vmem:[#allocation8 + $0x10] sm:$0xff]
    %v4088 = vld [vmem:[#allocation8 + $0x18] sm:$0xff]
    %v4089 = vld [vmem:[#allocation8 + $0x20] sm:$0xff]
    %v4090 = vld [vmem:[#allocation8 + $0x28] sm:$0xff]
    %v4091 = vld [vmem:[#allocation8 + $0x30] sm:$0xff]
    %v4092 = vld [vmem:[#allocation8 + $0x38] sm:$0xff]
    %v4093 = vld [vmem:[#allocation8 + $0x40] sm:$0xff]
    %v4094 = vld [vmem:[#allocation8 + $0x48] sm:$0xff]
    %v4095 = vld [vmem:[#allocation8 + $0x50] sm:$0xff]
    %v4096 = vld [vmem:[#allocation8 + $0x58] sm:$0xff]
    %v4097 = vld [vmem:[#allocation8 + $0x60] sm:$0xff]
    %v4098 = vld [vmem:[#allocation8 + $0x68] sm:$0xff]
    %v4099 = vld [vmem:[#allocation8 + $0x70] sm:$0xff]
    %v4100 = vld [vmem:[#allocation8 + $0x78] sm:$0xff]
    %v4101 = vld [vmem:[#allocation8 + $0x80] sm:$0xff]
    %v4102 = vld [vmem:[#allocation8 + $0x88] sm:$0xff]
    %v4103 = vld [vmem:[#allocation8 + $0x90] sm:$0xff]
    %v4104 = vld [vmem:[#allocation8 + $0x98] sm:$0xff]
    %v4105 = vld [vmem:[#allocation8 + $0xa0] sm:$0xff]
    %v4106 = vld [vmem:[#allocation8 + $0xa8] sm:$0xff]
    %v4107 = vld [vmem:[#allocation8 + $0xb0] sm:$0xff]
    %v4108 = vld [vmem:[#allocation8 + $0xb8] sm:$0xff]
    %v4109 = vld [vmem:[#allocation8 + $0xc0] sm:$0xff]
    %v4110 = vld [vmem:[#allocation8 + $0xc8] sm:$0xff]
    %v4111 = vld [vmem:[#allocation8 + $0xd0] sm:$0xff]
    %v4112 = vld [vmem:[#allocation8 + $0xd8] sm:$0xff]
    %v4113 = vld [vmem:[#allocation8 + $0xe0] sm:$0xff]
    %v4114 = vld [vmem:[#allocation8 + $0xe8] sm:$0xff]
    %v4115 = vld [vmem:[#allocation8 + $0xf0] sm:$0xff]
    %v4116 = vld [vmem:[#allocation8 + $0xf8] sm:$0xff]
    %v4117 = vld [vmem:[#allocation8 + $0x100] sm:$0xff]
    %v4118 = vld [vmem:[#allocation8 + $0x108] sm:$0xff]
    %v4119 = vld [vmem:[#allocation8 + $0x110] sm:$0xff]
    %v4120 = vld [vmem:[#allocation8 + $0x118] sm:$0xff]
    %v4121 = vld [vmem:[#allocation8 + $0x120] sm:$0xff]
    %v4122 = vld [vmem:[#allocation8 + $0x128] sm:$0xff]
    %v4123 = vld [vmem:[#allocation8 + $0x130] sm:$0xff]
    %v4124 = vld [vmem:[#allocation8 + $0x138] sm:$0xff]
    %v4125 = vld [vmem:[#allocation8 + $0x140] sm:$0xff]
    %v4126 = vld [vmem:[#allocation8 + $0x148] sm:$0xff]
    %v4127 = vld [vmem:[#allocation8 + $0x150] sm:$0xff]
    %v4128 = vld [vmem:[#allocation8 + $0x158] sm:$0xff]
    %v4129 = vld [vmem:[#allocation8 + $0x160] sm:$0xff]
    %v4130 = vld [vmem:[#allocation8 + $0x168] sm:$0xff]
    %v4131 = vld [vmem:[#allocation8 + $0x170] sm:$0xff]
    %v4132 = vld [vmem:[#allocation8 + $0x178] sm:$0xff]
    %v4133 = vld [vmem:[#allocation8 + $0x180] sm:$0xff]
    %v4134 = vld [vmem:[#allocation8 + $0x188] sm:$0xff]
    %v4135 = vld [vmem:[#allocation8 + $0x190] sm:$0xff]
    %v4136 = vld [vmem:[#allocation8 + $0x198] sm:$0xff]
    %v4137 = vld [vmem:[#allocation8 + $0x1a0] sm:$0xff]
    %v4138 = vld [vmem:[#allocation8 + $0x1a8] sm:$0xff]
    %v4139 = vld [vmem:[#allocation8 + $0x1b0] sm:$0xff]
    %v4140 = vld [vmem:[#allocation8 + $0x1b8] sm:$0xff]
    %v4141 = vld [vmem:[#allocation8 + $0x1c0] sm:$0xff]
    %v4142 = vld [vmem:[#allocation8 + $0x1c8] sm:$0xff]
    %v4143 = vld [vmem:[#allocation8 + $0x1d0] sm:$0xff]
    %v4144 = vld [vmem:[#allocation8 + $0x1d8] sm:$0xff]
    %v4145 = vld [vmem:[#allocation8 + $0x1e0] sm:$0xff]
    %v4146 = vld [vmem:[#allocation8 + $0x1e8] sm:$0xff]
    %v4147 = vld [vmem:[#allocation8 + $0x1f0] sm:$0xff]
    %v4148 = vld [vmem:[#allocation8 + $0x1f8] sm:$0xff]
    %v4149 = vld [vmem:[#allocation8 + $0x200] sm:$0xff]
    %v4150 = vld [vmem:[#allocation8 + $0x208] sm:$0xff]
    %v4151 = vld [vmem:[#allocation8 + $0x210] sm:$0xff]
    %v4152 = vld [vmem:[#allocation8 + $0x218] sm:$0xff]
    %v4153 = vld [vmem:[#allocation8 + $0x220] sm:$0xff]
    %v4154 = vld [vmem:[#allocation8 + $0x228] sm:$0xff]
    %v4155 = vld [vmem:[#allocation8 + $0x230] sm:$0xff]
    %v4156 = vld [vmem:[#allocation8 + $0x238] sm:$0xff]
    %v4157 = vld [vmem:[#allocation8 + $0x240] sm:$0xff]
    %v4158 = vld [vmem:[#allocation8 + $0x248] sm:$0xff]
    %v4159 = vld [vmem:[#allocation8 + $0x250] sm:$0xff]
    %v4160 = vld [vmem:[#allocation8 + $0x258] sm:$0xff]
    %v4161 = vld [vmem:[#allocation8 + $0x260] sm:$0xff]
    %v4162 = vld [vmem:[#allocation8 + $0x268] sm:$0xff]
    %v4163 = vld [vmem:[#allocation8 + $0x270] sm:$0xff]
    %v4164 = vld [vmem:[#allocation8 + $0x278] sm:$0xff]
    %v4165 = vld [vmem:[#allocation8 + $0x280] sm:$0xff]
    %v4166 = vld [vmem:[#allocation8 + $0x288] sm:$0xff]
    %v4167 = vld [vmem:[#allocation8 + $0x290] sm:$0xff]
    %v4168 = vld [vmem:[#allocation8 + $0x298] sm:$0xff]
    %v4169 = vld [vmem:[#allocation8 + $0x2a0] sm:$0xff]
    %v4170 = vld [vmem:[#allocation8 + $0x2a8] sm:$0xff]
    %v4171 = vld [vmem:[#allocation8 + $0x2b0] sm:$0xff]
    %v4172 = vld [vmem:[#allocation8 + $0x2b8] sm:$0xff]
    %v4173 = vld [vmem:[#allocation8 + $0x2c0] sm:$0xff]
    %v4174 = vld [vmem:[#allocation8 + $0x2c8] sm:$0xff]
    %v4175 = vld [vmem:[#allocation8 + $0x2d0] sm:$0xff]
    %v4176 = vld [vmem:[#allocation8 + $0x2d8] sm:$0xff]
    %v4177 = vld [vmem:[#allocation8 + $0x2e0] sm:$0xff]
    %v4178 = vld [vmem:[#allocation8 + $0x2e8] sm:$0xff]
    %v4179 = vld [vmem:[#allocation8 + $0x2f0] sm:$0xff]
    %v4180 = vld [vmem:[#allocation8 + $0x2f8] sm:$0xff]
    %v4181 = vld [vmem:[#allocation8 + $0x300] sm:$0xff]
    %v4182 = vld [vmem:[#allocation8 + $0x308] sm:$0xff]
    %v4183 = vld [vmem:[#allocation8 + $0x310] sm:$0xff]
    %v4184 = vld [vmem:[#allocation8 + $0x318] sm:$0xff]
    %v4185 = vld [vmem:[#allocation8 + $0x320] sm:$0xff]
    %v4186 = vld [vmem:[#allocation8 + $0x328] sm:$0xff]
    %v4187 = vld [vmem:[#allocation8 + $0x330] sm:$0xff]
    %v4188 = vld [vmem:[#allocation8 + $0x338] sm:$0xff]
    %v4189 = vld [vmem:[#allocation8 + $0x340] sm:$0xff]
    %v4190 = vld [vmem:[#allocation8 + $0x348] sm:$0xff]
    %v4191 = vld [vmem:[#allocation8 + $0x350] sm:$0xff]
    %v4192 = vld [vmem:[#allocation8 + $0x358] sm:$0xff]
    %v4193 = vld [vmem:[#allocation8 + $0x360] sm:$0xff]
    %v4194 = vld [vmem:[#allocation8 + $0x368] sm:$0xff]
    %v4195 = vld [vmem:[#allocation8 + $0x370] sm:$0xff]
    %v4196 = vld [vmem:[#allocation8 + $0x378] sm:$0xff]
    %v4197 = vld [vmem:[#allocation8 + $0x380] sm:$0xff]
    %v4198 = vld [vmem:[#allocation8 + $0x388] sm:$0xff]
    %v4199 = vld [vmem:[#allocation8 + $0x390] sm:$0xff]
    %v4200 = vld [vmem:[#allocation8 + $0x398] sm:$0xff]
    %v4201 = vld [vmem:[#allocation8 + $0x3a0] sm:$0xff]
    %v4202 = vld [vmem:[#allocation8 + $0x3a8] sm:$0xff]
    %v4203 = vld [vmem:[#allocation8 + $0x3b0] sm:$0xff]
    %v4204 = vld [vmem:[#allocation8 + $0x3b8] sm:$0xff]
    %v4205 = vld [vmem:[#allocation8 + $0x3c0] sm:$0xff]
    %v4206 = vld [vmem:[#allocation8 + $0x3c8] sm:$0xff]
    %v4207 = vld [vmem:[#allocation8 + $0x3d0] sm:$0xff]
    %v4208 = vld [vmem:[#allocation8 + $0x3d8] sm:$0xff]
    %v4209 = vld [vmem:[#allocation8 + $0x3e0] sm:$0xff]
    %v4210 = vld [vmem:[#allocation8 + $0x3e8] sm:$0xff]
    %v4211 = vld [vmem:[#allocation8 + $0x3f0] sm:$0xff]
    %v4212 = vld [vmem:[#allocation8 + $0x3f8] sm:$0xff]
    %v4213 = vld [vmem:[#allocation8 + $0x400] sm:$0xff]
    %v4214 = vld [vmem:[#allocation8 + $0x408] sm:$0xff]
    %v4215 = vld [vmem:[#allocation8 + $0x410] sm:$0xff]
    %v4216 = vld [vmem:[#allocation8 + $0x418] sm:$0xff]
    %v4217 = vld [vmem:[#allocation8 + $0x420] sm:$0xff]
    %v4218 = vld [vmem:[#allocation8 + $0x428] sm:$0xff]
    %v4219 = vld [vmem:[#allocation8 + $0x430] sm:$0xff]
    %v4220 = vld [vmem:[#allocation8 + $0x438] sm:$0xff]
    %v4221 = vld [vmem:[#allocation8 + $0x440] sm:$0xff]
    %v4222 = vld [vmem:[#allocation8 + $0x448] sm:$0xff]
    %v4223 = vld [vmem:[#allocation8 + $0x450] sm:$0xff]
    %v4224 = vld [vmem:[#allocation8 + $0x458] sm:$0xff]
    %v4225 = vld [vmem:[#allocation8 + $0x460] sm:$0xff]
    %v4226 = vld [vmem:[#allocation8 + $0x468] sm:$0xff]
    %v4227 = vld [vmem:[#allocation8 + $0x470] sm:$0xff]
    %v4228 = vld [vmem:[#allocation8 + $0x478] sm:$0xff]
    %v4229 = vld [vmem:[#allocation8 + $0x480] sm:$0xff]
    %v4230 = vld [vmem:[#allocation8 + $0x488] sm:$0xff]
    %v4231 = vld [vmem:[#allocation8 + $0x490] sm:$0xff]
    %v4232 = vld [vmem:[#allocation8 + $0x498] sm:$0xff]
    %v4233 = vld [vmem:[#allocation8 + $0x4a0] sm:$0xff]
    %v4234 = vld [vmem:[#allocation8 + $0x4a8] sm:$0xff]
    %v4235 = vld [vmem:[#allocation8 + $0x4b0] sm:$0xff]
    %v4236 = vld [vmem:[#allocation8 + $0x4b8] sm:$0xff]
    %v4237 = vld [vmem:[#allocation8 + $0x4c0] sm:$0xff]
    %v4238 = vld [vmem:[#allocation8 + $0x4c8] sm:$0xff]
    %v4239 = vld [vmem:[#allocation8 + $0x4d0] sm:$0xff]
    %v4240 = vld [vmem:[#allocation8 + $0x4d8] sm:$0xff]
    %v4241 = vld [vmem:[#allocation8 + $0x4e0] sm:$0xff]
    %v4242 = vld [vmem:[#allocation8 + $0x4e8] sm:$0xff]
    %v4243 = vld [vmem:[#allocation8 + $0x4f0] sm:$0xff]
    %v4244 = vld [vmem:[#allocation8 + $0x4f8] sm:$0xff]
    %v4245 = vld [vmem:[#allocation8 + $0x500] sm:$0xff]
    %v4246 = vld [vmem:[#allocation8 + $0x508] sm:$0xff]
    %v4247 = vld [vmem:[#allocation8 + $0x510] sm:$0xff]
    %v4248 = vld [vmem:[#allocation8 + $0x518] sm:$0xff]
    %v4249 = vld [vmem:[#allocation8 + $0x520] sm:$0xff]
    %v4250 = vld [vmem:[#allocation8 + $0x528] sm:$0xff]
    %v4251 = vld [vmem:[#allocation8 + $0x530] sm:$0xff]
    %v4252 = vld [vmem:[#allocation8 + $0x538] sm:$0xff]
    %v4253 = vld [vmem:[#allocation8 + $0x540] sm:$0xff]
    %v4254 = vld [vmem:[#allocation8 + $0x548] sm:$0xff]
    %v4255 = vld [vmem:[#allocation8 + $0x550] sm:$0xff]
    %v4256 = vld [vmem:[#allocation8 + $0x558] sm:$0xff]
    %v4257 = vld [vmem:[#allocation8 + $0x560] sm:$0xff]
    %v4258 = vld [vmem:[#allocation8 + $0x568] sm:$0xff]
    %v4259 = vld [vmem:[#allocation8 + $0x570] sm:$0xff]
    %v4260 = vld [vmem:[#allocation8 + $0x578] sm:$0xff]
    %v4261 = vld [vmem:[#allocation8 + $0x580] sm:$0xff]
    %v4262 = vld [vmem:[#allocation8 + $0x588] sm:$0xff]
    %v4263 = vld [vmem:[#allocation8 + $0x590] sm:$0xff]
    %v4264 = vld [vmem:[#allocation8 + $0x598] sm:$0xff]
    %v4265 = vld [vmem:[#allocation8 + $0x5a0] sm:$0xff]
    %v4266 = vld [vmem:[#allocation8 + $0x5a8] sm:$0xff]
    %v4267 = vld [vmem:[#allocation8 + $0x5b0] sm:$0xff]
    %v4268 = vld [vmem:[#allocation8 + $0x5b8] sm:$0xff]
    %v4269 = vld [vmem:[#allocation8 + $0x5c0] sm:$0xff]
    %v4270 = vld [vmem:[#allocation8 + $0x5c8] sm:$0xff]
    %v4271 = vld [vmem:[#allocation8 + $0x5d0] sm:$0xff]
    %v4272 = vld [vmem:[#allocation8 + $0x5d8] sm:$0xff]
    %v4273 = vld [vmem:[#allocation8 + $0x5e0] sm:$0xff]
    %v4274 = vld [vmem:[#allocation8 + $0x5e8] sm:$0xff]
    %v4275 = vld [vmem:[#allocation8 + $0x5f0] sm:$0xff]
    %v4276 = vld [vmem:[#allocation8 + $0x5f8] sm:$0xff]
    %v4277 = vld [vmem:[#allocation8 + $0x600] sm:$0xff]
    %v4278 = vld [vmem:[#allocation8 + $0x608] sm:$0xff]
    %v4279 = vld [vmem:[#allocation8 + $0x610] sm:$0xff]
    %v4280 = vld [vmem:[#allocation8 + $0x618] sm:$0xff]
    %v4281 = vld [vmem:[#allocation8 + $0x620] sm:$0xff]
    %v4282 = vld [vmem:[#allocation8 + $0x628] sm:$0xff]
    %v4283 = vld [vmem:[#allocation8 + $0x630] sm:$0xff]
    %v4284 = vld [vmem:[#allocation8 + $0x638] sm:$0xff]
    %v4285 = vld [vmem:[#allocation8 + $0x640] sm:$0xff]
    %v4286 = vld [vmem:[#allocation8 + $0x648] sm:$0xff]
    %v4287 = vld [vmem:[#allocation8 + $0x650] sm:$0xff]
    %v4288 = vld [vmem:[#allocation8 + $0x658] sm:$0xff]
    %v4289 = vld [vmem:[#allocation8 + $0x660] sm:$0xff]
    %v4290 = vld [vmem:[#allocation8 + $0x668] sm:$0xff]
    %v4291 = vld [vmem:[#allocation8 + $0x670] sm:$0xff]
    %v4292 = vld [vmem:[#allocation8 + $0x678] sm:$0xff]
    %v4293 = vld [vmem:[#allocation8 + $0x680] sm:$0xff]
    %v4294 = vld [vmem:[#allocation8 + $0x688] sm:$0xff]
    %v4295 = vld [vmem:[#allocation8 + $0x690] sm:$0xff]
    %v4296 = vld [vmem:[#allocation8 + $0x698] sm:$0xff]
    %v4297 = vld [vmem:[#allocation8 + $0x6a0] sm:$0xff]
    %v4298 = vld [vmem:[#allocation8 + $0x6a8] sm:$0xff]
    %v4299 = vld [vmem:[#allocation8 + $0x6b0] sm:$0xff]
    %v4300 = vld [vmem:[#allocation8 + $0x6b8] sm:$0xff]
    %v4301 = vld [vmem:[#allocation8 + $0x6c0] sm:$0xff]
    %v4302 = vld [vmem:[#allocation8 + $0x6c8] sm:$0xff]
    %v4303 = vld [vmem:[#allocation8 + $0x6d0] sm:$0xff]
    %v4304 = vld [vmem:[#allocation8 + $0x6d8] sm:$0xff]
    %v4305 = vld [vmem:[#allocation8 + $0x6e0] sm:$0xff]
    %v4306 = vld [vmem:[#allocation8 + $0x6e8] sm:$0xff]
    %v4307 = vld [vmem:[#allocation8 + $0x6f0] sm:$0xff]
    %v4308 = vld [vmem:[#allocation8 + $0x6f8] sm:$0xff]
    %v4309 = vld [vmem:[#allocation8 + $0x700] sm:$0xff]
    %v4310 = vld [vmem:[#allocation8 + $0x708] sm:$0xff]
    %v4311 = vld [vmem:[#allocation8 + $0x710] sm:$0xff]
    %v4312 = vld [vmem:[#allocation8 + $0x718] sm:$0xff]
    %v4313 = vld [vmem:[#allocation8 + $0x720] sm:$0xff]
    %v4314 = vld [vmem:[#allocation8 + $0x728] sm:$0xff]
    %v4315 = vld [vmem:[#allocation8 + $0x730] sm:$0xff]
    %v4316 = vld [vmem:[#allocation8 + $0x738] sm:$0xff]
    %v4317 = vld [vmem:[#allocation8 + $0x740] sm:$0xff]
    %v4318 = vld [vmem:[#allocation8 + $0x748] sm:$0xff]
    %v4319 = vld [vmem:[#allocation8 + $0x750] sm:$0xff]
    %v4320 = vld [vmem:[#allocation8 + $0x758] sm:$0xff]
    %v4321 = vld [vmem:[#allocation8 + $0x760] sm:$0xff]
    %v4322 = vld [vmem:[#allocation8 + $0x768] sm:$0xff]
    %v4323 = vld [vmem:[#allocation8 + $0x770] sm:$0xff]
    %v4324 = vld [vmem:[#allocation8 + $0x778] sm:$0xff]
    %v4325 = vld [vmem:[#allocation8 + $0x780] sm:$0xff]
    %v4326 = vld [vmem:[#allocation8 + $0x788] sm:$0xff]
    %v4327 = vld [vmem:[#allocation8 + $0x790] sm:$0xff]
    %v4328 = vld [vmem:[#allocation8 + $0x798] sm:$0xff]
    %v4329 = vld [vmem:[#allocation8 + $0x7a0] sm:$0xff]
    %v4330 = vld [vmem:[#allocation8 + $0x7a8] sm:$0xff]
    %v4331 = vld [vmem:[#allocation8 + $0x7b0] sm:$0xff]
    %v4332 = vld [vmem:[#allocation8 + $0x7b8] sm:$0xff]
    %v4333 = vld [vmem:[#allocation8 + $0x7c0] sm:$0xff]
    %v4334 = vld [vmem:[#allocation8 + $0x7c8] sm:$0xff]
    %v4335 = vld [vmem:[#allocation8 + $0x7d0] sm:$0xff]
    %v4336 = vld [vmem:[#allocation8 + $0x7d8] sm:$0xff]
    %v4337 = vld [vmem:[#allocation8 + $0x7e0] sm:$0xff]
    %v4338 = vld [vmem:[#allocation8 + $0x7e8] sm:$0xff]
    %v4339 = vld [vmem:[#allocation8 + $0x7f0] sm:$0xff]
    %v4340 = vld [vmem:[#allocation8 + $0x7f8] sm:$0xff]
    %v4341 = vld [vmem:[#allocation8 + $0x800] sm:$0xff]
    %v4342 = vld [vmem:[#allocation8 + $0x808] sm:$0xff]
    %v4343 = vld [vmem:[#allocation8 + $0x810] sm:$0xff]
    %v4344 = vld [vmem:[#allocation8 + $0x818] sm:$0xff]
    %v4345 = vld [vmem:[#allocation8 + $0x820] sm:$0xff]
    %v4346 = vld [vmem:[#allocation8 + $0x828] sm:$0xff]
    %v4347 = vld [vmem:[#allocation8 + $0x830] sm:$0xff]
    %v4348 = vld [vmem:[#allocation8 + $0x838] sm:$0xff]
    %v4349 = vld [vmem:[#allocation8 + $0x840] sm:$0xff]
    %v4350 = vld [vmem:[#allocation8 + $0x848] sm:$0xff]
    %v4351 = vld [vmem:[#allocation8 + $0x850] sm:$0xff]
    %v4352 = vld [vmem:[#allocation8 + $0x858] sm:$0xff]
    %v4353 = vld [vmem:[#allocation8 + $0x860] sm:$0xff]
    %v4354 = vld [vmem:[#allocation8 + $0x868] sm:$0xff]
    %v4355 = vld [vmem:[#allocation8 + $0x870] sm:$0xff]
    %v4356 = vld [vmem:[#allocation8 + $0x878] sm:$0xff]
    %v4357 = vld [vmem:[#allocation8 + $0x880] sm:$0xff]
    %v4358 = vld [vmem:[#allocation8 + $0x888] sm:$0xff]
    %v4359 = vld [vmem:[#allocation8 + $0x890] sm:$0xff]
    %v4360 = vld [vmem:[#allocation8 + $0x898] sm:$0xff]
    %v4361 = vld [vmem:[#allocation8 + $0x8a0] sm:$0xff]
    %v4362 = vld [vmem:[#allocation8 + $0x8a8] sm:$0xff]
    %v4363 = vld [vmem:[#allocation8 + $0x8b0] sm:$0xff]
    %v4364 = vld [vmem:[#allocation8 + $0x8b8] sm:$0xff]
    %v4365 = vld [vmem:[#allocation8 + $0x8c0] sm:$0xff]
    %v4366 = vld [vmem:[#allocation8 + $0x8c8] sm:$0xff]
    %v4367 = vld [vmem:[#allocation8 + $0x8d0] sm:$0xff]
    %v4368 = vld [vmem:[#allocation8 + $0x8d8] sm:$0xff]
    %v4369 = vld [vmem:[#allocation8 + $0x8e0] sm:$0xff]
    %v4370 = vld [vmem:[#allocation8 + $0x8e8] sm:$0xff]
    %v4371 = vld [vmem:[#allocation8 + $0x8f0] sm:$0xff]
    %v4372 = vld [vmem:[#allocation8 + $0x8f8] sm:$0xff]
    %v4373 = vld [vmem:[#allocation8 + $0x900] sm:$0xff]
    %v4374 = vld [vmem:[#allocation8 + $0x908] sm:$0xff]
    %v4375 = vld [vmem:[#allocation8 + $0x910] sm:$0xff]
    %v4376 = vld [vmem:[#allocation8 + $0x918] sm:$0xff]
    %v4377 = vld [vmem:[#allocation8 + $0x920] sm:$0xff]
    %v4378 = vld [vmem:[#allocation8 + $0x928] sm:$0xff]
    %v4379 = vld [vmem:[#allocation8 + $0x930] sm:$0xff]
    %v4380 = vld [vmem:[#allocation8 + $0x938] sm:$0xff]
    %v4381 = vld [vmem:[#allocation8 + $0x940] sm:$0xff]
    %v4382 = vld [vmem:[#allocation8 + $0x948] sm:$0xff]
    %v4383 = vld [vmem:[#allocation8 + $0x950] sm:$0xff]
    %v4384 = vld [vmem:[#allocation8 + $0x958] sm:$0xff]
    %v4385 = vld [vmem:[#allocation8 + $0x960] sm:$0xff]
    %v4386 = vld [vmem:[#allocation8 + $0x968] sm:$0xff]
    %v4387 = vld [vmem:[#allocation8 + $0x970] sm:$0xff]
    %v4388 = vld [vmem:[#allocation8 + $0x978] sm:$0xff]
    %v4389 = vld [vmem:[#allocation8 + $0x980] sm:$0xff]
    %v4390 = vld [vmem:[#allocation8 + $0x988] sm:$0xff]
    %v4391 = vld [vmem:[#allocation8 + $0x990] sm:$0xff]
    %v4392 = vld [vmem:[#allocation8 + $0x998] sm:$0xff]
    %v4393 = vld [vmem:[#allocation8 + $0x9a0] sm:$0xff]
    %v4394 = vld [vmem:[#allocation8 + $0x9a8] sm:$0xff]
    %v4395 = vld [vmem:[#allocation8 + $0x9b0] sm:$0xff]
    %v4396 = vld [vmem:[#allocation8 + $0x9b8] sm:$0xff]
    %v4397 = vld [vmem:[#allocation8 + $0x9c0] sm:$0xff]
    %v4398 = vld [vmem:[#allocation8 + $0x9c8] sm:$0xff]
    %v4399 = vld [vmem:[#allocation8 + $0x9d0] sm:$0xff]
    %v4400 = vld [vmem:[#allocation8 + $0x9d8] sm:$0xff]
    %v4401 = vld [vmem:[#allocation8 + $0x9e0] sm:$0xff]
    %v4402 = vld [vmem:[#allocation8 + $0x9e8] sm:$0xff]
    %v4403 = vld [vmem:[#allocation8 + $0x9f0] sm:$0xff]
    %v4404 = vld [vmem:[#allocation8 + $0x9f8] sm:$0xff]
    %v4405 = vld [vmem:[#allocation8 + $0xa00] sm:$0xff]
    %v4406 = vld [vmem:[#allocation8 + $0xa08] sm:$0xff]
    %v4407 = vld [vmem:[#allocation8 + $0xa10] sm:$0xff]
    %v4408 = vld [vmem:[#allocation8 + $0xa18] sm:$0xff]
    %v4409 = vld [vmem:[#allocation8 + $0xa20] sm:$0xff]
    %v4410 = vld [vmem:[#allocation8 + $0xa28] sm:$0xff]
    %v4411 = vld [vmem:[#allocation8 + $0xa30] sm:$0xff]
    %v4412 = vld [vmem:[#allocation8 + $0xa38] sm:$0xff]
    %v4413 = vld [vmem:[#allocation8 + $0xa40] sm:$0xff]
    %v4414 = vld [vmem:[#allocation8 + $0xa48] sm:$0xff]
    %v4415 = vld [vmem:[#allocation8 + $0xa50] sm:$0xff]
    %v4416 = vld [vmem:[#allocation8 + $0xa58] sm:$0xff]
    %v4417 = vld [vmem:[#allocation8 + $0xa60] sm:$0xff]
    %v4418 = vld [vmem:[#allocation8 + $0xa68] sm:$0xff]
    %v4419 = vld [vmem:[#allocation8 + $0xa70] sm:$0xff]
    %v4420 = vld [vmem:[#allocation8 + $0xa78] sm:$0xff]
    %v4421 = vld [vmem:[#allocation8 + $0xa80] sm:$0xff]
    %v4422 = vld [vmem:[#allocation8 + $0xa88] sm:$0xff]
    %v4423 = vld [vmem:[#allocation8 + $0xa90] sm:$0xff]
    %v4424 = vld [vmem:[#allocation8 + $0xa98] sm:$0xff]
    %v4425 = vld [vmem:[#allocation8 + $0xaa0] sm:$0xff]
    %v4426 = vld [vmem:[#allocation8 + $0xaa8] sm:$0xff]
    %v4427 = vld [vmem:[#allocation8 + $0xab0] sm:$0xff]
    %v4428 = vld [vmem:[#allocation8 + $0xab8] sm:$0xff]
    %v4429 = vld [vmem:[#allocation8 + $0xac0] sm:$0xff]
    %v4430 = vld [vmem:[#allocation8 + $0xac8] sm:$0xff]
    %v4431 = vld [vmem:[#allocation8 + $0xad0] sm:$0xff]
    %v4432 = vld [vmem:[#allocation8 + $0xad8] sm:$0xff]
    %v4433 = vld [vmem:[#allocation8 + $0xae0] sm:$0xff]
    %v4434 = vld [vmem:[#allocation8 + $0xae8] sm:$0xff]
    %v4435 = vld [vmem:[#allocation8 + $0xaf0] sm:$0xff]
    %v4436 = vld [vmem:[#allocation8 + $0xaf8] sm:$0xff]
    %v4437 = vld [vmem:[#allocation8 + $0xb00] sm:$0xff]
    %v4438 = vld [vmem:[#allocation8 + $0xb08] sm:$0xff]
    %v4439 = vld [vmem:[#allocation8 + $0xb10] sm:$0xff]
    %v4440 = vld [vmem:[#allocation8 + $0xb18] sm:$0xff]
    %v4441 = vld [vmem:[#allocation8 + $0xb20] sm:$0xff]
    %v4442 = vld [vmem:[#allocation8 + $0xb28] sm:$0xff]
    %v4443 = vld [vmem:[#allocation8 + $0xb30] sm:$0xff]
    %v4444 = vld [vmem:[#allocation8 + $0xb38] sm:$0xff]
    %v4445 = vld [vmem:[#allocation8 + $0xb40] sm:$0xff]
    %v4446 = vld [vmem:[#allocation8 + $0xb48] sm:$0xff]
    %v4447 = vld [vmem:[#allocation8 + $0xb50] sm:$0xff]
    %v4448 = vld [vmem:[#allocation8 + $0xb58] sm:$0xff]
    %v4449 = vld [vmem:[#allocation8 + $0xb60] sm:$0xff]
    %v4450 = vld [vmem:[#allocation8 + $0xb68] sm:$0xff]
    %v4451 = vld [vmem:[#allocation8 + $0xb70] sm:$0xff]
    %v4452 = vld [vmem:[#allocation8 + $0xb78] sm:$0xff]
    %v4453 = vld [vmem:[#allocation8 + $0xb80] sm:$0xff]
    %v4454 = vld [vmem:[#allocation8 + $0xb88] sm:$0xff]
    %v4455 = vld [vmem:[#allocation8 + $0xb90] sm:$0xff]
    %v4456 = vld [vmem:[#allocation8 + $0xb98] sm:$0xff]
    %v4457 = vld [vmem:[#allocation8 + $0xba0] sm:$0xff]
    %v4458 = vld [vmem:[#allocation8 + $0xba8] sm:$0xff]
    %v4459 = vld [vmem:[#allocation8 + $0xbb0] sm:$0xff]
    %v4460 = vld [vmem:[#allocation8 + $0xbb8] sm:$0xff]
    %v4461 = vld [vmem:[#allocation8 + $0xbc0] sm:$0xff]
    %v4462 = vld [vmem:[#allocation8 + $0xbc8] sm:$0xff]
    %v4463 = vld [vmem:[#allocation8 + $0xbd0] sm:$0xff]
    %v4464 = vld [vmem:[#allocation8 + $0xbd8] sm:$0xff]
    %v4465 = vld [vmem:[#allocation8 + $0xbe0] sm:$0xff]
    %v4466 = vld [vmem:[#allocation8 + $0xbe8] sm:$0xff]
    %v4467 = vld [vmem:[#allocation8 + $0xbf0] sm:$0xff]
    %v4468 = vld [vmem:[#allocation8 + $0xbf8] sm:$0xff]
    %v4469 = vld [vmem:[#allocation8 + $0xc00] sm:$0xff]
    %v4470 = vld [vmem:[#allocation8 + $0xc08] sm:$0xff]
    %v4471 = vld [vmem:[#allocation8 + $0xc10] sm:$0xff]
    %v4472 = vld [vmem:[#allocation8 + $0xc18] sm:$0xff]
    %v4473 = vld [vmem:[#allocation8 + $0xc20] sm:$0xff]
    %v4474 = vld [vmem:[#allocation8 + $0xc28] sm:$0xff]
    %v4475 = vld [vmem:[#allocation8 + $0xc30] sm:$0xff]
    %v4476 = vld [vmem:[#allocation8 + $0xc38] sm:$0xff]
    %v4477 = vld [vmem:[#allocation8 + $0xc40] sm:$0xff]
    %v4478 = vld [vmem:[#allocation8 + $0xc48] sm:$0xff]
    %v4479 = vld [vmem:[#allocation8 + $0xc50] sm:$0xff]
    %v4480 = vld [vmem:[#allocation8 + $0xc58] sm:$0xff]
    %v4481 = vld [vmem:[#allocation8 + $0xc60] sm:$0xff]
    %v4482 = vld [vmem:[#allocation8 + $0xc68] sm:$0xff]
    %v4483 = vld [vmem:[#allocation8 + $0xc70] sm:$0xff]
    %v4484 = vld [vmem:[#allocation8 + $0xc78] sm:$0xff]
    %v4485 = vld [vmem:[#allocation8 + $0xc80] sm:$0xff]
    %v4486 = vld [vmem:[#allocation8 + $0xc88] sm:$0xff]
    %v4487 = vld [vmem:[#allocation8 + $0xc90] sm:$0xff]
    %v4488 = vld [vmem:[#allocation8 + $0xc98] sm:$0xff]
    %v4489 = vld [vmem:[#allocation8 + $0xca0] sm:$0xff]
    %v4490 = vld [vmem:[#allocation8 + $0xca8] sm:$0xff]
    %v4491 = vld [vmem:[#allocation8 + $0xcb0] sm:$0xff]
    %v4492 = vld [vmem:[#allocation8 + $0xcb8] sm:$0xff]
    %v4493 = vld [vmem:[#allocation8 + $0xcc0] sm:$0xff]
    %v4494 = vld [vmem:[#allocation8 + $0xcc8] sm:$0xff]
    %v4495 = vld [vmem:[#allocation8 + $0xcd0] sm:$0xff]
    %v4496 = vld [vmem:[#allocation8 + $0xcd8] sm:$0xff]
    %v4497 = vld [vmem:[#allocation8 + $0xce0] sm:$0xff]
    %v4498 = vld [vmem:[#allocation8 + $0xce8] sm:$0xff]
    %v4499 = vld [vmem:[#allocation8 + $0xcf0] sm:$0xff]
    %v4500 = vld [vmem:[#allocation8 + $0xcf8] sm:$0xff]
    %v4501 = vld [vmem:[#allocation8 + $0xd00] sm:$0xff]
    %v4502 = vld [vmem:[#allocation8 + $0xd08] sm:$0xff]
    %v4503 = vld [vmem:[#allocation8 + $0xd10] sm:$0xff]
    %v4504 = vld [vmem:[#allocation8 + $0xd18] sm:$0xff]
    %v4505 = vld [vmem:[#allocation8 + $0xd20] sm:$0xff]
    %v4506 = vld [vmem:[#allocation8 + $0xd28] sm:$0xff]
    %v4507 = vld [vmem:[#allocation8 + $0xd30] sm:$0xff]
    %v4508 = vld [vmem:[#allocation8 + $0xd38] sm:$0xff]
    %v4509 = vld [vmem:[#allocation8 + $0xd40] sm:$0xff]
    %v4510 = vld [vmem:[#allocation8 + $0xd48] sm:$0xff]
    %v4511 = vld [vmem:[#allocation8 + $0xd50] sm:$0xff]
    %v4512 = vld [vmem:[#allocation8 + $0xd58] sm:$0xff]
    %v4513 = vld [vmem:[#allocation8 + $0xd60] sm:$0xff]
    %v4514 = vld [vmem:[#allocation8 + $0xd68] sm:$0xff]
    %v4515 = vld [vmem:[#allocation8 + $0xd70] sm:$0xff]
    %v4516 = vld [vmem:[#allocation8 + $0xd78] sm:$0xff]
    %v4517 = vld [vmem:[#allocation8 + $0xd80] sm:$0xff]
    %v4518 = vld [vmem:[#allocation8 + $0xd88] sm:$0xff]
    %v4519 = vld [vmem:[#allocation8 + $0xd90] sm:$0xff]
    %v4520 = vld [vmem:[#allocation8 + $0xd98] sm:$0xff]
    %v4521 = vld [vmem:[#allocation8 + $0xda0] sm:$0xff]
    %v4522 = vld [vmem:[#allocation8 + $0xda8] sm:$0xff]
    %v4523 = vld [vmem:[#allocation8 + $0xdb0] sm:$0xff]
    %v4524 = vld [vmem:[#allocation8 + $0xdb8] sm:$0xff]
    %v4525 = vld [vmem:[#allocation8 + $0xdc0] sm:$0xff]
    %v4526 = vld [vmem:[#allocation8 + $0xdc8] sm:$0xff]
    %v4527 = vld [vmem:[#allocation8 + $0xdd0] sm:$0xff]
    %v4528 = vld [vmem:[#allocation8 + $0xdd8] sm:$0xff]
    %v4529 = vld [vmem:[#allocation8 + $0xde0] sm:$0xff]
    %v4530 = vld [vmem:[#allocation8 + $0xde8] sm:$0xff]
    %v4531 = vld [vmem:[#allocation8 + $0xdf0] sm:$0xff]
    %v4532 = vld [vmem:[#allocation8 + $0xdf8] sm:$0xff]
    %v4533 = vld [vmem:[#allocation8 + $0xe00] sm:$0xff]
    %v4534 = vld [vmem:[#allocation8 + $0xe08] sm:$0xff]
    %v4535 = vld [vmem:[#allocation8 + $0xe10] sm:$0xff]
    %v4536 = vld [vmem:[#allocation8 + $0xe18] sm:$0xff]
    %v4537 = vld [vmem:[#allocation8 + $0xe20] sm:$0xff]
    %v4538 = vld [vmem:[#allocation8 + $0xe28] sm:$0xff]
    %v4539 = vld [vmem:[#allocation8 + $0xe30] sm:$0xff]
    %v4540 = vld [vmem:[#allocation8 + $0xe38] sm:$0xff]
    %v4541 = vld [vmem:[#allocation8 + $0xe40] sm:$0xff]
    %v4542 = vld [vmem:[#allocation8 + $0xe48] sm:$0xff]
    %v4543 = vld [vmem:[#allocation8 + $0xe50] sm:$0xff]
    %v4544 = vld [vmem:[#allocation8 + $0xe58] sm:$0xff]
    %v4545 = vld [vmem:[#allocation8 + $0xe60] sm:$0xff]
    %v4546 = vld [vmem:[#allocation8 + $0xe68] sm:$0xff]
    %v4547 = vld [vmem:[#allocation8 + $0xe70] sm:$0xff]
    %v4548 = vld [vmem:[#allocation8 + $0xe78] sm:$0xff]
    %v4549 = vld [vmem:[#allocation8 + $0xe80] sm:$0xff]
    %v4550 = vld [vmem:[#allocation8 + $0xe88] sm:$0xff]
    %v4551 = vld [vmem:[#allocation8 + $0xe90] sm:$0xff]
    %v4552 = vld [vmem:[#allocation8 + $0xe98] sm:$0xff]
    %v4553 = vld [vmem:[#allocation8 + $0xea0] sm:$0xff]
    %v4554 = vld [vmem:[#allocation8 + $0xea8] sm:$0xff]
    %v4555 = vld [vmem:[#allocation8 + $0xeb0] sm:$0xff]
    %v4556 = vld [vmem:[#allocation8 + $0xeb8] sm:$0xff]
    %v4557 = vld [vmem:[#allocation8 + $0xec0] sm:$0xff]
    %v4558 = vld [vmem:[#allocation8 + $0xec8] sm:$0xff]
    %v4559 = vld [vmem:[#allocation8 + $0xed0] sm:$0xff]
    %v4560 = vld [vmem:[#allocation8 + $0xed8] sm:$0xff]
    %v4561 = vld [vmem:[#allocation8 + $0xee0] sm:$0xff]
    %v4562 = vld [vmem:[#allocation8 + $0xee8] sm:$0xff]
    %v4563 = vld [vmem:[#allocation8 + $0xef0] sm:$0xff]
    %v4564 = vld [vmem:[#allocation8 + $0xef8] sm:$0xff]
    %v4565 = vld [vmem:[#allocation8 + $0xf00] sm:$0xff]
    %v4566 = vld [vmem:[#allocation8 + $0xf08] sm:$0xff]
    %v4567 = vld [vmem:[#allocation8 + $0xf10] sm:$0xff]
    %v4568 = vld [vmem:[#allocation8 + $0xf18] sm:$0xff]
    %v4569 = vld [vmem:[#allocation8 + $0xf20] sm:$0xff]
    %v4570 = vld [vmem:[#allocation8 + $0xf28] sm:$0xff]
    %v4571 = vld [vmem:[#allocation8 + $0xf30] sm:$0xff]
    %v4572 = vld [vmem:[#allocation8 + $0xf38] sm:$0xff]
    %v4573 = vld [vmem:[#allocation8 + $0xf40] sm:$0xff]
    %v4574 = vld [vmem:[#allocation8 + $0xf48] sm:$0xff]
    %v4575 = vld [vmem:[#allocation8 + $0xf50] sm:$0xff]
    %v4576 = vld [vmem:[#allocation8 + $0xf58] sm:$0xff]
    %v4577 = vld [vmem:[#allocation8 + $0xf60] sm:$0xff]
    %v4578 = vld [vmem:[#allocation8 + $0xf68] sm:$0xff]
    %v4579 = vld [vmem:[#allocation8 + $0xf70] sm:$0xff]
    %v4580 = vld [vmem:[#allocation8 + $0xf78] sm:$0xff]
    %v4581 = vld [vmem:[#allocation8 + $0xf80] sm:$0xff]
    %v4582 = vld [vmem:[#allocation8 + $0xf88] sm:$0xff]
    %v4583 = vld [vmem:[#allocation8 + $0xf90] sm:$0xff]
    %v4584 = vld [vmem:[#allocation8 + $0xf98] sm:$0xff]
    %v4585 = vld [vmem:[#allocation8 + $0xfa0] sm:$0xff]
    %v4586 = vld [vmem:[#allocation8 + $0xfa8] sm:$0xff]
    %v4587 = vld [vmem:[#allocation8 + $0xfb0] sm:$0xff]
    %v4588 = vld [vmem:[#allocation8 + $0xfb8] sm:$0xff]
    %v4589 = vld [vmem:[#allocation8 + $0xfc0] sm:$0xff]
    %v4590 = vld [vmem:[#allocation8 + $0xfc8] sm:$0xff]
    %v4591 = vld [vmem:[#allocation8 + $0xfd0] sm:$0xff]
    %v4592 = vld [vmem:[#allocation8 + $0xfd8] sm:$0xff]
    %v4593 = vld [vmem:[#allocation8 + $0xfe0] sm:$0xff]
    %v4594 = vld [vmem:[#allocation8 + $0xfe8] sm:$0xff]
    %v4595 = vld [vmem:[#allocation8 + $0xff0] sm:$0xff]
    %v4596 = vld [vmem:[#allocation8 + $0xff8] sm:$0xff]
    %v4597 = vld [vmem:[#allocation10] sm:$0xff]
    %v4599 = vperm.slane %v4597, 0
    %v4600 = vperm.slane %v4597, 1
    %v4601 = vperm.slane %v4597, 2
    %v4602 = vperm.slane %v4597, 3
    %v4603 = vperm.slane %v4597, 4
    %v4604 = vperm.slane %v4597, 5
    %v4605 = vperm.slane %v4597, 6
    %v4606 = vperm.slane %v4597, 7
    %v5127 = vunpack.c.l.b16 %v4085
    %v5128 = vunpack.c.h.b16 %v4085
    %v5129 = vunpack.c.l.b16 %v4086
    %v5130 = vunpack.c.h.b16 %v4086
    %v5131 = vunpack.c.l.b16 %v4087
    %v5132 = vunpack.c.h.b16 %v4087
    %v5133 = vunpack.c.l.b16 %v4088
    %v5134 = vunpack.c.h.b16 %v4088
    %v5135 = vunpack.c.l.b16 %v4089
    %v5136 = vunpack.c.h.b16 %v4089
    %v5137 = vunpack.c.l.b16 %v4090
    %v5138 = vunpack.c.h.b16 %v4090
    %v5139 = vunpack.c.l.b16 %v4091
    %v5140 = vunpack.c.h.b16 %v4091
    %v5141 = vunpack.c.l.b16 %v4092
    %v5142 = vunpack.c.h.b16 %v4092
    %v5143 = vunpack.c.l.b16 %v4093
    %v5144 = vunpack.c.h.b16 %v4093
    %v5145 = vunpack.c.l.b16 %v4094
    %v5146 = vunpack.c.h.b16 %v4094
    %v5147 = vunpack.c.l.b16 %v4095
    %v5148 = vunpack.c.h.b16 %v4095
    %v5149 = vunpack.c.l.b16 %v4096
    %v5150 = vunpack.c.h.b16 %v4096
    %v5151 = vunpack.c.l.b16 %v4097
    %v5152 = vunpack.c.h.b16 %v4097
    %v5153 = vunpack.c.l.b16 %v4098
    %v5154 = vunpack.c.h.b16 %v4098
    %v5155 = vunpack.c.l.b16 %v4099
    %v5156 = vunpack.c.h.b16 %v4099
    %v5157 = vunpack.c.l.b16 %v4100
    %v5158 = vunpack.c.h.b16 %v4100
    %v5159 = vunpack.c.l.b16 %v4101
    %v5160 = vunpack.c.h.b16 %v4101
    %v5161 = vunpack.c.l.b16 %v4102
    %v5162 = vunpack.c.h.b16 %v4102
    %v5163 = vunpack.c.l.b16 %v4103
    %v5164 = vunpack.c.h.b16 %v4103
    %v5165 = vunpack.c.l.b16 %v4104
    %v5166 = vunpack.c.h.b16 %v4104
    %v5167 = vunpack.c.l.b16 %v4105
    %v5168 = vunpack.c.h.b16 %v4105
    %v5169 = vunpack.c.l.b16 %v4106
    %v5170 = vunpack.c.h.b16 %v4106
    %v5171 = vunpack.c.l.b16 %v4107
    %v5172 = vunpack.c.h.b16 %v4107
    %v5173 = vunpack.c.l.b16 %v4108
    %v5174 = vunpack.c.h.b16 %v4108
    %v5175 = vunpack.c.l.b16 %v4109
    %v5176 = vunpack.c.h.b16 %v4109
    %v5177 = vunpack.c.l.b16 %v4110
    %v5178 = vunpack.c.h.b16 %v4110
    %v5179 = vunpack.c.l.b16 %v4111
    %v5180 = vunpack.c.h.b16 %v4111
    %v5181 = vunpack.c.l.b16 %v4112
    %v5182 = vunpack.c.h.b16 %v4112
    %v5183 = vunpack.c.l.b16 %v4113
    %v5184 = vunpack.c.h.b16 %v4113
    %v5185 = vunpack.c.l.b16 %v4114
    %v5186 = vunpack.c.h.b16 %v4114
    %v5187 = vunpack.c.l.b16 %v4115
    %v5188 = vunpack.c.h.b16 %v4115
    %v5189 = vunpack.c.l.b16 %v4116
    %v5190 = vunpack.c.h.b16 %v4116
    %v5191 = vunpack.c.l.b16 %v4117
    %v5192 = vunpack.c.h.b16 %v4117
    %v5193 = vunpack.c.l.b16 %v4118
    %v5194 = vunpack.c.h.b16 %v4118
    %v5195 = vunpack.c.l.b16 %v4119
    %v5196 = vunpack.c.h.b16 %v4119
    %v5197 = vunpack.c.l.b16 %v4120
    %v5198 = vunpack.c.h.b16 %v4120
    %v5199 = vunpack.c.l.b16 %v4121
    %v5200 = vunpack.c.h.b16 %v4121
    %v5201 = vunpack.c.l.b16 %v4122
    %v5202 = vunpack.c.h.b16 %v4122
    %v5203 = vunpack.c.l.b16 %v4123
    %v5204 = vunpack.c.h.b16 %v4123
    %v5205 = vunpack.c.l.b16 %v4124
    %v5206 = vunpack.c.h.b16 %v4124
    %v5207 = vunpack.c.l.b16 %v4125
    %v5208 = vunpack.c.h.b16 %v4125
    %v5209 = vunpack.c.l.b16 %v4126
    %v5210 = vunpack.c.h.b16 %v4126
    %v5211 = vunpack.c.l.b16 %v4127
    %v5212 = vunpack.c.h.b16 %v4127
    %v5213 = vunpack.c.l.b16 %v4128
    %v5214 = vunpack.c.h.b16 %v4128
    %v5215 = vunpack.c.l.b16 %v4129
    %v5216 = vunpack.c.h.b16 %v4129
    %v5217 = vunpack.c.l.b16 %v4130
    %v5218 = vunpack.c.h.b16 %v4130
    %v5219 = vunpack.c.l.b16 %v4131
    %v5220 = vunpack.c.h.b16 %v4131
    %v5221 = vunpack.c.l.b16 %v4132
    %v5222 = vunpack.c.h.b16 %v4132
    %v5223 = vunpack.c.l.b16 %v4133
    %v5224 = vunpack.c.h.b16 %v4133
    %v5225 = vunpack.c.l.b16 %v4134
    %v5226 = vunpack.c.h.b16 %v4134
    %v5227 = vunpack.c.l.b16 %v4135
    %v5228 = vunpack.c.h.b16 %v4135
    %v5229 = vunpack.c.l.b16 %v4136
    %v5230 = vunpack.c.h.b16 %v4136
    %v5231 = vunpack.c.l.b16 %v4137
    %v5232 = vunpack.c.h.b16 %v4137
    %v5233 = vunpack.c.l.b16 %v4138
    %v5234 = vunpack.c.h.b16 %v4138
    %v5235 = vunpack.c.l.b16 %v4139
    %v5236 = vunpack.c.h.b16 %v4139
    %v5237 = vunpack.c.l.b16 %v4140
    %v5238 = vunpack.c.h.b16 %v4140
    %v5239 = vunpack.c.l.b16 %v4141
    %v5240 = vunpack.c.h.b16 %v4141
    %v5241 = vunpack.c.l.b16 %v4142
    %v5242 = vunpack.c.h.b16 %v4142
    %v5243 = vunpack.c.l.b16 %v4143
    %v5244 = vunpack.c.h.b16 %v4143
    %v5245 = vunpack.c.l.b16 %v4144
    %v5246 = vunpack.c.h.b16 %v4144
    %v5247 = vunpack.c.l.b16 %v4145
    %v5248 = vunpack.c.h.b16 %v4145
    %v5249 = vunpack.c.l.b16 %v4146
    %v5250 = vunpack.c.h.b16 %v4146
    %v5251 = vunpack.c.l.b16 %v4147
    %v5252 = vunpack.c.h.b16 %v4147
    %v5253 = vunpack.c.l.b16 %v4148
    %v5254 = vunpack.c.h.b16 %v4148
    %v5255 = vunpack.c.l.b16 %v4149
    %v5256 = vunpack.c.h.b16 %v4149
    %v5257 = vunpack.c.l.b16 %v4150
    %v5258 = vunpack.c.h.b16 %v4150
    %v5259 = vunpack.c.l.b16 %v4151
    %v5260 = vunpack.c.h.b16 %v4151
    %v5261 = vunpack.c.l.b16 %v4152
    %v5262 = vunpack.c.h.b16 %v4152
    %v5263 = vunpack.c.l.b16 %v4153
    %v5264 = vunpack.c.h.b16 %v4153
    %v5265 = vunpack.c.l.b16 %v4154
    %v5266 = vunpack.c.h.b16 %v4154
    %v5267 = vunpack.c.l.b16 %v4155
    %v5268 = vunpack.c.h.b16 %v4155
    %v5269 = vunpack.c.l.b16 %v4156
    %v5270 = vunpack.c.h.b16 %v4156
    %v5271 = vunpack.c.l.b16 %v4157
    %v5272 = vunpack.c.h.b16 %v4157
    %v5273 = vunpack.c.l.b16 %v4158
    %v5274 = vunpack.c.h.b16 %v4158
    %v5275 = vunpack.c.l.b16 %v4159
    %v5276 = vunpack.c.h.b16 %v4159
    %v5277 = vunpack.c.l.b16 %v4160
    %v5278 = vunpack.c.h.b16 %v4160
    %v5279 = vunpack.c.l.b16 %v4161
    %v5280 = vunpack.c.h.b16 %v4161
    %v5281 = vunpack.c.l.b16 %v4162
    %v5282 = vunpack.c.h.b16 %v4162
    %v5283 = vunpack.c.l.b16 %v4163
    %v5284 = vunpack.c.h.b16 %v4163
    %v5285 = vunpack.c.l.b16 %v4164
    %v5286 = vunpack.c.h.b16 %v4164
    %v5287 = vunpack.c.l.b16 %v4165
    %v5288 = vunpack.c.h.b16 %v4165
    %v5289 = vunpack.c.l.b16 %v4166
    %v5290 = vunpack.c.h.b16 %v4166
    %v5291 = vunpack.c.l.b16 %v4167
    %v5292 = vunpack.c.h.b16 %v4167
    %v5293 = vunpack.c.l.b16 %v4168
    %v5294 = vunpack.c.h.b16 %v4168
    %v5295 = vunpack.c.l.b16 %v4169
    %v5296 = vunpack.c.h.b16 %v4169
    %v5297 = vunpack.c.l.b16 %v4170
    %v5298 = vunpack.c.h.b16 %v4170
    %v5299 = vunpack.c.l.b16 %v4171
    %v5300 = vunpack.c.h.b16 %v4171
    %v5301 = vunpack.c.l.b16 %v4172
    %v5302 = vunpack.c.h.b16 %v4172
    %v5303 = vunpack.c.l.b16 %v4173
    %v5304 = vunpack.c.h.b16 %v4173
    %v5305 = vunpack.c.l.b16 %v4174
    %v5306 = vunpack.c.h.b16 %v4174
    %v5307 = vunpack.c.l.b16 %v4175
    %v5308 = vunpack.c.h.b16 %v4175
    %v5309 = vunpack.c.l.b16 %v4176
    %v5310 = vunpack.c.h.b16 %v4176
    %v5311 = vunpack.c.l.b16 %v4177
    %v5312 = vunpack.c.h.b16 %v4177
    %v5313 = vunpack.c.l.b16 %v4178
    %v5314 = vunpack.c.h.b16 %v4178
    %v5315 = vunpack.c.l.b16 %v4179
    %v5316 = vunpack.c.h.b16 %v4179
    %v5317 = vunpack.c.l.b16 %v4180
    %v5318 = vunpack.c.h.b16 %v4180
    %v5319 = vunpack.c.l.b16 %v4181
    %v5320 = vunpack.c.h.b16 %v4181
    %v5321 = vunpack.c.l.b16 %v4182
    %v5322 = vunpack.c.h.b16 %v4182
    %v5323 = vunpack.c.l.b16 %v4183
    %v5324 = vunpack.c.h.b16 %v4183
    %v5325 = vunpack.c.l.b16 %v4184
    %v5326 = vunpack.c.h.b16 %v4184
    %v5327 = vunpack.c.l.b16 %v4185
    %v5328 = vunpack.c.h.b16 %v4185
    %v5329 = vunpack.c.l.b16 %v4186
    %v5330 = vunpack.c.h.b16 %v4186
    %v5331 = vunpack.c.l.b16 %v4187
    %v5332 = vunpack.c.h.b16 %v4187
    %v5333 = vunpack.c.l.b16 %v4188
    %v5334 = vunpack.c.h.b16 %v4188
    %v5335 = vunpack.c.l.b16 %v4189
    %v5336 = vunpack.c.h.b16 %v4189
    %v5337 = vunpack.c.l.b16 %v4190
    %v5338 = vunpack.c.h.b16 %v4190
    %v5339 = vunpack.c.l.b16 %v4191
    %v5340 = vunpack.c.h.b16 %v4191
    %v5341 = vunpack.c.l.b16 %v4192
    %v5342 = vunpack.c.h.b16 %v4192
    %v5343 = vunpack.c.l.b16 %v4193
    %v5344 = vunpack.c.h.b16 %v4193
    %v5345 = vunpack.c.l.b16 %v4194
    %v5346 = vunpack.c.h.b16 %v4194
    %v5347 = vunpack.c.l.b16 %v4195
    %v5348 = vunpack.c.h.b16 %v4195
    %v5349 = vunpack.c.l.b16 %v4196
    %v5350 = vunpack.c.h.b16 %v4196
    %v5351 = vunpack.c.l.b16 %v4197
    %v5352 = vunpack.c.h.b16 %v4197
    %v5353 = vunpack.c.l.b16 %v4198
    %v5354 = vunpack.c.h.b16 %v4198
    %v5355 = vunpack.c.l.b16 %v4199
    %v5356 = vunpack.c.h.b16 %v4199
    %v5357 = vunpack.c.l.b16 %v4200
    %v5358 = vunpack.c.h.b16 %v4200
    %v5359 = vunpack.c.l.b16 %v4201
    %v5360 = vunpack.c.h.b16 %v4201
    %v5361 = vunpack.c.l.b16 %v4202
    %v5362 = vunpack.c.h.b16 %v4202
    %v5363 = vunpack.c.l.b16 %v4203
    %v5364 = vunpack.c.h.b16 %v4203
    %v5365 = vunpack.c.l.b16 %v4204
    %v5366 = vunpack.c.h.b16 %v4204
    %v5367 = vunpack.c.l.b16 %v4205
    %v5368 = vunpack.c.h.b16 %v4205
    %v5369 = vunpack.c.l.b16 %v4206
    %v5370 = vunpack.c.h.b16 %v4206
    %v5371 = vunpack.c.l.b16 %v4207
    %v5372 = vunpack.c.h.b16 %v4207
    %v5373 = vunpack.c.l.b16 %v4208
    %v5374 = vunpack.c.h.b16 %v4208
    %v5375 = vunpack.c.l.b16 %v4209
    %v5376 = vunpack.c.h.b16 %v4209
    %v5377 = vunpack.c.l.b16 %v4210
    %v5378 = vunpack.c.h.b16 %v4210
    %v5379 = vunpack.c.l.b16 %v4211
    %v5380 = vunpack.c.h.b16 %v4211
    %v5381 = vunpack.c.l.b16 %v4212
    %v5382 = vunpack.c.h.b16 %v4212
    %v5383 = vunpack.c.l.b16 %v4213
    %v5384 = vunpack.c.h.b16 %v4213
    %v5385 = vunpack.c.l.b16 %v4214
    %v5386 = vunpack.c.h.b16 %v4214
    %v5387 = vunpack.c.l.b16 %v4215
    %v5388 = vunpack.c.h.b16 %v4215
    %v5389 = vunpack.c.l.b16 %v4216
    %v5390 = vunpack.c.h.b16 %v4216
    %v5391 = vunpack.c.l.b16 %v4217
    %v5392 = vunpack.c.h.b16 %v4217
    %v5393 = vunpack.c.l.b16 %v4218
    %v5394 = vunpack.c.h.b16 %v4218
    %v5395 = vunpack.c.l.b16 %v4219
    %v5396 = vunpack.c.h.b16 %v4219
    %v5397 = vunpack.c.l.b16 %v4220
    %v5398 = vunpack.c.h.b16 %v4220
    %v5399 = vunpack.c.l.b16 %v4221
    %v5400 = vunpack.c.h.b16 %v4221
    %v5401 = vunpack.c.l.b16 %v4222
    %v5402 = vunpack.c.h.b16 %v4222
    %v5403 = vunpack.c.l.b16 %v4223
    %v5404 = vunpack.c.h.b16 %v4223
    %v5405 = vunpack.c.l.b16 %v4224
    %v5406 = vunpack.c.h.b16 %v4224
    %v5407 = vunpack.c.l.b16 %v4225
    %v5408 = vunpack.c.h.b16 %v4225
    %v5409 = vunpack.c.l.b16 %v4226
    %v5410 = vunpack.c.h.b16 %v4226
    %v5411 = vunpack.c.l.b16 %v4227
    %v5412 = vunpack.c.h.b16 %v4227
    %v5413 = vunpack.c.l.b16 %v4228
    %v5414 = vunpack.c.h.b16 %v4228
    %v5415 = vunpack.c.l.b16 %v4229
    %v5416 = vunpack.c.h.b16 %v4229
    %v5417 = vunpack.c.l.b16 %v4230
    %v5418 = vunpack.c.h.b16 %v4230
    %v5419 = vunpack.c.l.b16 %v4231
    %v5420 = vunpack.c.h.b16 %v4231
    %v5421 = vunpack.c.l.b16 %v4232
    %v5422 = vunpack.c.h.b16 %v4232
    %v5423 = vunpack.c.l.b16 %v4233
    %v5424 = vunpack.c.h.b16 %v4233
    %v5425 = vunpack.c.l.b16 %v4234
    %v5426 = vunpack.c.h.b16 %v4234
    %v5427 = vunpack.c.l.b16 %v4235
    %v5428 = vunpack.c.h.b16 %v4235
    %v5429 = vunpack.c.l.b16 %v4236
    %v5430 = vunpack.c.h.b16 %v4236
    %v5431 = vunpack.c.l.b16 %v4237
    %v5432 = vunpack.c.h.b16 %v4237
    %v5433 = vunpack.c.l.b16 %v4238
    %v5434 = vunpack.c.h.b16 %v4238
    %v5435 = vunpack.c.l.b16 %v4239
    %v5436 = vunpack.c.h.b16 %v4239
    %v5437 = vunpack.c.l.b16 %v4240
    %v5438 = vunpack.c.h.b16 %v4240
    %v5439 = vunpack.c.l.b16 %v4241
    %v5440 = vunpack.c.h.b16 %v4241
    %v5441 = vunpack.c.l.b16 %v4242
    %v5442 = vunpack.c.h.b16 %v4242
    %v5443 = vunpack.c.l.b16 %v4243
    %v5444 = vunpack.c.h.b16 %v4243
    %v5445 = vunpack.c.l.b16 %v4244
    %v5446 = vunpack.c.h.b16 %v4244
    %v5447 = vunpack.c.l.b16 %v4245
    %v5448 = vunpack.c.h.b16 %v4245
    %v5449 = vunpack.c.l.b16 %v4246
    %v5450 = vunpack.c.h.b16 %v4246
    %v5451 = vunpack.c.l.b16 %v4247
    %v5452 = vunpack.c.h.b16 %v4247
    %v5453 = vunpack.c.l.b16 %v4248
    %v5454 = vunpack.c.h.b16 %v4248
    %v5455 = vunpack.c.l.b16 %v4249
    %v5456 = vunpack.c.h.b16 %v4249
    %v5457 = vunpack.c.l.b16 %v4250
    %v5458 = vunpack.c.h.b16 %v4250
    %v5459 = vunpack.c.l.b16 %v4251
    %v5460 = vunpack.c.h.b16 %v4251
    %v5461 = vunpack.c.l.b16 %v4252
    %v5462 = vunpack.c.h.b16 %v4252
    %v5463 = vunpack.c.l.b16 %v4253
    %v5464 = vunpack.c.h.b16 %v4253
    %v5465 = vunpack.c.l.b16 %v4254
    %v5466 = vunpack.c.h.b16 %v4254
    %v5467 = vunpack.c.l.b16 %v4255
    %v5468 = vunpack.c.h.b16 %v4255
    %v5469 = vunpack.c.l.b16 %v4256
    %v5470 = vunpack.c.h.b16 %v4256
    %v5471 = vunpack.c.l.b16 %v4257
    %v5472 = vunpack.c.h.b16 %v4257
    %v5473 = vunpack.c.l.b16 %v4258
    %v5474 = vunpack.c.h.b16 %v4258
    %v5475 = vunpack.c.l.b16 %v4259
    %v5476 = vunpack.c.h.b16 %v4259
    %v5477 = vunpack.c.l.b16 %v4260
    %v5478 = vunpack.c.h.b16 %v4260
    %v5479 = vunpack.c.l.b16 %v4261
    %v5480 = vunpack.c.h.b16 %v4261
    %v5481 = vunpack.c.l.b16 %v4262
    %v5482 = vunpack.c.h.b16 %v4262
    %v5483 = vunpack.c.l.b16 %v4263
    %v5484 = vunpack.c.h.b16 %v4263
    %v5485 = vunpack.c.l.b16 %v4264
    %v5486 = vunpack.c.h.b16 %v4264
    %v5487 = vunpack.c.l.b16 %v4265
    %v5488 = vunpack.c.h.b16 %v4265
    %v5489 = vunpack.c.l.b16 %v4266
    %v5490 = vunpack.c.h.b16 %v4266
    %v5491 = vunpack.c.l.b16 %v4267
    %v5492 = vunpack.c.h.b16 %v4267
    %v5493 = vunpack.c.l.b16 %v4268
    %v5494 = vunpack.c.h.b16 %v4268
    %v5495 = vunpack.c.l.b16 %v4269
    %v5496 = vunpack.c.h.b16 %v4269
    %v5497 = vunpack.c.l.b16 %v4270
    %v5498 = vunpack.c.h.b16 %v4270
    %v5499 = vunpack.c.l.b16 %v4271
    %v5500 = vunpack.c.h.b16 %v4271
    %v5501 = vunpack.c.l.b16 %v4272
    %v5502 = vunpack.c.h.b16 %v4272
    %v5503 = vunpack.c.l.b16 %v4273
    %v5504 = vunpack.c.h.b16 %v4273
    %v5505 = vunpack.c.l.b16 %v4274
    %v5506 = vunpack.c.h.b16 %v4274
    %v5507 = vunpack.c.l.b16 %v4275
    %v5508 = vunpack.c.h.b16 %v4275
    %v5509 = vunpack.c.l.b16 %v4276
    %v5510 = vunpack.c.h.b16 %v4276
    %v5511 = vunpack.c.l.b16 %v4277
    %v5512 = vunpack.c.h.b16 %v4277
    %v5513 = vunpack.c.l.b16 %v4278
    %v5514 = vunpack.c.h.b16 %v4278
    %v5515 = vunpack.c.l.b16 %v4279
    %v5516 = vunpack.c.h.b16 %v4279
    %v5517 = vunpack.c.l.b16 %v4280
    %v5518 = vunpack.c.h.b16 %v4280
    %v5519 = vunpack.c.l.b16 %v4281
    %v5520 = vunpack.c.h.b16 %v4281
    %v5521 = vunpack.c.l.b16 %v4282
    %v5522 = vunpack.c.h.b16 %v4282
    %v5523 = vunpack.c.l.b16 %v4283
    %v5524 = vunpack.c.h.b16 %v4283
    %v5525 = vunpack.c.l.b16 %v4284
    %v5526 = vunpack.c.h.b16 %v4284
    %v5527 = vunpack.c.l.b16 %v4285
    %v5528 = vunpack.c.h.b16 %v4285
    %v5529 = vunpack.c.l.b16 %v4286
    %v5530 = vunpack.c.h.b16 %v4286
    %v5531 = vunpack.c.l.b16 %v4287
    %v5532 = vunpack.c.h.b16 %v4287
    %v5533 = vunpack.c.l.b16 %v4288
    %v5534 = vunpack.c.h.b16 %v4288
    %v5535 = vunpack.c.l.b16 %v4289
    %v5536 = vunpack.c.h.b16 %v4289
    %v5537 = vunpack.c.l.b16 %v4290
    %v5538 = vunpack.c.h.b16 %v4290
    %v5539 = vunpack.c.l.b16 %v4291
    %v5540 = vunpack.c.h.b16 %v4291
    %v5541 = vunpack.c.l.b16 %v4292
    %v5542 = vunpack.c.h.b16 %v4292
    %v5543 = vunpack.c.l.b16 %v4293
    %v5544 = vunpack.c.h.b16 %v4293
    %v5545 = vunpack.c.l.b16 %v4294
    %v5546 = vunpack.c.h.b16 %v4294
    %v5547 = vunpack.c.l.b16 %v4295
    %v5548 = vunpack.c.h.b16 %v4295
    %v5549 = vunpack.c.l.b16 %v4296
    %v5550 = vunpack.c.h.b16 %v4296
    %v5551 = vunpack.c.l.b16 %v4297
    %v5552 = vunpack.c.h.b16 %v4297
    %v5553 = vunpack.c.l.b16 %v4298
    %v5554 = vunpack.c.h.b16 %v4298
    %v5555 = vunpack.c.l.b16 %v4299
    %v5556 = vunpack.c.h.b16 %v4299
    %v5557 = vunpack.c.l.b16 %v4300
    %v5558 = vunpack.c.h.b16 %v4300
    %v5559 = vunpack.c.l.b16 %v4301
    %v5560 = vunpack.c.h.b16 %v4301
    %v5561 = vunpack.c.l.b16 %v4302
    %v5562 = vunpack.c.h.b16 %v4302
    %v5563 = vunpack.c.l.b16 %v4303
    %v5564 = vunpack.c.h.b16 %v4303
    %v5565 = vunpack.c.l.b16 %v4304
    %v5566 = vunpack.c.h.b16 %v4304
    %v5567 = vunpack.c.l.b16 %v4305
    %v5568 = vunpack.c.h.b16 %v4305
    %v5569 = vunpack.c.l.b16 %v4306
    %v5570 = vunpack.c.h.b16 %v4306
    %v5571 = vunpack.c.l.b16 %v4307
    %v5572 = vunpack.c.h.b16 %v4307
    %v5573 = vunpack.c.l.b16 %v4308
    %v5574 = vunpack.c.h.b16 %v4308
    %v5575 = vunpack.c.l.b16 %v4309
    %v5576 = vunpack.c.h.b16 %v4309
    %v5577 = vunpack.c.l.b16 %v4310
    %v5578 = vunpack.c.h.b16 %v4310
    %v5579 = vunpack.c.l.b16 %v4311
    %v5580 = vunpack.c.h.b16 %v4311
    %v5581 = vunpack.c.l.b16 %v4312
    %v5582 = vunpack.c.h.b16 %v4312
    %v5583 = vunpack.c.l.b16 %v4313
    %v5584 = vunpack.c.h.b16 %v4313
    %v5585 = vunpack.c.l.b16 %v4314
    %v5586 = vunpack.c.h.b16 %v4314
    %v5587 = vunpack.c.l.b16 %v4315
    %v5588 = vunpack.c.h.b16 %v4315
    %v5589 = vunpack.c.l.b16 %v4316
    %v5590 = vunpack.c.h.b16 %v4316
    %v5591 = vunpack.c.l.b16 %v4317
    %v5592 = vunpack.c.h.b16 %v4317
    %v5593 = vunpack.c.l.b16 %v4318
    %v5594 = vunpack.c.h.b16 %v4318
    %v5595 = vunpack.c.l.b16 %v4319
    %v5596 = vunpack.c.h.b16 %v4319
    %v5597 = vunpack.c.l.b16 %v4320
    %v5598 = vunpack.c.h.b16 %v4320
    %v5599 = vunpack.c.l.b16 %v4321
    %v5600 = vunpack.c.h.b16 %v4321
    %v5601 = vunpack.c.l.b16 %v4322
    %v5602 = vunpack.c.h.b16 %v4322
    %v5603 = vunpack.c.l.b16 %v4323
    %v5604 = vunpack.c.h.b16 %v4323
    %v5605 = vunpack.c.l.b16 %v4324
    %v5606 = vunpack.c.h.b16 %v4324
    %v5607 = vunpack.c.l.b16 %v4325
    %v5608 = vunpack.c.h.b16 %v4325
    %v5609 = vunpack.c.l.b16 %v4326
    %v5610 = vunpack.c.h.b16 %v4326
    %v5611 = vunpack.c.l.b16 %v4327
    %v5612 = vunpack.c.h.b16 %v4327
    %v5613 = vunpack.c.l.b16 %v4328
    %v5614 = vunpack.c.h.b16 %v4328
    %v5615 = vunpack.c.l.b16 %v4329
    %v5616 = vunpack.c.h.b16 %v4329
    %v5617 = vunpack.c.l.b16 %v4330
    %v5618 = vunpack.c.h.b16 %v4330
    %v5619 = vunpack.c.l.b16 %v4331
    %v5620 = vunpack.c.h.b16 %v4331
    %v5621 = vunpack.c.l.b16 %v4332
    %v5622 = vunpack.c.h.b16 %v4332
    %v5623 = vunpack.c.l.b16 %v4333
    %v5624 = vunpack.c.h.b16 %v4333
    %v5625 = vunpack.c.l.b16 %v4334
    %v5626 = vunpack.c.h.b16 %v4334
    %v5627 = vunpack.c.l.b16 %v4335
    %v5628 = vunpack.c.h.b16 %v4335
    %v5629 = vunpack.c.l.b16 %v4336
    %v5630 = vunpack.c.h.b16 %v4336
    %v5631 = vunpack.c.l.b16 %v4337
    %v5632 = vunpack.c.h.b16 %v4337
    %v5633 = vunpack.c.l.b16 %v4338
    %v5634 = vunpack.c.h.b16 %v4338
    %v5635 = vunpack.c.l.b16 %v4339
    %v5636 = vunpack.c.h.b16 %v4339
    %v5637 = vunpack.c.l.b16 %v4340
    %v5638 = vunpack.c.h.b16 %v4340
    %v5639 = vunpack.c.l.b16 %v4341
    %v5640 = vunpack.c.h.b16 %v4341
    %v5641 = vunpack.c.l.b16 %v4342
    %v5642 = vunpack.c.h.b16 %v4342
    %v5643 = vunpack.c.l.b16 %v4343
    %v5644 = vunpack.c.h.b16 %v4343
    %v5645 = vunpack.c.l.b16 %v4344
    %v5646 = vunpack.c.h.b16 %v4344
    %v5647 = vunpack.c.l.b16 %v4345
    %v5648 = vunpack.c.h.b16 %v4345
    %v5649 = vunpack.c.l.b16 %v4346
    %v5650 = vunpack.c.h.b16 %v4346
    %v5651 = vunpack.c.l.b16 %v4347
    %v5652 = vunpack.c.h.b16 %v4347
    %v5653 = vunpack.c.l.b16 %v4348
    %v5654 = vunpack.c.h.b16 %v4348
    %v5655 = vunpack.c.l.b16 %v4349
    %v5656 = vunpack.c.h.b16 %v4349
    %v5657 = vunpack.c.l.b16 %v4350
    %v5658 = vunpack.c.h.b16 %v4350
    %v5659 = vunpack.c.l.b16 %v4351
    %v5660 = vunpack.c.h.b16 %v4351
    %v5661 = vunpack.c.l.b16 %v4352
    %v5662 = vunpack.c.h.b16 %v4352
    %v5663 = vunpack.c.l.b16 %v4353
    %v5664 = vunpack.c.h.b16 %v4353
    %v5665 = vunpack.c.l.b16 %v4354
    %v5666 = vunpack.c.h.b16 %v4354
    %v5667 = vunpack.c.l.b16 %v4355
    %v5668 = vunpack.c.h.b16 %v4355
    %v5669 = vunpack.c.l.b16 %v4356
    %v5670 = vunpack.c.h.b16 %v4356
    %v5671 = vunpack.c.l.b16 %v4357
    %v5672 = vunpack.c.h.b16 %v4357
    %v5673 = vunpack.c.l.b16 %v4358
    %v5674 = vunpack.c.h.b16 %v4358
    %v5675 = vunpack.c.l.b16 %v4359
    %v5676 = vunpack.c.h.b16 %v4359
    %v5677 = vunpack.c.l.b16 %v4360
    %v5678 = vunpack.c.h.b16 %v4360
    %v5679 = vunpack.c.l.b16 %v4361
    %v5680 = vunpack.c.h.b16 %v4361
    %v5681 = vunpack.c.l.b16 %v4362
    %v5682 = vunpack.c.h.b16 %v4362
    %v5683 = vunpack.c.l.b16 %v4363
    %v5684 = vunpack.c.h.b16 %v4363
    %v5685 = vunpack.c.l.b16 %v4364
    %v5686 = vunpack.c.h.b16 %v4364
    %v5687 = vunpack.c.l.b16 %v4365
    %v5688 = vunpack.c.h.b16 %v4365
    %v5689 = vunpack.c.l.b16 %v4366
    %v5690 = vunpack.c.h.b16 %v4366
    %v5691 = vunpack.c.l.b16 %v4367
    %v5692 = vunpack.c.h.b16 %v4367
    %v5693 = vunpack.c.l.b16 %v4368
    %v5694 = vunpack.c.h.b16 %v4368
    %v5695 = vunpack.c.l.b16 %v4369
    %v5696 = vunpack.c.h.b16 %v4369
    %v5697 = vunpack.c.l.b16 %v4370
    %v5698 = vunpack.c.h.b16 %v4370
    %v5699 = vunpack.c.l.b16 %v4371
    %v5700 = vunpack.c.h.b16 %v4371
    %v5701 = vunpack.c.l.b16 %v4372
    %v5702 = vunpack.c.h.b16 %v4372
    %v5703 = vunpack.c.l.b16 %v4373
    %v5704 = vunpack.c.h.b16 %v4373
    %v5705 = vunpack.c.l.b16 %v4374
    %v5706 = vunpack.c.h.b16 %v4374
    %v5707 = vunpack.c.l.b16 %v4375
    %v5708 = vunpack.c.h.b16 %v4375
    %v5709 = vunpack.c.l.b16 %v4376
    %v5710 = vunpack.c.h.b16 %v4376
    %v5711 = vunpack.c.l.b16 %v4377
    %v5712 = vunpack.c.h.b16 %v4377
    %v5713 = vunpack.c.l.b16 %v4378
    %v5714 = vunpack.c.h.b16 %v4378
    %v5715 = vunpack.c.l.b16 %v4379
    %v5716 = vunpack.c.h.b16 %v4379
    %v5717 = vunpack.c.l.b16 %v4380
    %v5718 = vunpack.c.h.b16 %v4380
    %v5719 = vunpack.c.l.b16 %v4381
    %v5720 = vunpack.c.h.b16 %v4381
    %v5721 = vunpack.c.l.b16 %v4382
    %v5722 = vunpack.c.h.b16 %v4382
    %v5723 = vunpack.c.l.b16 %v4383
    %v5724 = vunpack.c.h.b16 %v4383
    %v5725 = vunpack.c.l.b16 %v4384
    %v5726 = vunpack.c.h.b16 %v4384
    %v5727 = vunpack.c.l.b16 %v4385
    %v5728 = vunpack.c.h.b16 %v4385
    %v5729 = vunpack.c.l.b16 %v4386
    %v5730 = vunpack.c.h.b16 %v4386
    %v5731 = vunpack.c.l.b16 %v4387
    %v5732 = vunpack.c.h.b16 %v4387
    %v5733 = vunpack.c.l.b16 %v4388
    %v5734 = vunpack.c.h.b16 %v4388
    %v5735 = vunpack.c.l.b16 %v4389
    %v5736 = vunpack.c.h.b16 %v4389
    %v5737 = vunpack.c.l.b16 %v4390
    %v5738 = vunpack.c.h.b16 %v4390
    %v5739 = vunpack.c.l.b16 %v4391
    %v5740 = vunpack.c.h.b16 %v4391
    %v5741 = vunpack.c.l.b16 %v4392
    %v5742 = vunpack.c.h.b16 %v4392
    %v5743 = vunpack.c.l.b16 %v4393
    %v5744 = vunpack.c.h.b16 %v4393
    %v5745 = vunpack.c.l.b16 %v4394
    %v5746 = vunpack.c.h.b16 %v4394
    %v5747 = vunpack.c.l.b16 %v4395
    %v5748 = vunpack.c.h.b16 %v4395
    %v5749 = vunpack.c.l.b16 %v4396
    %v5750 = vunpack.c.h.b16 %v4396
    %v5751 = vunpack.c.l.b16 %v4397
    %v5752 = vunpack.c.h.b16 %v4397
    %v5753 = vunpack.c.l.b16 %v4398
    %v5754 = vunpack.c.h.b16 %v4398
    %v5755 = vunpack.c.l.b16 %v4399
    %v5756 = vunpack.c.h.b16 %v4399
    %v5757 = vunpack.c.l.b16 %v4400
    %v5758 = vunpack.c.h.b16 %v4400
    %v5759 = vunpack.c.l.b16 %v4401
    %v5760 = vunpack.c.h.b16 %v4401
    %v5761 = vunpack.c.l.b16 %v4402
    %v5762 = vunpack.c.h.b16 %v4402
    %v5763 = vunpack.c.l.b16 %v4403
    %v5764 = vunpack.c.h.b16 %v4403
    %v5765 = vunpack.c.l.b16 %v4404
    %v5766 = vunpack.c.h.b16 %v4404
    %v5767 = vunpack.c.l.b16 %v4405
    %v5768 = vunpack.c.h.b16 %v4405
    %v5769 = vunpack.c.l.b16 %v4406
    %v5770 = vunpack.c.h.b16 %v4406
    %v5771 = vunpack.c.l.b16 %v4407
    %v5772 = vunpack.c.h.b16 %v4407
    %v5773 = vunpack.c.l.b16 %v4408
    %v5774 = vunpack.c.h.b16 %v4408
    %v5775 = vunpack.c.l.b16 %v4409
    %v5776 = vunpack.c.h.b16 %v4409
    %v5777 = vunpack.c.l.b16 %v4410
    %v5778 = vunpack.c.h.b16 %v4410
    %v5779 = vunpack.c.l.b16 %v4411
    %v5780 = vunpack.c.h.b16 %v4411
    %v5781 = vunpack.c.l.b16 %v4412
    %v5782 = vunpack.c.h.b16 %v4412
    %v5783 = vunpack.c.l.b16 %v4413
    %v5784 = vunpack.c.h.b16 %v4413
    %v5785 = vunpack.c.l.b16 %v4414
    %v5786 = vunpack.c.h.b16 %v4414
    %v5787 = vunpack.c.l.b16 %v4415
    %v5788 = vunpack.c.h.b16 %v4415
    %v5789 = vunpack.c.l.b16 %v4416
    %v5790 = vunpack.c.h.b16 %v4416
    %v5791 = vunpack.c.l.b16 %v4417
    %v5792 = vunpack.c.h.b16 %v4417
    %v5793 = vunpack.c.l.b16 %v4418
    %v5794 = vunpack.c.h.b16 %v4418
    %v5795 = vunpack.c.l.b16 %v4419
    %v5796 = vunpack.c.h.b16 %v4419
    %v5797 = vunpack.c.l.b16 %v4420
    %v5798 = vunpack.c.h.b16 %v4420
    %v5799 = vunpack.c.l.b16 %v4421
    %v5800 = vunpack.c.h.b16 %v4421
    %v5801 = vunpack.c.l.b16 %v4422
    %v5802 = vunpack.c.h.b16 %v4422
    %v5803 = vunpack.c.l.b16 %v4423
    %v5804 = vunpack.c.h.b16 %v4423
    %v5805 = vunpack.c.l.b16 %v4424
    %v5806 = vunpack.c.h.b16 %v4424
    %v5807 = vunpack.c.l.b16 %v4425
    %v5808 = vunpack.c.h.b16 %v4425
    %v5809 = vunpack.c.l.b16 %v4426
    %v5810 = vunpack.c.h.b16 %v4426
    %v5811 = vunpack.c.l.b16 %v4427
    %v5812 = vunpack.c.h.b16 %v4427
    %v5813 = vunpack.c.l.b16 %v4428
    %v5814 = vunpack.c.h.b16 %v4428
    %v5815 = vunpack.c.l.b16 %v4429
    %v5816 = vunpack.c.h.b16 %v4429
    %v5817 = vunpack.c.l.b16 %v4430
    %v5818 = vunpack.c.h.b16 %v4430
    %v5819 = vunpack.c.l.b16 %v4431
    %v5820 = vunpack.c.h.b16 %v4431
    %v5821 = vunpack.c.l.b16 %v4432
    %v5822 = vunpack.c.h.b16 %v4432
    %v5823 = vunpack.c.l.b16 %v4433
    %v5824 = vunpack.c.h.b16 %v4433
    %v5825 = vunpack.c.l.b16 %v4434
    %v5826 = vunpack.c.h.b16 %v4434
    %v5827 = vunpack.c.l.b16 %v4435
    %v5828 = vunpack.c.h.b16 %v4435
    %v5829 = vunpack.c.l.b16 %v4436
    %v5830 = vunpack.c.h.b16 %v4436
    %v5831 = vunpack.c.l.b16 %v4437
    %v5832 = vunpack.c.h.b16 %v4437
    %v5833 = vunpack.c.l.b16 %v4438
    %v5834 = vunpack.c.h.b16 %v4438
    %v5835 = vunpack.c.l.b16 %v4439
    %v5836 = vunpack.c.h.b16 %v4439
    %v5837 = vunpack.c.l.b16 %v4440
    %v5838 = vunpack.c.h.b16 %v4440
    %v5839 = vunpack.c.l.b16 %v4441
    %v5840 = vunpack.c.h.b16 %v4441
    %v5841 = vunpack.c.l.b16 %v4442
    %v5842 = vunpack.c.h.b16 %v4442
    %v5843 = vunpack.c.l.b16 %v4443
    %v5844 = vunpack.c.h.b16 %v4443
    %v5845 = vunpack.c.l.b16 %v4444
    %v5846 = vunpack.c.h.b16 %v4444
    %v5847 = vunpack.c.l.b16 %v4445
    %v5848 = vunpack.c.h.b16 %v4445
    %v5849 = vunpack.c.l.b16 %v4446
    %v5850 = vunpack.c.h.b16 %v4446
    %v5851 = vunpack.c.l.b16 %v4447
    %v5852 = vunpack.c.h.b16 %v4447
    %v5853 = vunpack.c.l.b16 %v4448
    %v5854 = vunpack.c.h.b16 %v4448
    %v5855 = vunpack.c.l.b16 %v4449
    %v5856 = vunpack.c.h.b16 %v4449
    %v5857 = vunpack.c.l.b16 %v4450
    %v5858 = vunpack.c.h.b16 %v4450
    %v5859 = vunpack.c.l.b16 %v4451
    %v5860 = vunpack.c.h.b16 %v4451
    %v5861 = vunpack.c.l.b16 %v4452
    %v5862 = vunpack.c.h.b16 %v4452
    %v5863 = vunpack.c.l.b16 %v4453
    %v5864 = vunpack.c.h.b16 %v4453
    %v5865 = vunpack.c.l.b16 %v4454
    %v5866 = vunpack.c.h.b16 %v4454
    %v5867 = vunpack.c.l.b16 %v4455
    %v5868 = vunpack.c.h.b16 %v4455
    %v5869 = vunpack.c.l.b16 %v4456
    %v5870 = vunpack.c.h.b16 %v4456
    %v5871 = vunpack.c.l.b16 %v4457
    %v5872 = vunpack.c.h.b16 %v4457
    %v5873 = vunpack.c.l.b16 %v4458
    %v5874 = vunpack.c.h.b16 %v4458
    %v5875 = vunpack.c.l.b16 %v4459
    %v5876 = vunpack.c.h.b16 %v4459
    %v5877 = vunpack.c.l.b16 %v4460
    %v5878 = vunpack.c.h.b16 %v4460
    %v5879 = vunpack.c.l.b16 %v4461
    %v5880 = vunpack.c.h.b16 %v4461
    %v5881 = vunpack.c.l.b16 %v4462
    %v5882 = vunpack.c.h.b16 %v4462
    %v5883 = vunpack.c.l.b16 %v4463
    %v5884 = vunpack.c.h.b16 %v4463
    %v5885 = vunpack.c.l.b16 %v4464
    %v5886 = vunpack.c.h.b16 %v4464
    %v5887 = vunpack.c.l.b16 %v4465
    %v5888 = vunpack.c.h.b16 %v4465
    %v5889 = vunpack.c.l.b16 %v4466
    %v5890 = vunpack.c.h.b16 %v4466
    %v5891 = vunpack.c.l.b16 %v4467
    %v5892 = vunpack.c.h.b16 %v4467
    %v5893 = vunpack.c.l.b16 %v4468
    %v5894 = vunpack.c.h.b16 %v4468
    %v5895 = vunpack.c.l.b16 %v4469
    %v5896 = vunpack.c.h.b16 %v4469
    %v5897 = vunpack.c.l.b16 %v4470
    %v5898 = vunpack.c.h.b16 %v4470
    %v5899 = vunpack.c.l.b16 %v4471
    %v5900 = vunpack.c.h.b16 %v4471
    %v5901 = vunpack.c.l.b16 %v4472
    %v5902 = vunpack.c.h.b16 %v4472
    %v5903 = vunpack.c.l.b16 %v4473
    %v5904 = vunpack.c.h.b16 %v4473
    %v5905 = vunpack.c.l.b16 %v4474
    %v5906 = vunpack.c.h.b16 %v4474
    %v5907 = vunpack.c.l.b16 %v4475
    %v5908 = vunpack.c.h.b16 %v4475
    %v5909 = vunpack.c.l.b16 %v4476
    %v5910 = vunpack.c.h.b16 %v4476
    %v5911 = vunpack.c.l.b16 %v4477
    %v5912 = vunpack.c.h.b16 %v4477
    %v5913 = vunpack.c.l.b16 %v4478
    %v5914 = vunpack.c.h.b16 %v4478
    %v5915 = vunpack.c.l.b16 %v4479
    %v5916 = vunpack.c.h.b16 %v4479
    %v5917 = vunpack.c.l.b16 %v4480
    %v5918 = vunpack.c.h.b16 %v4480
    %v5919 = vunpack.c.l.b16 %v4481
    %v5920 = vunpack.c.h.b16 %v4481
    %v5921 = vunpack.c.l.b16 %v4482
    %v5922 = vunpack.c.h.b16 %v4482
    %v5923 = vunpack.c.l.b16 %v4483
    %v5924 = vunpack.c.h.b16 %v4483
    %v5925 = vunpack.c.l.b16 %v4484
    %v5926 = vunpack.c.h.b16 %v4484
    %v5927 = vunpack.c.l.b16 %v4485
    %v5928 = vunpack.c.h.b16 %v4485
    %v5929 = vunpack.c.l.b16 %v4486
    %v5930 = vunpack.c.h.b16 %v4486
    %v5931 = vunpack.c.l.b16 %v4487
    %v5932 = vunpack.c.h.b16 %v4487
    %v5933 = vunpack.c.l.b16 %v4488
    %v5934 = vunpack.c.h.b16 %v4488
    %v5935 = vunpack.c.l.b16 %v4489
    %v5936 = vunpack.c.h.b16 %v4489
    %v5937 = vunpack.c.l.b16 %v4490
    %v5938 = vunpack.c.h.b16 %v4490
    %v5939 = vunpack.c.l.b16 %v4491
    %v5940 = vunpack.c.h.b16 %v4491
    %v5941 = vunpack.c.l.b16 %v4492
    %v5942 = vunpack.c.h.b16 %v4492
    %v5943 = vunpack.c.l.b16 %v4493
    %v5944 = vunpack.c.h.b16 %v4493
    %v5945 = vunpack.c.l.b16 %v4494
    %v5946 = vunpack.c.h.b16 %v4494
    %v5947 = vunpack.c.l.b16 %v4495
    %v5948 = vunpack.c.h.b16 %v4495
    %v5949 = vunpack.c.l.b16 %v4496
    %v5950 = vunpack.c.h.b16 %v4496
    %v5951 = vunpack.c.l.b16 %v4497
    %v5952 = vunpack.c.h.b16 %v4497
    %v5953 = vunpack.c.l.b16 %v4498
    %v5954 = vunpack.c.h.b16 %v4498
    %v5955 = vunpack.c.l.b16 %v4499
    %v5956 = vunpack.c.h.b16 %v4499
    %v5957 = vunpack.c.l.b16 %v4500
    %v5958 = vunpack.c.h.b16 %v4500
    %v5959 = vunpack.c.l.b16 %v4501
    %v5960 = vunpack.c.h.b16 %v4501
    %v5961 = vunpack.c.l.b16 %v4502
    %v5962 = vunpack.c.h.b16 %v4502
    %v5963 = vunpack.c.l.b16 %v4503
    %v5964 = vunpack.c.h.b16 %v4503
    %v5965 = vunpack.c.l.b16 %v4504
    %v5966 = vunpack.c.h.b16 %v4504
    %v5967 = vunpack.c.l.b16 %v4505
    %v5968 = vunpack.c.h.b16 %v4505
    %v5969 = vunpack.c.l.b16 %v4506
    %v5970 = vunpack.c.h.b16 %v4506
    %v5971 = vunpack.c.l.b16 %v4507
    %v5972 = vunpack.c.h.b16 %v4507
    %v5973 = vunpack.c.l.b16 %v4508
    %v5974 = vunpack.c.h.b16 %v4508
    %v5975 = vunpack.c.l.b16 %v4509
    %v5976 = vunpack.c.h.b16 %v4509
    %v5977 = vunpack.c.l.b16 %v4510
    %v5978 = vunpack.c.h.b16 %v4510
    %v5979 = vunpack.c.l.b16 %v4511
    %v5980 = vunpack.c.h.b16 %v4511
    %v5981 = vunpack.c.l.b16 %v4512
    %v5982 = vunpack.c.h.b16 %v4512
    %v5983 = vunpack.c.l.b16 %v4513
    %v5984 = vunpack.c.h.b16 %v4513
    %v5985 = vunpack.c.l.b16 %v4514
    %v5986 = vunpack.c.h.b16 %v4514
    %v5987 = vunpack.c.l.b16 %v4515
    %v5988 = vunpack.c.h.b16 %v4515
    %v5989 = vunpack.c.l.b16 %v4516
    %v5990 = vunpack.c.h.b16 %v4516
    %v5991 = vunpack.c.l.b16 %v4517
    %v5992 = vunpack.c.h.b16 %v4517
    %v5993 = vunpack.c.l.b16 %v4518
    %v5994 = vunpack.c.h.b16 %v4518
    %v5995 = vunpack.c.l.b16 %v4519
    %v5996 = vunpack.c.h.b16 %v4519
    %v5997 = vunpack.c.l.b16 %v4520
    %v5998 = vunpack.c.h.b16 %v4520
    %v5999 = vunpack.c.l.b16 %v4521
    %v6000 = vunpack.c.h.b16 %v4521
    %v6001 = vunpack.c.l.b16 %v4522
    %v6002 = vunpack.c.h.b16 %v4522
    %v6003 = vunpack.c.l.b16 %v4523
    %v6004 = vunpack.c.h.b16 %v4523
    %v6005 = vunpack.c.l.b16 %v4524
    %v6006 = vunpack.c.h.b16 %v4524
    %v6007 = vunpack.c.l.b16 %v4525
    %v6008 = vunpack.c.h.b16 %v4525
    %v6009 = vunpack.c.l.b16 %v4526
    %v6010 = vunpack.c.h.b16 %v4526
    %v6011 = vunpack.c.l.b16 %v4527
    %v6012 = vunpack.c.h.b16 %v4527
    %v6013 = vunpack.c.l.b16 %v4528
    %v6014 = vunpack.c.h.b16 %v4528
    %v6015 = vunpack.c.l.b16 %v4529
    %v6016 = vunpack.c.h.b16 %v4529
    %v6017 = vunpack.c.l.b16 %v4530
    %v6018 = vunpack.c.h.b16 %v4530
    %v6019 = vunpack.c.l.b16 %v4531
    %v6020 = vunpack.c.h.b16 %v4531
    %v6021 = vunpack.c.l.b16 %v4532
    %v6022 = vunpack.c.h.b16 %v4532
    %v6023 = vunpack.c.l.b16 %v4533
    %v6024 = vunpack.c.h.b16 %v4533
    %v6025 = vunpack.c.l.b16 %v4534
    %v6026 = vunpack.c.h.b16 %v4534
    %v6027 = vunpack.c.l.b16 %v4535
    %v6028 = vunpack.c.h.b16 %v4535
    %v6029 = vunpack.c.l.b16 %v4536
    %v6030 = vunpack.c.h.b16 %v4536
    %v6031 = vunpack.c.l.b16 %v4537
    %v6032 = vunpack.c.h.b16 %v4537
    %v6033 = vunpack.c.l.b16 %v4538
    %v6034 = vunpack.c.h.b16 %v4538
    %v6035 = vunpack.c.l.b16 %v4539
    %v6036 = vunpack.c.h.b16 %v4539
    %v6037 = vunpack.c.l.b16 %v4540
    %v6038 = vunpack.c.h.b16 %v4540
    %v6039 = vunpack.c.l.b16 %v4541
    %v6040 = vunpack.c.h.b16 %v4541
    %v6041 = vunpack.c.l.b16 %v4542
    %v6042 = vunpack.c.h.b16 %v4542
    %v6043 = vunpack.c.l.b16 %v4543
    %v6044 = vunpack.c.h.b16 %v4543
    %v6045 = vunpack.c.l.b16 %v4544
    %v6046 = vunpack.c.h.b16 %v4544
    %v6047 = vunpack.c.l.b16 %v4545
    %v6048 = vunpack.c.h.b16 %v4545
    %v6049 = vunpack.c.l.b16 %v4546
    %v6050 = vunpack.c.h.b16 %v4546
    %v6051 = vunpack.c.l.b16 %v4547
    %v6052 = vunpack.c.h.b16 %v4547
    %v6053 = vunpack.c.l.b16 %v4548
    %v6054 = vunpack.c.h.b16 %v4548
    %v6055 = vunpack.c.l.b16 %v4549
    %v6056 = vunpack.c.h.b16 %v4549
    %v6057 = vunpack.c.l.b16 %v4550
    %v6058 = vunpack.c.h.b16 %v4550
    %v6059 = vunpack.c.l.b16 %v4551
    %v6060 = vunpack.c.h.b16 %v4551
    %v6061 = vunpack.c.l.b16 %v4552
    %v6062 = vunpack.c.h.b16 %v4552
    %v6063 = vunpack.c.l.b16 %v4553
    %v6064 = vunpack.c.h.b16 %v4553
    %v6065 = vunpack.c.l.b16 %v4554
    %v6066 = vunpack.c.h.b16 %v4554
    %v6067 = vunpack.c.l.b16 %v4555
    %v6068 = vunpack.c.h.b16 %v4555
    %v6069 = vunpack.c.l.b16 %v4556
    %v6070 = vunpack.c.h.b16 %v4556
    %v6071 = vunpack.c.l.b16 %v4557
    %v6072 = vunpack.c.h.b16 %v4557
    %v6073 = vunpack.c.l.b16 %v4558
    %v6074 = vunpack.c.h.b16 %v4558
    %v6075 = vunpack.c.l.b16 %v4559
    %v6076 = vunpack.c.h.b16 %v4559
    %v6077 = vunpack.c.l.b16 %v4560
    %v6078 = vunpack.c.h.b16 %v4560
    %v6079 = vunpack.c.l.b16 %v4561
    %v6080 = vunpack.c.h.b16 %v4561
    %v6081 = vunpack.c.l.b16 %v4562
    %v6082 = vunpack.c.h.b16 %v4562
    %v6083 = vunpack.c.l.b16 %v4563
    %v6084 = vunpack.c.h.b16 %v4563
    %v6085 = vunpack.c.l.b16 %v4564
    %v6086 = vunpack.c.h.b16 %v4564
    %v6087 = vunpack.c.l.b16 %v4565
    %v6088 = vunpack.c.h.b16 %v4565
    %v6089 = vunpack.c.l.b16 %v4566
    %v6090 = vunpack.c.h.b16 %v4566
    %v6091 = vunpack.c.l.b16 %v4567
    %v6092 = vunpack.c.h.b16 %v4567
    %v6093 = vunpack.c.l.b16 %v4568
    %v6094 = vunpack.c.h.b16 %v4568
    %v6095 = vunpack.c.l.b16 %v4569
    %v6096 = vunpack.c.h.b16 %v4569
    %v6097 = vunpack.c.l.b16 %v4570
    %v6098 = vunpack.c.h.b16 %v4570
    %v6099 = vunpack.c.l.b16 %v4571
    %v6100 = vunpack.c.h.b16 %v4571
    %v6101 = vunpack.c.l.b16 %v4572
    %v6102 = vunpack.c.h.b16 %v4572
    %v6103 = vunpack.c.l.b16 %v4573
    %v6104 = vunpack.c.h.b16 %v4573
    %v6105 = vunpack.c.l.b16 %v4574
    %v6106 = vunpack.c.h.b16 %v4574
    %v6107 = vunpack.c.l.b16 %v4575
    %v6108 = vunpack.c.h.b16 %v4575
    %v6109 = vunpack.c.l.b16 %v4576
    %v6110 = vunpack.c.h.b16 %v4576
    %v6111 = vunpack.c.l.b16 %v4577
    %v6112 = vunpack.c.h.b16 %v4577
    %v6113 = vunpack.c.l.b16 %v4578
    %v6114 = vunpack.c.h.b16 %v4578
    %v6115 = vunpack.c.l.b16 %v4579
    %v6116 = vunpack.c.h.b16 %v4579
    %v6117 = vunpack.c.l.b16 %v4580
    %v6118 = vunpack.c.h.b16 %v4580
    %v6119 = vunpack.c.l.b16 %v4581
    %v6120 = vunpack.c.h.b16 %v4581
    %v6121 = vunpack.c.l.b16 %v4582
    %v6122 = vunpack.c.h.b16 %v4582
    %v6123 = vunpack.c.l.b16 %v4583
    %v6124 = vunpack.c.h.b16 %v4583
    %v6125 = vunpack.c.l.b16 %v4584
    %v6126 = vunpack.c.h.b16 %v4584
    %v6127 = vunpack.c.l.b16 %v4585
    %v6128 = vunpack.c.h.b16 %v4585
    %v6129 = vunpack.c.l.b16 %v4586
    %v6130 = vunpack.c.h.b16 %v4586
    %v6131 = vunpack.c.l.b16 %v4587
    %v6132 = vunpack.c.h.b16 %v4587
    %v6133 = vunpack.c.l.b16 %v4588
    %v6134 = vunpack.c.h.b16 %v4588
    %v6135 = vunpack.c.l.b16 %v4589
    %v6136 = vunpack.c.h.b16 %v4589
    %v6137 = vunpack.c.l.b16 %v4590
    %v6138 = vunpack.c.h.b16 %v4590
    %v6139 = vunpack.c.l.b16 %v4591
    %v6140 = vunpack.c.h.b16 %v4591
    %v6141 = vunpack.c.l.b16 %v4592
    %v6142 = vunpack.c.h.b16 %v4592
    %v6143 = vunpack.c.l.b16 %v4593
    %v6144 = vunpack.c.h.b16 %v4593
    %v6145 = vunpack.c.l.b16 %v4594
    %v6146 = vunpack.c.h.b16 %v4594
    %v6147 = vunpack.c.l.b16 %v4595
    %v6148 = vunpack.c.h.b16 %v4595
    %v6149 = vunpack.c.l.b16 %v4596
    %v6150 = vunpack.c.h.b16 %v4596
    %v6151 = vpack.c.b16 %v5135, %v5127
    %v6152 = vpack.c.b16 %v5136, %v5128
    %v6153 = vpack.c.b16 %v5137, %v5129
    %v6154 = vpack.c.b16 %v5138, %v5130
    %v6155 = vpack.c.b16 %v5139, %v5131
    %v6156 = vpack.c.b16 %v5140, %v5132
    %v6157 = vpack.c.b16 %v5141, %v5133
    %v6158 = vpack.c.b16 %v5142, %v5134
    %v6159 = vpack.c.b16 %v5151, %v5143
    %v6160 = vpack.c.b16 %v5152, %v5144
    %v6161 = vpack.c.b16 %v5153, %v5145
    %v6162 = vpack.c.b16 %v5154, %v5146
    %v6163 = vpack.c.b16 %v5155, %v5147
    %v6164 = vpack.c.b16 %v5156, %v5148
    %v6165 = vpack.c.b16 %v5157, %v5149
    %v6166 = vpack.c.b16 %v5158, %v5150
    %v6167 = vpack.c.b16 %v5167, %v5159
    %v6168 = vpack.c.b16 %v5168, %v5160
    %v6169 = vpack.c.b16 %v5169, %v5161
    %v6170 = vpack.c.b16 %v5170, %v5162
    %v6171 = vpack.c.b16 %v5171, %v5163
    %v6172 = vpack.c.b16 %v5172, %v5164
    %v6173 = vpack.c.b16 %v5173, %v5165
    %v6174 = vpack.c.b16 %v5174, %v5166
    %v6175 = vpack.c.b16 %v5183, %v5175
    %v6176 = vpack.c.b16 %v5184, %v5176
    %v6177 = vpack.c.b16 %v5185, %v5177
    %v6178 = vpack.c.b16 %v5186, %v5178
    %v6179 = vpack.c.b16 %v5187, %v5179
    %v6180 = vpack.c.b16 %v5188, %v5180
    %v6181 = vpack.c.b16 %v5189, %v5181
    %v6182 = vpack.c.b16 %v5190, %v5182
    %v6183 = vpack.c.b16 %v5199, %v5191
    %v6184 = vpack.c.b16 %v5200, %v5192
    %v6185 = vpack.c.b16 %v5201, %v5193
    %v6186 = vpack.c.b16 %v5202, %v5194
    %v6187 = vpack.c.b16 %v5203, %v5195
    %v6188 = vpack.c.b16 %v5204, %v5196
    %v6189 = vpack.c.b16 %v5205, %v5197
    %v6190 = vpack.c.b16 %v5206, %v5198
    %v6191 = vpack.c.b16 %v5215, %v5207
    %v6192 = vpack.c.b16 %v5216, %v5208
    %v6193 = vpack.c.b16 %v5217, %v5209
    %v6194 = vpack.c.b16 %v5218, %v5210
    %v6195 = vpack.c.b16 %v5219, %v5211
    %v6196 = vpack.c.b16 %v5220, %v5212
    %v6197 = vpack.c.b16 %v5221, %v5213
    %v6198 = vpack.c.b16 %v5222, %v5214
    %v6199 = vpack.c.b16 %v5231, %v5223
    %v6200 = vpack.c.b16 %v5232, %v5224
    %v6201 = vpack.c.b16 %v5233, %v5225
    %v6202 = vpack.c.b16 %v5234, %v5226
    %v6203 = vpack.c.b16 %v5235, %v5227
    %v6204 = vpack.c.b16 %v5236, %v5228
    %v6205 = vpack.c.b16 %v5237, %v5229
    %v6206 = vpack.c.b16 %v5238, %v5230
    %v6207 = vpack.c.b16 %v5247, %v5239
    %v6208 = vpack.c.b16 %v5248, %v5240
    %v6209 = vpack.c.b16 %v5249, %v5241
    %v6210 = vpack.c.b16 %v5250, %v5242
    %v6211 = vpack.c.b16 %v5251, %v5243
    %v6212 = vpack.c.b16 %v5252, %v5244
    %v6213 = vpack.c.b16 %v5253, %v5245
    %v6214 = vpack.c.b16 %v5254, %v5246
    %v6215 = vpack.c.b16 %v5263, %v5255
    %v6216 = vpack.c.b16 %v5264, %v5256
    %v6217 = vpack.c.b16 %v5265, %v5257
    %v6218 = vpack.c.b16 %v5266, %v5258
    %v6219 = vpack.c.b16 %v5267, %v5259
    %v6220 = vpack.c.b16 %v5268, %v5260
    %v6221 = vpack.c.b16 %v5269, %v5261
    %v6222 = vpack.c.b16 %v5270, %v5262
    %v6223 = vpack.c.b16 %v5279, %v5271
    %v6224 = vpack.c.b16 %v5280, %v5272
    %v6225 = vpack.c.b16 %v5281, %v5273
    %v6226 = vpack.c.b16 %v5282, %v5274
    %v6227 = vpack.c.b16 %v5283, %v5275
    %v6228 = vpack.c.b16 %v5284, %v5276
    %v6229 = vpack.c.b16 %v5285, %v5277
    %v6230 = vpack.c.b16 %v5286, %v5278
    %v6231 = vpack.c.b16 %v5295, %v5287
    %v6232 = vpack.c.b16 %v5296, %v5288
    %v6233 = vpack.c.b16 %v5297, %v5289
    %v6234 = vpack.c.b16 %v5298, %v5290
    %v6235 = vpack.c.b16 %v5299, %v5291
    %v6236 = vpack.c.b16 %v5300, %v5292
    %v6237 = vpack.c.b16 %v5301, %v5293
    %v6238 = vpack.c.b16 %v5302, %v5294
    %v6239 = vpack.c.b16 %v5311, %v5303
    %v6240 = vpack.c.b16 %v5312, %v5304
    %v6241 = vpack.c.b16 %v5313, %v5305
    %v6242 = vpack.c.b16 %v5314, %v5306
    %v6243 = vpack.c.b16 %v5315, %v5307
    %v6244 = vpack.c.b16 %v5316, %v5308
    %v6245 = vpack.c.b16 %v5317, %v5309
    %v6246 = vpack.c.b16 %v5318, %v5310
    %v6247 = vpack.c.b16 %v5327, %v5319
    %v6248 = vpack.c.b16 %v5328, %v5320
    %v6249 = vpack.c.b16 %v5329, %v5321
    %v6250 = vpack.c.b16 %v5330, %v5322
    %v6251 = vpack.c.b16 %v5331, %v5323
    %v6252 = vpack.c.b16 %v5332, %v5324
    %v6253 = vpack.c.b16 %v5333, %v5325
    %v6254 = vpack.c.b16 %v5334, %v5326
    %v6255 = vpack.c.b16 %v5343, %v5335
    %v6256 = vpack.c.b16 %v5344, %v5336
    %v6257 = vpack.c.b16 %v5345, %v5337
    %v6258 = vpack.c.b16 %v5346, %v5338
    %v6259 = vpack.c.b16 %v5347, %v5339
    %v6260 = vpack.c.b16 %v5348, %v5340
    %v6261 = vpack.c.b16 %v5349, %v5341
    %v6262 = vpack.c.b16 %v5350, %v5342
    %v6263 = vpack.c.b16 %v5359, %v5351
    %v6264 = vpack.c.b16 %v5360, %v5352
    %v6265 = vpack.c.b16 %v5361, %v5353
    %v6266 = vpack.c.b16 %v5362, %v5354
    %v6267 = vpack.c.b16 %v5363, %v5355
    %v6268 = vpack.c.b16 %v5364, %v5356
    %v6269 = vpack.c.b16 %v5365, %v5357
    %v6270 = vpack.c.b16 %v5366, %v5358
    %v6271 = vpack.c.b16 %v5375, %v5367
    %v6272 = vpack.c.b16 %v5376, %v5368
    %v6273 = vpack.c.b16 %v5377, %v5369
    %v6274 = vpack.c.b16 %v5378, %v5370
    %v6275 = vpack.c.b16 %v5379, %v5371
    %v6276 = vpack.c.b16 %v5380, %v5372
    %v6277 = vpack.c.b16 %v5381, %v5373
    %v6278 = vpack.c.b16 %v5382, %v5374
    %v6279 = vpack.c.b16 %v5391, %v5383
    %v6280 = vpack.c.b16 %v5392, %v5384
    %v6281 = vpack.c.b16 %v5393, %v5385
    %v6282 = vpack.c.b16 %v5394, %v5386
    %v6283 = vpack.c.b16 %v5395, %v5387
    %v6284 = vpack.c.b16 %v5396, %v5388
    %v6285 = vpack.c.b16 %v5397, %v5389
    %v6286 = vpack.c.b16 %v5398, %v5390
    %v6287 = vpack.c.b16 %v5407, %v5399
    %v6288 = vpack.c.b16 %v5408, %v5400
    %v6289 = vpack.c.b16 %v5409, %v5401
    %v6290 = vpack.c.b16 %v5410, %v5402
    %v6291 = vpack.c.b16 %v5411, %v5403
    %v6292 = vpack.c.b16 %v5412, %v5404
    %v6293 = vpack.c.b16 %v5413, %v5405
    %v6294 = vpack.c.b16 %v5414, %v5406
    %v6295 = vpack.c.b16 %v5423, %v5415
    %v6296 = vpack.c.b16 %v5424, %v5416
    %v6297 = vpack.c.b16 %v5425, %v5417
    %v6298 = vpack.c.b16 %v5426, %v5418
    %v6299 = vpack.c.b16 %v5427, %v5419
    %v6300 = vpack.c.b16 %v5428, %v5420
    %v6301 = vpack.c.b16 %v5429, %v5421
    %v6302 = vpack.c.b16 %v5430, %v5422
    %v6303 = vpack.c.b16 %v5439, %v5431
    %v6304 = vpack.c.b16 %v5440, %v5432
    %v6305 = vpack.c.b16 %v5441, %v5433
    %v6306 = vpack.c.b16 %v5442, %v5434
    %v6307 = vpack.c.b16 %v5443, %v5435
    %v6308 = vpack.c.b16 %v5444, %v5436
    %v6309 = vpack.c.b16 %v5445, %v5437
    %v6310 = vpack.c.b16 %v5446, %v5438
    %v6311 = vpack.c.b16 %v5455, %v5447
    %v6312 = vpack.c.b16 %v5456, %v5448
    %v6313 = vpack.c.b16 %v5457, %v5449
    %v6314 = vpack.c.b16 %v5458, %v5450
    %v6315 = vpack.c.b16 %v5459, %v5451
    %v6316 = vpack.c.b16 %v5460, %v5452
    %v6317 = vpack.c.b16 %v5461, %v5453
    %v6318 = vpack.c.b16 %v5462, %v5454
    %v6319 = vpack.c.b16 %v5471, %v5463
    %v6320 = vpack.c.b16 %v5472, %v5464
    %v6321 = vpack.c.b16 %v5473, %v5465
    %v6322 = vpack.c.b16 %v5474, %v5466
    %v6323 = vpack.c.b16 %v5475, %v5467
    %v6324 = vpack.c.b16 %v5476, %v5468
    %v6325 = vpack.c.b16 %v5477, %v5469
    %v6326 = vpack.c.b16 %v5478, %v5470
    %v6327 = vpack.c.b16 %v5487, %v5479
    %v6328 = vpack.c.b16 %v5488, %v5480
    %v6329 = vpack.c.b16 %v5489, %v5481
    %v6330 = vpack.c.b16 %v5490, %v5482
    %v6331 = vpack.c.b16 %v5491, %v5483
    %v6332 = vpack.c.b16 %v5492, %v5484
    %v6333 = vpack.c.b16 %v5493, %v5485
    %v6334 = vpack.c.b16 %v5494, %v5486
    %v6335 = vpack.c.b16 %v5503, %v5495
    %v6336 = vpack.c.b16 %v5504, %v5496
    %v6337 = vpack.c.b16 %v5505, %v5497
    %v6338 = vpack.c.b16 %v5506, %v5498
    %v6339 = vpack.c.b16 %v5507, %v5499
    %v6340 = vpack.c.b16 %v5508, %v5500
    %v6341 = vpack.c.b16 %v5509, %v5501
    %v6342 = vpack.c.b16 %v5510, %v5502
    %v6343 = vpack.c.b16 %v5519, %v5511
    %v6344 = vpack.c.b16 %v5520, %v5512
    %v6345 = vpack.c.b16 %v5521, %v5513
    %v6346 = vpack.c.b16 %v5522, %v5514
    %v6347 = vpack.c.b16 %v5523, %v5515
    %v6348 = vpack.c.b16 %v5524, %v5516
    %v6349 = vpack.c.b16 %v5525, %v5517
    %v6350 = vpack.c.b16 %v5526, %v5518
    %v6351 = vpack.c.b16 %v5535, %v5527
    %v6352 = vpack.c.b16 %v5536, %v5528
    %v6353 = vpack.c.b16 %v5537, %v5529
    %v6354 = vpack.c.b16 %v5538, %v5530
    %v6355 = vpack.c.b16 %v5539, %v5531
    %v6356 = vpack.c.b16 %v5540, %v5532
    %v6357 = vpack.c.b16 %v5541, %v5533
    %v6358 = vpack.c.b16 %v5542, %v5534
    %v6359 = vpack.c.b16 %v5551, %v5543
    %v6360 = vpack.c.b16 %v5552, %v5544
    %v6361 = vpack.c.b16 %v5553, %v5545
    %v6362 = vpack.c.b16 %v5554, %v5546
    %v6363 = vpack.c.b16 %v5555, %v5547
    %v6364 = vpack.c.b16 %v5556, %v5548
    %v6365 = vpack.c.b16 %v5557, %v5549
    %v6366 = vpack.c.b16 %v5558, %v5550
    %v6367 = vpack.c.b16 %v5567, %v5559
    %v6368 = vpack.c.b16 %v5568, %v5560
    %v6369 = vpack.c.b16 %v5569, %v5561
    %v6370 = vpack.c.b16 %v5570, %v5562
    %v6371 = vpack.c.b16 %v5571, %v5563
    %v6372 = vpack.c.b16 %v5572, %v5564
    %v6373 = vpack.c.b16 %v5573, %v5565
    %v6374 = vpack.c.b16 %v5574, %v5566
    %v6375 = vpack.c.b16 %v5583, %v5575
    %v6376 = vpack.c.b16 %v5584, %v5576
    %v6377 = vpack.c.b16 %v5585, %v5577
    %v6378 = vpack.c.b16 %v5586, %v5578
    %v6379 = vpack.c.b16 %v5587, %v5579
    %v6380 = vpack.c.b16 %v5588, %v5580
    %v6381 = vpack.c.b16 %v5589, %v5581
    %v6382 = vpack.c.b16 %v5590, %v5582
    %v6383 = vpack.c.b16 %v5599, %v5591
    %v6384 = vpack.c.b16 %v5600, %v5592
    %v6385 = vpack.c.b16 %v5601, %v5593
    %v6386 = vpack.c.b16 %v5602, %v5594
    %v6387 = vpack.c.b16 %v5603, %v5595
    %v6388 = vpack.c.b16 %v5604, %v5596
    %v6389 = vpack.c.b16 %v5605, %v5597
    %v6390 = vpack.c.b16 %v5606, %v5598
    %v6391 = vpack.c.b16 %v5615, %v5607
    %v6392 = vpack.c.b16 %v5616, %v5608
    %v6393 = vpack.c.b16 %v5617, %v5609
    %v6394 = vpack.c.b16 %v5618, %v5610
    %v6395 = vpack.c.b16 %v5619, %v5611
    %v6396 = vpack.c.b16 %v5620, %v5612
    %v6397 = vpack.c.b16 %v5621, %v5613
    %v6398 = vpack.c.b16 %v5622, %v5614
    %v6399 = vpack.c.b16 %v5631, %v5623
    %v6400 = vpack.c.b16 %v5632, %v5624
    %v6401 = vpack.c.b16 %v5633, %v5625
    %v6402 = vpack.c.b16 %v5634, %v5626
    %v6403 = vpack.c.b16 %v5635, %v5627
    %v6404 = vpack.c.b16 %v5636, %v5628
    %v6405 = vpack.c.b16 %v5637, %v5629
    %v6406 = vpack.c.b16 %v5638, %v5630
    %v6407 = vpack.c.b16 %v5647, %v5639
    %v6408 = vpack.c.b16 %v5648, %v5640
    %v6409 = vpack.c.b16 %v5649, %v5641
    %v6410 = vpack.c.b16 %v5650, %v5642
    %v6411 = vpack.c.b16 %v5651, %v5643
    %v6412 = vpack.c.b16 %v5652, %v5644
    %v6413 = vpack.c.b16 %v5653, %v5645
    %v6414 = vpack.c.b16 %v5654, %v5646
    %v6415 = vpack.c.b16 %v5663, %v5655
    %v6416 = vpack.c.b16 %v5664, %v5656
    %v6417 = vpack.c.b16 %v5665, %v5657
    %v6418 = vpack.c.b16 %v5666, %v5658
    %v6419 = vpack.c.b16 %v5667, %v5659
    %v6420 = vpack.c.b16 %v5668, %v5660
    %v6421 = vpack.c.b16 %v5669, %v5661
    %v6422 = vpack.c.b16 %v5670, %v5662
    %v6423 = vpack.c.b16 %v5679, %v5671
    %v6424 = vpack.c.b16 %v5680, %v5672
    %v6425 = vpack.c.b16 %v5681, %v5673
    %v6426 = vpack.c.b16 %v5682, %v5674
    %v6427 = vpack.c.b16 %v5683, %v5675
    %v6428 = vpack.c.b16 %v5684, %v5676
    %v6429 = vpack.c.b16 %v5685, %v5677
    %v6430 = vpack.c.b16 %v5686, %v5678
    %v6431 = vpack.c.b16 %v5695, %v5687
    %v6432 = vpack.c.b16 %v5696, %v5688
    %v6433 = vpack.c.b16 %v5697, %v5689
    %v6434 = vpack.c.b16 %v5698, %v5690
    %v6435 = vpack.c.b16 %v5699, %v5691
    %v6436 = vpack.c.b16 %v5700, %v5692
    %v6437 = vpack.c.b16 %v5701, %v5693
    %v6438 = vpack.c.b16 %v5702, %v5694
    %v6439 = vpack.c.b16 %v5711, %v5703
    %v6440 = vpack.c.b16 %v5712, %v5704
    %v6441 = vpack.c.b16 %v5713, %v5705
    %v6442 = vpack.c.b16 %v5714, %v5706
    %v6443 = vpack.c.b16 %v5715, %v5707
    %v6444 = vpack.c.b16 %v5716, %v5708
    %v6445 = vpack.c.b16 %v5717, %v5709
    %v6446 = vpack.c.b16 %v5718, %v5710
    %v6447 = vpack.c.b16 %v5727, %v5719
    %v6448 = vpack.c.b16 %v5728, %v5720
    %v6449 = vpack.c.b16 %v5729, %v5721
    %v6450 = vpack.c.b16 %v5730, %v5722
    %v6451 = vpack.c.b16 %v5731, %v5723
    %v6452 = vpack.c.b16 %v5732, %v5724
    %v6453 = vpack.c.b16 %v5733, %v5725
    %v6454 = vpack.c.b16 %v5734, %v5726
    %v6455 = vpack.c.b16 %v5743, %v5735
    %v6456 = vpack.c.b16 %v5744, %v5736
    %v6457 = vpack.c.b16 %v5745, %v5737
    %v6458 = vpack.c.b16 %v5746, %v5738
    %v6459 = vpack.c.b16 %v5747, %v5739
    %v6460 = vpack.c.b16 %v5748, %v5740
    %v6461 = vpack.c.b16 %v5749, %v5741
    %v6462 = vpack.c.b16 %v5750, %v5742
    %v6463 = vpack.c.b16 %v5759, %v5751
    %v6464 = vpack.c.b16 %v5760, %v5752
    %v6465 = vpack.c.b16 %v5761, %v5753
    %v6466 = vpack.c.b16 %v5762, %v5754
    %v6467 = vpack.c.b16 %v5763, %v5755
    %v6468 = vpack.c.b16 %v5764, %v5756
    %v6469 = vpack.c.b16 %v5765, %v5757
    %v6470 = vpack.c.b16 %v5766, %v5758
    %v6471 = vpack.c.b16 %v5775, %v5767
    %v6472 = vpack.c.b16 %v5776, %v5768
    %v6473 = vpack.c.b16 %v5777, %v5769
    %v6474 = vpack.c.b16 %v5778, %v5770
    %v6475 = vpack.c.b16 %v5779, %v5771
    %v6476 = vpack.c.b16 %v5780, %v5772
    %v6477 = vpack.c.b16 %v5781, %v5773
    %v6478 = vpack.c.b16 %v5782, %v5774
    %v6479 = vpack.c.b16 %v5791, %v5783
    %v6480 = vpack.c.b16 %v5792, %v5784
    %v6481 = vpack.c.b16 %v5793, %v5785
    %v6482 = vpack.c.b16 %v5794, %v5786
    %v6483 = vpack.c.b16 %v5795, %v5787
    %v6484 = vpack.c.b16 %v5796, %v5788
    %v6485 = vpack.c.b16 %v5797, %v5789
    %v6486 = vpack.c.b16 %v5798, %v5790
    %v6487 = vpack.c.b16 %v5807, %v5799
    %v6488 = vpack.c.b16 %v5808, %v5800
    %v6489 = vpack.c.b16 %v5809, %v5801
    %v6490 = vpack.c.b16 %v5810, %v5802
    %v6491 = vpack.c.b16 %v5811, %v5803
    %v6492 = vpack.c.b16 %v5812, %v5804
    %v6493 = vpack.c.b16 %v5813, %v5805
    %v6494 = vpack.c.b16 %v5814, %v5806
    %v6495 = vpack.c.b16 %v5823, %v5815
    %v6496 = vpack.c.b16 %v5824, %v5816
    %v6497 = vpack.c.b16 %v5825, %v5817
    %v6498 = vpack.c.b16 %v5826, %v5818
    %v6499 = vpack.c.b16 %v5827, %v5819
    %v6500 = vpack.c.b16 %v5828, %v5820
    %v6501 = vpack.c.b16 %v5829, %v5821
    %v6502 = vpack.c.b16 %v5830, %v5822
    %v6503 = vpack.c.b16 %v5839, %v5831
    %v6504 = vpack.c.b16 %v5840, %v5832
    %v6505 = vpack.c.b16 %v5841, %v5833
    %v6506 = vpack.c.b16 %v5842, %v5834
    %v6507 = vpack.c.b16 %v5843, %v5835
    %v6508 = vpack.c.b16 %v5844, %v5836
    %v6509 = vpack.c.b16 %v5845, %v5837
    %v6510 = vpack.c.b16 %v5846, %v5838
    %v6511 = vpack.c.b16 %v5855, %v5847
    %v6512 = vpack.c.b16 %v5856, %v5848
    %v6513 = vpack.c.b16 %v5857, %v5849
    %v6514 = vpack.c.b16 %v5858, %v5850
    %v6515 = vpack.c.b16 %v5859, %v5851
    %v6516 = vpack.c.b16 %v5860, %v5852
    %v6517 = vpack.c.b16 %v5861, %v5853
    %v6518 = vpack.c.b16 %v5862, %v5854
    %v6519 = vpack.c.b16 %v5871, %v5863
    %v6520 = vpack.c.b16 %v5872, %v5864
    %v6521 = vpack.c.b16 %v5873, %v5865
    %v6522 = vpack.c.b16 %v5874, %v5866
    %v6523 = vpack.c.b16 %v5875, %v5867
    %v6524 = vpack.c.b16 %v5876, %v5868
    %v6525 = vpack.c.b16 %v5877, %v5869
    %v6526 = vpack.c.b16 %v5878, %v5870
    %v6527 = vpack.c.b16 %v5887, %v5879
    %v6528 = vpack.c.b16 %v5888, %v5880
    %v6529 = vpack.c.b16 %v5889, %v5881
    %v6530 = vpack.c.b16 %v5890, %v5882
    %v6531 = vpack.c.b16 %v5891, %v5883
    %v6532 = vpack.c.b16 %v5892, %v5884
    %v6533 = vpack.c.b16 %v5893, %v5885
    %v6534 = vpack.c.b16 %v5894, %v5886
    %v6535 = vpack.c.b16 %v5903, %v5895
    %v6536 = vpack.c.b16 %v5904, %v5896
    %v6537 = vpack.c.b16 %v5905, %v5897
    %v6538 = vpack.c.b16 %v5906, %v5898
    %v6539 = vpack.c.b16 %v5907, %v5899
    %v6540 = vpack.c.b16 %v5908, %v5900
    %v6541 = vpack.c.b16 %v5909, %v5901
    %v6542 = vpack.c.b16 %v5910, %v5902
    %v6543 = vpack.c.b16 %v5919, %v5911
    %v6544 = vpack.c.b16 %v5920, %v5912
    %v6545 = vpack.c.b16 %v5921, %v5913
    %v6546 = vpack.c.b16 %v5922, %v5914
    %v6547 = vpack.c.b16 %v5923, %v5915
    %v6548 = vpack.c.b16 %v5924, %v5916
    %v6549 = vpack.c.b16 %v5925, %v5917
    %v6550 = vpack.c.b16 %v5926, %v5918
    %v6551 = vpack.c.b16 %v5935, %v5927
    %v6552 = vpack.c.b16 %v5936, %v5928
    %v6553 = vpack.c.b16 %v5937, %v5929
    %v6554 = vpack.c.b16 %v5938, %v5930
    %v6555 = vpack.c.b16 %v5939, %v5931
    %v6556 = vpack.c.b16 %v5940, %v5932
    %v6557 = vpack.c.b16 %v5941, %v5933
    %v6558 = vpack.c.b16 %v5942, %v5934
    %v6559 = vpack.c.b16 %v5951, %v5943
    %v6560 = vpack.c.b16 %v5952, %v5944
    %v6561 = vpack.c.b16 %v5953, %v5945
    %v6562 = vpack.c.b16 %v5954, %v5946
    %v6563 = vpack.c.b16 %v5955, %v5947
    %v6564 = vpack.c.b16 %v5956, %v5948
    %v6565 = vpack.c.b16 %v5957, %v5949
    %v6566 = vpack.c.b16 %v5958, %v5950
    %v6567 = vpack.c.b16 %v5967, %v5959
    %v6568 = vpack.c.b16 %v5968, %v5960
    %v6569 = vpack.c.b16 %v5969, %v5961
    %v6570 = vpack.c.b16 %v5970, %v5962
    %v6571 = vpack.c.b16 %v5971, %v5963
    %v6572 = vpack.c.b16 %v5972, %v5964
    %v6573 = vpack.c.b16 %v5973, %v5965
    %v6574 = vpack.c.b16 %v5974, %v5966
    %v6575 = vpack.c.b16 %v5983, %v5975
    %v6576 = vpack.c.b16 %v5984, %v5976
    %v6577 = vpack.c.b16 %v5985, %v5977
    %v6578 = vpack.c.b16 %v5986, %v5978
    %v6579 = vpack.c.b16 %v5987, %v5979
    %v6580 = vpack.c.b16 %v5988, %v5980
    %v6581 = vpack.c.b16 %v5989, %v5981
    %v6582 = vpack.c.b16 %v5990, %v5982
    %v6583 = vpack.c.b16 %v5999, %v5991
    %v6584 = vpack.c.b16 %v6000, %v5992
    %v6585 = vpack.c.b16 %v6001, %v5993
    %v6586 = vpack.c.b16 %v6002, %v5994
    %v6587 = vpack.c.b16 %v6003, %v5995
    %v6588 = vpack.c.b16 %v6004, %v5996
    %v6589 = vpack.c.b16 %v6005, %v5997
    %v6590 = vpack.c.b16 %v6006, %v5998
    %v6591 = vpack.c.b16 %v6015, %v6007
    %v6592 = vpack.c.b16 %v6016, %v6008
    %v6593 = vpack.c.b16 %v6017, %v6009
    %v6594 = vpack.c.b16 %v6018, %v6010
    %v6595 = vpack.c.b16 %v6019, %v6011
    %v6596 = vpack.c.b16 %v6020, %v6012
    %v6597 = vpack.c.b16 %v6021, %v6013
    %v6598 = vpack.c.b16 %v6022, %v6014
    %v6599 = vpack.c.b16 %v6031, %v6023
    %v6600 = vpack.c.b16 %v6032, %v6024
    %v6601 = vpack.c.b16 %v6033, %v6025
    %v6602 = vpack.c.b16 %v6034, %v6026
    %v6603 = vpack.c.b16 %v6035, %v6027
    %v6604 = vpack.c.b16 %v6036, %v6028
    %v6605 = vpack.c.b16 %v6037, %v6029
    %v6606 = vpack.c.b16 %v6038, %v6030
    %v6607 = vpack.c.b16 %v6047, %v6039
    %v6608 = vpack.c.b16 %v6048, %v6040
    %v6609 = vpack.c.b16 %v6049, %v6041
    %v6610 = vpack.c.b16 %v6050, %v6042
    %v6611 = vpack.c.b16 %v6051, %v6043
    %v6612 = vpack.c.b16 %v6052, %v6044
    %v6613 = vpack.c.b16 %v6053, %v6045
    %v6614 = vpack.c.b16 %v6054, %v6046
    %v6615 = vpack.c.b16 %v6063, %v6055
    %v6616 = vpack.c.b16 %v6064, %v6056
    %v6617 = vpack.c.b16 %v6065, %v6057
    %v6618 = vpack.c.b16 %v6066, %v6058
    %v6619 = vpack.c.b16 %v6067, %v6059
    %v6620 = vpack.c.b16 %v6068, %v6060
    %v6621 = vpack.c.b16 %v6069, %v6061
    %v6622 = vpack.c.b16 %v6070, %v6062
    %v6623 = vpack.c.b16 %v6079, %v6071
    %v6624 = vpack.c.b16 %v6080, %v6072
    %v6625 = vpack.c.b16 %v6081, %v6073
    %v6626 = vpack.c.b16 %v6082, %v6074
    %v6627 = vpack.c.b16 %v6083, %v6075
    %v6628 = vpack.c.b16 %v6084, %v6076
    %v6629 = vpack.c.b16 %v6085, %v6077
    %v6630 = vpack.c.b16 %v6086, %v6078
    %v6631 = vpack.c.b16 %v6095, %v6087
    %v6632 = vpack.c.b16 %v6096, %v6088
    %v6633 = vpack.c.b16 %v6097, %v6089
    %v6634 = vpack.c.b16 %v6098, %v6090
    %v6635 = vpack.c.b16 %v6099, %v6091
    %v6636 = vpack.c.b16 %v6100, %v6092
    %v6637 = vpack.c.b16 %v6101, %v6093
    %v6638 = vpack.c.b16 %v6102, %v6094
    %v6639 = vpack.c.b16 %v6111, %v6103
    %v6640 = vpack.c.b16 %v6112, %v6104
    %v6641 = vpack.c.b16 %v6113, %v6105
    %v6642 = vpack.c.b16 %v6114, %v6106
    %v6643 = vpack.c.b16 %v6115, %v6107
    %v6644 = vpack.c.b16 %v6116, %v6108
    %v6645 = vpack.c.b16 %v6117, %v6109
    %v6646 = vpack.c.b16 %v6118, %v6110
    %v6647 = vpack.c.b16 %v6127, %v6119
    %v6648 = vpack.c.b16 %v6128, %v6120
    %v6649 = vpack.c.b16 %v6129, %v6121
    %v6650 = vpack.c.b16 %v6130, %v6122
    %v6651 = vpack.c.b16 %v6131, %v6123
    %v6652 = vpack.c.b16 %v6132, %v6124
    %v6653 = vpack.c.b16 %v6133, %v6125
    %v6654 = vpack.c.b16 %v6134, %v6126
    %v6655 = vpack.c.b16 %v6143, %v6135
    %v6656 = vpack.c.b16 %v6144, %v6136
    %v6657 = vpack.c.b16 %v6145, %v6137
    %v6658 = vpack.c.b16 %v6146, %v6138
    %v6659 = vpack.c.b16 %v6147, %v6139
    %v6660 = vpack.c.b16 %v6148, %v6140
    %v6661 = vpack.c.b16 %v6149, %v6141
    %v6662 = vpack.c.b16 %v6150, %v6142
    %7175 = vmatpush.bf16.msra.mxu0 %v6207
    %7176 = vmatpush.bf16.msra.mxu0 %v6199
    %7177 = vmatpush.bf16.msra.mxu0 %v6191
    %7178 = vmatpush.bf16.msra.mxu0 %v6183
    %7179 = vmatpush.bf16.msra.mxu0 %v6175
    %7180 = vmatpush.bf16.msra.mxu0 %v6167
    %7181 = vmatpush.bf16.msra.mxu0 %v6159
    %7182 = vmatpush.bf16.msra.mxu0 %v6151
    %7183 = vmatmul.bf16.gmra.mxu0 %v4077
    %v7184 = vpop.f32.mrf.mxu0
    %v7185 = vadd.f32 %v4599, %v7184
    %v7186 = vpop.f32.mrf.mxu0
    %7187 = vdwg.mxu0
    %7188 = vmatpush.bf16.msra.mxu0 %v6271
    %7189 = vmatpush.bf16.msra.mxu0 %v6263
    %7190 = vmatpush.bf16.msra.mxu0 %v6255
    %7191 = vmatpush.bf16.msra.mxu0 %v6247
    %7192 = vmatpush.bf16.msra.mxu0 %v6239
    %7193 = vmatpush.bf16.msra.mxu0 %v6231
    %7194 = vmatpush.bf16.msra.mxu0 %v6223
    %7195 = vmatpush.bf16.msra.mxu0 %v6215
    %7196 = vmatmul.bf16.gmra.mxu0 %v4078
    %v7197 = vpop.f32.mrf.mxu0
    %v7198 = vadd.f32 %v7185, %v7197
    %v7199 = vpop.f32.mrf.mxu0
    %7200 = vdwg.mxu0
    %7201 = vmatpush.bf16.msra.mxu0 %v6335
    %7202 = vmatpush.bf16.msra.mxu0 %v6327
    %7203 = vmatpush.bf16.msra.mxu0 %v6319
    %7204 = vmatpush.bf16.msra.mxu0 %v6311
    %7205 = vmatpush.bf16.msra.mxu0 %v6303
    %7206 = vmatpush.bf16.msra.mxu0 %v6295
    %7207 = vmatpush.bf16.msra.mxu0 %v6287
    %7208 = vmatpush.bf16.msra.mxu0 %v6279
    %7209 = vmatmul.bf16.gmra.mxu0 %v4079
    %v7210 = vpop.f32.mrf.mxu0
    %v7211 = vadd.f32 %v7198, %v7210
    %v7212 = vpop.f32.mrf.mxu0
    %7213 = vdwg.mxu0
    %7214 = vmatpush.bf16.msra.mxu0 %v6399
    %7215 = vmatpush.bf16.msra.mxu0 %v6391
    %7216 = vmatpush.bf16.msra.mxu0 %v6383
    %7217 = vmatpush.bf16.msra.mxu0 %v6375
    %7218 = vmatpush.bf16.msra.mxu0 %v6367
    %7219 = vmatpush.bf16.msra.mxu0 %v6359
    %7220 = vmatpush.bf16.msra.mxu0 %v6351
    %7221 = vmatpush.bf16.msra.mxu0 %v6343
    %7222 = vmatmul.bf16.gmra.mxu0 %v4080
    %v7223 = vpop.f32.mrf.mxu0
    %v7224 = vadd.f32 %v7211, %v7223
    %v7225 = vpop.f32.mrf.mxu0
    %7226 = vdwg.mxu0
    %7227 = vmatpush.bf16.msra.mxu0 %v6463
    %7228 = vmatpush.bf16.msra.mxu0 %v6455
    %7229 = vmatpush.bf16.msra.mxu0 %v6447
    %7230 = vmatpush.bf16.msra.mxu0 %v6439
    %7231 = vmatpush.bf16.msra.mxu0 %v6431
    %7232 = vmatpush.bf16.msra.mxu0 %v6423
    %7233 = vmatpush.bf16.msra.mxu0 %v6415
    %7234 = vmatpush.bf16.msra.mxu0 %v6407
    %7235 = vmatmul.bf16.gmra.mxu0 %v4081
    %v7236 = vpop.f32.mrf.mxu0
    %v7237 = vadd.f32 %v7224, %v7236
    %v7238 = vpop.f32.mrf.mxu0
    %7239 = vdwg.mxu0
    %7240 = vmatpush.bf16.msra.mxu0 %v6527
    %7241 = vmatpush.bf16.msra.mxu0 %v6519
    %7242 = vmatpush.bf16.msra.mxu0 %v6511
    %7243 = vmatpush.bf16.msra.mxu0 %v6503
    %7244 = vmatpush.bf16.msra.mxu0 %v6495
    %7245 = vmatpush.bf16.msra.mxu0 %v6487
    %7246 = vmatpush.bf16.msra.mxu0 %v6479
    %7247 = vmatpush.bf16.msra.mxu0 %v6471
    %7248 = vmatmul.bf16.gmra.mxu0 %v4082
    %v7249 = vpop.f32.mrf.mxu0
    %v7250 = vadd.f32 %v7237, %v7249
    %v7251 = vpop.f32.mrf.mxu0
    %7252 = vdwg.mxu0
    %7253 = vmatpush.bf16.msra.mxu0 %v6591
    %7254 = vmatpush.bf16.msra.mxu0 %v6583
    %7255 = vmatpush.bf16.msra.mxu0 %v6575
    %7256 = vmatpush.bf16.msra.mxu0 %v6567
    %7257 = vmatpush.bf16.msra.mxu0 %v6559
    %7258 = vmatpush.bf16.msra.mxu0 %v6551
    %7259 = vmatpush.bf16.msra.mxu0 %v6543
    %7260 = vmatpush.bf16.msra.mxu0 %v6535
    %7261 = vmatmul.bf16.gmra.mxu0 %v4083
    %v7262 = vpop.f32.mrf.mxu0
    %v7263 = vadd.f32 %v7250, %v7262
    %v7264 = vpop.f32.mrf.mxu0
    %7265 = vdwg.mxu0
    %7266 = vmatpush.bf16.msra.mxu0 %v6655
    %7267 = vmatpush.bf16.msra.mxu0 %v6647
    %7268 = vmatpush.bf16.msra.mxu0 %v6639
    %7269 = vmatpush.bf16.msra.mxu0 %v6631
    %7270 = vmatpush.bf16.msra.mxu0 %v6623
    %7271 = vmatpush.bf16.msra.mxu0 %v6615
    %7272 = vmatpush.bf16.msra.mxu0 %v6607
    %7273 = vmatpush.bf16.msra.mxu0 %v6599
    %7274 = vmatmul.bf16.gmra.mxu0 %v4084
    %v7275 = vpop.f32.mrf.mxu0
    %v7276 = vadd.f32 %v7263, %v7275
    %v7277 = vpop.f32.mrf.mxu0
    %7278 = vdwg.mxu0
    %7279 = vmatpush.bf16.msra.mxu0 %v6208
    %7280 = vmatpush.bf16.msra.mxu0 %v6200
    %7281 = vmatpush.bf16.msra.mxu0 %v6192
    %7282 = vmatpush.bf16.msra.mxu0 %v6184
    %7283 = vmatpush.bf16.msra.mxu0 %v6176
    %7284 = vmatpush.bf16.msra.mxu0 %v6168
    %7285 = vmatpush.bf16.msra.mxu0 %v6160
    %7286 = vmatpush.bf16.msra.mxu0 %v6152
    %7287 = vmatmul.bf16.gmra.mxu0 %v4077
    %v7288 = vpop.f32.mrf.mxu0
    %v7289 = vadd.f32 %v4600, %v7288
    %v7290 = vpop.f32.mrf.mxu0
    %7291 = vdwg.mxu0
    %7292 = vmatpush.bf16.msra.mxu0 %v6272
    %7293 = vmatpush.bf16.msra.mxu0 %v6264
    %7294 = vmatpush.bf16.msra.mxu0 %v6256
    %7295 = vmatpush.bf16.msra.mxu0 %v6248
    %7296 = vmatpush.bf16.msra.mxu0 %v6240
    %7297 = vmatpush.bf16.msra.mxu0 %v6232
    %7298 = vmatpush.bf16.msra.mxu0 %v6224
    %7299 = vmatpush.bf16.msra.mxu0 %v6216
    %7300 = vmatmul.bf16.gmra.mxu0 %v4078
    %v7301 = vpop.f32.mrf.mxu0
    %v7302 = vadd.f32 %v7289, %v7301
    %v7303 = vpop.f32.mrf.mxu0
    %7304 = vdwg.mxu0
    %7305 = vmatpush.bf16.msra.mxu0 %v6336
    %7306 = vmatpush.bf16.msra.mxu0 %v6328
    %7307 = vmatpush.bf16.msra.mxu0 %v6320
    %7308 = vmatpush.bf16.msra.mxu0 %v6312
    %7309 = vmatpush.bf16.msra.mxu0 %v6304
    %7310 = vmatpush.bf16.msra.mxu0 %v6296
    %7311 = vmatpush.bf16.msra.mxu0 %v6288
    %7312 = vmatpush.bf16.msra.mxu0 %v6280
    %7313 = vmatmul.bf16.gmra.mxu0 %v4079
    %v7314 = vpop.f32.mrf.mxu0
    %v7315 = vadd.f32 %v7302, %v7314
    %v7316 = vpop.f32.mrf.mxu0
    %7317 = vdwg.mxu0
    %7318 = vmatpush.bf16.msra.mxu0 %v6400
    %7319 = vmatpush.bf16.msra.mxu0 %v6392
    %7320 = vmatpush.bf16.msra.mxu0 %v6384
    %7321 = vmatpush.bf16.msra.mxu0 %v6376
    %7322 = vmatpush.bf16.msra.mxu0 %v6368
    %7323 = vmatpush.bf16.msra.mxu0 %v6360
    %7324 = vmatpush.bf16.msra.mxu0 %v6352
    %7325 = vmatpush.bf16.msra.mxu0 %v6344
    %7326 = vmatmul.bf16.gmra.mxu0 %v4080
    %v7327 = vpop.f32.mrf.mxu0
    %v7328 = vadd.f32 %v7315, %v7327
    %v7329 = vpop.f32.mrf.mxu0
    %7330 = vdwg.mxu0
    %7331 = vmatpush.bf16.msra.mxu0 %v6464
    %7332 = vmatpush.bf16.msra.mxu0 %v6456
    %7333 = vmatpush.bf16.msra.mxu0 %v6448
    %7334 = vmatpush.bf16.msra.mxu0 %v6440
    %7335 = vmatpush.bf16.msra.mxu0 %v6432
    %7336 = vmatpush.bf16.msra.mxu0 %v6424
    %7337 = vmatpush.bf16.msra.mxu0 %v6416
    %7338 = vmatpush.bf16.msra.mxu0 %v6408
    %7339 = vmatmul.bf16.gmra.mxu0 %v4081
    %v7340 = vpop.f32.mrf.mxu0
    %v7341 = vadd.f32 %v7328, %v7340
    %v7342 = vpop.f32.mrf.mxu0
    %7343 = vdwg.mxu0
    %7344 = vmatpush.bf16.msra.mxu0 %v6528
    %7345 = vmatpush.bf16.msra.mxu0 %v6520
    %7346 = vmatpush.bf16.msra.mxu0 %v6512
    %7347 = vmatpush.bf16.msra.mxu0 %v6504
    %7348 = vmatpush.bf16.msra.mxu0 %v6496
    %7349 = vmatpush.bf16.msra.mxu0 %v6488
    %7350 = vmatpush.bf16.msra.mxu0 %v6480
    %7351 = vmatpush.bf16.msra.mxu0 %v6472
    %7352 = vmatmul.bf16.gmra.mxu0 %v4082
    %v7353 = vpop.f32.mrf.mxu0
    %v7354 = vadd.f32 %v7341, %v7353
    %v7355 = vpop.f32.mrf.mxu0
    %7356 = vdwg.mxu0
    %7357 = vmatpush.bf16.msra.mxu0 %v6592
    %7358 = vmatpush.bf16.msra.mxu0 %v6584
    %7359 = vmatpush.bf16.msra.mxu0 %v6576
    %7360 = vmatpush.bf16.msra.mxu0 %v6568
    %7361 = vmatpush.bf16.msra.mxu0 %v6560
    %7362 = vmatpush.bf16.msra.mxu0 %v6552
    %7363 = vmatpush.bf16.msra.mxu0 %v6544
    %7364 = vmatpush.bf16.msra.mxu0 %v6536
    %7365 = vmatmul.bf16.gmra.mxu0 %v4083
    %v7366 = vpop.f32.mrf.mxu0
    %v7367 = vadd.f32 %v7354, %v7366
    %v7368 = vpop.f32.mrf.mxu0
    %7369 = vdwg.mxu0
    %7370 = vmatpush.bf16.msra.mxu0 %v6656
    %7371 = vmatpush.bf16.msra.mxu0 %v6648
    %7372 = vmatpush.bf16.msra.mxu0 %v6640
    %7373 = vmatpush.bf16.msra.mxu0 %v6632
    %7374 = vmatpush.bf16.msra.mxu0 %v6624
    %7375 = vmatpush.bf16.msra.mxu0 %v6616
    %7376 = vmatpush.bf16.msra.mxu0 %v6608
    %7377 = vmatpush.bf16.msra.mxu0 %v6600
    %7378 = vmatmul.bf16.gmra.mxu0 %v4084
    %v7379 = vpop.f32.mrf.mxu0
    %v7380 = vadd.f32 %v7367, %v7379
    %v7381 = vpop.f32.mrf.mxu0
    %7382 = vdwg.mxu0
    %7383 = vmatpush.bf16.msra.mxu0 %v6209
    %7384 = vmatpush.bf16.msra.mxu0 %v6201
    %7385 = vmatpush.bf16.msra.mxu0 %v6193
    %7386 = vmatpush.bf16.msra.mxu0 %v6185
    %7387 = vmatpush.bf16.msra.mxu0 %v6177
    %7388 = vmatpush.bf16.msra.mxu0 %v6169
    %7389 = vmatpush.bf16.msra.mxu0 %v6161
    %7390 = vmatpush.bf16.msra.mxu0 %v6153
    %7391 = vmatmul.bf16.gmra.mxu0 %v4077
    %v7392 = vpop.f32.mrf.mxu0
    %v7393 = vadd.f32 %v4601, %v7392
    %v7394 = vpop.f32.mrf.mxu0
    %7395 = vdwg.mxu0
    %7396 = vmatpush.bf16.msra.mxu0 %v6273
    %7397 = vmatpush.bf16.msra.mxu0 %v6265
    %7398 = vmatpush.bf16.msra.mxu0 %v6257
    %7399 = vmatpush.bf16.msra.mxu0 %v6249
    %7400 = vmatpush.bf16.msra.mxu0 %v6241
    %7401 = vmatpush.bf16.msra.mxu0 %v6233
    %7402 = vmatpush.bf16.msra.mxu0 %v6225
    %7403 = vmatpush.bf16.msra.mxu0 %v6217
    %7404 = vmatmul.bf16.gmra.mxu0 %v4078
    %v7405 = vpop.f32.mrf.mxu0
    %v7406 = vadd.f32 %v7393, %v7405
    %v7407 = vpop.f32.mrf.mxu0
    %7408 = vdwg.mxu0
    %7409 = vmatpush.bf16.msra.mxu0 %v6337
    %7410 = vmatpush.bf16.msra.mxu0 %v6329
    %7411 = vmatpush.bf16.msra.mxu0 %v6321
    %7412 = vmatpush.bf16.msra.mxu0 %v6313
    %7413 = vmatpush.bf16.msra.mxu0 %v6305
    %7414 = vmatpush.bf16.msra.mxu0 %v6297
    %7415 = vmatpush.bf16.msra.mxu0 %v6289
    %7416 = vmatpush.bf16.msra.mxu0 %v6281
    %7417 = vmatmul.bf16.gmra.mxu0 %v4079
    %v7418 = vpop.f32.mrf.mxu0
    %v7419 = vadd.f32 %v7406, %v7418
    %v7420 = vpop.f32.mrf.mxu0
    %7421 = vdwg.mxu0
    %7422 = vmatpush.bf16.msra.mxu0 %v6401
    %7423 = vmatpush.bf16.msra.mxu0 %v6393
    %7424 = vmatpush.bf16.msra.mxu0 %v6385
    %7425 = vmatpush.bf16.msra.mxu0 %v6377
    %7426 = vmatpush.bf16.msra.mxu0 %v6369
    %7427 = vmatpush.bf16.msra.mxu0 %v6361
    %7428 = vmatpush.bf16.msra.mxu0 %v6353
    %7429 = vmatpush.bf16.msra.mxu0 %v6345
    %7430 = vmatmul.bf16.gmra.mxu0 %v4080
    %v7431 = vpop.f32.mrf.mxu0
    %v7432 = vadd.f32 %v7419, %v7431
    %v7433 = vpop.f32.mrf.mxu0
    %7434 = vdwg.mxu0
    %7435 = vmatpush.bf16.msra.mxu0 %v6465
    %7436 = vmatpush.bf16.msra.mxu0 %v6457
    %7437 = vmatpush.bf16.msra.mxu0 %v6449
    %7438 = vmatpush.bf16.msra.mxu0 %v6441
    %7439 = vmatpush.bf16.msra.mxu0 %v6433
    %7440 = vmatpush.bf16.msra.mxu0 %v6425
    %7441 = vmatpush.bf16.msra.mxu0 %v6417
    %7442 = vmatpush.bf16.msra.mxu0 %v6409
    %7443 = vmatmul.bf16.gmra.mxu0 %v4081
    %v7444 = vpop.f32.mrf.mxu0
    %v7445 = vadd.f32 %v7432, %v7444
    %v7446 = vpop.f32.mrf.mxu0
    %7447 = vdwg.mxu0
    %7448 = vmatpush.bf16.msra.mxu0 %v6529
    %7449 = vmatpush.bf16.msra.mxu0 %v6521
    %7450 = vmatpush.bf16.msra.mxu0 %v6513
    %7451 = vmatpush.bf16.msra.mxu0 %v6505
    %7452 = vmatpush.bf16.msra.mxu0 %v6497
    %7453 = vmatpush.bf16.msra.mxu0 %v6489
    %7454 = vmatpush.bf16.msra.mxu0 %v6481
    %7455 = vmatpush.bf16.msra.mxu0 %v6473
    %7456 = vmatmul.bf16.gmra.mxu0 %v4082
    %v7457 = vpop.f32.mrf.mxu0
    %v7458 = vadd.f32 %v7445, %v7457
    %v7459 = vpop.f32.mrf.mxu0
    %7460 = vdwg.mxu0
    %7461 = vmatpush.bf16.msra.mxu0 %v6593
    %7462 = vmatpush.bf16.msra.mxu0 %v6585
    %7463 = vmatpush.bf16.msra.mxu0 %v6577
    %7464 = vmatpush.bf16.msra.mxu0 %v6569
    %7465 = vmatpush.bf16.msra.mxu0 %v6561
    %7466 = vmatpush.bf16.msra.mxu0 %v6553
    %7467 = vmatpush.bf16.msra.mxu0 %v6545
    %7468 = vmatpush.bf16.msra.mxu0 %v6537
    %7469 = vmatmul.bf16.gmra.mxu0 %v4083
    %v7470 = vpop.f32.mrf.mxu0
    %v7471 = vadd.f32 %v7458, %v7470
    %v7472 = vpop.f32.mrf.mxu0
    %7473 = vdwg.mxu0
    %7474 = vmatpush.bf16.msra.mxu0 %v6657
    %7475 = vmatpush.bf16.msra.mxu0 %v6649
    %7476 = vmatpush.bf16.msra.mxu0 %v6641
    %7477 = vmatpush.bf16.msra.mxu0 %v6633
    %7478 = vmatpush.bf16.msra.mxu0 %v6625
    %7479 = vmatpush.bf16.msra.mxu0 %v6617
    %7480 = vmatpush.bf16.msra.mxu0 %v6609
    %7481 = vmatpush.bf16.msra.mxu0 %v6601
    %7482 = vmatmul.bf16.gmra.mxu0 %v4084
    %v7483 = vpop.f32.mrf.mxu0
    %v7484 = vadd.f32 %v7471, %v7483
    %v7485 = vpop.f32.mrf.mxu0
    %7486 = vdwg.mxu0
    %7487 = vmatpush.bf16.msra.mxu0 %v6210
    %7488 = vmatpush.bf16.msra.mxu0 %v6202
    %7489 = vmatpush.bf16.msra.mxu0 %v6194
    %7490 = vmatpush.bf16.msra.mxu0 %v6186
    %7491 = vmatpush.bf16.msra.mxu0 %v6178
    %7492 = vmatpush.bf16.msra.mxu0 %v6170
    %7493 = vmatpush.bf16.msra.mxu0 %v6162
    %7494 = vmatpush.bf16.msra.mxu0 %v6154
    %7495 = vmatmul.bf16.gmra.mxu0 %v4077
    %v7496 = vpop.f32.mrf.mxu0
    %v7497 = vadd.f32 %v4602, %v7496
    %v7498 = vpop.f32.mrf.mxu0
    %7499 = vdwg.mxu0
    %7500 = vmatpush.bf16.msra.mxu0 %v6274
    %7501 = vmatpush.bf16.msra.mxu0 %v6266
    %7502 = vmatpush.bf16.msra.mxu0 %v6258
    %7503 = vmatpush.bf16.msra.mxu0 %v6250
    %7504 = vmatpush.bf16.msra.mxu0 %v6242
    %7505 = vmatpush.bf16.msra.mxu0 %v6234
    %7506 = vmatpush.bf16.msra.mxu0 %v6226
    %7507 = vmatpush.bf16.msra.mxu0 %v6218
    %7508 = vmatmul.bf16.gmra.mxu0 %v4078
    %v7509 = vpop.f32.mrf.mxu0
    %v7510 = vadd.f32 %v7497, %v7509
    %v7511 = vpop.f32.mrf.mxu0
    %7512 = vdwg.mxu0
    %7513 = vmatpush.bf16.msra.mxu0 %v6338
    %7514 = vmatpush.bf16.msra.mxu0 %v6330
    %7515 = vmatpush.bf16.msra.mxu0 %v6322
    %7516 = vmatpush.bf16.msra.mxu0 %v6314
    %7517 = vmatpush.bf16.msra.mxu0 %v6306
    %7518 = vmatpush.bf16.msra.mxu0 %v6298
    %7519 = vmatpush.bf16.msra.mxu0 %v6290
    %7520 = vmatpush.bf16.msra.mxu0 %v6282
    %7521 = vmatmul.bf16.gmra.mxu0 %v4079
    %v7522 = vpop.f32.mrf.mxu0
    %v7523 = vadd.f32 %v7510, %v7522
    %v7524 = vpop.f32.mrf.mxu0
    %7525 = vdwg.mxu0
    %7526 = vmatpush.bf16.msra.mxu0 %v6402
    %7527 = vmatpush.bf16.msra.mxu0 %v6394
    %7528 = vmatpush.bf16.msra.mxu0 %v6386
    %7529 = vmatpush.bf16.msra.mxu0 %v6378
    %7530 = vmatpush.bf16.msra.mxu0 %v6370
    %7531 = vmatpush.bf16.msra.mxu0 %v6362
    %7532 = vmatpush.bf16.msra.mxu0 %v6354
    %7533 = vmatpush.bf16.msra.mxu0 %v6346
    %7534 = vmatmul.bf16.gmra.mxu0 %v4080
    %v7535 = vpop.f32.mrf.mxu0
    %v7536 = vadd.f32 %v7523, %v7535
    %v7537 = vpop.f32.mrf.mxu0
    %7538 = vdwg.mxu0
    %7539 = vmatpush.bf16.msra.mxu0 %v6466
    %7540 = vmatpush.bf16.msra.mxu0 %v6458
    %7541 = vmatpush.bf16.msra.mxu0 %v6450
    %7542 = vmatpush.bf16.msra.mxu0 %v6442
    %7543 = vmatpush.bf16.msra.mxu0 %v6434
    %7544 = vmatpush.bf16.msra.mxu0 %v6426
    %7545 = vmatpush.bf16.msra.mxu0 %v6418
    %7546 = vmatpush.bf16.msra.mxu0 %v6410
    %7547 = vmatmul.bf16.gmra.mxu0 %v4081
    %v7548 = vpop.f32.mrf.mxu0
    %v7549 = vadd.f32 %v7536, %v7548
    %v7550 = vpop.f32.mrf.mxu0
    %7551 = vdwg.mxu0
    %7552 = vmatpush.bf16.msra.mxu0 %v6530
    %7553 = vmatpush.bf16.msra.mxu0 %v6522
    %7554 = vmatpush.bf16.msra.mxu0 %v6514
    %7555 = vmatpush.bf16.msra.mxu0 %v6506
    %7556 = vmatpush.bf16.msra.mxu0 %v6498
    %7557 = vmatpush.bf16.msra.mxu0 %v6490
    %7558 = vmatpush.bf16.msra.mxu0 %v6482
    %7559 = vmatpush.bf16.msra.mxu0 %v6474
    %7560 = vmatmul.bf16.gmra.mxu0 %v4082
    %v7561 = vpop.f32.mrf.mxu0
    %v7562 = vadd.f32 %v7549, %v7561
    %v7563 = vpop.f32.mrf.mxu0
    %7564 = vdwg.mxu0
    %7565 = vmatpush.bf16.msra.mxu0 %v6594
    %7566 = vmatpush.bf16.msra.mxu0 %v6586
    %7567 = vmatpush.bf16.msra.mxu0 %v6578
    %7568 = vmatpush.bf16.msra.mxu0 %v6570
    %7569 = vmatpush.bf16.msra.mxu0 %v6562
    %7570 = vmatpush.bf16.msra.mxu0 %v6554
    %7571 = vmatpush.bf16.msra.mxu0 %v6546
    %7572 = vmatpush.bf16.msra.mxu0 %v6538
    %7573 = vmatmul.bf16.gmra.mxu0 %v4083
    %v7574 = vpop.f32.mrf.mxu0
    %v7575 = vadd.f32 %v7562, %v7574
    %v7576 = vpop.f32.mrf.mxu0
    %7577 = vdwg.mxu0
    %7578 = vmatpush.bf16.msra.mxu0 %v6658
    %7579 = vmatpush.bf16.msra.mxu0 %v6650
    %7580 = vmatpush.bf16.msra.mxu0 %v6642
    %7581 = vmatpush.bf16.msra.mxu0 %v6634
    %7582 = vmatpush.bf16.msra.mxu0 %v6626
    %7583 = vmatpush.bf16.msra.mxu0 %v6618
    %7584 = vmatpush.bf16.msra.mxu0 %v6610
    %7585 = vmatpush.bf16.msra.mxu0 %v6602
    %7586 = vmatmul.bf16.gmra.mxu0 %v4084
    %v7587 = vpop.f32.mrf.mxu0
    %v7588 = vadd.f32 %v7575, %v7587
    %v7589 = vpop.f32.mrf.mxu0
    %7590 = vdwg.mxu0
    %7591 = vmatpush.bf16.msra.mxu0 %v6211
    %7592 = vmatpush.bf16.msra.mxu0 %v6203
    %7593 = vmatpush.bf16.msra.mxu0 %v6195
    %7594 = vmatpush.bf16.msra.mxu0 %v6187
    %7595 = vmatpush.bf16.msra.mxu0 %v6179
    %7596 = vmatpush.bf16.msra.mxu0 %v6171
    %7597 = vmatpush.bf16.msra.mxu0 %v6163
    %7598 = vmatpush.bf16.msra.mxu0 %v6155
    %7599 = vmatmul.bf16.gmra.mxu0 %v4077
    %v7600 = vpop.f32.mrf.mxu0
    %v7601 = vadd.f32 %v4603, %v7600
    %v7602 = vpop.f32.mrf.mxu0
    %7603 = vdwg.mxu0
    %7604 = vmatpush.bf16.msra.mxu0 %v6275
    %7605 = vmatpush.bf16.msra.mxu0 %v6267
    %7606 = vmatpush.bf16.msra.mxu0 %v6259
    %7607 = vmatpush.bf16.msra.mxu0 %v6251
    %7608 = vmatpush.bf16.msra.mxu0 %v6243
    %7609 = vmatpush.bf16.msra.mxu0 %v6235
    %7610 = vmatpush.bf16.msra.mxu0 %v6227
    %7611 = vmatpush.bf16.msra.mxu0 %v6219
    %7612 = vmatmul.bf16.gmra.mxu0 %v4078
    %v7613 = vpop.f32.mrf.mxu0
    %v7614 = vadd.f32 %v7601, %v7613
    %v7615 = vpop.f32.mrf.mxu0
    %7616 = vdwg.mxu0
    %7617 = vmatpush.bf16.msra.mxu0 %v6339
    %7618 = vmatpush.bf16.msra.mxu0 %v6331
    %7619 = vmatpush.bf16.msra.mxu0 %v6323
    %7620 = vmatpush.bf16.msra.mxu0 %v6315
    %7621 = vmatpush.bf16.msra.mxu0 %v6307
    %7622 = vmatpush.bf16.msra.mxu0 %v6299
    %7623 = vmatpush.bf16.msra.mxu0 %v6291
    %7624 = vmatpush.bf16.msra.mxu0 %v6283
    %7625 = vmatmul.bf16.gmra.mxu0 %v4079
    %v7626 = vpop.f32.mrf.mxu0
    %v7627 = vadd.f32 %v7614, %v7626
    %v7628 = vpop.f32.mrf.mxu0
    %7629 = vdwg.mxu0
    %7630 = vmatpush.bf16.msra.mxu0 %v6403
    %7631 = vmatpush.bf16.msra.mxu0 %v6395
    %7632 = vmatpush.bf16.msra.mxu0 %v6387
    %7633 = vmatpush.bf16.msra.mxu0 %v6379
    %7634 = vmatpush.bf16.msra.mxu0 %v6371
    %7635 = vmatpush.bf16.msra.mxu0 %v6363
    %7636 = vmatpush.bf16.msra.mxu0 %v6355
    %7637 = vmatpush.bf16.msra.mxu0 %v6347
    %7638 = vmatmul.bf16.gmra.mxu0 %v4080
    %v7639 = vpop.f32.mrf.mxu0
    %v7640 = vadd.f32 %v7627, %v7639
    %v7641 = vpop.f32.mrf.mxu0
    %7642 = vdwg.mxu0
    %7643 = vmatpush.bf16.msra.mxu0 %v6467
    %7644 = vmatpush.bf16.msra.mxu0 %v6459
    %7645 = vmatpush.bf16.msra.mxu0 %v6451
    %7646 = vmatpush.bf16.msra.mxu0 %v6443
    %7647 = vmatpush.bf16.msra.mxu0 %v6435
    %7648 = vmatpush.bf16.msra.mxu0 %v6427
    %7649 = vmatpush.bf16.msra.mxu0 %v6419
    %7650 = vmatpush.bf16.msra.mxu0 %v6411
    %7651 = vmatmul.bf16.gmra.mxu0 %v4081
    %v7652 = vpop.f32.mrf.mxu0
    %v7653 = vadd.f32 %v7640, %v7652
    %v7654 = vpop.f32.mrf.mxu0
    %7655 = vdwg.mxu0
    %7656 = vmatpush.bf16.msra.mxu0 %v6531
    %7657 = vmatpush.bf16.msra.mxu0 %v6523
    %7658 = vmatpush.bf16.msra.mxu0 %v6515
    %7659 = vmatpush.bf16.msra.mxu0 %v6507
    %7660 = vmatpush.bf16.msra.mxu0 %v6499
    %7661 = vmatpush.bf16.msra.mxu0 %v6491
    %7662 = vmatpush.bf16.msra.mxu0 %v6483
    %7663 = vmatpush.bf16.msra.mxu0 %v6475
    %7664 = vmatmul.bf16.gmra.mxu0 %v4082
    %v7665 = vpop.f32.mrf.mxu0
    %v7666 = vadd.f32 %v7653, %v7665
    %v7667 = vpop.f32.mrf.mxu0
    %7668 = vdwg.mxu0
    %7669 = vmatpush.bf16.msra.mxu0 %v6595
    %7670 = vmatpush.bf16.msra.mxu0 %v6587
    %7671 = vmatpush.bf16.msra.mxu0 %v6579
    %7672 = vmatpush.bf16.msra.mxu0 %v6571
    %7673 = vmatpush.bf16.msra.mxu0 %v6563
    %7674 = vmatpush.bf16.msra.mxu0 %v6555
    %7675 = vmatpush.bf16.msra.mxu0 %v6547
    %7676 = vmatpush.bf16.msra.mxu0 %v6539
    %7677 = vmatmul.bf16.gmra.mxu0 %v4083
    %v7678 = vpop.f32.mrf.mxu0
    %v7679 = vadd.f32 %v7666, %v7678
    %v7680 = vpop.f32.mrf.mxu0
    %7681 = vdwg.mxu0
    %7682 = vmatpush.bf16.msra.mxu0 %v6659
    %7683 = vmatpush.bf16.msra.mxu0 %v6651
    %7684 = vmatpush.bf16.msra.mxu0 %v6643
    %7685 = vmatpush.bf16.msra.mxu0 %v6635
    %7686 = vmatpush.bf16.msra.mxu0 %v6627
    %7687 = vmatpush.bf16.msra.mxu0 %v6619
    %7688 = vmatpush.bf16.msra.mxu0 %v6611
    %7689 = vmatpush.bf16.msra.mxu0 %v6603
    %7690 = vmatmul.bf16.gmra.mxu0 %v4084
    %v7691 = vpop.f32.mrf.mxu0
    %v7692 = vadd.f32 %v7679, %v7691
    %v7693 = vpop.f32.mrf.mxu0
    %7694 = vdwg.mxu0
    %7695 = vmatpush.bf16.msra.mxu0 %v6212
    %7696 = vmatpush.bf16.msra.mxu0 %v6204
    %7697 = vmatpush.bf16.msra.mxu0 %v6196
    %7698 = vmatpush.bf16.msra.mxu0 %v6188
    %7699 = vmatpush.bf16.msra.mxu0 %v6180
    %7700 = vmatpush.bf16.msra.mxu0 %v6172
    %7701 = vmatpush.bf16.msra.mxu0 %v6164
    %7702 = vmatpush.bf16.msra.mxu0 %v6156
    %7703 = vmatmul.bf16.gmra.mxu0 %v4077
    %v7704 = vpop.f32.mrf.mxu0
    %v7705 = vadd.f32 %v4604, %v7704
    %v7706 = vpop.f32.mrf.mxu0
    %7707 = vdwg.mxu0
    %7708 = vmatpush.bf16.msra.mxu0 %v6276
    %7709 = vmatpush.bf16.msra.mxu0 %v6268
    %7710 = vmatpush.bf16.msra.mxu0 %v6260
    %7711 = vmatpush.bf16.msra.mxu0 %v6252
    %7712 = vmatpush.bf16.msra.mxu0 %v6244
    %7713 = vmatpush.bf16.msra.mxu0 %v6236
    %7714 = vmatpush.bf16.msra.mxu0 %v6228
    %7715 = vmatpush.bf16.msra.mxu0 %v6220
    %7716 = vmatmul.bf16.gmra.mxu0 %v4078
    %v7717 = vpop.f32.mrf.mxu0
    %v7718 = vadd.f32 %v7705, %v7717
    %v7719 = vpop.f32.mrf.mxu0
    %7720 = vdwg.mxu0
    %7721 = vmatpush.bf16.msra.mxu0 %v6340
    %7722 = vmatpush.bf16.msra.mxu0 %v6332
    %7723 = vmatpush.bf16.msra.mxu0 %v6324
    %7724 = vmatpush.bf16.msra.mxu0 %v6316
    %7725 = vmatpush.bf16.msra.mxu0 %v6308
    %7726 = vmatpush.bf16.msra.mxu0 %v6300
    %7727 = vmatpush.bf16.msra.mxu0 %v6292
    %7728 = vmatpush.bf16.msra.mxu0 %v6284
    %7729 = vmatmul.bf16.gmra.mxu0 %v4079
    %v7730 = vpop.f32.mrf.mxu0
    %v7731 = vadd.f32 %v7718, %v7730
    %v7732 = vpop.f32.mrf.mxu0
    %7733 = vdwg.mxu0
    %7734 = vmatpush.bf16.msra.mxu0 %v6404
    %7735 = vmatpush.bf16.msra.mxu0 %v6396
    %7736 = vmatpush.bf16.msra.mxu0 %v6388
    %7737 = vmatpush.bf16.msra.mxu0 %v6380
    %7738 = vmatpush.bf16.msra.mxu0 %v6372
    %7739 = vmatpush.bf16.msra.mxu0 %v6364
    %7740 = vmatpush.bf16.msra.mxu0 %v6356
    %7741 = vmatpush.bf16.msra.mxu0 %v6348
    %7742 = vmatmul.bf16.gmra.mxu0 %v4080
    %v7743 = vpop.f32.mrf.mxu0
    %v7744 = vadd.f32 %v7731, %v7743
    %v7745 = vpop.f32.mrf.mxu0
    %7746 = vdwg.mxu0
    %7747 = vmatpush.bf16.msra.mxu0 %v6468
    %7748 = vmatpush.bf16.msra.mxu0 %v6460
    %7749 = vmatpush.bf16.msra.mxu0 %v6452
    %7750 = vmatpush.bf16.msra.mxu0 %v6444
    %7751 = vmatpush.bf16.msra.mxu0 %v6436
    %7752 = vmatpush.bf16.msra.mxu0 %v6428
    %7753 = vmatpush.bf16.msra.mxu0 %v6420
    %7754 = vmatpush.bf16.msra.mxu0 %v6412
    %7755 = vmatmul.bf16.gmra.mxu0 %v4081
    %v7756 = vpop.f32.mrf.mxu0
    %v7757 = vadd.f32 %v7744, %v7756
    %v7758 = vpop.f32.mrf.mxu0
    %7759 = vdwg.mxu0
    %7760 = vmatpush.bf16.msra.mxu0 %v6532
    %7761 = vmatpush.bf16.msra.mxu0 %v6524
    %7762 = vmatpush.bf16.msra.mxu0 %v6516
    %7763 = vmatpush.bf16.msra.mxu0 %v6508
    %7764 = vmatpush.bf16.msra.mxu0 %v6500
    %7765 = vmatpush.bf16.msra.mxu0 %v6492
    %7766 = vmatpush.bf16.msra.mxu0 %v6484
    %7767 = vmatpush.bf16.msra.mxu0 %v6476
    %7768 = vmatmul.bf16.gmra.mxu0 %v4082
    %v7769 = vpop.f32.mrf.mxu0
    %v7770 = vadd.f32 %v7757, %v7769
    %v7771 = vpop.f32.mrf.mxu0
    %7772 = vdwg.mxu0
    %7773 = vmatpush.bf16.msra.mxu0 %v6596
    %7774 = vmatpush.bf16.msra.mxu0 %v6588
    %7775 = vmatpush.bf16.msra.mxu0 %v6580
    %7776 = vmatpush.bf16.msra.mxu0 %v6572
    %7777 = vmatpush.bf16.msra.mxu0 %v6564
    %7778 = vmatpush.bf16.msra.mxu0 %v6556
    %7779 = vmatpush.bf16.msra.mxu0 %v6548
    %7780 = vmatpush.bf16.msra.mxu0 %v6540
    %7781 = vmatmul.bf16.gmra.mxu0 %v4083
    %v7782 = vpop.f32.mrf.mxu0
    %v7783 = vadd.f32 %v7770, %v7782
    %v7784 = vpop.f32.mrf.mxu0
    %7785 = vdwg.mxu0
    %7786 = vmatpush.bf16.msra.mxu0 %v6660
    %7787 = vmatpush.bf16.msra.mxu0 %v6652
    %7788 = vmatpush.bf16.msra.mxu0 %v6644
    %7789 = vmatpush.bf16.msra.mxu0 %v6636
    %7790 = vmatpush.bf16.msra.mxu0 %v6628
    %7791 = vmatpush.bf16.msra.mxu0 %v6620
    %7792 = vmatpush.bf16.msra.mxu0 %v6612
    %7793 = vmatpush.bf16.msra.mxu0 %v6604
    %7794 = vmatmul.bf16.gmra.mxu0 %v4084
    %v7795 = vpop.f32.mrf.mxu0
    %v7796 = vadd.f32 %v7783, %v7795
    %v7797 = vpop.f32.mrf.mxu0
    %7798 = vdwg.mxu0
    %7799 = vmatpush.bf16.msra.mxu0 %v6213
    %7800 = vmatpush.bf16.msra.mxu0 %v6205
    %7801 = vmatpush.bf16.msra.mxu0 %v6197
    %7802 = vmatpush.bf16.msra.mxu0 %v6189
    %7803 = vmatpush.bf16.msra.mxu0 %v6181
    %7804 = vmatpush.bf16.msra.mxu0 %v6173
    %7805 = vmatpush.bf16.msra.mxu0 %v6165
    %7806 = vmatpush.bf16.msra.mxu0 %v6157
    %7807 = vmatmul.bf16.gmra.mxu0 %v4077
    %v7808 = vpop.f32.mrf.mxu0
    %v7809 = vadd.f32 %v4605, %v7808
    %v7810 = vpop.f32.mrf.mxu0
    %7811 = vdwg.mxu0
    %7812 = vmatpush.bf16.msra.mxu0 %v6277
    %7813 = vmatpush.bf16.msra.mxu0 %v6269
    %7814 = vmatpush.bf16.msra.mxu0 %v6261
    %7815 = vmatpush.bf16.msra.mxu0 %v6253
    %7816 = vmatpush.bf16.msra.mxu0 %v6245
    %7817 = vmatpush.bf16.msra.mxu0 %v6237
    %7818 = vmatpush.bf16.msra.mxu0 %v6229
    %7819 = vmatpush.bf16.msra.mxu0 %v6221
    %7820 = vmatmul.bf16.gmra.mxu0 %v4078
    %v7821 = vpop.f32.mrf.mxu0
    %v7822 = vadd.f32 %v7809, %v7821
    %v7823 = vpop.f32.mrf.mxu0
    %7824 = vdwg.mxu0
    %7825 = vmatpush.bf16.msra.mxu0 %v6341
    %7826 = vmatpush.bf16.msra.mxu0 %v6333
    %7827 = vmatpush.bf16.msra.mxu0 %v6325
    %7828 = vmatpush.bf16.msra.mxu0 %v6317
    %7829 = vmatpush.bf16.msra.mxu0 %v6309
    %7830 = vmatpush.bf16.msra.mxu0 %v6301
    %7831 = vmatpush.bf16.msra.mxu0 %v6293
    %7832 = vmatpush.bf16.msra.mxu0 %v6285
    %7833 = vmatmul.bf16.gmra.mxu0 %v4079
    %v7834 = vpop.f32.mrf.mxu0
    %v7835 = vadd.f32 %v7822, %v7834
    %v7836 = vpop.f32.mrf.mxu0
    %7837 = vdwg.mxu0
    %7838 = vmatpush.bf16.msra.mxu0 %v6405
    %7839 = vmatpush.bf16.msra.mxu0 %v6397
    %7840 = vmatpush.bf16.msra.mxu0 %v6389
    %7841 = vmatpush.bf16.msra.mxu0 %v6381
    %7842 = vmatpush.bf16.msra.mxu0 %v6373
    %7843 = vmatpush.bf16.msra.mxu0 %v6365
    %7844 = vmatpush.bf16.msra.mxu0 %v6357
    %7845 = vmatpush.bf16.msra.mxu0 %v6349
    %7846 = vmatmul.bf16.gmra.mxu0 %v4080
    %v7847 = vpop.f32.mrf.mxu0
    %v7848 = vadd.f32 %v7835, %v7847
    %v7849 = vpop.f32.mrf.mxu0
    %7850 = vdwg.mxu0
    %7851 = vmatpush.bf16.msra.mxu0 %v6469
    %7852 = vmatpush.bf16.msra.mxu0 %v6461
    %7853 = vmatpush.bf16.msra.mxu0 %v6453
    %7854 = vmatpush.bf16.msra.mxu0 %v6445
    %7855 = vmatpush.bf16.msra.mxu0 %v6437
    %7856 = vmatpush.bf16.msra.mxu0 %v6429
    %7857 = vmatpush.bf16.msra.mxu0 %v6421
    %7858 = vmatpush.bf16.msra.mxu0 %v6413
    %7859 = vmatmul.bf16.gmra.mxu0 %v4081
    %v7860 = vpop.f32.mrf.mxu0
    %v7861 = vadd.f32 %v7848, %v7860
    %v7862 = vpop.f32.mrf.mxu0
    %7863 = vdwg.mxu0
    %7864 = vmatpush.bf16.msra.mxu0 %v6533
    %7865 = vmatpush.bf16.msra.mxu0 %v6525
    %7866 = vmatpush.bf16.msra.mxu0 %v6517
    %7867 = vmatpush.bf16.msra.mxu0 %v6509
    %7868 = vmatpush.bf16.msra.mxu0 %v6501
    %7869 = vmatpush.bf16.msra.mxu0 %v6493
    %7870 = vmatpush.bf16.msra.mxu0 %v6485
    %7871 = vmatpush.bf16.msra.mxu0 %v6477
    %7872 = vmatmul.bf16.gmra.mxu0 %v4082
    %v7873 = vpop.f32.mrf.mxu0
    %v7874 = vadd.f32 %v7861, %v7873
    %v7875 = vpop.f32.mrf.mxu0
    %7876 = vdwg.mxu0
    %7877 = vmatpush.bf16.msra.mxu0 %v6597
    %7878 = vmatpush.bf16.msra.mxu0 %v6589
    %7879 = vmatpush.bf16.msra.mxu0 %v6581
    %7880 = vmatpush.bf16.msra.mxu0 %v6573
    %7881 = vmatpush.bf16.msra.mxu0 %v6565
    %7882 = vmatpush.bf16.msra.mxu0 %v6557
    %7883 = vmatpush.bf16.msra.mxu0 %v6549
    %7884 = vmatpush.bf16.msra.mxu0 %v6541
    %7885 = vmatmul.bf16.gmra.mxu0 %v4083
    %v7886 = vpop.f32.mrf.mxu0
    %v7887 = vadd.f32 %v7874, %v7886
    %v7888 = vpop.f32.mrf.mxu0
    %7889 = vdwg.mxu0
    %7890 = vmatpush.bf16.msra.mxu0 %v6661
    %7891 = vmatpush.bf16.msra.mxu0 %v6653
    %7892 = vmatpush.bf16.msra.mxu0 %v6645
    %7893 = vmatpush.bf16.msra.mxu0 %v6637
    %7894 = vmatpush.bf16.msra.mxu0 %v6629
    %7895 = vmatpush.bf16.msra.mxu0 %v6621
    %7896 = vmatpush.bf16.msra.mxu0 %v6613
    %7897 = vmatpush.bf16.msra.mxu0 %v6605
    %7898 = vmatmul.bf16.gmra.mxu0 %v4084
    %v7899 = vpop.f32.mrf.mxu0
    %v7900 = vadd.f32 %v7887, %v7899
    %v7901 = vpop.f32.mrf.mxu0
    %7902 = vdwg.mxu0
    %7903 = vmatpush.bf16.msra.mxu0 %v6214
    %7904 = vmatpush.bf16.msra.mxu0 %v6206
    %7905 = vmatpush.bf16.msra.mxu0 %v6198
    %7906 = vmatpush.bf16.msra.mxu0 %v6190
    %7907 = vmatpush.bf16.msra.mxu0 %v6182
    %7908 = vmatpush.bf16.msra.mxu0 %v6174
    %7909 = vmatpush.bf16.msra.mxu0 %v6166
    %7910 = vmatpush.bf16.msra.mxu0 %v6158
    %7911 = vmatmul.bf16.gmra.mxu0 %v4077
    %v7912 = vpop.f32.mrf.mxu0
    %v7913 = vadd.f32 %v4606, %v7912
    %v7914 = vpop.f32.mrf.mxu0
    %7915 = vdwg.mxu0
    %7916 = vmatpush.bf16.msra.mxu0 %v6278
    %7917 = vmatpush.bf16.msra.mxu0 %v6270
    %7918 = vmatpush.bf16.msra.mxu0 %v6262
    %7919 = vmatpush.bf16.msra.mxu0 %v6254
    %7920 = vmatpush.bf16.msra.mxu0 %v6246
    %7921 = vmatpush.bf16.msra.mxu0 %v6238
    %7922 = vmatpush.bf16.msra.mxu0 %v6230
    %7923 = vmatpush.bf16.msra.mxu0 %v6222
    %7924 = vmatmul.bf16.gmra.mxu0 %v4078
    %v7925 = vpop.f32.mrf.mxu0
    %v7926 = vadd.f32 %v7913, %v7925
    %v7927 = vpop.f32.mrf.mxu0
    %7928 = vdwg.mxu0
    %7929 = vmatpush.bf16.msra.mxu0 %v6342
    %7930 = vmatpush.bf16.msra.mxu0 %v6334
    %7931 = vmatpush.bf16.msra.mxu0 %v6326
    %7932 = vmatpush.bf16.msra.mxu0 %v6318
    %7933 = vmatpush.bf16.msra.mxu0 %v6310
    %7934 = vmatpush.bf16.msra.mxu0 %v6302
    %7935 = vmatpush.bf16.msra.mxu0 %v6294
    %7936 = vmatpush.bf16.msra.mxu0 %v6286
    %7937 = vmatmul.bf16.gmra.mxu0 %v4079
    %v7938 = vpop.f32.mrf.mxu0
    %v7939 = vadd.f32 %v7926, %v7938
    %v7940 = vpop.f32.mrf.mxu0
    %7941 = vdwg.mxu0
    %7942 = vmatpush.bf16.msra.mxu0 %v6406
    %7943 = vmatpush.bf16.msra.mxu0 %v6398
    %7944 = vmatpush.bf16.msra.mxu0 %v6390
    %7945 = vmatpush.bf16.msra.mxu0 %v6382
    %7946 = vmatpush.bf16.msra.mxu0 %v6374
    %7947 = vmatpush.bf16.msra.mxu0 %v6366
    %7948 = vmatpush.bf16.msra.mxu0 %v6358
    %7949 = vmatpush.bf16.msra.mxu0 %v6350
    %7950 = vmatmul.bf16.gmra.mxu0 %v4080
    %v7951 = vpop.f32.mrf.mxu0
    %v7952 = vadd.f32 %v7939, %v7951
    %v7953 = vpop.f32.mrf.mxu0
    %7954 = vdwg.mxu0
    %7955 = vmatpush.bf16.msra.mxu0 %v6470
    %7956 = vmatpush.bf16.msra.mxu0 %v6462
    %7957 = vmatpush.bf16.msra.mxu0 %v6454
    %7958 = vmatpush.bf16.msra.mxu0 %v6446
    %7959 = vmatpush.bf16.msra.mxu0 %v6438
    %7960 = vmatpush.bf16.msra.mxu0 %v6430
    %7961 = vmatpush.bf16.msra.mxu0 %v6422
    %7962 = vmatpush.bf16.msra.mxu0 %v6414
    %7963 = vmatmul.bf16.gmra.mxu0 %v4081
    %v7964 = vpop.f32.mrf.mxu0
    %v7965 = vadd.f32 %v7952, %v7964
    %v7966 = vpop.f32.mrf.mxu0
    %7967 = vdwg.mxu0
    %7968 = vmatpush.bf16.msra.mxu0 %v6534
    %7969 = vmatpush.bf16.msra.mxu0 %v6526
    %7970 = vmatpush.bf16.msra.mxu0 %v6518
    %7971 = vmatpush.bf16.msra.mxu0 %v6510
    %7972 = vmatpush.bf16.msra.mxu0 %v6502
    %7973 = vmatpush.bf16.msra.mxu0 %v6494
    %7974 = vmatpush.bf16.msra.mxu0 %v6486
    %7975 = vmatpush.bf16.msra.mxu0 %v6478
    %7976 = vmatmul.bf16.gmra.mxu0 %v4082
    %v7977 = vpop.f32.mrf.mxu0
    %v7978 = vadd.f32 %v7965, %v7977
    %v7979 = vpop.f32.mrf.mxu0
    %7980 = vdwg.mxu0
    %7981 = vmatpush.bf16.msra.mxu0 %v6598
    %7982 = vmatpush.bf16.msra.mxu0 %v6590
    %7983 = vmatpush.bf16.msra.mxu0 %v6582
    %7984 = vmatpush.bf16.msra.mxu0 %v6574
    %7985 = vmatpush.bf16.msra.mxu0 %v6566
    %7986 = vmatpush.bf16.msra.mxu0 %v6558
    %7987 = vmatpush.bf16.msra.mxu0 %v6550
    %7988 = vmatpush.bf16.msra.mxu0 %v6542
    %7989 = vmatmul.bf16.gmra.mxu0 %v4083
    %v7990 = vpop.f32.mrf.mxu0
    %v7991 = vadd.f32 %v7978, %v7990
    %v7992 = vpop.f32.mrf.mxu0
    %7993 = vdwg.mxu0
    %7994 = vmatpush.bf16.msra.mxu0 %v6662
    %7995 = vmatpush.bf16.msra.mxu0 %v6654
    %7996 = vmatpush.bf16.msra.mxu0 %v6646
    %7997 = vmatpush.bf16.msra.mxu0 %v6638
    %7998 = vmatpush.bf16.msra.mxu0 %v6630
    %7999 = vmatpush.bf16.msra.mxu0 %v6622
    %8000 = vmatpush.bf16.msra.mxu0 %v6614
    %8001 = vmatpush.bf16.msra.mxu0 %v6606
    %8002 = vmatmul.bf16.gmra.mxu0 %v4084
    %v8003 = vpop.f32.mrf.mxu0
    %v8004 = vadd.f32 %v7991, %v8003
    %v8005 = vpop.f32.mrf.mxu0
    %8006 = vdwg.mxu0
    %v8007 = vmax.f32 %v7276, 0.0
    %v8008 = vmax.f32 %v7380, 0.0
    %v8009 = vmax.f32 %v7484, 0.0
    %v8010 = vmax.f32 %v7588, 0.0
    %v8011 = vmax.f32 %v7692, 0.0
    %v8012 = vmax.f32 %v7796, 0.0
    %v8013 = vmax.f32 %v7900, 0.0
    %v8014 = vmax.f32 %v8004, 0.0
    %8015 = vst [vmem:[#allocation14] sm:$0xff] %v8007
    %8016 = vst [vmem:[#allocation14 + $0x8] sm:$0xff] %v8008
    %8017 = vst [vmem:[#allocation14 + $0x10] sm:$0xff] %v8009
    %8018 = vst [vmem:[#allocation14 + $0x18] sm:$0xff] %v8010
    %8019 = vst [vmem:[#allocation14 + $0x20] sm:$0xff] %v8011
    %8020 = vst [vmem:[#allocation14 + $0x28] sm:$0xff] %v8012
    %8021 = vst [vmem:[#allocation14 + $0x30] sm:$0xff] %v8013
    %8022 = vst [vmem:[#allocation14 + $0x38] sm:$0xff] %v8014
    %v8023 = vpack.c.bf16 %v8007, %v8007
    %v8024 = vpack.c.bf16 %v8008, %v8008
    %v8025 = vpack.c.bf16 %v8009, %v8009
    %v8026 = vpack.c.bf16 %v8010, %v8010
    %v8027 = vpack.c.bf16 %v8011, %v8011
    %v8028 = vpack.c.bf16 %v8012, %v8012
    %v8029 = vpack.c.bf16 %v8013, %v8013
    %v8030 = vpack.c.bf16 %v8014, %v8014
    %v8031 = vld [vmem:[#allocation11] sm:$0xf]
    %v8032 = vld [vmem:[#allocation11 + $0x4] sm:$0xf]
    %v8033 = vld [vmem:[#allocation11 + $0x8] sm:$0xf]
    %v8034 = vld [vmem:[#allocation11 + $0xc] sm:$0xf]
    %v8035 = vld [vmem:[#allocation11 + $0x10] sm:$0xf]
    %v8036 = vld [vmem:[#allocation11 + $0x14] sm:$0xf]
    %v8037 = vld [vmem:[#allocation11 + $0x18] sm:$0xf]
    %v8038 = vld [vmem:[#allocation11 + $0x1c] sm:$0xf]
    %v8039 = vld [vmem:[#allocation11 + $0x20] sm:$0xf]
    %v8040 = vld [vmem:[#allocation11 + $0x24] sm:$0xf]
    %v8041 = vld [vmem:[#allocation11 + $0x28] sm:$0xf]
    %v8042 = vld [vmem:[#allocation11 + $0x2c] sm:$0xf]
    %v8043 = vld [vmem:[#allocation11 + $0x30] sm:$0xf]
    %v8044 = vld [vmem:[#allocation11 + $0x34] sm:$0xf]
    %v8045 = vld [vmem:[#allocation11 + $0x38] sm:$0xf]
    %v8046 = vld [vmem:[#allocation11 + $0x3c] sm:$0xf]
    %v8047 = vld [vmem:[#allocation11 + $0x40] sm:$0xf]
    %v8048 = vld [vmem:[#allocation11 + $0x44] sm:$0xf]
    %v8049 = vld [vmem:[#allocation11 + $0x48] sm:$0xf]
    %v8050 = vld [vmem:[#allocation11 + $0x4c] sm:$0xf]
    %v8051 = vld [vmem:[#allocation11 + $0x50] sm:$0xf]
    %v8052 = vld [vmem:[#allocation11 + $0x54] sm:$0xf]
    %v8053 = vld [vmem:[#allocation11 + $0x58] sm:$0xf]
    %v8054 = vld [vmem:[#allocation11 + $0x5c] sm:$0xf]
    %v8055 = vld [vmem:[#allocation11 + $0x60] sm:$0xf]
    %v8056 = vld [vmem:[#allocation11 + $0x64] sm:$0xf]
    %v8057 = vld [vmem:[#allocation11 + $0x68] sm:$0xf]
    %v8058 = vld [vmem:[#allocation11 + $0x6c] sm:$0xf]
    %v8059 = vld [vmem:[#allocation11 + $0x70] sm:$0xf]
    %v8060 = vld [vmem:[#allocation11 + $0x74] sm:$0xf]
    %v8061 = vld [vmem:[#allocation11 + $0x78] sm:$0xf]
    %v8062 = vld [vmem:[#allocation11 + $0x7c] sm:$0xf]
    %v8063 = vld [vmem:[#allocation11 + $0x80] sm:$0xf]
    %v8064 = vld [vmem:[#allocation11 + $0x84] sm:$0xf]
    %v8065 = vld [vmem:[#allocation11 + $0x88] sm:$0xf]
    %v8066 = vld [vmem:[#allocation11 + $0x8c] sm:$0xf]
    %v8067 = vld [vmem:[#allocation11 + $0x90] sm:$0xf]
    %v8068 = vld [vmem:[#allocation11 + $0x94] sm:$0xf]
    %v8069 = vld [vmem:[#allocation11 + $0x98] sm:$0xf]
    %v8070 = vld [vmem:[#allocation11 + $0x9c] sm:$0xf]
    %v8071 = vld [vmem:[#allocation11 + $0xa0] sm:$0xf]
    %v8072 = vld [vmem:[#allocation11 + $0xa4] sm:$0xf]
    %v8073 = vld [vmem:[#allocation11 + $0xa8] sm:$0xf]
    %v8074 = vld [vmem:[#allocation11 + $0xac] sm:$0xf]
    %v8075 = vld [vmem:[#allocation11 + $0xb0] sm:$0xf]
    %v8076 = vld [vmem:[#allocation11 + $0xb4] sm:$0xf]
    %v8077 = vld [vmem:[#allocation11 + $0xb8] sm:$0xf]
    %v8078 = vld [vmem:[#allocation11 + $0xbc] sm:$0xf]
    %v8079 = vld [vmem:[#allocation11 + $0xc0] sm:$0xf]
    %v8080 = vld [vmem:[#allocation11 + $0xc4] sm:$0xf]
    %v8081 = vld [vmem:[#allocation11 + $0xc8] sm:$0xf]
    %v8082 = vld [vmem:[#allocation11 + $0xcc] sm:$0xf]
    %v8083 = vld [vmem:[#allocation11 + $0xd0] sm:$0xf]
    %v8084 = vld [vmem:[#allocation11 + $0xd4] sm:$0xf]
    %v8085 = vld [vmem:[#allocation11 + $0xd8] sm:$0xf]
    %v8086 = vld [vmem:[#allocation11 + $0xdc] sm:$0xf]
    %v8087 = vld [vmem:[#allocation11 + $0xe0] sm:$0xf]
    %v8088 = vld [vmem:[#allocation11 + $0xe4] sm:$0xf]
    %v8089 = vld [vmem:[#allocation11 + $0xe8] sm:$0xf]
    %v8090 = vld [vmem:[#allocation11 + $0xec] sm:$0xf]
    %v8091 = vld [vmem:[#allocation11 + $0xf0] sm:$0xf]
    %v8092 = vld [vmem:[#allocation11 + $0xf4] sm:$0xf]
    %v8093 = vld [vmem:[#allocation11 + $0xf8] sm:$0xf]
    %v8094 = vld [vmem:[#allocation11 + $0xfc] sm:$0xf]
    %v8095 = vld [vmem:[#allocation11 + $0x100] sm:$0xf]
    %v8096 = vld [vmem:[#allocation11 + $0x104] sm:$0xf]
    %v8097 = vld [vmem:[#allocation11 + $0x108] sm:$0xf]
    %v8098 = vld [vmem:[#allocation11 + $0x10c] sm:$0xf]
    %v8099 = vld [vmem:[#allocation11 + $0x110] sm:$0xf]
    %v8100 = vld [vmem:[#allocation11 + $0x114] sm:$0xf]
    %v8101 = vld [vmem:[#allocation11 + $0x118] sm:$0xf]
    %v8102 = vld [vmem:[#allocation11 + $0x11c] sm:$0xf]
    %v8103 = vld [vmem:[#allocation11 + $0x120] sm:$0xf]
    %v8104 = vld [vmem:[#allocation11 + $0x124] sm:$0xf]
    %v8105 = vld [vmem:[#allocation11 + $0x128] sm:$0xf]
    %v8106 = vld [vmem:[#allocation11 + $0x12c] sm:$0xf]
    %v8107 = vld [vmem:[#allocation11 + $0x130] sm:$0xf]
    %v8108 = vld [vmem:[#allocation11 + $0x134] sm:$0xf]
    %v8109 = vld [vmem:[#allocation11 + $0x138] sm:$0xf]
    %v8110 = vld [vmem:[#allocation11 + $0x13c] sm:$0xf]
    %v8111 = vld [vmem:[#allocation11 + $0x140] sm:$0xf]
    %v8112 = vld [vmem:[#allocation11 + $0x144] sm:$0xf]
    %v8113 = vld [vmem:[#allocation11 + $0x148] sm:$0xf]
    %v8114 = vld [vmem:[#allocation11 + $0x14c] sm:$0xf]
    %v8115 = vld [vmem:[#allocation11 + $0x150] sm:$0xf]
    %v8116 = vld [vmem:[#allocation11 + $0x154] sm:$0xf]
    %v8117 = vld [vmem:[#allocation11 + $0x158] sm:$0xf]
    %v8118 = vld [vmem:[#allocation11 + $0x15c] sm:$0xf]
    %v8119 = vld [vmem:[#allocation11 + $0x160] sm:$0xf]
    %v8120 = vld [vmem:[#allocation11 + $0x164] sm:$0xf]
    %v8121 = vld [vmem:[#allocation11 + $0x168] sm:$0xf]
    %v8122 = vld [vmem:[#allocation11 + $0x16c] sm:$0xf]
    %v8123 = vld [vmem:[#allocation11 + $0x170] sm:$0xf]
    %v8124 = vld [vmem:[#allocation11 + $0x174] sm:$0xf]
    %v8125 = vld [vmem:[#allocation11 + $0x178] sm:$0xf]
    %v8126 = vld [vmem:[#allocation11 + $0x17c] sm:$0xf]
    %v8127 = vld [vmem:[#allocation11 + $0x180] sm:$0xf]
    %v8128 = vld [vmem:[#allocation11 + $0x184] sm:$0xf]
    %v8129 = vld [vmem:[#allocation11 + $0x188] sm:$0xf]
    %v8130 = vld [vmem:[#allocation11 + $0x18c] sm:$0xf]
    %v8131 = vld [vmem:[#allocation11 + $0x190] sm:$0xf]
    %v8132 = vld [vmem:[#allocation11 + $0x194] sm:$0xf]
    %v8133 = vld [vmem:[#allocation11 + $0x198] sm:$0xf]
    %v8134 = vld [vmem:[#allocation11 + $0x19c] sm:$0xf]
    %v8135 = vld [vmem:[#allocation11 + $0x1a0] sm:$0xf]
    %v8136 = vld [vmem:[#allocation11 + $0x1a4] sm:$0xf]
    %v8137 = vld [vmem:[#allocation11 + $0x1a8] sm:$0xf]
    %v8138 = vld [vmem:[#allocation11 + $0x1ac] sm:$0xf]
    %v8139 = vld [vmem:[#allocation11 + $0x1b0] sm:$0xf]
    %v8140 = vld [vmem:[#allocation11 + $0x1b4] sm:$0xf]
    %v8141 = vld [vmem:[#allocation11 + $0x1b8] sm:$0xf]
    %v8142 = vld [vmem:[#allocation11 + $0x1bc] sm:$0xf]
    %v8143 = vld [vmem:[#allocation11 + $0x1c0] sm:$0xf]
    %v8144 = vld [vmem:[#allocation11 + $0x1c4] sm:$0xf]
    %v8145 = vld [vmem:[#allocation11 + $0x1c8] sm:$0xf]
    %v8146 = vld [vmem:[#allocation11 + $0x1cc] sm:$0xf]
    %v8147 = vld [vmem:[#allocation11 + $0x1d0] sm:$0xf]
    %v8148 = vld [vmem:[#allocation11 + $0x1d4] sm:$0xf]
    %v8149 = vld [vmem:[#allocation11 + $0x1d8] sm:$0xf]
    %v8150 = vld [vmem:[#allocation11 + $0x1dc] sm:$0xf]
    %v8151 = vld [vmem:[#allocation11 + $0x1e0] sm:$0xf]
    %v8152 = vld [vmem:[#allocation11 + $0x1e4] sm:$0xf]
    %v8153 = vld [vmem:[#allocation11 + $0x1e8] sm:$0xf]
    %v8154 = vld [vmem:[#allocation11 + $0x1ec] sm:$0xf]
    %v8155 = vld [vmem:[#allocation11 + $0x1f0] sm:$0xf]
    %v8156 = vld [vmem:[#allocation11 + $0x1f4] sm:$0xf]
    %v8157 = vld [vmem:[#allocation11 + $0x1f8] sm:$0xf]
    %v8158 = vld [vmem:[#allocation11 + $0x1fc] sm:$0xf]
    %v8159 = vld [vmem:[#allocation13] sm:$0x1]
    %v8161 = vperm.slane %v8159, 0
    %v8291 = vunpack.c.l.b16 %v8031
    %v8292 = vunpack.c.l.b16 %v8032
    %v8293 = vunpack.c.l.b16 %v8033
    %v8294 = vunpack.c.l.b16 %v8034
    %v8295 = vunpack.c.l.b16 %v8035
    %v8296 = vunpack.c.l.b16 %v8036
    %v8297 = vunpack.c.l.b16 %v8037
    %v8298 = vunpack.c.l.b16 %v8038
    %v8299 = vunpack.c.l.b16 %v8039
    %v8300 = vunpack.c.l.b16 %v8040
    %v8301 = vunpack.c.l.b16 %v8041
    %v8302 = vunpack.c.l.b16 %v8042
    %v8303 = vunpack.c.l.b16 %v8043
    %v8304 = vunpack.c.l.b16 %v8044
    %v8305 = vunpack.c.l.b16 %v8045
    %v8306 = vunpack.c.l.b16 %v8046
    %v8307 = vunpack.c.l.b16 %v8047
    %v8308 = vunpack.c.l.b16 %v8048
    %v8309 = vunpack.c.l.b16 %v8049
    %v8310 = vunpack.c.l.b16 %v8050
    %v8311 = vunpack.c.l.b16 %v8051
    %v8312 = vunpack.c.l.b16 %v8052
    %v8313 = vunpack.c.l.b16 %v8053
    %v8314 = vunpack.c.l.b16 %v8054
    %v8315 = vunpack.c.l.b16 %v8055
    %v8316 = vunpack.c.l.b16 %v8056
    %v8317 = vunpack.c.l.b16 %v8057
    %v8318 = vunpack.c.l.b16 %v8058
    %v8319 = vunpack.c.l.b16 %v8059
    %v8320 = vunpack.c.l.b16 %v8060
    %v8321 = vunpack.c.l.b16 %v8061
    %v8322 = vunpack.c.l.b16 %v8062
    %v8323 = vunpack.c.l.b16 %v8063
    %v8324 = vunpack.c.l.b16 %v8064
    %v8325 = vunpack.c.l.b16 %v8065
    %v8326 = vunpack.c.l.b16 %v8066
    %v8327 = vunpack.c.l.b16 %v8067
    %v8328 = vunpack.c.l.b16 %v8068
    %v8329 = vunpack.c.l.b16 %v8069
    %v8330 = vunpack.c.l.b16 %v8070
    %v8331 = vunpack.c.l.b16 %v8071
    %v8332 = vunpack.c.l.b16 %v8072
    %v8333 = vunpack.c.l.b16 %v8073
    %v8334 = vunpack.c.l.b16 %v8074
    %v8335 = vunpack.c.l.b16 %v8075
    %v8336 = vunpack.c.l.b16 %v8076
    %v8337 = vunpack.c.l.b16 %v8077
    %v8338 = vunpack.c.l.b16 %v8078
    %v8339 = vunpack.c.l.b16 %v8079
    %v8340 = vunpack.c.l.b16 %v8080
    %v8341 = vunpack.c.l.b16 %v8081
    %v8342 = vunpack.c.l.b16 %v8082
    %v8343 = vunpack.c.l.b16 %v8083
    %v8344 = vunpack.c.l.b16 %v8084
    %v8345 = vunpack.c.l.b16 %v8085
    %v8346 = vunpack.c.l.b16 %v8086
    %v8347 = vunpack.c.l.b16 %v8087
    %v8348 = vunpack.c.l.b16 %v8088
    %v8349 = vunpack.c.l.b16 %v8089
    %v8350 = vunpack.c.l.b16 %v8090
    %v8351 = vunpack.c.l.b16 %v8091
    %v8352 = vunpack.c.l.b16 %v8092
    %v8353 = vunpack.c.l.b16 %v8093
    %v8354 = vunpack.c.l.b16 %v8094
    %v8355 = vunpack.c.l.b16 %v8095
    %v8356 = vunpack.c.l.b16 %v8096
    %v8357 = vunpack.c.l.b16 %v8097
    %v8358 = vunpack.c.l.b16 %v8098
    %v8359 = vunpack.c.l.b16 %v8099
    %v8360 = vunpack.c.l.b16 %v8100
    %v8361 = vunpack.c.l.b16 %v8101
    %v8362 = vunpack.c.l.b16 %v8102
    %v8363 = vunpack.c.l.b16 %v8103
    %v8364 = vunpack.c.l.b16 %v8104
    %v8365 = vunpack.c.l.b16 %v8105
    %v8366 = vunpack.c.l.b16 %v8106
    %v8367 = vunpack.c.l.b16 %v8107
    %v8368 = vunpack.c.l.b16 %v8108
    %v8369 = vunpack.c.l.b16 %v8109
    %v8370 = vunpack.c.l.b16 %v8110
    %v8371 = vunpack.c.l.b16 %v8111
    %v8372 = vunpack.c.l.b16 %v8112
    %v8373 = vunpack.c.l.b16 %v8113
    %v8374 = vunpack.c.l.b16 %v8114
    %v8375 = vunpack.c.l.b16 %v8115
    %v8376 = vunpack.c.l.b16 %v8116
    %v8377 = vunpack.c.l.b16 %v8117
    %v8378 = vunpack.c.l.b16 %v8118
    %v8379 = vunpack.c.l.b16 %v8119
    %v8380 = vunpack.c.l.b16 %v8120
    %v8381 = vunpack.c.l.b16 %v8121
    %v8382 = vunpack.c.l.b16 %v8122
    %v8383 = vunpack.c.l.b16 %v8123
    %v8384 = vunpack.c.l.b16 %v8124
    %v8385 = vunpack.c.l.b16 %v8125
    %v8386 = vunpack.c.l.b16 %v8126
    %v8387 = vunpack.c.l.b16 %v8127
    %v8388 = vunpack.c.l.b16 %v8128
    %v8389 = vunpack.c.l.b16 %v8129
    %v8390 = vunpack.c.l.b16 %v8130
    %v8391 = vunpack.c.l.b16 %v8131
    %v8392 = vunpack.c.l.b16 %v8132
    %v8393 = vunpack.c.l.b16 %v8133
    %v8394 = vunpack.c.l.b16 %v8134
    %v8395 = vunpack.c.l.b16 %v8135
    %v8396 = vunpack.c.l.b16 %v8136
    %v8397 = vunpack.c.l.b16 %v8137
    %v8398 = vunpack.c.l.b16 %v8138
    %v8399 = vunpack.c.l.b16 %v8139
    %v8400 = vunpack.c.l.b16 %v8140
    %v8401 = vunpack.c.l.b16 %v8141
    %v8402 = vunpack.c.l.b16 %v8142
    %v8403 = vunpack.c.l.b16 %v8143
    %v8404 = vunpack.c.l.b16 %v8144
    %v8405 = vunpack.c.l.b16 %v8145
    %v8406 = vunpack.c.l.b16 %v8146
    %v8407 = vunpack.c.l.b16 %v8147
    %v8408 = vunpack.c.l.b16 %v8148
    %v8409 = vunpack.c.l.b16 %v8149
    %v8410 = vunpack.c.l.b16 %v8150
    %v8411 = vunpack.c.l.b16 %v8151
    %v8412 = vunpack.c.l.b16 %v8152
    %v8413 = vunpack.c.l.b16 %v8153
    %v8414 = vunpack.c.l.b16 %v8154
    %v8415 = vunpack.c.l.b16 %v8155
    %v8416 = vunpack.c.l.b16 %v8156
    %v8417 = vunpack.c.l.b16 %v8157
    %v8418 = vunpack.c.l.b16 %v8158
    %v8419 = vpack.c.b16 %v8292, %v8291
    %v8420 = vpack.c.b16 %v8294, %v8293
    %v8421 = vpack.c.b16 %v8296, %v8295
    %v8422 = vpack.c.b16 %v8298, %v8297
    %v8423 = vpack.c.b16 %v8300, %v8299
    %v8424 = vpack.c.b16 %v8302, %v8301
    %v8425 = vpack.c.b16 %v8304, %v8303
    %v8426 = vpack.c.b16 %v8306, %v8305
    %v8427 = vpack.c.b16 %v8308, %v8307
    %v8428 = vpack.c.b16 %v8310, %v8309
    %v8429 = vpack.c.b16 %v8312, %v8311
    %v8430 = vpack.c.b16 %v8314, %v8313
    %v8431 = vpack.c.b16 %v8316, %v8315
    %v8432 = vpack.c.b16 %v8318, %v8317
    %v8433 = vpack.c.b16 %v8320, %v8319
    %v8434 = vpack.c.b16 %v8322, %v8321
    %v8435 = vpack.c.b16 %v8324, %v8323
    %v8436 = vpack.c.b16 %v8326, %v8325
    %v8437 = vpack.c.b16 %v8328, %v8327
    %v8438 = vpack.c.b16 %v8330, %v8329
    %v8439 = vpack.c.b16 %v8332, %v8331
    %v8440 = vpack.c.b16 %v8334, %v8333
    %v8441 = vpack.c.b16 %v8336, %v8335
    %v8442 = vpack.c.b16 %v8338, %v8337
    %v8443 = vpack.c.b16 %v8340, %v8339
    %v8444 = vpack.c.b16 %v8342, %v8341
    %v8445 = vpack.c.b16 %v8344, %v8343
    %v8446 = vpack.c.b16 %v8346, %v8345
    %v8447 = vpack.c.b16 %v8348, %v8347
    %v8448 = vpack.c.b16 %v8350, %v8349
    %v8449 = vpack.c.b16 %v8352, %v8351
    %v8450 = vpack.c.b16 %v8354, %v8353
    %v8451 = vpack.c.b16 %v8356, %v8355
    %v8452 = vpack.c.b16 %v8358, %v8357
    %v8453 = vpack.c.b16 %v8360, %v8359
    %v8454 = vpack.c.b16 %v8362, %v8361
    %v8455 = vpack.c.b16 %v8364, %v8363
    %v8456 = vpack.c.b16 %v8366, %v8365
    %v8457 = vpack.c.b16 %v8368, %v8367
    %v8458 = vpack.c.b16 %v8370, %v8369
    %v8459 = vpack.c.b16 %v8372, %v8371
    %v8460 = vpack.c.b16 %v8374, %v8373
    %v8461 = vpack.c.b16 %v8376, %v8375
    %v8462 = vpack.c.b16 %v8378, %v8377
    %v8463 = vpack.c.b16 %v8380, %v8379
    %v8464 = vpack.c.b16 %v8382, %v8381
    %v8465 = vpack.c.b16 %v8384, %v8383
    %v8466 = vpack.c.b16 %v8386, %v8385
    %v8467 = vpack.c.b16 %v8388, %v8387
    %v8468 = vpack.c.b16 %v8390, %v8389
    %v8469 = vpack.c.b16 %v8392, %v8391
    %v8470 = vpack.c.b16 %v8394, %v8393
    %v8471 = vpack.c.b16 %v8396, %v8395
    %v8472 = vpack.c.b16 %v8398, %v8397
    %v8473 = vpack.c.b16 %v8400, %v8399
    %v8474 = vpack.c.b16 %v8402, %v8401
    %v8475 = vpack.c.b16 %v8404, %v8403
    %v8476 = vpack.c.b16 %v8406, %v8405
    %v8477 = vpack.c.b16 %v8408, %v8407
    %v8478 = vpack.c.b16 %v8410, %v8409
    %v8479 = vpack.c.b16 %v8412, %v8411
    %v8480 = vpack.c.b16 %v8414, %v8413
    %v8481 = vpack.c.b16 %v8416, %v8415
    %v8482 = vpack.c.b16 %v8418, %v8417
    %8547 = vmatpush.bf16.msra.mxu0 %v8426
    %8548 = vmatpush.bf16.msra.mxu0 %v8425
    %8549 = vmatpush.bf16.msra.mxu0 %v8424
    %8550 = vmatpush.bf16.msra.mxu0 %v8423
    %8551 = vmatpush.bf16.msra.mxu0 %v8422
    %8552 = vmatpush.bf16.msra.mxu0 %v8421
    %8553 = vmatpush.bf16.msra.mxu0 %v8420
    %8554 = vmatpush.bf16.msra.mxu0 %v8419
    %8555 = vmatmul.bf16.gmra.mxu0 %v8023
    %v8556 = vpop.f32.mrf.mxu0
    %v8557 = vadd.f32 %v8161, %v8556
    %v8558 = vpop.f32.mrf.mxu0
    %8559 = vdwg.mxu0
    %8560 = vmatpush.bf16.msra.mxu0 %v8434
    %8561 = vmatpush.bf16.msra.mxu0 %v8433
    %8562 = vmatpush.bf16.msra.mxu0 %v8432
    %8563 = vmatpush.bf16.msra.mxu0 %v8431
    %8564 = vmatpush.bf16.msra.mxu0 %v8430
    %8565 = vmatpush.bf16.msra.mxu0 %v8429
    %8566 = vmatpush.bf16.msra.mxu0 %v8428
    %8567 = vmatpush.bf16.msra.mxu0 %v8427
    %8568 = vmatmul.bf16.gmra.mxu0 %v8024
    %v8569 = vpop.f32.mrf.mxu0
    %v8570 = vadd.f32 %v8557, %v8569
    %v8571 = vpop.f32.mrf.mxu0
    %8572 = vdwg.mxu0
    %8573 = vmatpush.bf16.msra.mxu0 %v8442
    %8574 = vmatpush.bf16.msra.mxu0 %v8441
    %8575 = vmatpush.bf16.msra.mxu0 %v8440
    %8576 = vmatpush.bf16.msra.mxu0 %v8439
    %8577 = vmatpush.bf16.msra.mxu0 %v8438
    %8578 = vmatpush.bf16.msra.mxu0 %v8437
    %8579 = vmatpush.bf16.msra.mxu0 %v8436
    %8580 = vmatpush.bf16.msra.mxu0 %v8435
    %8581 = vmatmul.bf16.gmra.mxu0 %v8025
    %v8582 = vpop.f32.mrf.mxu0
    %v8583 = vadd.f32 %v8570, %v8582
    %v8584 = vpop.f32.mrf.mxu0
    %8585 = vdwg.mxu0
    %8586 = vmatpush.bf16.msra.mxu0 %v8450
    %8587 = vmatpush.bf16.msra.mxu0 %v8449
    %8588 = vmatpush.bf16.msra.mxu0 %v8448
    %8589 = vmatpush.bf16.msra.mxu0 %v8447
    %8590 = vmatpush.bf16.msra.mxu0 %v8446
    %8591 = vmatpush.bf16.msra.mxu0 %v8445
    %8592 = vmatpush.bf16.msra.mxu0 %v8444
    %8593 = vmatpush.bf16.msra.mxu0 %v8443
    %8594 = vmatmul.bf16.gmra.mxu0 %v8026
    %v8595 = vpop.f32.mrf.mxu0
    %v8596 = vadd.f32 %v8583, %v8595
    %v8597 = vpop.f32.mrf.mxu0
    %8598 = vdwg.mxu0
    %8599 = vmatpush.bf16.msra.mxu0 %v8458
    %8600 = vmatpush.bf16.msra.mxu0 %v8457
    %8601 = vmatpush.bf16.msra.mxu0 %v8456
    %8602 = vmatpush.bf16.msra.mxu0 %v8455
    %8603 = vmatpush.bf16.msra.mxu0 %v8454
    %8604 = vmatpush.bf16.msra.mxu0 %v8453
    %8605 = vmatpush.bf16.msra.mxu0 %v8452
    %8606 = vmatpush.bf16.msra.mxu0 %v8451
    %8607 = vmatmul.bf16.gmra.mxu0 %v8027
    %v8608 = vpop.f32.mrf.mxu0
    %v8609 = vadd.f32 %v8596, %v8608
    %v8610 = vpop.f32.mrf.mxu0
    %8611 = vdwg.mxu0
    %8612 = vmatpush.bf16.msra.mxu0 %v8466
    %8613 = vmatpush.bf16.msra.mxu0 %v8465
    %8614 = vmatpush.bf16.msra.mxu0 %v8464
    %8615 = vmatpush.bf16.msra.mxu0 %v8463
    %8616 = vmatpush.bf16.msra.mxu0 %v8462
    %8617 = vmatpush.bf16.msra.mxu0 %v8461
    %8618 = vmatpush.bf16.msra.mxu0 %v8460
    %8619 = vmatpush.bf16.msra.mxu0 %v8459
    %8620 = vmatmul.bf16.gmra.mxu0 %v8028
    %v8621 = vpop.f32.mrf.mxu0
    %v8622 = vadd.f32 %v8609, %v8621
    %v8623 = vpop.f32.mrf.mxu0
    %8624 = vdwg.mxu0
    %8625 = vmatpush.bf16.msra.mxu0 %v8474
    %8626 = vmatpush.bf16.msra.mxu0 %v8473
    %8627 = vmatpush.bf16.msra.mxu0 %v8472
    %8628 = vmatpush.bf16.msra.mxu0 %v8471
    %8629 = vmatpush.bf16.msra.mxu0 %v8470
    %8630 = vmatpush.bf16.msra.mxu0 %v8469
    %8631 = vmatpush.bf16.msra.mxu0 %v8468
    %8632 = vmatpush.bf16.msra.mxu0 %v8467
    %8633 = vmatmul.bf16.gmra.mxu0 %v8029
    %v8634 = vpop.f32.mrf.mxu0
    %v8635 = vadd.f32 %v8622, %v8634
    %v8636 = vpop.f32.mrf.mxu0
    %8637 = vdwg.mxu0
    %8638 = vmatpush.bf16.msra.mxu0 %v8482
    %8639 = vmatpush.bf16.msra.mxu0 %v8481
    %8640 = vmatpush.bf16.msra.mxu0 %v8480
    %8641 = vmatpush.bf16.msra.mxu0 %v8479
    %8642 = vmatpush.bf16.msra.mxu0 %v8478
    %8643 = vmatpush.bf16.msra.mxu0 %v8477
    %8644 = vmatpush.bf16.msra.mxu0 %v8476
    %8645 = vmatpush.bf16.msra.mxu0 %v8475
    %8646 = vmatmul.bf16.gmra.mxu0 %v8030
    %v8647 = vpop.f32.mrf.mxu0
    %v8648 = vadd.f32 %v8635, %v8647
    %v8649 = vpop.f32.mrf.mxu0
    %8650 = vdwg.mxu0
    %8651 = vst [vmem:[#allocation15] sm:$0xff] %v8648
    // Predicated region
    $region58: #{tpu_custom_call.1} parent=1 // pred_check
      _
    $region59: #{tpu_custom_call.1} parent=1 // pred_check_branch
      %8653 = sbr.rel (0) target = $region61
    $region60: #{tpu_custom_call.1} parent=1 // pred_region
      %8655 = vsyncadd [#allocation4], 0
      %s8657 = sshll.u32 [#allocation14], 4
      %s8658 = int_to_ptr.vmem [resolvable:$true] %s8657
      %s8659 = sshll.u32 %s7, 4
      %s8660 = int_to_ptr.hbm [resolvable:$true] %s8659
      %8662 = dma.vmem_to_hbm [thread:$0]  %s8658, 1024, %s8660, [#allocation4]
    $region61: #{tpu_custom_call.1} parent=1 // pred_fallthru
      _
    // Predicated region
    $region62: #{tpu_custom_call.1} parent=1 // pred_check
      _
    $region63: #{tpu_custom_call.1} parent=1 // pred_check_branch
      %8664 = sbr.rel (0) target = $region65
    $region64: #{tpu_custom_call.1} parent=1 // pred_region
      %8666 = vsyncadd [#allocation16], 0
      %s8668 = sshll.u32 [#allocation15], 4
      %s8669 = int_to_ptr.vmem [resolvable:$true] %s8668
      %s8670 = sshll.u32 %s8, 4
      %s8671 = int_to_ptr.hbm [resolvable:$true] %s8670
      %8673 = dma.vmem_to_hbm [thread:$0]  %s8669, 128, %s8671, [#allocation16]
    $region65: #{tpu_custom_call.1} parent=1 // pred_fallthru
      _
    // Predicated region
    $region66: #{tpu_custom_call.1} parent=1 // pred_check
      _
    $region67: #{tpu_custom_call.1} parent=1 // pred_check_branch
      %8675 = sbr.rel (0) target = $region69
    $region68: #{tpu_custom_call.1} parent=1 // pred_region
      %8677 = dma.done [#allocation4], 1024
    $region69: #{tpu_custom_call.1} parent=1 // pred_fallthru
      _
    // Predicated region
    $region70: #{tpu_custom_call.1} parent=1 // pred_check
      _
    $region71: #{tpu_custom_call.1} parent=1 // pred_check_branch
      %8679 = sbr.rel (0) target = $region73
    $region72: #{tpu_custom_call.1} parent=1 // pred_region
      %8681 = dma.done [#allocation16], 128
    $region73: #{tpu_custom_call.1} parent=1 // pred_fallthru
      _
    %8682 = vsyncpa [#allocation3], 1
    %8683 = vsyncpa [#allocation6], 1
    %8684 = vsyncpa [#allocation9], 1
    %8685 = vsyncpa [#allocation12], 1
    %8686 = vsyncpa [#allocation4], 1
    %8687 = vsyncpa [#allocation16], 1

</llo_original>
